<compile_context>
chip_gen: v7x
topology: tpu7x:2x2x1
jax: 0.10.0
libtpu: 0.0.40
codegen_flags: <defaults>
</compile_context>

<pallas_src>
import functools

import numpy as np

import jax
import jax.numpy as jnp
from jax import lax
from jax.experimental import pallas as pl
from jax.experimental.pallas import tpu as pltpu


def _srcnn_kernel(x1_ref, w1_ref, b1_ref, w2_ref, b2_ref, w3_ref, b3_ref,
                  ring_ref, core_ref, o_ref, x3_ref, *, H, W, B, k1, k3, c3):
    # x1_ref  : (1, 8, B*blk)   padded input, channels padded 3->8, flat stride (W+4)
    # w1_ref  : (128, 648)      conv1 weight, K ordered (kh, kw, cin_pad8)
    # b1_ref  : (128, 1)
    # w2_ref  : (64, 128)       conv2 1x1 weight, channel-first
    # b2_ref  : (64, 1)
    # w3_ref  : (8, 1600)       conv3 weight, K ordered (kh, kw, cin), cout padded 3->8
    # b3_ref  : (8, 1)
    # ring_ref: (1, B*blk)      1.0 on conv2's 16x16 output footprint inside x3, else 0
    # core_ref: (1, Lc1)        1.0 on valid conv1/conv2 positions in the strided frame
    # o_ref   : (B, 3, H*W)     lane-dense flattened NCHW output
    # x3_ref  : VMEM (64, B*blk) flat conv3 input scratch (same stride as the input)
    S = W + 4                            # shared flat row stride
    blk = (H + 4) * S                    # per-image flat block
    h1h, h1w = H + 5 - k1, W + 5 - k1    # conv1 output spatial (pad=2)
    Lc1 = (B - 1) * blk + (h1h - 1) * S + h1w   # strided width of conv1/conv2 output
    Lc3 = (B - 1) * blk + (H - 1) * S + W       # strided width of conv3 output
    core_off = 4 * S + 4                 # h2 core offset inside x3 (conv2 pad + conv3 pad)

    # ---- conv1: in-kernel im2col = 81 contiguous lane slices -> one MXU call ----
    x1 = x1_ref[0]                                                   # (8, B*blk)
    pm1 = jnp.concatenate(
        [x1[:, kh * S + kw:kh * S + kw + Lc1]
         for kh in range(k1) for kw in range(k1)], axis=0)           # (648, Lc1)
    h1 = jnp.dot(w1_ref[...], pm1, preferred_element_type=jnp.float32)
    h1 = jnp.maximum(h1 + b1_ref[...], 0.0)                          # (128, Lc1)

    # ---- conv2 (1x1): plain matmul on the interior, still in the strided layout ----
    h2 = jnp.dot(w2_ref[...], h1, preferred_element_type=jnp.float32)
    h2 = jnp.maximum(h2 + b2_ref[...], 0.0)                          # (64, Lc1)

    # ---- assemble conv3's flat padded input: one base store + one core blend ----
    #   outer 2-ring: conv3's zero padding (ring mask = 0)
    #   next  2-ring: conv2 evaluated on its zero padding = relu(b2)
    #   core        : h2 (same stride, so a single wide masked blend, no narrow stores)
    x3_ref[...] = ring_ref[...] * jnp.maximum(b2_ref[...], 0.0)
    old = x3_ref[:, core_off:core_off + Lc1]
    x3_ref[:, core_off:core_off + Lc1] = jnp.where(core_ref[...] > 0.5, h2, old)

    # ---- conv3: 25 contiguous lane slices -> one (8,1600)@(1600,Lc3) MXU call ----
    pm3 = jnp.concatenate(
        [x3_ref[:, kh * S + kw:kh * S + kw + Lc3]
         for kh in range(k3) for kw in range(k3)], axis=0)           # (1600, Lc3)
    acc = jnp.dot(w3_ref[...], pm3, preferred_element_type=jnp.float32) + b3_ref[...]

    # ---- ONE strided -> lane-dense compaction, then lane-dense per-image store ----
    for b in range(B):                                               # static unroll
        img = jnp.concatenate(
            [acc[:, b * blk + i * S:b * blk + i * S + W] for i in range(H)],
            axis=1)                                                  # (8, H*W)
        o_ref[b] = img[:c3].astype(o_ref.dtype)


def srcnn_forward(x_nchw, params, images_per_step=None):
    """Fused SRCNN forward. x_nchw: (N, 3, H, W) -> (N, 3, H, W)."""
    (w1, b1), (w2, b2), (w3, b3) = params
    N, cin, H, W = x_nchw.shape
    k1, _, _, c1 = w1.shape            # 9, 9, 3, 128
    _, _, _, c2 = w2.shape             # 1, 1, 128, 64
    k3, _, _, c3 = w3.shape            # 5, 5, 64, 3
    cin_p, c3_p = 8, 8                 # pad conv1-cin / conv3-cout to one sublane group

    # Pack B images per grid step along the lane axis.  For N==2 this collapses the
    # grid to a single step (best on single-TC v5e/v6e); on dual-TC v7x one can pass
    # images_per_step=1 for N==2 to keep both TensorCores busy instead.
    if images_per_step is None:
        images_per_step = 2 if N % 2 == 0 else 1
    B = images_per_step
    assert N % B == 0, "batch must be divisible by images_per_step"
    G = N // B

    S = W + 4                          # shared flat row stride
    blk = (H + 4) * S                  # per-image flat block
    h1h, h1w = H + 5 - k1, W + 5 - k1  # conv1 output spatial
    Lc1 = (B - 1) * blk + (h1h - 1) * S + h1w
    s3 = H * W

    # --- input prep: channel-pad 3->8, spatial-pad by 2, flatten to stride-(W+4),
    #     pack B images per step along the lane axis (tiny; fused by XLA) ---
    xpad = jnp.pad(x_nchw, ((0, 0), (0, cin_p - cin), (2, 2), (2, 2)))
    x1 = xpad.reshape(G, B, cin_p, blk).transpose(0, 2, 1, 3).reshape(G, cin_p, B * blk)

    # --- weights: channel-first, contraction ordered (kh, kw, cin) to match the
    #     in-kernel patch concatenation; conv1 cin / conv3 cout zero-padded to 8 ---
    w1t = jnp.pad(jnp.transpose(w1, (3, 0, 1, 2)),
                  ((0, 0), (0, 0), (0, 0), (0, cin_p - cin))).reshape(c1, k1 * k1 * cin_p)
    w2t = jnp.transpose(w2[0, 0], (1, 0))                               # (64, 128)
    w3t = jnp.pad(jnp.transpose(w3, (3, 0, 1, 2)).reshape(c3, k3 * k3 * c2),
                  ((0, c3_p - c3), (0, 0)))                             # (8, 1600)
    b3p = jnp.pad(b3, (0, c3_p - c3)).reshape(c3_p, 1)

    # --- batch-invariant masks in the flat strided layout (trace-time constants) ---
    ring2d = np.zeros((H + 4, W + 4), np.float32)
    ring2d[2:H + 2, 2:W + 2] = 1.0             # conv2's output footprint inside x3
    ring = jnp.asarray(np.tile(ring2d.reshape(-1), B)[None, :])         # (1, B*blk)
    core2d = np.zeros((H + 4, W + 4), np.float32)
    core2d[:h1h, :h1w] = 1.0                   # valid conv1/conv2 positions (strided frame)
    core = jnp.asarray(np.tile(core2d.reshape(-1), B)[None, :Lc1])      # (1, Lc1)

    kernel = functools.partial(_srcnn_kernel, H=H, W=W, B=B, k1=k1, k3=k3, c3=c3)

    out = pl.pallas_call(
        kernel,
        out_shape=jax.ShapeDtypeStruct((N, c3, s3), x_nchw.dtype),
        grid_spec=pltpu.PrefetchScalarGridSpec(
            num_scalar_prefetch=0,
            grid=(G,),
            in_specs=[
                pl.BlockSpec((1, cin_p, B * blk), lambda g: (g, 0, 0)),
                pl.BlockSpec((c1, k1 * k1 * cin_p), lambda g: (0, 0)),
                pl.BlockSpec((c1, 1), lambda g: (0, 0)),
                pl.BlockSpec((c2, c1), lambda g: (0, 0)),
                pl.BlockSpec((c2, 1), lambda g: (0, 0)),
                pl.BlockSpec((c3_p, k3 * k3 * c2), lambda g: (0, 0)),
                pl.BlockSpec((c3_p, 1), lambda g: (0, 0)),
                pl.BlockSpec((1, B * blk), lambda g: (0, 0)),
                pl.BlockSpec((1, Lc1), lambda g: (0, 0)),
            ],
            out_specs=pl.BlockSpec((B, c3, s3), lambda g: (g, 0, 0)),
            scratch_shapes=[pltpu.VMEM((c2, B * blk), jnp.float32)],
        ),
        compiler_params=pltpu.CompilerParams(
            dimension_semantics=("parallel",),
            vmem_limit_bytes=32 * 1024 * 1024),
    )(x1, w1t, b1.reshape(c1, 1), w2t, b2.reshape(c2, 1), w3t, b3p, ring, core)

    # (N, 3, H*W) channel-first, lane-dense -> NCHW with a free reshape.
    return out.reshape(N, c3, H, W)


def init_srcnn_params(key):
    """Deterministic synthetic params; shapes match the PyTorch module (HWIO)."""
    ks = jax.random.split(key, 6)

    def mk(kw_, kb, kh, kwid, cin, cout):
        w = jax.random.normal(kw_, (kh, kwid, cin, cout), jnp.float32) * 0.05
        b = jax.random.normal(kb, (cout,), jnp.float32) * 0.05
        return w, b

    w1, b1 = mk(ks[0], ks[1], 9, 9, 3, 128)    # conv1: 3 -> 128, k=9, pad=2
    w2, b2 = mk(ks[2], ks[3], 1, 1, 128, 64)   # conv2: 128 -> 64, k=1, pad=2
    w3, b3 = mk(ks[4], ks[5], 5, 5, 64, 3)     # conv3: 64 -> 3,  k=5, pad=2
    return (w1, b1), (w2, b2), (w3, b3)


def _ref_conv(x_nchw, w_hwio, b, padding):
    w_oihw = jnp.transpose(w_hwio, (3, 2, 0, 1))
    y = lax.conv_general_dilated(
        x_nchw, w_oihw, window_strides=(1, 1),
        padding=[(padding, padding), (padding, padding)],
        dimension_numbers=("NCHW", "OIHW", "NCHW"))
    return y + b.reshape(1, -1, 1, 1)


def srcnn_reference(x_nchw, params):
    (w1, b1), (w2, b2), (w3, b3) = params
    x = jax.nn.relu(_ref_conv(x_nchw, w1, b1, 2))
    x = jax.nn.relu(_ref_conv(x, w2, b2, 2))
    return _ref_conv(x, w3, b3, 2)


if __name__ == "__main__":
    key = jax.random.PRNGKey(0)
    kx, kp = jax.random.split(key)
    # SRCNN requires 3 input channels (conv1 is 3 -> 128).
    x = jax.random.normal(kx, (2, 3, 16, 16), jnp.float32)        # NCHW
    params = init_srcnn_params(kp)

    fwd = jax.jit(srcnn_forward)
    out = jax.block_until_ready(fwd(x, params))

    ref = jax.block_until_ready(srcnn_reference(x, params))
    assert out.shape == ref.shape == (2, 3, 16, 16), out.shape
    assert jnp.allclose(out, ref, rtol=1e-3, atol=1e-3), "mismatch vs XLA reference"

    print("KERNEL_OK")
</pallas_src>

<mosaic_0001>
module attributes {stable_mosaic.version = 11 : i64} {
  func.func @_srcnn_kernel(%arg0: i32, %arg1: memref<1x8x800xf32, #tpu.memory_space<vmem>>, %arg2: memref<128x648xf32, #tpu.memory_space<vmem>>, %arg3: memref<128x1xf32, #tpu.memory_space<vmem>>, %arg4: memref<64x128xf32, #tpu.memory_space<vmem>>, %arg5: memref<64x1xf32, #tpu.memory_space<vmem>>, %arg6: memref<8x1600xf32, #tpu.memory_space<vmem>>, %arg7: memref<8x1xf32, #tpu.memory_space<vmem>>, %arg8: memref<1x800xf32, #tpu.memory_space<vmem>>, %arg9: memref<1x632xf32, #tpu.memory_space<vmem>>, %arg10: memref<2x3x256xf32, #tpu.memory_space<vmem>>, %arg11: memref<64x800xf32, #tpu.memory_space<vmem>>) attributes {dimension_semantics = [#tpu.dimension_semantics<parallel>], iteration_bounds = array<i64: 1>, scalar_prefetch = 0 : i64, scratch_operands = 1 : i64, tpu.core_type = #tpu.core_type<tc>, window_params = [{transform_indices = @transform_0, window_bounds = array<i64: 1, 8, 800>}, {pipeline_mode = #tpu.pipeline_mode<synchronous>, transform_indices = @transform_1, window_bounds = array<i64: 128, 648>}, {pipeline_mode = #tpu.pipeline_mode<synchronous>, transform_indices = @transform_2, window_bounds = array<i64: 128, 1>}, {pipeline_mode = #tpu.pipeline_mode<synchronous>, transform_indices = @transform_3, window_bounds = array<i64: 64, 128>}, {pipeline_mode = #tpu.pipeline_mode<synchronous>, transform_indices = @transform_4, window_bounds = array<i64: 64, 1>}, {pipeline_mode = #tpu.pipeline_mode<synchronous>, transform_indices = @transform_5, window_bounds = array<i64: 8, 1600>}, {pipeline_mode = #tpu.pipeline_mode<synchronous>, transform_indices = @transform_6, window_bounds = array<i64: 8, 1>}, {pipeline_mode = #tpu.pipeline_mode<synchronous>, transform_indices = @transform_7, window_bounds = array<i64: 1, 800>}, {pipeline_mode = #tpu.pipeline_mode<synchronous>, transform_indices = @transform_8, window_bounds = array<i64: 1, 632>}, {transform_indices = @transform_9, window_bounds = array<i64: 2, 3, 256>}]} {
    %c0 = arith.constant 0 : index
    %c0_0 = arith.constant 0 : index
    %c0_1 = arith.constant 0 : index
    %0 = vector.load %arg1[%c0, %c0_0, %c0_1] : memref<1x8x800xf32, #tpu.memory_space<vmem>>, vector<1x8x800xf32>
    %1 = vector.shape_cast %0 : vector<1x8x800xf32> to vector<8x800xf32>
    %2 = vector.extract_strided_slice %1 {offsets = [0, 0], sizes = [8, 632], strides = [1, 1]} : vector<8x800xf32> to vector<8x632xf32>
    %3 = vector.extract_strided_slice %1 {offsets = [0, 1], sizes = [8, 632], strides = [1, 1]} : vector<8x800xf32> to vector<8x632xf32>
    %4 = vector.extract_strided_slice %1 {offsets = [0, 2], sizes = [8, 632], strides = [1, 1]} : vector<8x800xf32> to vector<8x632xf32>
    %5 = vector.extract_strided_slice %1 {offsets = [0, 3], sizes = [8, 632], strides = [1, 1]} : vector<8x800xf32> to vector<8x632xf32>
    %6 = vector.extract_strided_slice %1 {offsets = [0, 4], sizes = [8, 632], strides = [1, 1]} : vector<8x800xf32> to vector<8x632xf32>
    %7 = vector.extract_strided_slice %1 {offsets = [0, 5], sizes = [8, 632], strides = [1, 1]} : vector<8x800xf32> to vector<8x632xf32>
    %8 = vector.extract_strided_slice %1 {offsets = [0, 6], sizes = [8, 632], strides = [1, 1]} : vector<8x800xf32> to vector<8x632xf32>
    %9 = vector.extract_strided_slice %1 {offsets = [0, 7], sizes = [8, 632], strides = [1, 1]} : vector<8x800xf32> to vector<8x632xf32>
    %10 = vector.extract_strided_slice %1 {offsets = [0, 8], sizes = [8, 632], strides = [1, 1]} : vector<8x800xf32> to vector<8x632xf32>
    %11 = vector.extract_strided_slice %1 {offsets = [0, 20], sizes = [8, 632], strides = [1, 1]} : vector<8x800xf32> to vector<8x632xf32>
    %12 = vector.extract_strided_slice %1 {offsets = [0, 21], sizes = [8, 632], strides = [1, 1]} : vector<8x800xf32> to vector<8x632xf32>
    %13 = vector.extract_strided_slice %1 {offsets = [0, 22], sizes = [8, 632], strides = [1, 1]} : vector<8x800xf32> to vector<8x632xf32>
    %14 = vector.extract_strided_slice %1 {offsets = [0, 23], sizes = [8, 632], strides = [1, 1]} : vector<8x800xf32> to vector<8x632xf32>
    %15 = vector.extract_strided_slice %1 {offsets = [0, 24], sizes = [8, 632], strides = [1, 1]} : vector<8x800xf32> to vector<8x632xf32>
    %16 = vector.extract_strided_slice %1 {offsets = [0, 25], sizes = [8, 632], strides = [1, 1]} : vector<8x800xf32> to vector<8x632xf32>
    %17 = vector.extract_strided_slice %1 {offsets = [0, 26], sizes = [8, 632], strides = [1, 1]} : vector<8x800xf32> to vector<8x632xf32>
    %18 = vector.extract_strided_slice %1 {offsets = [0, 27], sizes = [8, 632], strides = [1, 1]} : vector<8x800xf32> to vector<8x632xf32>
    %19 = vector.extract_strided_slice %1 {offsets = [0, 28], sizes = [8, 632], strides = [1, 1]} : vector<8x800xf32> to vector<8x632xf32>
    %20 = vector.extract_strided_slice %1 {offsets = [0, 40], sizes = [8, 632], strides = [1, 1]} : vector<8x800xf32> to vector<8x632xf32>
    %21 = vector.extract_strided_slice %1 {offsets = [0, 41], sizes = [8, 632], strides = [1, 1]} : vector<8x800xf32> to vector<8x632xf32>
    %22 = vector.extract_strided_slice %1 {offsets = [0, 42], sizes = [8, 632], strides = [1, 1]} : vector<8x800xf32> to vector<8x632xf32>
    %23 = vector.extract_strided_slice %1 {offsets = [0, 43], sizes = [8, 632], strides = [1, 1]} : vector<8x800xf32> to vector<8x632xf32>
    %24 = vector.extract_strided_slice %1 {offsets = [0, 44], sizes = [8, 632], strides = [1, 1]} : vector<8x800xf32> to vector<8x632xf32>
    %25 = vector.extract_strided_slice %1 {offsets = [0, 45], sizes = [8, 632], strides = [1, 1]} : vector<8x800xf32> to vector<8x632xf32>
    %26 = vector.extract_strided_slice %1 {offsets = [0, 46], sizes = [8, 632], strides = [1, 1]} : vector<8x800xf32> to vector<8x632xf32>
    %27 = vector.extract_strided_slice %1 {offsets = [0, 47], sizes = [8, 632], strides = [1, 1]} : vector<8x800xf32> to vector<8x632xf32>
    %28 = vector.extract_strided_slice %1 {offsets = [0, 48], sizes = [8, 632], strides = [1, 1]} : vector<8x800xf32> to vector<8x632xf32>
    %29 = vector.extract_strided_slice %1 {offsets = [0, 60], sizes = [8, 632], strides = [1, 1]} : vector<8x800xf32> to vector<8x632xf32>
    %30 = vector.extract_strided_slice %1 {offsets = [0, 61], sizes = [8, 632], strides = [1, 1]} : vector<8x800xf32> to vector<8x632xf32>
    %31 = vector.extract_strided_slice %1 {offsets = [0, 62], sizes = [8, 632], strides = [1, 1]} : vector<8x800xf32> to vector<8x632xf32>
    %32 = vector.extract_strided_slice %1 {offsets = [0, 63], sizes = [8, 632], strides = [1, 1]} : vector<8x800xf32> to vector<8x632xf32>
    %33 = vector.extract_strided_slice %1 {offsets = [0, 64], sizes = [8, 632], strides = [1, 1]} : vector<8x800xf32> to vector<8x632xf32>
    %34 = vector.extract_strided_slice %1 {offsets = [0, 65], sizes = [8, 632], strides = [1, 1]} : vector<8x800xf32> to vector<8x632xf32>
    %35 = vector.extract_strided_slice %1 {offsets = [0, 66], sizes = [8, 632], strides = [1, 1]} : vector<8x800xf32> to vector<8x632xf32>
    %36 = vector.extract_strided_slice %1 {offsets = [0, 67], sizes = [8, 632], strides = [1, 1]} : vector<8x800xf32> to vector<8x632xf32>
    %37 = vector.extract_strided_slice %1 {offsets = [0, 68], sizes = [8, 632], strides = [1, 1]} : vector<8x800xf32> to vector<8x632xf32>
    %38 = vector.extract_strided_slice %1 {offsets = [0, 80], sizes = [8, 632], strides = [1, 1]} : vector<8x800xf32> to vector<8x632xf32>
    %39 = vector.extract_strided_slice %1 {offsets = [0, 81], sizes = [8, 632], strides = [1, 1]} : vector<8x800xf32> to vector<8x632xf32>
    %40 = vector.extract_strided_slice %1 {offsets = [0, 82], sizes = [8, 632], strides = [1, 1]} : vector<8x800xf32> to vector<8x632xf32>
    %41 = vector.extract_strided_slice %1 {offsets = [0, 83], sizes = [8, 632], strides = [1, 1]} : vector<8x800xf32> to vector<8x632xf32>
    %42 = vector.extract_strided_slice %1 {offsets = [0, 84], sizes = [8, 632], strides = [1, 1]} : vector<8x800xf32> to vector<8x632xf32>
    %43 = vector.extract_strided_slice %1 {offsets = [0, 85], sizes = [8, 632], strides = [1, 1]} : vector<8x800xf32> to vector<8x632xf32>
    %44 = vector.extract_strided_slice %1 {offsets = [0, 86], sizes = [8, 632], strides = [1, 1]} : vector<8x800xf32> to vector<8x632xf32>
    %45 = vector.extract_strided_slice %1 {offsets = [0, 87], sizes = [8, 632], strides = [1, 1]} : vector<8x800xf32> to vector<8x632xf32>
    %46 = vector.extract_strided_slice %1 {offsets = [0, 88], sizes = [8, 632], strides = [1, 1]} : vector<8x800xf32> to vector<8x632xf32>
    %47 = vector.extract_strided_slice %1 {offsets = [0, 100], sizes = [8, 632], strides = [1, 1]} : vector<8x800xf32> to vector<8x632xf32>
    %48 = vector.extract_strided_slice %1 {offsets = [0, 101], sizes = [8, 632], strides = [1, 1]} : vector<8x800xf32> to vector<8x632xf32>
    %49 = vector.extract_strided_slice %1 {offsets = [0, 102], sizes = [8, 632], strides = [1, 1]} : vector<8x800xf32> to vector<8x632xf32>
    %50 = vector.extract_strided_slice %1 {offsets = [0, 103], sizes = [8, 632], strides = [1, 1]} : vector<8x800xf32> to vector<8x632xf32>
    %51 = vector.extract_strided_slice %1 {offsets = [0, 104], sizes = [8, 632], strides = [1, 1]} : vector<8x800xf32> to vector<8x632xf32>
    %52 = vector.extract_strided_slice %1 {offsets = [0, 105], sizes = [8, 632], strides = [1, 1]} : vector<8x800xf32> to vector<8x632xf32>
    %53 = vector.extract_strided_slice %1 {offsets = [0, 106], sizes = [8, 632], strides = [1, 1]} : vector<8x800xf32> to vector<8x632xf32>
    %54 = vector.extract_strided_slice %1 {offsets = [0, 107], sizes = [8, 632], strides = [1, 1]} : vector<8x800xf32> to vector<8x632xf32>
    %55 = vector.extract_strided_slice %1 {offsets = [0, 108], sizes = [8, 632], strides = [1, 1]} : vector<8x800xf32> to vector<8x632xf32>
    %56 = vector.extract_strided_slice %1 {offsets = [0, 120], sizes = [8, 632], strides = [1, 1]} : vector<8x800xf32> to vector<8x632xf32>
    %57 = vector.extract_strided_slice %1 {offsets = [0, 121], sizes = [8, 632], strides = [1, 1]} : vector<8x800xf32> to vector<8x632xf32>
    %58 = vector.extract_strided_slice %1 {offsets = [0, 122], sizes = [8, 632], strides = [1, 1]} : vector<8x800xf32> to vector<8x632xf32>
    %59 = vector.extract_strided_slice %1 {offsets = [0, 123], sizes = [8, 632], strides = [1, 1]} : vector<8x800xf32> to vector<8x632xf32>
    %60 = vector.extract_strided_slice %1 {offsets = [0, 124], sizes = [8, 632], strides = [1, 1]} : vector<8x800xf32> to vector<8x632xf32>
    %61 = vector.extract_strided_slice %1 {offsets = [0, 125], sizes = [8, 632], strides = [1, 1]} : vector<8x800xf32> to vector<8x632xf32>
    %62 = vector.extract_strided_slice %1 {offsets = [0, 126], sizes = [8, 632], strides = [1, 1]} : vector<8x800xf32> to vector<8x632xf32>
    %63 = vector.extract_strided_slice %1 {offsets = [0, 127], sizes = [8, 632], strides = [1, 1]} : vector<8x800xf32> to vector<8x632xf32>
    %64 = vector.extract_strided_slice %1 {offsets = [0, 128], sizes = [8, 632], strides = [1, 1]} : vector<8x800xf32> to vector<8x632xf32>
    %65 = vector.extract_strided_slice %1 {offsets = [0, 140], sizes = [8, 632], strides = [1, 1]} : vector<8x800xf32> to vector<8x632xf32>
    %66 = vector.extract_strided_slice %1 {offsets = [0, 141], sizes = [8, 632], strides = [1, 1]} : vector<8x800xf32> to vector<8x632xf32>
    %67 = vector.extract_strided_slice %1 {offsets = [0, 142], sizes = [8, 632], strides = [1, 1]} : vector<8x800xf32> to vector<8x632xf32>
    %68 = vector.extract_strided_slice %1 {offsets = [0, 143], sizes = [8, 632], strides = [1, 1]} : vector<8x800xf32> to vector<8x632xf32>
    %69 = vector.extract_strided_slice %1 {offsets = [0, 144], sizes = [8, 632], strides = [1, 1]} : vector<8x800xf32> to vector<8x632xf32>
    %70 = vector.extract_strided_slice %1 {offsets = [0, 145], sizes = [8, 632], strides = [1, 1]} : vector<8x800xf32> to vector<8x632xf32>
    %71 = vector.extract_strided_slice %1 {offsets = [0, 146], sizes = [8, 632], strides = [1, 1]} : vector<8x800xf32> to vector<8x632xf32>
    %72 = vector.extract_strided_slice %1 {offsets = [0, 147], sizes = [8, 632], strides = [1, 1]} : vector<8x800xf32> to vector<8x632xf32>
    %73 = vector.extract_strided_slice %1 {offsets = [0, 148], sizes = [8, 632], strides = [1, 1]} : vector<8x800xf32> to vector<8x632xf32>
    %74 = vector.extract_strided_slice %1 {offsets = [0, 160], sizes = [8, 632], strides = [1, 1]} : vector<8x800xf32> to vector<8x632xf32>
    %75 = vector.extract_strided_slice %1 {offsets = [0, 161], sizes = [8, 632], strides = [1, 1]} : vector<8x800xf32> to vector<8x632xf32>
    %76 = vector.extract_strided_slice %1 {offsets = [0, 162], sizes = [8, 632], strides = [1, 1]} : vector<8x800xf32> to vector<8x632xf32>
    %77 = vector.extract_strided_slice %1 {offsets = [0, 163], sizes = [8, 632], strides = [1, 1]} : vector<8x800xf32> to vector<8x632xf32>
    %78 = vector.extract_strided_slice %1 {offsets = [0, 164], sizes = [8, 632], strides = [1, 1]} : vector<8x800xf32> to vector<8x632xf32>
    %79 = vector.extract_strided_slice %1 {offsets = [0, 165], sizes = [8, 632], strides = [1, 1]} : vector<8x800xf32> to vector<8x632xf32>
    %80 = vector.extract_strided_slice %1 {offsets = [0, 166], sizes = [8, 632], strides = [1, 1]} : vector<8x800xf32> to vector<8x632xf32>
    %81 = vector.extract_strided_slice %1 {offsets = [0, 167], sizes = [8, 632], strides = [1, 1]} : vector<8x800xf32> to vector<8x632xf32>
    %82 = vector.extract_strided_slice %1 {offsets = [0, 168], sizes = [8, 632], strides = [1, 1]} : vector<8x800xf32> to vector<8x632xf32>
    %83 = tpu.concatenate %2, %3, %4, %5, %6, %7, %8, %9, %10, %11, %12, %13, %14, %15, %16, %17 in 0 : vector<8x632xf32>, vector<8x632xf32>, vector<8x632xf32>, vector<8x632xf32>, vector<8x632xf32>, vector<8x632xf32>, vector<8x632xf32>, vector<8x632xf32>, vector<8x632xf32>, vector<8x632xf32>, vector<8x632xf32>, vector<8x632xf32>, vector<8x632xf32>, vector<8x632xf32>, vector<8x632xf32>, vector<8x632xf32> -> vector<128x632xf32>
    %84 = tpu.concatenate %18, %19, %20, %21, %22, %23, %24, %25, %26, %27, %28, %29, %30, %31, %32, %33 in 0 : vector<8x632xf32>, vector<8x632xf32>, vector<8x632xf32>, vector<8x632xf32>, vector<8x632xf32>, vector<8x632xf32>, vector<8x632xf32>, vector<8x632xf32>, vector<8x632xf32>, vector<8x632xf32>, vector<8x632xf32>, vector<8x632xf32>, vector<8x632xf32>, vector<8x632xf32>, vector<8x632xf32>, vector<8x632xf32> -> vector<128x632xf32>
    %85 = tpu.concatenate %34, %35, %36, %37, %38, %39, %40, %41, %42, %43, %44, %45, %46, %47, %48, %49 in 0 : vector<8x632xf32>, vector<8x632xf32>, vector<8x632xf32>, vector<8x632xf32>, vector<8x632xf32>, vector<8x632xf32>, vector<8x632xf32>, vector<8x632xf32>, vector<8x632xf32>, vector<8x632xf32>, vector<8x632xf32>, vector<8x632xf32>, vector<8x632xf32>, vector<8x632xf32>, vector<8x632xf32>, vector<8x632xf32> -> vector<128x632xf32>
    %86 = tpu.concatenate %50, %51, %52, %53, %54, %55, %56, %57, %58, %59, %60, %61, %62, %63, %64, %65 in 0 : vector<8x632xf32>, vector<8x632xf32>, vector<8x632xf32>, vector<8x632xf32>, vector<8x632xf32>, vector<8x632xf32>, vector<8x632xf32>, vector<8x632xf32>, vector<8x632xf32>, vector<8x632xf32>, vector<8x632xf32>, vector<8x632xf32>, vector<8x632xf32>, vector<8x632xf32>, vector<8x632xf32>, vector<8x632xf32> -> vector<128x632xf32>
    %87 = tpu.concatenate %66, %67, %68, %69, %70, %71, %72, %73, %74, %75, %76, %77, %78, %79, %80, %81 in 0 : vector<8x632xf32>, vector<8x632xf32>, vector<8x632xf32>, vector<8x632xf32>, vector<8x632xf32>, vector<8x632xf32>, vector<8x632xf32>, vector<8x632xf32>, vector<8x632xf32>, vector<8x632xf32>, vector<8x632xf32>, vector<8x632xf32>, vector<8x632xf32>, vector<8x632xf32>, vector<8x632xf32>, vector<8x632xf32> -> vector<128x632xf32>
    %88 = tpu.concatenate %83, %84, %85, %86, %87, %82 in 0 : vector<128x632xf32>, vector<128x632xf32>, vector<128x632xf32>, vector<128x632xf32>, vector<128x632xf32>, vector<8x632xf32> -> vector<648x632xf32>
    %c0_2 = arith.constant 0 : index
    %c0_3 = arith.constant 0 : index
    %89 = vector.load %arg2[%c0_2, %c0_3] : memref<128x648xf32, #tpu.memory_space<vmem>>, vector<128x648xf32>
    %cst = arith.constant dense<0.000000e+00> : vector<128x632xf32>
    %90 = tpu.matmul %89, %88, %cst {dimension_numbers = #tpu.dot_dimension_numbers<[1], [0], [0], [1], [0, 0, 1, 1], [], []>} : vector<128x648xf32>, vector<648x632xf32>, vector<128x632xf32> -> vector<128x632xf32>
    %c0_4 = arith.constant 0 : index
    %c0_5 = arith.constant 0 : index
    %91 = vector.load %arg3[%c0_4, %c0_5] : memref<128x1xf32, #tpu.memory_space<vmem>>, vector<128x1xf32>
    %92 = vector.broadcast %91 : vector<128x1xf32> to vector<128x632xf32>
    %93 = arith.addf %90, %92 : vector<128x632xf32>
    %cst_6 = arith.constant 0.000000e+00 : f32
    %94 = vector.broadcast %cst_6 : f32 to vector<128x632xf32>
    %95 = arith.maximumf %93, %94 : vector<128x632xf32>
    %c0_7 = arith.constant 0 : index
    %c0_8 = arith.constant 0 : index
    %96 = vector.load %arg4[%c0_7, %c0_8] : memref<64x128xf32, #tpu.memory_space<vmem>>, vector<64x128xf32>
    %cst_9 = arith.constant dense<0.000000e+00> : vector<64x632xf32>
    %97 = tpu.matmul %96, %95, %cst_9 {dimension_numbers = #tpu.dot_dimension_numbers<[1], [0], [0], [1], [0, 0, 1, 1], [], []>} : vector<64x128xf32>, vector<128x632xf32>, vector<64x632xf32> -> vector<64x632xf32>
    %c0_10 = arith.constant 0 : index
    %c0_11 = arith.constant 0 : index
    %98 = vector.load %arg5[%c0_10, %c0_11] : memref<64x1xf32, #tpu.memory_space<vmem>>, vector<64x1xf32>
    %99 = vector.broadcast %98 : vector<64x1xf32> to vector<64x632xf32>
    %100 = arith.addf %97, %99 : vector<64x632xf32>
    %cst_12 = arith.constant 0.000000e+00 : f32
    %101 = vector.broadcast %cst_12 : f32 to vector<64x632xf32>
    %102 = arith.maximumf %100, %101 : vector<64x632xf32>
    %c0_13 = arith.constant 0 : index
    %c0_14 = arith.constant 0 : index
    %103 = vector.load %arg8[%c0_13, %c0_14] : memref<1x800xf32, #tpu.memory_space<vmem>>, vector<1x800xf32>
    %c0_15 = arith.constant 0 : index
    %c0_16 = arith.constant 0 : index
    %104 = vector.load %arg5[%c0_15, %c0_16] : memref<64x1xf32, #tpu.memory_space<vmem>>, vector<64x1xf32>
    %cst_17 = arith.constant 0.000000e+00 : f32
    %105 = vector.broadcast %cst_17 : f32 to vector<64x1xf32>
    %106 = arith.maximumf %104, %105 : vector<64x1xf32>
    %107 = vector.broadcast %103 : vector<1x800xf32> to vector<64x800xf32>
    %108 = vector.broadcast %106 : vector<64x1xf32> to vector<64x800xf32>
    %109 = arith.mulf %107, %108 : vector<64x800xf32>
    %c0_18 = arith.constant 0 : index
    %c0_19 = arith.constant 0 : index
    %110 = vector.load %arg11[%c0_18, %c0_19] : memref<64x800xf32, #tpu.memory_space<vmem>>, vector<64x800xf32>
    tpu.vector_store %arg11[%c0_18, %c0_19], %109 {strides = array<i32>} : memref<64x800xf32, #tpu.memory_space<vmem>>, vector<64x800xf32>,
    %c0_20 = arith.constant 0 : index
    %c84 = arith.constant 84 : index
    %111 = vector.load %arg11[%c0_20, %c84] : memref<64x800xf32, #tpu.memory_space<vmem>>, vector<64x632xf32>
    %c0_21 = arith.constant 0 : index
    %c0_22 = arith.constant 0 : index
    %112 = vector.load %arg9[%c0_21, %c0_22] : memref<1x632xf32, #tpu.memory_space<vmem>>, vector<1x632xf32>
    %cst_23 = arith.constant 5.000000e-01 : f32
    %113 = vector.broadcast %cst_23 : f32 to vector<1x632xf32>
    %114 = arith.cmpf ogt, %112, %113 : vector<1x632xf32>
    %115 = vector.shape_cast %114 : vector<1x632xi1> to vector<1x632xi1>
    %116 = vector.broadcast %115 : vector<1x632xi1> to vector<64x632xi1>
    %117 = arith.select %116, %102, %111 : vector<64x632xi1>, vector<64x632xf32>
    %c0_24 = arith.constant 0 : index
    %c84_25 = arith.constant 84 : index
    %118 = vector.load %arg11[%c0_24, %c84_25] : memref<64x800xf32, #tpu.memory_space<vmem>>, vector<64x632xf32>
    tpu.vector_store %arg11[%c0_24, %c84_25], %117 {strides = array<i32>} : memref<64x800xf32, #tpu.memory_space<vmem>>, vector<64x632xf32>,
    %c0_26 = arith.constant 0 : index
    %c0_27 = arith.constant 0 : index
    %119 = vector.load %arg11[%c0_26, %c0_27] : memref<64x800xf32, #tpu.memory_space<vmem>>, vector<64x716xf32>
    %c0_28 = arith.constant 0 : index
    %c1 = arith.constant 1 : index
    %120 = vector.load %arg11[%c0_28, %c1] : memref<64x800xf32, #tpu.memory_space<vmem>>, vector<64x716xf32>
    %c0_29 = arith.constant 0 : index
    %c2 = arith.constant 2 : index
    %121 = vector.load %arg11[%c0_29, %c2] : memref<64x800xf32, #tpu.memory_space<vmem>>, vector<64x716xf32>
    %c0_30 = arith.constant 0 : index
    %c3 = arith.constant 3 : index
    %122 = vector.load %arg11[%c0_30, %c3] : memref<64x800xf32, #tpu.memory_space<vmem>>, vector<64x716xf32>
    %c0_31 = arith.constant 0 : index
    %c4 = arith.constant 4 : index
    %123 = vector.load %arg11[%c0_31, %c4] : memref<64x800xf32, #tpu.memory_space<vmem>>, vector<64x716xf32>
    %c0_32 = arith.constant 0 : index
    %c20 = arith.constant 20 : index
    %124 = vector.load %arg11[%c0_32, %c20] : memref<64x800xf32, #tpu.memory_space<vmem>>, vector<64x716xf32>
    %c0_33 = arith.constant 0 : index
    %c21 = arith.constant 21 : index
    %125 = vector.load %arg11[%c0_33, %c21] : memref<64x800xf32, #tpu.memory_space<vmem>>, vector<64x716xf32>
    %c0_34 = arith.constant 0 : index
    %c22 = arith.constant 22 : index
    %126 = vector.load %arg11[%c0_34, %c22] : memref<64x800xf32, #tpu.memory_space<vmem>>, vector<64x716xf32>
    %c0_35 = arith.constant 0 : index
    %c23 = arith.constant 23 : index
    %127 = vector.load %arg11[%c0_35, %c23] : memref<64x800xf32, #tpu.memory_space<vmem>>, vector<64x716xf32>
    %c0_36 = arith.constant 0 : index
    %c24 = arith.constant 24 : index
    %128 = vector.load %arg11[%c0_36, %c24] : memref<64x800xf32, #tpu.memory_space<vmem>>, vector<64x716xf32>
    %c0_37 = arith.constant 0 : index
    %c40 = arith.constant 40 : index
    %129 = vector.load %arg11[%c0_37, %c40] : memref<64x800xf32, #tpu.memory_space<vmem>>, vector<64x716xf32>
    %c0_38 = arith.constant 0 : index
    %c41 = arith.constant 41 : index
    %130 = vector.load %arg11[%c0_38, %c41] : memref<64x800xf32, #tpu.memory_space<vmem>>, vector<64x716xf32>
    %c0_39 = arith.constant 0 : index
    %c42 = arith.constant 42 : index
    %131 = vector.load %arg11[%c0_39, %c42] : memref<64x800xf32, #tpu.memory_space<vmem>>, vector<64x716xf32>
    %c0_40 = arith.constant 0 : index
    %c43 = arith.constant 43 : index
    %132 = vector.load %arg11[%c0_40, %c43] : memref<64x800xf32, #tpu.memory_space<vmem>>, vector<64x716xf32>
    %c0_41 = arith.constant 0 : index
    %c44 = arith.constant 44 : index
    %133 = vector.load %arg11[%c0_41, %c44] : memref<64x800xf32, #tpu.memory_space<vmem>>, vector<64x716xf32>
    %c0_42 = arith.constant 0 : index
    %c60 = arith.constant 60 : index
    %134 = vector.load %arg11[%c0_42, %c60] : memref<64x800xf32, #tpu.memory_space<vmem>>, vector<64x716xf32>
    %c0_43 = arith.constant 0 : index
    %c61 = arith.constant 61 : index
    %135 = vector.load %arg11[%c0_43, %c61] : memref<64x800xf32, #tpu.memory_space<vmem>>, vector<64x716xf32>
    %c0_44 = arith.constant 0 : index
    %c62 = arith.constant 62 : index
    %136 = vector.load %arg11[%c0_44, %c62] : memref<64x800xf32, #tpu.memory_space<vmem>>, vector<64x716xf32>
    %c0_45 = arith.constant 0 : index
    %c63 = arith.constant 63 : index
    %137 = vector.load %arg11[%c0_45, %c63] : memref<64x800xf32, #tpu.memory_space<vmem>>, vector<64x716xf32>
    %c0_46 = arith.constant 0 : index
    %c64 = arith.constant 64 : index
    %138 = vector.load %arg11[%c0_46, %c64] : memref<64x800xf32, #tpu.memory_space<vmem>>, vector<64x716xf32>
    %c0_47 = arith.constant 0 : index
    %c80 = arith.constant 80 : index
    %139 = vector.load %arg11[%c0_47, %c80] : memref<64x800xf32, #tpu.memory_space<vmem>>, vector<64x716xf32>
    %c0_48 = arith.constant 0 : index
    %c81 = arith.constant 81 : index
    %140 = vector.load %arg11[%c0_48, %c81] : memref<64x800xf32, #tpu.memory_space<vmem>>, vector<64x716xf32>
    %c0_49 = arith.constant 0 : index
    %c82 = arith.constant 82 : index
    %141 = vector.load %arg11[%c0_49, %c82] : memref<64x800xf32, #tpu.memory_space<vmem>>, vector<64x716xf32>
    %c0_50 = arith.constant 0 : index
    %c83 = arith.constant 83 : index
    %142 = vector.load %arg11[%c0_50, %c83] : memref<64x800xf32, #tpu.memory_space<vmem>>, vector<64x716xf32>
    %c0_51 = arith.constant 0 : index
    %c84_52 = arith.constant 84 : index
    %143 = vector.load %arg11[%c0_51, %c84_52] : memref<64x800xf32, #tpu.memory_space<vmem>>, vector<64x716xf32>
    %144 = tpu.concatenate %119, %120, %121, %122, %123, %124, %125, %126, %127, %128, %129, %130, %131, %132, %133, %134 in 0 : vector<64x716xf32>, vector<64x716xf32>, vector<64x716xf32>, vector<64x716xf32>, vector<64x716xf32>, vector<64x716xf32>, vector<64x716xf32>, vector<64x716xf32>, vector<64x716xf32>, vector<64x716xf32>, vector<64x716xf32>, vector<64x716xf32>, vector<64x716xf32>, vector<64x716xf32>, vector<64x716xf32>, vector<64x716xf32> -> vector<1024x716xf32>
    %145 = tpu.concatenate %135, %136, %137, %138, %139, %140, %141, %142, %143 in 0 : vector<64x716xf32>, vector<64x716xf32>, vector<64x716xf32>, vector<64x716xf32>, vector<64x716xf32>, vector<64x716xf32>, vector<64x716xf32>, vector<64x716xf32>, vector<64x716xf32> -> vector<576x716xf32>
    %146 = tpu.concatenate %144, %145 in 0 : vector<1024x716xf32>, vector<576x716xf32> -> vector<1600x716xf32>
    %c0_53 = arith.constant 0 : index
    %c0_54 = arith.constant 0 : index
    %147 = vector.load %arg6[%c0_53, %c0_54] : memref<8x1600xf32, #tpu.memory_space<vmem>>, vector<8x1600xf32>
    %cst_55 = arith.constant dense<0.000000e+00> : vector<8x716xf32>
    %148 = tpu.matmul %147, %146, %cst_55 {dimension_numbers = #tpu.dot_dimension_numbers<[1], [0], [0], [1], [0, 0, 1, 1], [], []>} : vector<8x1600xf32>, vector<1600x716xf32>, vector<8x716xf32> -> vector<8x716xf32>
    %c0_56 = arith.constant 0 : index
    %c0_57 = arith.constant 0 : index
    %149 = vector.load %arg7[%c0_56, %c0_57] : memref<8x1xf32, #tpu.memory_space<vmem>>, vector<8x1xf32>
    %150 = vector.broadcast %149 : vector<8x1xf32> to vector<8x716xf32>
    %151 = arith.addf %148, %150 : vector<8x716xf32>
    %152 = vector.extract_strided_slice %151 {offsets = [0, 0], sizes = [8, 16], strides = [1, 1]} : vector<8x716xf32> to vector<8x16xf32>
    %153 = vector.extract_strided_slice %151 {offsets = [0, 20], sizes = [8, 16], strides = [1, 1]} : vector<8x716xf32> to vector<8x16xf32>
    %154 = vector.extract_strided_slice %151 {offsets = [0, 40], sizes = [8, 16], strides = [1, 1]} : vector<8x716xf32> to vector<8x16xf32>
    %155 = vector.extract_strided_slice %151 {offsets = [0, 60], sizes = [8, 16], strides = [1, 1]} : vector<8x716xf32> to vector<8x16xf32>
    %156 = vector.extract_strided_slice %151 {offsets = [0, 80], sizes = [8, 16], strides = [1, 1]} : vector<8x716xf32> to vector<8x16xf32>
    %157 = vector.extract_strided_slice %151 {offsets = [0, 100], sizes = [8, 16], strides = [1, 1]} : vector<8x716xf32> to vector<8x16xf32>
    %158 = vector.extract_strided_slice %151 {offsets = [0, 120], sizes = [8, 16], strides = [1, 1]} : vector<8x716xf32> to vector<8x16xf32>
    %159 = vector.extract_strided_slice %151 {offsets = [0, 140], sizes = [8, 16], strides = [1, 1]} : vector<8x716xf32> to vector<8x16xf32>
    %160 = vector.extract_strided_slice %151 {offsets = [0, 160], sizes = [8, 16], strides = [1, 1]} : vector<8x716xf32> to vector<8x16xf32>
    %161 = vector.extract_strided_slice %151 {offsets = [0, 180], sizes = [8, 16], strides = [1, 1]} : vector<8x716xf32> to vector<8x16xf32>
    %162 = vector.extract_strided_slice %151 {offsets = [0, 200], sizes = [8, 16], strides = [1, 1]} : vector<8x716xf32> to vector<8x16xf32>
    %163 = vector.extract_strided_slice %151 {offsets = [0, 220], sizes = [8, 16], strides = [1, 1]} : vector<8x716xf32> to vector<8x16xf32>
    %164 = vector.extract_strided_slice %151 {offsets = [0, 240], sizes = [8, 16], strides = [1, 1]} : vector<8x716xf32> to vector<8x16xf32>
    %165 = vector.extract_strided_slice %151 {offsets = [0, 260], sizes = [8, 16], strides = [1, 1]} : vector<8x716xf32> to vector<8x16xf32>
    %166 = vector.extract_strided_slice %151 {offsets = [0, 280], sizes = [8, 16], strides = [1, 1]} : vector<8x716xf32> to vector<8x16xf32>
    %167 = vector.extract_strided_slice %151 {offsets = [0, 300], sizes = [8, 16], strides = [1, 1]} : vector<8x716xf32> to vector<8x16xf32>
    %168 = tpu.concatenate %152, %153, %154, %155, %156, %157, %158, %159, %160, %161, %162, %163, %164, %165, %166, %167 in 1 : vector<8x16xf32>, vector<8x16xf32>, vector<8x16xf32>, vector<8x16xf32>, vector<8x16xf32>, vector<8x16xf32>, vector<8x16xf32>, vector<8x16xf32>, vector<8x16xf32>, vector<8x16xf32>, vector<8x16xf32>, vector<8x16xf32>, vector<8x16xf32>, vector<8x16xf32>, vector<8x16xf32>, vector<8x16xf32> -> vector<8x256xf32>
    %169 = vector.extract_strided_slice %168 {offsets = [0, 0], sizes = [3, 256], strides = [1, 1]} : vector<8x256xf32> to vector<3x256xf32>
    %c0_58 = arith.constant 0 : index
    %c0_59 = arith.constant 0 : index
    %c0_60 = arith.constant 0 : index
    %170 = vector.load %arg10[%c0_58, %c0_59, %c0_60] : memref<2x3x256xf32, #tpu.memory_space<vmem>>, vector<1x3x256xf32>
    %171 = vector.shape_cast %170 : vector<1x3x256xf32> to vector<3x256xf32>
    %172 = vector.shape_cast %169 : vector<3x256xf32> to vector<1x3x256xf32>
    tpu.vector_store %arg10[%c0_58, %c0_59, %c0_60], %172 {strides = array<i32>} : memref<2x3x256xf32, #tpu.memory_space<vmem>>, vector<1x3x256xf32>,
    %173 = vector.extract_strided_slice %151 {offsets = [0, 400], sizes = [8, 16], strides = [1, 1]} : vector<8x716xf32> to vector<8x16xf32>
    %174 = vector.extract_strided_slice %151 {offsets = [0, 420], sizes = [8, 16], strides = [1, 1]} : vector<8x716xf32> to vector<8x16xf32>
    %175 = vector.extract_strided_slice %151 {offsets = [0, 440], sizes = [8, 16], strides = [1, 1]} : vector<8x716xf32> to vector<8x16xf32>
    %176 = vector.extract_strided_slice %151 {offsets = [0, 460], sizes = [8, 16], strides = [1, 1]} : vector<8x716xf32> to vector<8x16xf32>
    %177 = vector.extract_strided_slice %151 {offsets = [0, 480], sizes = [8, 16], strides = [1, 1]} : vector<8x716xf32> to vector<8x16xf32>
    %178 = vector.extract_strided_slice %151 {offsets = [0, 500], sizes = [8, 16], strides = [1, 1]} : vector<8x716xf32> to vector<8x16xf32>
    %179 = vector.extract_strided_slice %151 {offsets = [0, 520], sizes = [8, 16], strides = [1, 1]} : vector<8x716xf32> to vector<8x16xf32>
    %180 = vector.extract_strided_slice %151 {offsets = [0, 540], sizes = [8, 16], strides = [1, 1]} : vector<8x716xf32> to vector<8x16xf32>
    %181 = vector.extract_strided_slice %151 {offsets = [0, 560], sizes = [8, 16], strides = [1, 1]} : vector<8x716xf32> to vector<8x16xf32>
    %182 = vector.extract_strided_slice %151 {offsets = [0, 580], sizes = [8, 16], strides = [1, 1]} : vector<8x716xf32> to vector<8x16xf32>
    %183 = vector.extract_strided_slice %151 {offsets = [0, 600], sizes = [8, 16], strides = [1, 1]} : vector<8x716xf32> to vector<8x16xf32>
    %184 = vector.extract_strided_slice %151 {offsets = [0, 620], sizes = [8, 16], strides = [1, 1]} : vector<8x716xf32> to vector<8x16xf32>
    %185 = vector.extract_strided_slice %151 {offsets = [0, 640], sizes = [8, 16], strides = [1, 1]} : vector<8x716xf32> to vector<8x16xf32>
    %186 = vector.extract_strided_slice %151 {offsets = [0, 660], sizes = [8, 16], strides = [1, 1]} : vector<8x716xf32> to vector<8x16xf32>
    %187 = vector.extract_strided_slice %151 {offsets = [0, 680], sizes = [8, 16], strides = [1, 1]} : vector<8x716xf32> to vector<8x16xf32>
    %188 = vector.extract_strided_slice %151 {offsets = [0, 700], sizes = [8, 16], strides = [1, 1]} : vector<8x716xf32> to vector<8x16xf32>
    %189 = tpu.concatenate %173, %174, %175, %176, %177, %178, %179, %180, %181, %182, %183, %184, %185, %186, %187, %188 in 1 : vector<8x16xf32>, vector<8x16xf32>, vector<8x16xf32>, vector<8x16xf32>, vector<8x16xf32>, vector<8x16xf32>, vector<8x16xf32>, vector<8x16xf32>, vector<8x16xf32>, vector<8x16xf32>, vector<8x16xf32>, vector<8x16xf32>, vector<8x16xf32>, vector<8x16xf32>, vector<8x16xf32>, vector<8x16xf32> -> vector<8x256xf32>
    %190 = vector.extract_strided_slice %189 {offsets = [0, 0], sizes = [3, 256], strides = [1, 1]} : vector<8x256xf32> to vector<3x256xf32>
    %c1_61 = arith.constant 1 : index
    %c0_62 = arith.constant 0 : index
    %c0_63 = arith.constant 0 : index
    %191 = vector.load %arg10[%c1_61, %c0_62, %c0_63] : memref<2x3x256xf32, #tpu.memory_space<vmem>>, vector<1x3x256xf32>
    %192 = vector.shape_cast %191 : vector<1x3x256xf32> to vector<3x256xf32>
    %193 = vector.shape_cast %190 : vector<3x256xf32> to vector<1x3x256xf32>
    tpu.vector_store %arg10[%c1_61, %c0_62, %c0_63], %193 {strides = array<i32>} : memref<2x3x256xf32, #tpu.memory_space<vmem>>, vector<1x3x256xf32>,
    return
  }
  func.func @transform_0(%arg0: i32) -> (i32, i32, i32) {
    %c0_i32 = arith.constant 0 : i32
    %c0_i32_0 = arith.constant 0 : i32
    %c0_i32_1 = arith.constant 0 : i32
    return %arg0, %c0_i32, %c0_i32_0 : i32, i32, i32
  }
  func.func @transform_1(%arg0: i32) -> (i32, i32) {
    %c0_i32 = arith.constant 0 : i32
    %c0_i32_0 = arith.constant 0 : i32
    %c0_i32_1 = arith.constant 0 : i32
    return %c0_i32, %c0_i32_0 : i32, i32
  }
  func.func @transform_2(%arg0: i32) -> (i32, i32) {
    %c0_i32 = arith.constant 0 : i32
    %c0_i32_0 = arith.constant 0 : i32
    %c0_i32_1 = arith.constant 0 : i32
    return %c0_i32, %c0_i32_0 : i32, i32
  }
  func.func @transform_3(%arg0: i32) -> (i32, i32) {
    %c0_i32 = arith.constant 0 : i32
    %c0_i32_0 = arith.constant 0 : i32
    %c0_i32_1 = arith.constant 0 : i32
    return %c0_i32, %c0_i32_0 : i32, i32
  }
  func.func @transform_4(%arg0: i32) -> (i32, i32) {
    %c0_i32 = arith.constant 0 : i32
    %c0_i32_0 = arith.constant 0 : i32
    %c0_i32_1 = arith.constant 0 : i32
    return %c0_i32, %c0_i32_0 : i32, i32
  }
  func.func @transform_5(%arg0: i32) -> (i32, i32) {
    %c0_i32 = arith.constant 0 : i32
    %c0_i32_0 = arith.constant 0 : i32
    %c0_i32_1 = arith.constant 0 : i32
    return %c0_i32, %c0_i32_0 : i32, i32
  }
  func.func @transform_6(%arg0: i32) -> (i32, i32) {
    %c0_i32 = arith.constant 0 : i32
    %c0_i32_0 = arith.constant 0 : i32
    %c0_i32_1 = arith.constant 0 : i32
    return %c0_i32, %c0_i32_0 : i32, i32
  }
  func.func @transform_7(%arg0: i32) -> (i32, i32) {
    %c0_i32 = arith.constant 0 : i32
    %c0_i32_0 = arith.constant 0 : i32
    %c0_i32_1 = arith.constant 0 : i32
    return %c0_i32, %c0_i32_0 : i32, i32
  }
  func.func @transform_8(%arg0: i32) -> (i32, i32) {
    %c0_i32 = arith.constant 0 : i32
    %c0_i32_0 = arith.constant 0 : i32
    %c0_i32_1 = arith.constant 0 : i32
    return %c0_i32, %c0_i32_0 : i32, i32
  }
  func.func @transform_9(%arg0: i32) -> (i32, i32, i32) {
    %c0_i32 = arith.constant 0 : i32
    %c0_i32_0 = arith.constant 0 : i32
    %c0_i32_1 = arith.constant 0 : i32
    return %arg0, %c0_i32, %c0_i32_0 : i32, i32, i32
  }
}

</mosaic_0001>

<llo_original>
// kernel: srcnn_forward.1
$region0: #{srcnn_forward.1}
  #allocation0 [shape = 'u32[]', space=smem, size = 0x4, offset = 0x4, fixed_abs, tag = 'smem constant byte address 0x4 - core index']
  #allocation1 [shape = 'u32[144,128]{1,0:T(1,128)}', space=vmem, size = 0x12000, scoped, tag = 'internal scratch']
  #allocation2 [shape = 'f32[64,800]{1,0:T(8,128)}', space=vmem, size = 0x38000, scoped, tag = 'scratch operand']
  %s0 = inlined_call_operand.vmem [shape: f32[1,8,800], index: 0, kind: input, shape index: {}]
  %s1 = inlined_call_operand.vmem [shape: f32[128,648], index: 1, kind: input, shape index: {}]
  %s2 = inlined_call_operand.vmem [shape: f32[128,1], index: 2, kind: input, shape index: {}]
  %s3 = inlined_call_operand.vmem [shape: f32[64,128], index: 3, kind: input, shape index: {}]
  %s4 = inlined_call_operand.vmem [shape: f32[64,1], index: 4, kind: input, shape index: {}]
  %s5 = inlined_call_operand.vmem [shape: f32[8,1600], index: 5, kind: input, shape index: {}]
  %s6 = inlined_call_operand.vmem [shape: f32[8,1], index: 6, kind: input, shape index: {}]
  %s7 = inlined_call_operand.vmem [shape: f32[1,800], index: 7, kind: input, shape index: {}]
  %s8 = inlined_call_operand.vmem [shape: f32[1,632], index: 8, kind: input, shape index: {}]
  %s9 = inlined_call_operand.vmem [shape: f32[2,3,256], index: 9, kind: output, shape index: {}]
  %s10 = sld [smem:[#allocation0]]
  $region46: #{srcnn_forward.1} parent=0
    _
  %s12 = ssub.s32 1, %s10
  %s13 = scalar_select 0, %s12, %s10
  // Predicated region
  $region2: #{srcnn_forward.1} parent=0 // pred_check
    _
  $region3: #{srcnn_forward.1} parent=0 // pred_check_branch
    %15 = sbr.rel (0) target = $region5
  $region4: #{srcnn_forward.1} parent=0 // pred_region
    _
  $region5: #{srcnn_forward.1} parent=0 // pred_fallthru
    _
  // Predicated region
  $region6: #{srcnn_forward.1} parent=0 // pred_check
    _
  $region7: #{srcnn_forward.1} parent=0 // pred_check_branch
    %17 = sbr.rel (0) target = $region9
  $region8: #{srcnn_forward.1} parent=0 // pred_region
    _
  $region9: #{srcnn_forward.1} parent=0 // pred_fallthru
    _
  // Predicated region
  $region10: #{srcnn_forward.1} parent=0 // pred_check
    _
  $region11: #{srcnn_forward.1} parent=0 // pred_check_branch
    %19 = sbr.rel (0) target = $region13
  $region12: #{srcnn_forward.1} parent=0 // pred_region
    _
  $region13: #{srcnn_forward.1} parent=0 // pred_fallthru
    _
  // Predicated region
  $region14: #{srcnn_forward.1} parent=0 // pred_check
    _
  $region15: #{srcnn_forward.1} parent=0 // pred_check_branch
    %21 = sbr.rel (0) target = $region17
  $region16: #{srcnn_forward.1} parent=0 // pred_region
    _
  $region17: #{srcnn_forward.1} parent=0 // pred_fallthru
    _
  // Predicated region
  $region18: #{srcnn_forward.1} parent=0 // pred_check
    _
  $region19: #{srcnn_forward.1} parent=0 // pred_check_branch
    %23 = sbr.rel (0) target = $region21
  $region20: #{srcnn_forward.1} parent=0 // pred_region
    _
  $region21: #{srcnn_forward.1} parent=0 // pred_fallthru
    _
  // Predicated region
  $region22: #{srcnn_forward.1} parent=0 // pred_check
    _
  $region23: #{srcnn_forward.1} parent=0 // pred_check_branch
    %25 = sbr.rel (0) target = $region25
  $region24: #{srcnn_forward.1} parent=0 // pred_region
    _
  $region25: #{srcnn_forward.1} parent=0 // pred_fallthru
    _
  // Predicated region
  $region26: #{srcnn_forward.1} parent=0 // pred_check
    _
  $region27: #{srcnn_forward.1} parent=0 // pred_check_branch
    %27 = sbr.rel (0) target = $region29
  $region28: #{srcnn_forward.1} parent=0 // pred_region
    _
  $region29: #{srcnn_forward.1} parent=0 // pred_fallthru
    _
  // Predicated region
  $region30: #{srcnn_forward.1} parent=0 // pred_check
    _
  $region31: #{srcnn_forward.1} parent=0 // pred_check_branch
    %29 = sbr.rel (0) target = $region33
  $region32: #{srcnn_forward.1} parent=0 // pred_region
    _
  $region33: #{srcnn_forward.1} parent=0 // pred_fallthru
    _
  // Predicated region
  $region34: #{srcnn_forward.1} parent=0 // pred_check
    _
  $region35: #{srcnn_forward.1} parent=0 // pred_check_branch
    %31 = sbr.rel (0) target = $region37
  $region36: #{srcnn_forward.1} parent=0 // pred_region
    _
  $region37: #{srcnn_forward.1} parent=0 // pred_fallthru
    _
  %v32 = vld [vmem:[%s0] sm:$0xff]
  %v33 = vld [vmem:[%s0 + $0x8] sm:$0xff]
  %v34 = vld [vmem:[%s0 + $0x10] sm:$0xff]
  %v35 = vld [vmem:[%s0 + $0x18] sm:$0xff]
  %v36 = vld [vmem:[%s0 + $0x20] sm:$0xff]
  %v37 = vld [vmem:[%s0 + $0x28] sm:$0xff]
  %v38 = vld [vmem:[%s0 + $0x30] sm:$0xff]
  %44 = vrot.lane.b32.xlu0 %v32, 127
  %v45 = vpop.permute.xlu0 %44
  %46 = vrot.lane.b32.xlu0 %v33, 127
  %v47 = vpop.permute.xlu0 %46
  %48 = vrot.lane.b32.xlu0 %v34, 127
  %v49 = vpop.permute.xlu0 %48
  %50 = vrot.lane.b32.xlu0 %v35, 127
  %v51 = vpop.permute.xlu0 %50
  %52 = vrot.lane.b32.xlu0 %v36, 127
  %v53 = vpop.permute.xlu0 %52
  %vm54 = vcmask 1039360
  %v55 = vsel %vm54, %v45, %v47
  %v56 = vsel %vm54, %v47, %v49
  %v57 = vsel %vm54, %v49, %v51
  %v58 = vsel %vm54, %v51, %v53
  %64 = vrot.lane.b32.xlu0 %v32, 126
  %v65 = vpop.permute.xlu0 %64
  %66 = vrot.lane.b32.xlu0 %v33, 126
  %v67 = vpop.permute.xlu0 %66
  %68 = vrot.lane.b32.xlu0 %v34, 126
  %v69 = vpop.permute.xlu0 %68
  %70 = vrot.lane.b32.xlu0 %v35, 126
  %v71 = vpop.permute.xlu0 %70
  %72 = vrot.lane.b32.xlu0 %v36, 126
  %v73 = vpop.permute.xlu0 %72
  %vm74 = vcmask 1031168
  %v75 = vsel %vm74, %v65, %v67
  %v76 = vsel %vm74, %v67, %v69
  %v77 = vsel %vm74, %v69, %v71
  %v78 = vsel %vm74, %v71, %v73
  %84 = vrot.lane.b32.xlu0 %v32, 125
  %v85 = vpop.permute.xlu0 %84
  %86 = vrot.lane.b32.xlu0 %v33, 125
  %v87 = vpop.permute.xlu0 %86
  %88 = vrot.lane.b32.xlu0 %v34, 125
  %v89 = vpop.permute.xlu0 %88
  %90 = vrot.lane.b32.xlu0 %v35, 125
  %v91 = vpop.permute.xlu0 %90
  %92 = vrot.lane.b32.xlu0 %v36, 125
  %v93 = vpop.permute.xlu0 %92
  %vm94 = vcmask 1022976
  %v95 = vsel %vm94, %v85, %v87
  %v96 = vsel %vm94, %v87, %v89
  %v97 = vsel %vm94, %v89, %v91
  %v98 = vsel %vm94, %v91, %v93
  %104 = vrot.lane.b32.xlu0 %v32, 124
  %v105 = vpop.permute.xlu0 %104
  %106 = vrot.lane.b32.xlu0 %v33, 124
  %v107 = vpop.permute.xlu0 %106
  %108 = vrot.lane.b32.xlu0 %v34, 124
  %v109 = vpop.permute.xlu0 %108
  %110 = vrot.lane.b32.xlu0 %v35, 124
  %v111 = vpop.permute.xlu0 %110
  %112 = vrot.lane.b32.xlu0 %v36, 124
  %v113 = vpop.permute.xlu0 %112
  %vm114 = vcmask 1014784
  %v115 = vsel %vm114, %v105, %v107
  %v116 = vsel %vm114, %v107, %v109
  %v117 = vsel %vm114, %v109, %v111
  %v118 = vsel %vm114, %v111, %v113
  %124 = vrot.lane.b32.xlu0 %v32, 123
  %v125 = vpop.permute.xlu0 %124
  %126 = vrot.lane.b32.xlu0 %v33, 123
  %v127 = vpop.permute.xlu0 %126
  %128 = vrot.lane.b32.xlu0 %v34, 123
  %v129 = vpop.permute.xlu0 %128
  %130 = vrot.lane.b32.xlu0 %v35, 123
  %v131 = vpop.permute.xlu0 %130
  %132 = vrot.lane.b32.xlu0 %v36, 123
  %v133 = vpop.permute.xlu0 %132
  %vm134 = vcmask 1006592
  %v135 = vsel %vm134, %v125, %v127
  %v136 = vsel %vm134, %v127, %v129
  %v137 = vsel %vm134, %v129, %v131
  %v138 = vsel %vm134, %v131, %v133
  %144 = vrot.lane.b32.xlu0 %v32, 122
  %v145 = vpop.permute.xlu0 %144
  %146 = vrot.lane.b32.xlu0 %v33, 122
  %v147 = vpop.permute.xlu0 %146
  %148 = vrot.lane.b32.xlu0 %v34, 122
  %v149 = vpop.permute.xlu0 %148
  %150 = vrot.lane.b32.xlu0 %v35, 122
  %v151 = vpop.permute.xlu0 %150
  %152 = vrot.lane.b32.xlu0 %v36, 122
  %v153 = vpop.permute.xlu0 %152
  %vm154 = vcmask 998400
  %v155 = vsel %vm154, %v145, %v147
  %v156 = vsel %vm154, %v147, %v149
  %v157 = vsel %vm154, %v149, %v151
  %v158 = vsel %vm154, %v151, %v153
  %164 = vrot.lane.b32.xlu0 %v32, 121
  %v165 = vpop.permute.xlu0 %164
  %166 = vrot.lane.b32.xlu0 %v33, 121
  %v167 = vpop.permute.xlu0 %166
  %168 = vrot.lane.b32.xlu0 %v34, 121
  %v169 = vpop.permute.xlu0 %168
  %170 = vrot.lane.b32.xlu0 %v35, 121
  %v171 = vpop.permute.xlu0 %170
  %172 = vrot.lane.b32.xlu0 %v36, 121
  %v173 = vpop.permute.xlu0 %172
  %vm174 = vcmask 990208
  %v175 = vsel %vm174, %v165, %v167
  %v176 = vsel %vm174, %v167, %v169
  %v177 = vsel %vm174, %v169, %v171
  %v178 = vsel %vm174, %v171, %v173
  %184 = vrot.lane.b32.xlu0 %v32, 120
  %v185 = vpop.permute.xlu0 %184
  %186 = vrot.lane.b32.xlu0 %v33, 120
  %v187 = vpop.permute.xlu0 %186
  %188 = vrot.lane.b32.xlu0 %v34, 120
  %v189 = vpop.permute.xlu0 %188
  %190 = vrot.lane.b32.xlu0 %v35, 120
  %v191 = vpop.permute.xlu0 %190
  %192 = vrot.lane.b32.xlu0 %v36, 120
  %v193 = vpop.permute.xlu0 %192
  %vm194 = vcmask 982016
  %v195 = vsel %vm194, %v185, %v187
  %v196 = vsel %vm194, %v187, %v189
  %v197 = vsel %vm194, %v189, %v191
  %v198 = vsel %vm194, %v191, %v193
  %205 = vrot.lane.b32.xlu0 %v32, 108
  %v206 = vpop.permute.xlu0 %205
  %207 = vrot.lane.b32.xlu0 %v33, 108
  %v208 = vpop.permute.xlu0 %207
  %209 = vrot.lane.b32.xlu0 %v34, 108
  %v210 = vpop.permute.xlu0 %209
  %211 = vrot.lane.b32.xlu0 %v35, 108
  %v212 = vpop.permute.xlu0 %211
  %213 = vrot.lane.b32.xlu0 %v36, 108
  %v214 = vpop.permute.xlu0 %213
  %215 = vrot.lane.b32.xlu0 %v37, 108
  %v216 = vpop.permute.xlu0 %215
  %vm217 = vcmask 883712
  %v218 = vsel %vm217, %v206, %v208
  %v219 = vsel %vm217, %v208, %v210
  %v220 = vsel %vm217, %v210, %v212
  %v221 = vsel %vm217, %v212, %v214
  %v222 = vsel %vm217, %v214, %v216
  %228 = vrot.lane.b32.xlu0 %v32, 107
  %v229 = vpop.permute.xlu0 %228
  %230 = vrot.lane.b32.xlu0 %v33, 107
  %v231 = vpop.permute.xlu0 %230
  %232 = vrot.lane.b32.xlu0 %v34, 107
  %v233 = vpop.permute.xlu0 %232
  %234 = vrot.lane.b32.xlu0 %v35, 107
  %v235 = vpop.permute.xlu0 %234
  %236 = vrot.lane.b32.xlu0 %v36, 107
  %v237 = vpop.permute.xlu0 %236
  %238 = vrot.lane.b32.xlu0 %v37, 107
  %v239 = vpop.permute.xlu0 %238
  %vm240 = vcmask 875520
  %v241 = vsel %vm240, %v229, %v231
  %v242 = vsel %vm240, %v231, %v233
  %v243 = vsel %vm240, %v233, %v235
  %v244 = vsel %vm240, %v235, %v237
  %v245 = vsel %vm240, %v237, %v239
  %251 = vrot.lane.b32.xlu0 %v32, 106
  %v252 = vpop.permute.xlu0 %251
  %253 = vrot.lane.b32.xlu0 %v33, 106
  %v254 = vpop.permute.xlu0 %253
  %255 = vrot.lane.b32.xlu0 %v34, 106
  %v256 = vpop.permute.xlu0 %255
  %257 = vrot.lane.b32.xlu0 %v35, 106
  %v258 = vpop.permute.xlu0 %257
  %259 = vrot.lane.b32.xlu0 %v36, 106
  %v260 = vpop.permute.xlu0 %259
  %261 = vrot.lane.b32.xlu0 %v37, 106
  %v262 = vpop.permute.xlu0 %261
  %vm263 = vcmask 867328
  %v264 = vsel %vm263, %v252, %v254
  %v265 = vsel %vm263, %v254, %v256
  %v266 = vsel %vm263, %v256, %v258
  %v267 = vsel %vm263, %v258, %v260
  %v268 = vsel %vm263, %v260, %v262
  %274 = vrot.lane.b32.xlu0 %v32, 105
  %v275 = vpop.permute.xlu0 %274
  %276 = vrot.lane.b32.xlu0 %v33, 105
  %v277 = vpop.permute.xlu0 %276
  %278 = vrot.lane.b32.xlu0 %v34, 105
  %v279 = vpop.permute.xlu0 %278
  %280 = vrot.lane.b32.xlu0 %v35, 105
  %v281 = vpop.permute.xlu0 %280
  %282 = vrot.lane.b32.xlu0 %v36, 105
  %v283 = vpop.permute.xlu0 %282
  %284 = vrot.lane.b32.xlu0 %v37, 105
  %v285 = vpop.permute.xlu0 %284
  %vm286 = vcmask 859136
  %v287 = vsel %vm286, %v275, %v277
  %v288 = vsel %vm286, %v277, %v279
  %v289 = vsel %vm286, %v279, %v281
  %v290 = vsel %vm286, %v281, %v283
  %v291 = vsel %vm286, %v283, %v285
  %297 = vrot.lane.b32.xlu0 %v32, 104
  %v298 = vpop.permute.xlu0 %297
  %299 = vrot.lane.b32.xlu0 %v33, 104
  %v300 = vpop.permute.xlu0 %299
  %301 = vrot.lane.b32.xlu0 %v34, 104
  %v302 = vpop.permute.xlu0 %301
  %303 = vrot.lane.b32.xlu0 %v35, 104
  %v304 = vpop.permute.xlu0 %303
  %305 = vrot.lane.b32.xlu0 %v36, 104
  %v306 = vpop.permute.xlu0 %305
  %307 = vrot.lane.b32.xlu0 %v37, 104
  %v308 = vpop.permute.xlu0 %307
  %vm309 = vcmask 850944
  %v310 = vsel %vm309, %v298, %v300
  %v311 = vsel %vm309, %v300, %v302
  %v312 = vsel %vm309, %v302, %v304
  %v313 = vsel %vm309, %v304, %v306
  %v314 = vsel %vm309, %v306, %v308
  %320 = vrot.lane.b32.xlu0 %v32, 103
  %v321 = vpop.permute.xlu0 %320
  %322 = vrot.lane.b32.xlu0 %v33, 103
  %v323 = vpop.permute.xlu0 %322
  %324 = vrot.lane.b32.xlu0 %v34, 103
  %v325 = vpop.permute.xlu0 %324
  %326 = vrot.lane.b32.xlu0 %v35, 103
  %v327 = vpop.permute.xlu0 %326
  %328 = vrot.lane.b32.xlu0 %v36, 103
  %v329 = vpop.permute.xlu0 %328
  %330 = vrot.lane.b32.xlu0 %v37, 103
  %v331 = vpop.permute.xlu0 %330
  %vm332 = vcmask 842752
  %v333 = vsel %vm332, %v321, %v323
  %v334 = vsel %vm332, %v323, %v325
  %v335 = vsel %vm332, %v325, %v327
  %v336 = vsel %vm332, %v327, %v329
  %v337 = vsel %vm332, %v329, %v331
  %343 = vrot.lane.b32.xlu0 %v32, 102
  %v344 = vpop.permute.xlu0 %343
  %345 = vrot.lane.b32.xlu0 %v33, 102
  %v346 = vpop.permute.xlu0 %345
  %347 = vrot.lane.b32.xlu0 %v34, 102
  %v348 = vpop.permute.xlu0 %347
  %349 = vrot.lane.b32.xlu0 %v35, 102
  %v350 = vpop.permute.xlu0 %349
  %351 = vrot.lane.b32.xlu0 %v36, 102
  %v352 = vpop.permute.xlu0 %351
  %353 = vrot.lane.b32.xlu0 %v37, 102
  %v354 = vpop.permute.xlu0 %353
  %vm355 = vcmask 834560
  %v356 = vsel %vm355, %v344, %v346
  %v357 = vsel %vm355, %v346, %v348
  %v358 = vsel %vm355, %v348, %v350
  %v359 = vsel %vm355, %v350, %v352
  %v360 = vsel %vm355, %v352, %v354
  %366 = vrot.lane.b32.xlu0 %v37, 127
  %v367 = vpop.permute.xlu0 %366
  %v368 = vsel %vm54, %v53, %v367
  %369 = vrot.lane.b32.xlu0 %v32, 115
  %v370 = vpop.permute.xlu0 %369
  %371 = vrot.lane.b32.xlu0 %v33, 115
  %v372 = vpop.permute.xlu0 %371
  %373 = vrot.lane.b32.xlu0 %v34, 115
  %v374 = vpop.permute.xlu0 %373
  %375 = vrot.lane.b32.xlu0 %v35, 115
  %v376 = vpop.permute.xlu0 %375
  %377 = vrot.lane.b32.xlu0 %v36, 115
  %v378 = vpop.permute.xlu0 %377
  %379 = vrot.lane.b32.xlu0 %v37, 115
  %v380 = vpop.permute.xlu0 %379
  %vm381 = vcmask 941056
  %v382 = vsel %vm381, %v370, %v372
  %v383 = vsel %vm381, %v372, %v374
  %v384 = vsel %vm381, %v374, %v376
  %v385 = vsel %vm381, %v376, %v378
  %v386 = vsel %vm381, %v378, %v380
  %387 = vrot.lane.b32.xlu0 %v32, 114
  %v388 = vpop.permute.xlu0 %387
  %389 = vrot.lane.b32.xlu0 %v33, 114
  %v390 = vpop.permute.xlu0 %389
  %391 = vrot.lane.b32.xlu0 %v34, 114
  %v392 = vpop.permute.xlu0 %391
  %393 = vrot.lane.b32.xlu0 %v35, 114
  %v394 = vpop.permute.xlu0 %393
  %395 = vrot.lane.b32.xlu0 %v36, 114
  %v396 = vpop.permute.xlu0 %395
  %397 = vrot.lane.b32.xlu0 %v37, 114
  %v398 = vpop.permute.xlu0 %397
  %vm399 = vcmask 932864
  %v400 = vsel %vm399, %v388, %v390
  %v401 = vsel %vm399, %v390, %v392
  %v402 = vsel %vm399, %v392, %v394
  %v403 = vsel %vm399, %v394, %v396
  %v404 = vsel %vm399, %v396, %v398
  %405 = vrot.lane.b32.xlu0 %v32, 113
  %v406 = vpop.permute.xlu0 %405
  %407 = vrot.lane.b32.xlu0 %v33, 113
  %v408 = vpop.permute.xlu0 %407
  %409 = vrot.lane.b32.xlu0 %v34, 113
  %v410 = vpop.permute.xlu0 %409
  %411 = vrot.lane.b32.xlu0 %v35, 113
  %v412 = vpop.permute.xlu0 %411
  %413 = vrot.lane.b32.xlu0 %v36, 113
  %v414 = vpop.permute.xlu0 %413
  %415 = vrot.lane.b32.xlu0 %v37, 113
  %v416 = vpop.permute.xlu0 %415
  %vm417 = vcmask 924672
  %v418 = vsel %vm417, %v406, %v408
  %v419 = vsel %vm417, %v408, %v410
  %v420 = vsel %vm417, %v410, %v412
  %v421 = vsel %vm417, %v412, %v414
  %v422 = vsel %vm417, %v414, %v416
  %423 = vrot.lane.b32.xlu0 %v32, 112
  %v424 = vpop.permute.xlu0 %423
  %425 = vrot.lane.b32.xlu0 %v33, 112
  %v426 = vpop.permute.xlu0 %425
  %427 = vrot.lane.b32.xlu0 %v34, 112
  %v428 = vpop.permute.xlu0 %427
  %429 = vrot.lane.b32.xlu0 %v35, 112
  %v430 = vpop.permute.xlu0 %429
  %431 = vrot.lane.b32.xlu0 %v36, 112
  %v432 = vpop.permute.xlu0 %431
  %433 = vrot.lane.b32.xlu0 %v37, 112
  %v434 = vpop.permute.xlu0 %433
  %vm435 = vcmask 916480
  %v436 = vsel %vm435, %v424, %v426
  %v437 = vsel %vm435, %v426, %v428
  %v438 = vsel %vm435, %v428, %v430
  %v439 = vsel %vm435, %v430, %v432
  %v440 = vsel %vm435, %v432, %v434
  %441 = vrot.lane.b32.xlu0 %v32, 111
  %v442 = vpop.permute.xlu0 %441
  %443 = vrot.lane.b32.xlu0 %v33, 111
  %v444 = vpop.permute.xlu0 %443
  %445 = vrot.lane.b32.xlu0 %v34, 111
  %v446 = vpop.permute.xlu0 %445
  %447 = vrot.lane.b32.xlu0 %v35, 111
  %v448 = vpop.permute.xlu0 %447
  %449 = vrot.lane.b32.xlu0 %v36, 111
  %v450 = vpop.permute.xlu0 %449
  %451 = vrot.lane.b32.xlu0 %v37, 111
  %v452 = vpop.permute.xlu0 %451
  %vm453 = vcmask 908288
  %v454 = vsel %vm453, %v442, %v444
  %v455 = vsel %vm453, %v444, %v446
  %v456 = vsel %vm453, %v446, %v448
  %v457 = vsel %vm453, %v448, %v450
  %v458 = vsel %vm453, %v450, %v452
  %459 = vrot.lane.b32.xlu0 %v32, 110
  %v460 = vpop.permute.xlu0 %459
  %461 = vrot.lane.b32.xlu0 %v33, 110
  %v462 = vpop.permute.xlu0 %461
  %463 = vrot.lane.b32.xlu0 %v34, 110
  %v464 = vpop.permute.xlu0 %463
  %465 = vrot.lane.b32.xlu0 %v35, 110
  %v466 = vpop.permute.xlu0 %465
  %467 = vrot.lane.b32.xlu0 %v36, 110
  %v468 = vpop.permute.xlu0 %467
  %469 = vrot.lane.b32.xlu0 %v37, 110
  %v470 = vpop.permute.xlu0 %469
  %vm471 = vcmask 900096
  %v472 = vsel %vm471, %v460, %v462
  %v473 = vsel %vm471, %v462, %v464
  %v474 = vsel %vm471, %v464, %v466
  %v475 = vsel %vm471, %v466, %v468
  %v476 = vsel %vm471, %v468, %v470
  %477 = vrot.lane.b32.xlu0 %v32, 109
  %v478 = vpop.permute.xlu0 %477
  %479 = vrot.lane.b32.xlu0 %v33, 109
  %v480 = vpop.permute.xlu0 %479
  %481 = vrot.lane.b32.xlu0 %v34, 109
  %v482 = vpop.permute.xlu0 %481
  %483 = vrot.lane.b32.xlu0 %v35, 109
  %v484 = vpop.permute.xlu0 %483
  %485 = vrot.lane.b32.xlu0 %v36, 109
  %v486 = vpop.permute.xlu0 %485
  %487 = vrot.lane.b32.xlu0 %v37, 109
  %v488 = vpop.permute.xlu0 %487
  %vm489 = vcmask 891904
  %v490 = vsel %vm489, %v478, %v480
  %v491 = vsel %vm489, %v480, %v482
  %v492 = vsel %vm489, %v482, %v484
  %v493 = vsel %vm489, %v484, %v486
  %v494 = vsel %vm489, %v486, %v488
  %495 = vrot.lane.b32.xlu0 %v32, 95
  %v496 = vpop.permute.xlu0 %495
  %497 = vrot.lane.b32.xlu0 %v33, 95
  %v498 = vpop.permute.xlu0 %497
  %499 = vrot.lane.b32.xlu0 %v34, 95
  %v500 = vpop.permute.xlu0 %499
  %501 = vrot.lane.b32.xlu0 %v35, 95
  %v502 = vpop.permute.xlu0 %501
  %503 = vrot.lane.b32.xlu0 %v36, 95
  %v504 = vpop.permute.xlu0 %503
  %505 = vrot.lane.b32.xlu0 %v37, 95
  %v506 = vpop.permute.xlu0 %505
  %vm507 = vcmask 777216
  %v508 = vsel %vm507, %v496, %v498
  %v509 = vsel %vm507, %v498, %v500
  %v510 = vsel %vm507, %v500, %v502
  %v511 = vsel %vm507, %v502, %v504
  %v512 = vsel %vm507, %v504, %v506
  %513 = vrot.lane.b32.xlu0 %v32, 94
  %v514 = vpop.permute.xlu0 %513
  %515 = vrot.lane.b32.xlu0 %v33, 94
  %v516 = vpop.permute.xlu0 %515
  %517 = vrot.lane.b32.xlu0 %v34, 94
  %v518 = vpop.permute.xlu0 %517
  %519 = vrot.lane.b32.xlu0 %v35, 94
  %v520 = vpop.permute.xlu0 %519
  %521 = vrot.lane.b32.xlu0 %v36, 94
  %v522 = vpop.permute.xlu0 %521
  %523 = vrot.lane.b32.xlu0 %v37, 94
  %v524 = vpop.permute.xlu0 %523
  %vm525 = vcmask 769024
  %v526 = vsel %vm525, %v514, %v516
  %v527 = vsel %vm525, %v516, %v518
  %v528 = vsel %vm525, %v518, %v520
  %v529 = vsel %vm525, %v520, %v522
  %v530 = vsel %vm525, %v522, %v524
  %531 = vrot.lane.b32.xlu0 %v32, 93
  %v532 = vpop.permute.xlu0 %531
  %533 = vrot.lane.b32.xlu0 %v33, 93
  %v534 = vpop.permute.xlu0 %533
  %535 = vrot.lane.b32.xlu0 %v34, 93
  %v536 = vpop.permute.xlu0 %535
  %537 = vrot.lane.b32.xlu0 %v35, 93
  %v538 = vpop.permute.xlu0 %537
  %539 = vrot.lane.b32.xlu0 %v36, 93
  %v540 = vpop.permute.xlu0 %539
  %541 = vrot.lane.b32.xlu0 %v37, 93
  %v542 = vpop.permute.xlu0 %541
  %vm543 = vcmask 760832
  %v544 = vsel %vm543, %v532, %v534
  %v545 = vsel %vm543, %v534, %v536
  %v546 = vsel %vm543, %v536, %v538
  %v547 = vsel %vm543, %v538, %v540
  %v548 = vsel %vm543, %v540, %v542
  %549 = vrot.lane.b32.xlu0 %v32, 92
  %v550 = vpop.permute.xlu0 %549
  %551 = vrot.lane.b32.xlu0 %v33, 92
  %v552 = vpop.permute.xlu0 %551
  %553 = vrot.lane.b32.xlu0 %v34, 92
  %v554 = vpop.permute.xlu0 %553
  %555 = vrot.lane.b32.xlu0 %v35, 92
  %v556 = vpop.permute.xlu0 %555
  %557 = vrot.lane.b32.xlu0 %v36, 92
  %v558 = vpop.permute.xlu0 %557
  %559 = vrot.lane.b32.xlu0 %v37, 92
  %v560 = vpop.permute.xlu0 %559
  %vm561 = vcmask 752640
  %v562 = vsel %vm561, %v550, %v552
  %v563 = vsel %vm561, %v552, %v554
  %v564 = vsel %vm561, %v554, %v556
  %v565 = vsel %vm561, %v556, %v558
  %v566 = vsel %vm561, %v558, %v560
  %567 = vrot.lane.b32.xlu0 %v32, 91
  %v568 = vpop.permute.xlu0 %567
  %569 = vrot.lane.b32.xlu0 %v33, 91
  %v570 = vpop.permute.xlu0 %569
  %571 = vrot.lane.b32.xlu0 %v34, 91
  %v572 = vpop.permute.xlu0 %571
  %573 = vrot.lane.b32.xlu0 %v35, 91
  %v574 = vpop.permute.xlu0 %573
  %575 = vrot.lane.b32.xlu0 %v36, 91
  %v576 = vpop.permute.xlu0 %575
  %577 = vrot.lane.b32.xlu0 %v37, 91
  %v578 = vpop.permute.xlu0 %577
  %vm579 = vcmask 744448
  %v580 = vsel %vm579, %v568, %v570
  %v581 = vsel %vm579, %v570, %v572
  %v582 = vsel %vm579, %v572, %v574
  %v583 = vsel %vm579, %v574, %v576
  %v584 = vsel %vm579, %v576, %v578
  %585 = vrot.lane.b32.xlu0 %v37, 126
  %v586 = vpop.permute.xlu0 %585
  %v587 = vsel %vm74, %v73, %v586
  %588 = vrot.lane.b32.xlu0 %v37, 125
  %v589 = vpop.permute.xlu0 %588
  %v590 = vsel %vm94, %v93, %v589
  %591 = vrot.lane.b32.xlu0 %v37, 124
  %v592 = vpop.permute.xlu0 %591
  %v593 = vsel %vm114, %v113, %v592
  %594 = vrot.lane.b32.xlu0 %v37, 123
  %v595 = vpop.permute.xlu0 %594
  %v596 = vsel %vm134, %v133, %v595
  %598 = vrot.lane.b32.xlu0 %v38, 91
  %v599 = vpop.permute.xlu0 %598
  %v600 = vsel %vm579, %v578, %v599
  %601 = vrot.lane.b32.xlu0 %v38, 127
  %v602 = vpop.permute.xlu0 %601
  %v603 = vsel %vm54, %v367, %v602
  %604 = vrot.lane.b32.xlu0 %v38, 126
  %v605 = vpop.permute.xlu0 %604
  %v606 = vsel %vm74, %v586, %v605
  %607 = vrot.lane.b32.xlu0 %v38, 125
  %v608 = vpop.permute.xlu0 %607
  %v609 = vsel %vm94, %v589, %v608
  %610 = vrot.lane.b32.xlu0 %v38, 124
  %v611 = vpop.permute.xlu0 %610
  %v612 = vsel %vm114, %v592, %v611
  %613 = vrot.lane.b32.xlu0 %v38, 123
  %v614 = vpop.permute.xlu0 %613
  %v615 = vsel %vm134, %v595, %v614
  %616 = vrot.lane.b32.xlu0 %v37, 122
  %v617 = vpop.permute.xlu0 %616
  %618 = vrot.lane.b32.xlu0 %v38, 122
  %v619 = vpop.permute.xlu0 %618
  %v620 = vsel %vm154, %v153, %v617
  %v621 = vsel %vm154, %v617, %v619
  %622 = vrot.lane.b32.xlu0 %v37, 121
  %v623 = vpop.permute.xlu0 %622
  %624 = vrot.lane.b32.xlu0 %v38, 121
  %v625 = vpop.permute.xlu0 %624
  %v626 = vsel %vm174, %v173, %v623
  %v627 = vsel %vm174, %v623, %v625
  %628 = vrot.lane.b32.xlu0 %v38, 109
  %v629 = vpop.permute.xlu0 %628
  %v630 = vsel %vm489, %v488, %v629
  %631 = vrot.lane.b32.xlu0 %v38, 108
  %v632 = vpop.permute.xlu0 %631
  %v633 = vsel %vm217, %v216, %v632
  %634 = vrot.lane.b32.xlu0 %v38, 107
  %v635 = vpop.permute.xlu0 %634
  %v636 = vsel %vm240, %v239, %v635
  %637 = vrot.lane.b32.xlu0 %v38, 106
  %v638 = vpop.permute.xlu0 %637
  %v639 = vsel %vm263, %v262, %v638
  %640 = vrot.lane.b32.xlu0 %v38, 105
  %v641 = vpop.permute.xlu0 %640
  %v642 = vsel %vm286, %v285, %v641
  %643 = vrot.lane.b32.xlu0 %v38, 104
  %v644 = vpop.permute.xlu0 %643
  %v645 = vsel %vm309, %v308, %v644
  %646 = vrot.lane.b32.xlu0 %v38, 103
  %v647 = vpop.permute.xlu0 %646
  %v648 = vsel %vm332, %v331, %v647
  %649 = vrot.lane.b32.xlu0 %v38, 102
  %v650 = vpop.permute.xlu0 %649
  %v651 = vsel %vm355, %v354, %v650
  %652 = vrot.lane.b32.xlu0 %v32, 101
  %v653 = vpop.permute.xlu0 %652
  %654 = vrot.lane.b32.xlu0 %v33, 101
  %v655 = vpop.permute.xlu0 %654
  %656 = vrot.lane.b32.xlu0 %v34, 101
  %v657 = vpop.permute.xlu0 %656
  %658 = vrot.lane.b32.xlu0 %v35, 101
  %v659 = vpop.permute.xlu0 %658
  %660 = vrot.lane.b32.xlu0 %v36, 101
  %v661 = vpop.permute.xlu0 %660
  %662 = vrot.lane.b32.xlu0 %v37, 101
  %v663 = vpop.permute.xlu0 %662
  %664 = vrot.lane.b32.xlu0 %v55, 101
  %v665 = vpop.permute.xlu0 %664
  %666 = vrot.lane.b32.xlu0 %v56, 101
  %v667 = vpop.permute.xlu0 %666
  %668 = vrot.lane.b32.xlu0 %v57, 101
  %v669 = vpop.permute.xlu0 %668
  %670 = vrot.lane.b32.xlu0 %v58, 101
  %v671 = vpop.permute.xlu0 %670
  %672 = vrot.lane.b32.xlu0 %v368, 101
  %v673 = vpop.permute.xlu0 %672
  %674 = vrot.lane.b32.xlu0 %v367, 101
  %v675 = vpop.permute.xlu0 %674
  %676 = vrot.lane.b32.xlu0 %v382, 101
  %v677 = vpop.permute.xlu0 %676
  %678 = vrot.lane.b32.xlu0 %v383, 101
  %v679 = vpop.permute.xlu0 %678
  %680 = vrot.lane.b32.xlu0 %v384, 101
  %v681 = vpop.permute.xlu0 %680
  %682 = vrot.lane.b32.xlu0 %v385, 101
  %v683 = vpop.permute.xlu0 %682
  %684 = vrot.lane.b32.xlu0 %v386, 101
  %v685 = vpop.permute.xlu0 %684
  %686 = vrot.lane.b32.xlu0 %v380, 101
  %v687 = vpop.permute.xlu0 %686
  %688 = vrot.lane.b32.xlu0 %v400, 101
  %v689 = vpop.permute.xlu0 %688
  %690 = vrot.lane.b32.xlu0 %v401, 101
  %v691 = vpop.permute.xlu0 %690
  %692 = vrot.lane.b32.xlu0 %v402, 101
  %v693 = vpop.permute.xlu0 %692
  %694 = vrot.lane.b32.xlu0 %v403, 101
  %v695 = vpop.permute.xlu0 %694
  %696 = vrot.lane.b32.xlu0 %v404, 101
  %v697 = vpop.permute.xlu0 %696
  %698 = vrot.lane.b32.xlu0 %v398, 101
  %v699 = vpop.permute.xlu0 %698
  %700 = vrot.lane.b32.xlu0 %v418, 101
  %v701 = vpop.permute.xlu0 %700
  %702 = vrot.lane.b32.xlu0 %v419, 101
  %v703 = vpop.permute.xlu0 %702
  %704 = vrot.lane.b32.xlu0 %v420, 101
  %v705 = vpop.permute.xlu0 %704
  %706 = vrot.lane.b32.xlu0 %v421, 101
  %v707 = vpop.permute.xlu0 %706
  %708 = vrot.lane.b32.xlu0 %v422, 101
  %v709 = vpop.permute.xlu0 %708
  %710 = vrot.lane.b32.xlu0 %v416, 101
  %v711 = vpop.permute.xlu0 %710
  %712 = vrot.lane.b32.xlu0 %v436, 101
  %v713 = vpop.permute.xlu0 %712
  %714 = vrot.lane.b32.xlu0 %v437, 101
  %v715 = vpop.permute.xlu0 %714
  %716 = vrot.lane.b32.xlu0 %v438, 101
  %v717 = vpop.permute.xlu0 %716
  %718 = vrot.lane.b32.xlu0 %v439, 101
  %v719 = vpop.permute.xlu0 %718
  %720 = vrot.lane.b32.xlu0 %v440, 101
  %v721 = vpop.permute.xlu0 %720
  %722 = vrot.lane.b32.xlu0 %v434, 101
  %v723 = vpop.permute.xlu0 %722
  %724 = vrot.lane.b32.xlu0 %v454, 101
  %v725 = vpop.permute.xlu0 %724
  %726 = vrot.lane.b32.xlu0 %v455, 101
  %v727 = vpop.permute.xlu0 %726
  %728 = vrot.lane.b32.xlu0 %v456, 101
  %v729 = vpop.permute.xlu0 %728
  %730 = vrot.lane.b32.xlu0 %v457, 101
  %v731 = vpop.permute.xlu0 %730
  %732 = vrot.lane.b32.xlu0 %v458, 101
  %v733 = vpop.permute.xlu0 %732
  %734 = vrot.lane.b32.xlu0 %v452, 101
  %v735 = vpop.permute.xlu0 %734
  %736 = vrot.lane.b32.xlu0 %v472, 101
  %v737 = vpop.permute.xlu0 %736
  %738 = vrot.lane.b32.xlu0 %v473, 101
  %v739 = vpop.permute.xlu0 %738
  %740 = vrot.lane.b32.xlu0 %v474, 101
  %v741 = vpop.permute.xlu0 %740
  %742 = vrot.lane.b32.xlu0 %v475, 101
  %v743 = vpop.permute.xlu0 %742
  %744 = vrot.lane.b32.xlu0 %v476, 101
  %v745 = vpop.permute.xlu0 %744
  %746 = vrot.lane.b32.xlu0 %v470, 101
  %v747 = vpop.permute.xlu0 %746
  %748 = vrot.lane.b32.xlu0 %v490, 101
  %v749 = vpop.permute.xlu0 %748
  %750 = vrot.lane.b32.xlu0 %v491, 101
  %v751 = vpop.permute.xlu0 %750
  %752 = vrot.lane.b32.xlu0 %v492, 101
  %v753 = vpop.permute.xlu0 %752
  %754 = vrot.lane.b32.xlu0 %v493, 101
  %v755 = vpop.permute.xlu0 %754
  %756 = vrot.lane.b32.xlu0 %v494, 101
  %v757 = vpop.permute.xlu0 %756
  %758 = vrot.lane.b32.xlu0 %v488, 101
  %v759 = vpop.permute.xlu0 %758
  %760 = vrot.lane.b32.xlu0 %v218, 101
  %v761 = vpop.permute.xlu0 %760
  %762 = vrot.lane.b32.xlu0 %v219, 101
  %v763 = vpop.permute.xlu0 %762
  %764 = vrot.lane.b32.xlu0 %v220, 101
  %v765 = vpop.permute.xlu0 %764
  %766 = vrot.lane.b32.xlu0 %v221, 101
  %v767 = vpop.permute.xlu0 %766
  %768 = vrot.lane.b32.xlu0 %v222, 101
  %v769 = vpop.permute.xlu0 %768
  %770 = vrot.lane.b32.xlu0 %v216, 101
  %v771 = vpop.permute.xlu0 %770
  %772 = vrot.lane.b32.xlu0 %v241, 101
  %v773 = vpop.permute.xlu0 %772
  %774 = vrot.lane.b32.xlu0 %v242, 101
  %v775 = vpop.permute.xlu0 %774
  %776 = vrot.lane.b32.xlu0 %v243, 101
  %v777 = vpop.permute.xlu0 %776
  %778 = vrot.lane.b32.xlu0 %v244, 101
  %v779 = vpop.permute.xlu0 %778
  %780 = vrot.lane.b32.xlu0 %v245, 101
  %v781 = vpop.permute.xlu0 %780
  %782 = vrot.lane.b32.xlu0 %v239, 101
  %v783 = vpop.permute.xlu0 %782
  %784 = vrot.lane.b32.xlu0 %v508, 101
  %v785 = vpop.permute.xlu0 %784
  %786 = vrot.lane.b32.xlu0 %v509, 101
  %v787 = vpop.permute.xlu0 %786
  %788 = vrot.lane.b32.xlu0 %v510, 101
  %v789 = vpop.permute.xlu0 %788
  %790 = vrot.lane.b32.xlu0 %v511, 101
  %v791 = vpop.permute.xlu0 %790
  %792 = vrot.lane.b32.xlu0 %v512, 101
  %v793 = vpop.permute.xlu0 %792
  %794 = vrot.lane.b32.xlu0 %v506, 101
  %v795 = vpop.permute.xlu0 %794
  %796 = vrot.lane.b32.xlu0 %v526, 101
  %v797 = vpop.permute.xlu0 %796
  %798 = vrot.lane.b32.xlu0 %v527, 101
  %v799 = vpop.permute.xlu0 %798
  %800 = vrot.lane.b32.xlu0 %v528, 101
  %v801 = vpop.permute.xlu0 %800
  %802 = vrot.lane.b32.xlu0 %v529, 101
  %v803 = vpop.permute.xlu0 %802
  %804 = vrot.lane.b32.xlu0 %v530, 101
  %v805 = vpop.permute.xlu0 %804
  %806 = vrot.lane.b32.xlu0 %v524, 101
  %v807 = vpop.permute.xlu0 %806
  %808 = vrot.lane.b32.xlu0 %v544, 101
  %v809 = vpop.permute.xlu0 %808
  %810 = vrot.lane.b32.xlu0 %v545, 101
  %v811 = vpop.permute.xlu0 %810
  %812 = vrot.lane.b32.xlu0 %v546, 101
  %v813 = vpop.permute.xlu0 %812
  %814 = vrot.lane.b32.xlu0 %v547, 101
  %v815 = vpop.permute.xlu0 %814
  %816 = vrot.lane.b32.xlu0 %v548, 101
  %v817 = vpop.permute.xlu0 %816
  %818 = vrot.lane.b32.xlu0 %v542, 101
  %v819 = vpop.permute.xlu0 %818
  %820 = vrot.lane.b32.xlu0 %v562, 101
  %v821 = vpop.permute.xlu0 %820
  %822 = vrot.lane.b32.xlu0 %v563, 101
  %v823 = vpop.permute.xlu0 %822
  %824 = vrot.lane.b32.xlu0 %v564, 101
  %v825 = vpop.permute.xlu0 %824
  %826 = vrot.lane.b32.xlu0 %v565, 101
  %v827 = vpop.permute.xlu0 %826
  %828 = vrot.lane.b32.xlu0 %v566, 101
  %v829 = vpop.permute.xlu0 %828
  %830 = vrot.lane.b32.xlu0 %v560, 101
  %v831 = vpop.permute.xlu0 %830
  %832 = vrot.lane.b32.xlu0 %v580, 101
  %v833 = vpop.permute.xlu0 %832
  %834 = vrot.lane.b32.xlu0 %v581, 101
  %v835 = vpop.permute.xlu0 %834
  %836 = vrot.lane.b32.xlu0 %v582, 101
  %v837 = vpop.permute.xlu0 %836
  %838 = vrot.lane.b32.xlu0 %v583, 101
  %v839 = vpop.permute.xlu0 %838
  %840 = vrot.lane.b32.xlu0 %v584, 101
  %v841 = vpop.permute.xlu0 %840
  %842 = vrot.lane.b32.xlu0 %v578, 101
  %v843 = vpop.permute.xlu0 %842
  %vm844 = vcmask 826368
  %v845 = vsel %vm844, %v653, %v655
  %v846 = vsel %vm844, %v655, %v657
  %v847 = vsel %vm844, %v657, %v659
  %v848 = vsel %vm844, %v659, %v661
  %v849 = vsel %vm844, %v661, %v663
  %v850 = vsel %vm844, %v665, %v667
  %v851 = vsel %vm844, %v667, %v669
  %v852 = vsel %vm844, %v669, %v671
  %v853 = vsel %vm844, %v671, %v673
  %v854 = vsel %vm844, %v673, %v675
  %v855 = vsel %vm844, %v677, %v679
  %v856 = vsel %vm844, %v679, %v681
  %v857 = vsel %vm844, %v681, %v683
  %v858 = vsel %vm844, %v683, %v685
  %v859 = vsel %vm844, %v685, %v687
  %v860 = vsel %vm844, %v689, %v691
  %v861 = vsel %vm844, %v691, %v693
  %v862 = vsel %vm844, %v693, %v695
  %v863 = vsel %vm844, %v695, %v697
  %v864 = vsel %vm844, %v697, %v699
  %v865 = vsel %vm844, %v701, %v703
  %v866 = vsel %vm844, %v703, %v705
  %v867 = vsel %vm844, %v705, %v707
  %v868 = vsel %vm844, %v707, %v709
  %v869 = vsel %vm844, %v709, %v711
  %v870 = vsel %vm844, %v713, %v715
  %v871 = vsel %vm844, %v715, %v717
  %v872 = vsel %vm844, %v717, %v719
  %v873 = vsel %vm844, %v719, %v721
  %v874 = vsel %vm844, %v721, %v723
  %v875 = vsel %vm844, %v725, %v727
  %v876 = vsel %vm844, %v727, %v729
  %v877 = vsel %vm844, %v729, %v731
  %v878 = vsel %vm844, %v731, %v733
  %v879 = vsel %vm844, %v733, %v735
  %v880 = vsel %vm844, %v737, %v739
  %v881 = vsel %vm844, %v739, %v741
  %v882 = vsel %vm844, %v741, %v743
  %v883 = vsel %vm844, %v743, %v745
  %v884 = vsel %vm844, %v745, %v747
  %v885 = vsel %vm844, %v749, %v751
  %v886 = vsel %vm844, %v751, %v753
  %v887 = vsel %vm844, %v753, %v755
  %v888 = vsel %vm844, %v755, %v757
  %v889 = vsel %vm844, %v757, %v759
  %v890 = vsel %vm844, %v761, %v763
  %v891 = vsel %vm844, %v763, %v765
  %v892 = vsel %vm844, %v765, %v767
  %v893 = vsel %vm844, %v767, %v769
  %v894 = vsel %vm844, %v769, %v771
  %v895 = vsel %vm844, %v773, %v775
  %v896 = vsel %vm844, %v775, %v777
  %v897 = vsel %vm844, %v777, %v779
  %v898 = vsel %vm844, %v779, %v781
  %v899 = vsel %vm844, %v781, %v783
  %v900 = vsel %vm844, %v785, %v787
  %v901 = vsel %vm844, %v787, %v789
  %v902 = vsel %vm844, %v789, %v791
  %v903 = vsel %vm844, %v791, %v793
  %v904 = vsel %vm844, %v793, %v795
  %v905 = vsel %vm844, %v797, %v799
  %v906 = vsel %vm844, %v799, %v801
  %v907 = vsel %vm844, %v801, %v803
  %v908 = vsel %vm844, %v803, %v805
  %v909 = vsel %vm844, %v805, %v807
  %v910 = vsel %vm844, %v809, %v811
  %v911 = vsel %vm844, %v811, %v813
  %v912 = vsel %vm844, %v813, %v815
  %v913 = vsel %vm844, %v815, %v817
  %v914 = vsel %vm844, %v817, %v819
  %v915 = vsel %vm844, %v821, %v823
  %v916 = vsel %vm844, %v823, %v825
  %v917 = vsel %vm844, %v825, %v827
  %v918 = vsel %vm844, %v827, %v829
  %v919 = vsel %vm844, %v829, %v831
  %v920 = vsel %vm844, %v833, %v835
  %v921 = vsel %vm844, %v835, %v837
  %v922 = vsel %vm844, %v837, %v839
  %v923 = vsel %vm844, %v839, %v841
  %v924 = vsel %vm844, %v841, %v843
  %1005 = vrot.lane.b32.xlu0 %v32, 63
  %v1006 = vpop.permute.xlu0 %1005
  %1007 = vrot.lane.b32.xlu0 %v33, 63
  %v1008 = vpop.permute.xlu0 %1007
  %1009 = vrot.lane.b32.xlu0 %v34, 63
  %v1010 = vpop.permute.xlu0 %1009
  %1011 = vrot.lane.b32.xlu0 %v35, 63
  %v1012 = vpop.permute.xlu0 %1011
  %1013 = vrot.lane.b32.xlu0 %v36, 63
  %v1014 = vpop.permute.xlu0 %1013
  %1015 = vrot.lane.b32.xlu0 %v37, 63
  %v1016 = vpop.permute.xlu0 %1015
  %1017 = vrot.lane.b32.xlu0 %v55, 63
  %v1018 = vpop.permute.xlu0 %1017
  %1019 = vrot.lane.b32.xlu0 %v56, 63
  %v1020 = vpop.permute.xlu0 %1019
  %1021 = vrot.lane.b32.xlu0 %v57, 63
  %v1022 = vpop.permute.xlu0 %1021
  %1023 = vrot.lane.b32.xlu0 %v58, 63
  %v1024 = vpop.permute.xlu0 %1023
  %1025 = vrot.lane.b32.xlu0 %v368, 63
  %v1026 = vpop.permute.xlu0 %1025
  %1027 = vrot.lane.b32.xlu0 %v367, 63
  %v1028 = vpop.permute.xlu0 %1027
  %1029 = vrot.lane.b32.xlu0 %v75, 63
  %v1030 = vpop.permute.xlu0 %1029
  %1031 = vrot.lane.b32.xlu0 %v76, 63
  %v1032 = vpop.permute.xlu0 %1031
  %1033 = vrot.lane.b32.xlu0 %v77, 63
  %v1034 = vpop.permute.xlu0 %1033
  %1035 = vrot.lane.b32.xlu0 %v78, 63
  %v1036 = vpop.permute.xlu0 %1035
  %1037 = vrot.lane.b32.xlu0 %v587, 63
  %v1038 = vpop.permute.xlu0 %1037
  %1039 = vrot.lane.b32.xlu0 %v586, 63
  %v1040 = vpop.permute.xlu0 %1039
  %1041 = vrot.lane.b32.xlu0 %v95, 63
  %v1042 = vpop.permute.xlu0 %1041
  %1043 = vrot.lane.b32.xlu0 %v96, 63
  %v1044 = vpop.permute.xlu0 %1043
  %1045 = vrot.lane.b32.xlu0 %v97, 63
  %v1046 = vpop.permute.xlu0 %1045
  %1047 = vrot.lane.b32.xlu0 %v98, 63
  %v1048 = vpop.permute.xlu0 %1047
  %1049 = vrot.lane.b32.xlu0 %v590, 63
  %v1050 = vpop.permute.xlu0 %1049
  %1051 = vrot.lane.b32.xlu0 %v589, 63
  %v1052 = vpop.permute.xlu0 %1051
  %1053 = vrot.lane.b32.xlu0 %v418, 63
  %v1054 = vpop.permute.xlu0 %1053
  %1055 = vrot.lane.b32.xlu0 %v419, 63
  %v1056 = vpop.permute.xlu0 %1055
  %1057 = vrot.lane.b32.xlu0 %v420, 63
  %v1058 = vpop.permute.xlu0 %1057
  %1059 = vrot.lane.b32.xlu0 %v421, 63
  %v1060 = vpop.permute.xlu0 %1059
  %1061 = vrot.lane.b32.xlu0 %v422, 63
  %v1062 = vpop.permute.xlu0 %1061
  %1063 = vrot.lane.b32.xlu0 %v416, 63
  %v1064 = vpop.permute.xlu0 %1063
  %1065 = vrot.lane.b32.xlu0 %v436, 63
  %v1066 = vpop.permute.xlu0 %1065
  %1067 = vrot.lane.b32.xlu0 %v437, 63
  %v1068 = vpop.permute.xlu0 %1067
  %1069 = vrot.lane.b32.xlu0 %v438, 63
  %v1070 = vpop.permute.xlu0 %1069
  %1071 = vrot.lane.b32.xlu0 %v439, 63
  %v1072 = vpop.permute.xlu0 %1071
  %1073 = vrot.lane.b32.xlu0 %v440, 63
  %v1074 = vpop.permute.xlu0 %1073
  %1075 = vrot.lane.b32.xlu0 %v434, 63
  %v1076 = vpop.permute.xlu0 %1075
  %1077 = vrot.lane.b32.xlu0 %v454, 63
  %v1078 = vpop.permute.xlu0 %1077
  %1079 = vrot.lane.b32.xlu0 %v455, 63
  %v1080 = vpop.permute.xlu0 %1079
  %1081 = vrot.lane.b32.xlu0 %v456, 63
  %v1082 = vpop.permute.xlu0 %1081
  %1083 = vrot.lane.b32.xlu0 %v457, 63
  %v1084 = vpop.permute.xlu0 %1083
  %1085 = vrot.lane.b32.xlu0 %v458, 63
  %v1086 = vpop.permute.xlu0 %1085
  %1087 = vrot.lane.b32.xlu0 %v452, 63
  %v1088 = vpop.permute.xlu0 %1087
  %1089 = vrot.lane.b32.xlu0 %v472, 63
  %v1090 = vpop.permute.xlu0 %1089
  %1091 = vrot.lane.b32.xlu0 %v473, 63
  %v1092 = vpop.permute.xlu0 %1091
  %1093 = vrot.lane.b32.xlu0 %v474, 63
  %v1094 = vpop.permute.xlu0 %1093
  %1095 = vrot.lane.b32.xlu0 %v475, 63
  %v1096 = vpop.permute.xlu0 %1095
  %1097 = vrot.lane.b32.xlu0 %v476, 63
  %v1098 = vpop.permute.xlu0 %1097
  %1099 = vrot.lane.b32.xlu0 %v470, 63
  %v1100 = vpop.permute.xlu0 %1099
  %1101 = vrot.lane.b32.xlu0 %v490, 63
  %v1102 = vpop.permute.xlu0 %1101
  %1103 = vrot.lane.b32.xlu0 %v491, 63
  %v1104 = vpop.permute.xlu0 %1103
  %1105 = vrot.lane.b32.xlu0 %v492, 63
  %v1106 = vpop.permute.xlu0 %1105
  %1107 = vrot.lane.b32.xlu0 %v493, 63
  %v1108 = vpop.permute.xlu0 %1107
  %1109 = vrot.lane.b32.xlu0 %v494, 63
  %v1110 = vpop.permute.xlu0 %1109
  %1111 = vrot.lane.b32.xlu0 %v488, 63
  %v1112 = vpop.permute.xlu0 %1111
  %1113 = vrot.lane.b32.xlu0 %v218, 63
  %v1114 = vpop.permute.xlu0 %1113
  %1115 = vrot.lane.b32.xlu0 %v219, 63
  %v1116 = vpop.permute.xlu0 %1115
  %1117 = vrot.lane.b32.xlu0 %v220, 63
  %v1118 = vpop.permute.xlu0 %1117
  %1119 = vrot.lane.b32.xlu0 %v221, 63
  %v1120 = vpop.permute.xlu0 %1119
  %1121 = vrot.lane.b32.xlu0 %v222, 63
  %v1122 = vpop.permute.xlu0 %1121
  %1123 = vrot.lane.b32.xlu0 %v216, 63
  %v1124 = vpop.permute.xlu0 %1123
  %1125 = vrot.lane.b32.xlu0 %v241, 63
  %v1126 = vpop.permute.xlu0 %1125
  %1127 = vrot.lane.b32.xlu0 %v242, 63
  %v1128 = vpop.permute.xlu0 %1127
  %1129 = vrot.lane.b32.xlu0 %v243, 63
  %v1130 = vpop.permute.xlu0 %1129
  %1131 = vrot.lane.b32.xlu0 %v244, 63
  %v1132 = vpop.permute.xlu0 %1131
  %1133 = vrot.lane.b32.xlu0 %v245, 63
  %v1134 = vpop.permute.xlu0 %1133
  %1135 = vrot.lane.b32.xlu0 %v239, 63
  %v1136 = vpop.permute.xlu0 %1135
  %1137 = vrot.lane.b32.xlu0 %v264, 63
  %v1138 = vpop.permute.xlu0 %1137
  %1139 = vrot.lane.b32.xlu0 %v265, 63
  %v1140 = vpop.permute.xlu0 %1139
  %1141 = vrot.lane.b32.xlu0 %v266, 63
  %v1142 = vpop.permute.xlu0 %1141
  %1143 = vrot.lane.b32.xlu0 %v267, 63
  %v1144 = vpop.permute.xlu0 %1143
  %1145 = vrot.lane.b32.xlu0 %v268, 63
  %v1146 = vpop.permute.xlu0 %1145
  %1147 = vrot.lane.b32.xlu0 %v262, 63
  %v1148 = vpop.permute.xlu0 %1147
  %1149 = vrot.lane.b32.xlu0 %v287, 63
  %v1150 = vpop.permute.xlu0 %1149
  %1151 = vrot.lane.b32.xlu0 %v288, 63
  %v1152 = vpop.permute.xlu0 %1151
  %1153 = vrot.lane.b32.xlu0 %v289, 63
  %v1154 = vpop.permute.xlu0 %1153
  %1155 = vrot.lane.b32.xlu0 %v290, 63
  %v1156 = vpop.permute.xlu0 %1155
  %1157 = vrot.lane.b32.xlu0 %v291, 63
  %v1158 = vpop.permute.xlu0 %1157
  %1159 = vrot.lane.b32.xlu0 %v285, 63
  %v1160 = vpop.permute.xlu0 %1159
  %1161 = vrot.lane.b32.xlu0 %v544, 63
  %v1162 = vpop.permute.xlu0 %1161
  %1163 = vrot.lane.b32.xlu0 %v545, 63
  %v1164 = vpop.permute.xlu0 %1163
  %1165 = vrot.lane.b32.xlu0 %v546, 63
  %v1166 = vpop.permute.xlu0 %1165
  %1167 = vrot.lane.b32.xlu0 %v547, 63
  %v1168 = vpop.permute.xlu0 %1167
  %1169 = vrot.lane.b32.xlu0 %v548, 63
  %v1170 = vpop.permute.xlu0 %1169
  %1171 = vrot.lane.b32.xlu0 %v542, 63
  %v1172 = vpop.permute.xlu0 %1171
  %1173 = vrot.lane.b32.xlu0 %v562, 63
  %v1174 = vpop.permute.xlu0 %1173
  %1175 = vrot.lane.b32.xlu0 %v563, 63
  %v1176 = vpop.permute.xlu0 %1175
  %1177 = vrot.lane.b32.xlu0 %v564, 63
  %v1178 = vpop.permute.xlu0 %1177
  %1179 = vrot.lane.b32.xlu0 %v565, 63
  %v1180 = vpop.permute.xlu0 %1179
  %1181 = vrot.lane.b32.xlu0 %v566, 63
  %v1182 = vpop.permute.xlu0 %1181
  %1183 = vrot.lane.b32.xlu0 %v560, 63
  %v1184 = vpop.permute.xlu0 %1183
  %1185 = vrot.lane.b32.xlu0 %v580, 63
  %v1186 = vpop.permute.xlu0 %1185
  %1187 = vrot.lane.b32.xlu0 %v581, 63
  %v1188 = vpop.permute.xlu0 %1187
  %1189 = vrot.lane.b32.xlu0 %v582, 63
  %v1190 = vpop.permute.xlu0 %1189
  %1191 = vrot.lane.b32.xlu0 %v583, 63
  %v1192 = vpop.permute.xlu0 %1191
  %1193 = vrot.lane.b32.xlu0 %v584, 63
  %v1194 = vpop.permute.xlu0 %1193
  %1195 = vrot.lane.b32.xlu0 %v578, 63
  %v1196 = vpop.permute.xlu0 %1195
  %vm1197 = vcmask 515072
  %v1198 = vsel %vm1197, %v1006, %v1008
  %v1199 = vsel %vm1197, %v1008, %v1010
  %v1200 = vsel %vm1197, %v1010, %v1012
  %v1201 = vsel %vm1197, %v1012, %v1014
  %v1202 = vsel %vm1197, %v1014, %v1016
  %v1203 = vsel %vm1197, %v1018, %v1020
  %v1204 = vsel %vm1197, %v1020, %v1022
  %v1205 = vsel %vm1197, %v1022, %v1024
  %v1206 = vsel %vm1197, %v1024, %v1026
  %v1207 = vsel %vm1197, %v1026, %v1028
  %v1208 = vsel %vm1197, %v1030, %v1032
  %v1209 = vsel %vm1197, %v1032, %v1034
  %v1210 = vsel %vm1197, %v1034, %v1036
  %v1211 = vsel %vm1197, %v1036, %v1038
  %v1212 = vsel %vm1197, %v1038, %v1040
  %v1213 = vsel %vm1197, %v1042, %v1044
  %v1214 = vsel %vm1197, %v1044, %v1046
  %v1215 = vsel %vm1197, %v1046, %v1048
  %v1216 = vsel %vm1197, %v1048, %v1050
  %v1217 = vsel %vm1197, %v1050, %v1052
  %v1218 = vsel %vm1197, %v1054, %v1056
  %v1219 = vsel %vm1197, %v1056, %v1058
  %v1220 = vsel %vm1197, %v1058, %v1060
  %v1221 = vsel %vm1197, %v1060, %v1062
  %v1222 = vsel %vm1197, %v1062, %v1064
  %v1223 = vsel %vm1197, %v1066, %v1068
  %v1224 = vsel %vm1197, %v1068, %v1070
  %v1225 = vsel %vm1197, %v1070, %v1072
  %v1226 = vsel %vm1197, %v1072, %v1074
  %v1227 = vsel %vm1197, %v1074, %v1076
  %v1228 = vsel %vm1197, %v1078, %v1080
  %v1229 = vsel %vm1197, %v1080, %v1082
  %v1230 = vsel %vm1197, %v1082, %v1084
  %v1231 = vsel %vm1197, %v1084, %v1086
  %v1232 = vsel %vm1197, %v1086, %v1088
  %v1233 = vsel %vm1197, %v1090, %v1092
  %v1234 = vsel %vm1197, %v1092, %v1094
  %v1235 = vsel %vm1197, %v1094, %v1096
  %v1236 = vsel %vm1197, %v1096, %v1098
  %v1237 = vsel %vm1197, %v1098, %v1100
  %v1238 = vsel %vm1197, %v1102, %v1104
  %v1239 = vsel %vm1197, %v1104, %v1106
  %v1240 = vsel %vm1197, %v1106, %v1108
  %v1241 = vsel %vm1197, %v1108, %v1110
  %v1242 = vsel %vm1197, %v1110, %v1112
  %v1243 = vsel %vm1197, %v1114, %v1116
  %v1244 = vsel %vm1197, %v1116, %v1118
  %v1245 = vsel %vm1197, %v1118, %v1120
  %v1246 = vsel %vm1197, %v1120, %v1122
  %v1247 = vsel %vm1197, %v1122, %v1124
  %v1248 = vsel %vm1197, %v1126, %v1128
  %v1249 = vsel %vm1197, %v1128, %v1130
  %v1250 = vsel %vm1197, %v1130, %v1132
  %v1251 = vsel %vm1197, %v1132, %v1134
  %v1252 = vsel %vm1197, %v1134, %v1136
  %v1253 = vsel %vm1197, %v1138, %v1140
  %v1254 = vsel %vm1197, %v1140, %v1142
  %v1255 = vsel %vm1197, %v1142, %v1144
  %v1256 = vsel %vm1197, %v1144, %v1146
  %v1257 = vsel %vm1197, %v1146, %v1148
  %v1258 = vsel %vm1197, %v1150, %v1152
  %v1259 = vsel %vm1197, %v1152, %v1154
  %v1260 = vsel %vm1197, %v1154, %v1156
  %v1261 = vsel %vm1197, %v1156, %v1158
  %v1262 = vsel %vm1197, %v1158, %v1160
  %v1263 = vsel %vm1197, %v1162, %v1164
  %v1264 = vsel %vm1197, %v1164, %v1166
  %v1265 = vsel %vm1197, %v1166, %v1168
  %v1266 = vsel %vm1197, %v1168, %v1170
  %v1267 = vsel %vm1197, %v1170, %v1172
  %v1268 = vsel %vm1197, %v1174, %v1176
  %v1269 = vsel %vm1197, %v1176, %v1178
  %v1270 = vsel %vm1197, %v1178, %v1180
  %v1271 = vsel %vm1197, %v1180, %v1182
  %v1272 = vsel %vm1197, %v1182, %v1184
  %v1273 = vsel %vm1197, %v1186, %v1188
  %v1274 = vsel %vm1197, %v1188, %v1190
  %v1275 = vsel %vm1197, %v1190, %v1192
  %v1276 = vsel %vm1197, %v1192, %v1194
  %v1277 = vsel %vm1197, %v1194, %v1196
  %1358 = vrot.lane.b32.xlu0 %v32, 25
  %v1359 = vpop.permute.xlu0 %1358
  %1360 = vrot.lane.b32.xlu0 %v33, 25
  %v1361 = vpop.permute.xlu0 %1360
  %1362 = vrot.lane.b32.xlu0 %v34, 25
  %v1363 = vpop.permute.xlu0 %1362
  %1364 = vrot.lane.b32.xlu0 %v35, 25
  %v1365 = vpop.permute.xlu0 %1364
  %1366 = vrot.lane.b32.xlu0 %v36, 25
  %v1367 = vpop.permute.xlu0 %1366
  %1368 = vrot.lane.b32.xlu0 %v37, 25
  %v1369 = vpop.permute.xlu0 %1368
  %1370 = vrot.lane.b32.xlu0 %v55, 25
  %v1371 = vpop.permute.xlu0 %1370
  %1372 = vrot.lane.b32.xlu0 %v56, 25
  %v1373 = vpop.permute.xlu0 %1372
  %1374 = vrot.lane.b32.xlu0 %v57, 25
  %v1375 = vpop.permute.xlu0 %1374
  %1376 = vrot.lane.b32.xlu0 %v58, 25
  %v1377 = vpop.permute.xlu0 %1376
  %1378 = vrot.lane.b32.xlu0 %v368, 25
  %v1379 = vpop.permute.xlu0 %1378
  %1380 = vrot.lane.b32.xlu0 %v367, 25
  %v1381 = vpop.permute.xlu0 %1380
  %1382 = vrot.lane.b32.xlu0 %v75, 25
  %v1383 = vpop.permute.xlu0 %1382
  %1384 = vrot.lane.b32.xlu0 %v76, 25
  %v1385 = vpop.permute.xlu0 %1384
  %1386 = vrot.lane.b32.xlu0 %v77, 25
  %v1387 = vpop.permute.xlu0 %1386
  %1388 = vrot.lane.b32.xlu0 %v78, 25
  %v1389 = vpop.permute.xlu0 %1388
  %1390 = vrot.lane.b32.xlu0 %v587, 25
  %v1391 = vpop.permute.xlu0 %1390
  %1392 = vrot.lane.b32.xlu0 %v586, 25
  %v1393 = vpop.permute.xlu0 %1392
  %1394 = vrot.lane.b32.xlu0 %v95, 25
  %v1395 = vpop.permute.xlu0 %1394
  %1396 = vrot.lane.b32.xlu0 %v96, 25
  %v1397 = vpop.permute.xlu0 %1396
  %1398 = vrot.lane.b32.xlu0 %v97, 25
  %v1399 = vpop.permute.xlu0 %1398
  %1400 = vrot.lane.b32.xlu0 %v98, 25
  %v1401 = vpop.permute.xlu0 %1400
  %1402 = vrot.lane.b32.xlu0 %v590, 25
  %v1403 = vpop.permute.xlu0 %1402
  %1404 = vrot.lane.b32.xlu0 %v589, 25
  %v1405 = vpop.permute.xlu0 %1404
  %1406 = vrot.lane.b32.xlu0 %v115, 25
  %v1407 = vpop.permute.xlu0 %1406
  %1408 = vrot.lane.b32.xlu0 %v116, 25
  %v1409 = vpop.permute.xlu0 %1408
  %1410 = vrot.lane.b32.xlu0 %v117, 25
  %v1411 = vpop.permute.xlu0 %1410
  %1412 = vrot.lane.b32.xlu0 %v118, 25
  %v1413 = vpop.permute.xlu0 %1412
  %1414 = vrot.lane.b32.xlu0 %v593, 25
  %v1415 = vpop.permute.xlu0 %1414
  %1416 = vrot.lane.b32.xlu0 %v592, 25
  %v1417 = vpop.permute.xlu0 %1416
  %1418 = vrot.lane.b32.xlu0 %v135, 25
  %v1419 = vpop.permute.xlu0 %1418
  %1420 = vrot.lane.b32.xlu0 %v136, 25
  %v1421 = vpop.permute.xlu0 %1420
  %1422 = vrot.lane.b32.xlu0 %v137, 25
  %v1423 = vpop.permute.xlu0 %1422
  %1424 = vrot.lane.b32.xlu0 %v138, 25
  %v1425 = vpop.permute.xlu0 %1424
  %1426 = vrot.lane.b32.xlu0 %v596, 25
  %v1427 = vpop.permute.xlu0 %1426
  %1428 = vrot.lane.b32.xlu0 %v595, 25
  %v1429 = vpop.permute.xlu0 %1428
  %1430 = vrot.lane.b32.xlu0 %v454, 25
  %v1431 = vpop.permute.xlu0 %1430
  %1432 = vrot.lane.b32.xlu0 %v455, 25
  %v1433 = vpop.permute.xlu0 %1432
  %1434 = vrot.lane.b32.xlu0 %v456, 25
  %v1435 = vpop.permute.xlu0 %1434
  %1436 = vrot.lane.b32.xlu0 %v457, 25
  %v1437 = vpop.permute.xlu0 %1436
  %1438 = vrot.lane.b32.xlu0 %v458, 25
  %v1439 = vpop.permute.xlu0 %1438
  %1440 = vrot.lane.b32.xlu0 %v452, 25
  %v1441 = vpop.permute.xlu0 %1440
  %1442 = vrot.lane.b32.xlu0 %v472, 25
  %v1443 = vpop.permute.xlu0 %1442
  %1444 = vrot.lane.b32.xlu0 %v473, 25
  %v1445 = vpop.permute.xlu0 %1444
  %1446 = vrot.lane.b32.xlu0 %v474, 25
  %v1447 = vpop.permute.xlu0 %1446
  %1448 = vrot.lane.b32.xlu0 %v475, 25
  %v1449 = vpop.permute.xlu0 %1448
  %1450 = vrot.lane.b32.xlu0 %v476, 25
  %v1451 = vpop.permute.xlu0 %1450
  %1452 = vrot.lane.b32.xlu0 %v470, 25
  %v1453 = vpop.permute.xlu0 %1452
  %1454 = vrot.lane.b32.xlu0 %v490, 25
  %v1455 = vpop.permute.xlu0 %1454
  %1456 = vrot.lane.b32.xlu0 %v491, 25
  %v1457 = vpop.permute.xlu0 %1456
  %1458 = vrot.lane.b32.xlu0 %v492, 25
  %v1459 = vpop.permute.xlu0 %1458
  %1460 = vrot.lane.b32.xlu0 %v493, 25
  %v1461 = vpop.permute.xlu0 %1460
  %1462 = vrot.lane.b32.xlu0 %v494, 25
  %v1463 = vpop.permute.xlu0 %1462
  %1464 = vrot.lane.b32.xlu0 %v488, 25
  %v1465 = vpop.permute.xlu0 %1464
  %1466 = vrot.lane.b32.xlu0 %v218, 25
  %v1467 = vpop.permute.xlu0 %1466
  %1468 = vrot.lane.b32.xlu0 %v219, 25
  %v1469 = vpop.permute.xlu0 %1468
  %1470 = vrot.lane.b32.xlu0 %v220, 25
  %v1471 = vpop.permute.xlu0 %1470
  %1472 = vrot.lane.b32.xlu0 %v221, 25
  %v1473 = vpop.permute.xlu0 %1472
  %1474 = vrot.lane.b32.xlu0 %v222, 25
  %v1475 = vpop.permute.xlu0 %1474
  %1476 = vrot.lane.b32.xlu0 %v216, 25
  %v1477 = vpop.permute.xlu0 %1476
  %1478 = vrot.lane.b32.xlu0 %v241, 25
  %v1479 = vpop.permute.xlu0 %1478
  %1480 = vrot.lane.b32.xlu0 %v242, 25
  %v1481 = vpop.permute.xlu0 %1480
  %1482 = vrot.lane.b32.xlu0 %v243, 25
  %v1483 = vpop.permute.xlu0 %1482
  %1484 = vrot.lane.b32.xlu0 %v244, 25
  %v1485 = vpop.permute.xlu0 %1484
  %1486 = vrot.lane.b32.xlu0 %v245, 25
  %v1487 = vpop.permute.xlu0 %1486
  %1488 = vrot.lane.b32.xlu0 %v239, 25
  %v1489 = vpop.permute.xlu0 %1488
  %1490 = vrot.lane.b32.xlu0 %v264, 25
  %v1491 = vpop.permute.xlu0 %1490
  %1492 = vrot.lane.b32.xlu0 %v265, 25
  %v1493 = vpop.permute.xlu0 %1492
  %1494 = vrot.lane.b32.xlu0 %v266, 25
  %v1495 = vpop.permute.xlu0 %1494
  %1496 = vrot.lane.b32.xlu0 %v267, 25
  %v1497 = vpop.permute.xlu0 %1496
  %1498 = vrot.lane.b32.xlu0 %v268, 25
  %v1499 = vpop.permute.xlu0 %1498
  %1500 = vrot.lane.b32.xlu0 %v262, 25
  %v1501 = vpop.permute.xlu0 %1500
  %1502 = vrot.lane.b32.xlu0 %v287, 25
  %v1503 = vpop.permute.xlu0 %1502
  %1504 = vrot.lane.b32.xlu0 %v288, 25
  %v1505 = vpop.permute.xlu0 %1504
  %1506 = vrot.lane.b32.xlu0 %v289, 25
  %v1507 = vpop.permute.xlu0 %1506
  %1508 = vrot.lane.b32.xlu0 %v290, 25
  %v1509 = vpop.permute.xlu0 %1508
  %1510 = vrot.lane.b32.xlu0 %v291, 25
  %v1511 = vpop.permute.xlu0 %1510
  %1512 = vrot.lane.b32.xlu0 %v285, 25
  %v1513 = vpop.permute.xlu0 %1512
  %1514 = vrot.lane.b32.xlu0 %v310, 25
  %v1515 = vpop.permute.xlu0 %1514
  %1516 = vrot.lane.b32.xlu0 %v311, 25
  %v1517 = vpop.permute.xlu0 %1516
  %1518 = vrot.lane.b32.xlu0 %v312, 25
  %v1519 = vpop.permute.xlu0 %1518
  %1520 = vrot.lane.b32.xlu0 %v313, 25
  %v1521 = vpop.permute.xlu0 %1520
  %1522 = vrot.lane.b32.xlu0 %v314, 25
  %v1523 = vpop.permute.xlu0 %1522
  %1524 = vrot.lane.b32.xlu0 %v308, 25
  %v1525 = vpop.permute.xlu0 %1524
  %1526 = vrot.lane.b32.xlu0 %v323, 25
  %v1527 = vpop.permute.xlu0 %1526
  %1528 = vrot.lane.b32.xlu0 %v334, 25
  %v1529 = vpop.permute.xlu0 %1528
  %1530 = vrot.lane.b32.xlu0 %v335, 25
  %v1531 = vpop.permute.xlu0 %1530
  %1532 = vrot.lane.b32.xlu0 %v336, 25
  %v1533 = vpop.permute.xlu0 %1532
  %1534 = vrot.lane.b32.xlu0 %v337, 25
  %v1535 = vpop.permute.xlu0 %1534
  %1536 = vrot.lane.b32.xlu0 %v331, 25
  %v1537 = vpop.permute.xlu0 %1536
  %1538 = vrot.lane.b32.xlu0 %v570, 25
  %v1539 = vpop.permute.xlu0 %1538
  %1540 = vrot.lane.b32.xlu0 %v581, 25
  %v1541 = vpop.permute.xlu0 %1540
  %1542 = vrot.lane.b32.xlu0 %v582, 25
  %v1543 = vpop.permute.xlu0 %1542
  %1544 = vrot.lane.b32.xlu0 %v583, 25
  %v1545 = vpop.permute.xlu0 %1544
  %1546 = vrot.lane.b32.xlu0 %v584, 25
  %v1547 = vpop.permute.xlu0 %1546
  %1548 = vrot.lane.b32.xlu0 %v600, 25
  %v1549 = vpop.permute.xlu0 %1548
  %vm1550 = vcmask 203776
  %v1551 = vsel %vm1550, %v1359, %v1361
  %v1552 = vsel %vm1550, %v1361, %v1363
  %v1553 = vsel %vm1550, %v1363, %v1365
  %v1554 = vsel %vm1550, %v1365, %v1367
  %v1555 = vsel %vm1550, %v1367, %v1369
  %v1556 = vsel %vm1550, %v1371, %v1373
  %v1557 = vsel %vm1550, %v1373, %v1375
  %v1558 = vsel %vm1550, %v1375, %v1377
  %v1559 = vsel %vm1550, %v1377, %v1379
  %v1560 = vsel %vm1550, %v1379, %v1381
  %v1561 = vsel %vm1550, %v1383, %v1385
  %v1562 = vsel %vm1550, %v1385, %v1387
  %v1563 = vsel %vm1550, %v1387, %v1389
  %v1564 = vsel %vm1550, %v1389, %v1391
  %v1565 = vsel %vm1550, %v1391, %v1393
  %v1566 = vsel %vm1550, %v1395, %v1397
  %v1567 = vsel %vm1550, %v1397, %v1399
  %v1568 = vsel %vm1550, %v1399, %v1401
  %v1569 = vsel %vm1550, %v1401, %v1403
  %v1570 = vsel %vm1550, %v1403, %v1405
  %v1571 = vsel %vm1550, %v1407, %v1409
  %v1572 = vsel %vm1550, %v1409, %v1411
  %v1573 = vsel %vm1550, %v1411, %v1413
  %v1574 = vsel %vm1550, %v1413, %v1415
  %v1575 = vsel %vm1550, %v1415, %v1417
  %v1576 = vsel %vm1550, %v1419, %v1421
  %v1577 = vsel %vm1550, %v1421, %v1423
  %v1578 = vsel %vm1550, %v1423, %v1425
  %v1579 = vsel %vm1550, %v1425, %v1427
  %v1580 = vsel %vm1550, %v1427, %v1429
  %v1581 = vsel %vm1550, %v1431, %v1433
  %v1582 = vsel %vm1550, %v1433, %v1435
  %v1583 = vsel %vm1550, %v1435, %v1437
  %v1584 = vsel %vm1550, %v1437, %v1439
  %v1585 = vsel %vm1550, %v1439, %v1441
  %v1586 = vsel %vm1550, %v1443, %v1445
  %v1587 = vsel %vm1550, %v1445, %v1447
  %v1588 = vsel %vm1550, %v1447, %v1449
  %v1589 = vsel %vm1550, %v1449, %v1451
  %v1590 = vsel %vm1550, %v1451, %v1453
  %v1591 = vsel %vm1550, %v1455, %v1457
  %v1592 = vsel %vm1550, %v1457, %v1459
  %v1593 = vsel %vm1550, %v1459, %v1461
  %v1594 = vsel %vm1550, %v1461, %v1463
  %v1595 = vsel %vm1550, %v1463, %v1465
  %v1596 = vsel %vm1550, %v1467, %v1469
  %v1597 = vsel %vm1550, %v1469, %v1471
  %v1598 = vsel %vm1550, %v1471, %v1473
  %v1599 = vsel %vm1550, %v1473, %v1475
  %v1600 = vsel %vm1550, %v1475, %v1477
  %v1601 = vsel %vm1550, %v1479, %v1481
  %v1602 = vsel %vm1550, %v1481, %v1483
  %v1603 = vsel %vm1550, %v1483, %v1485
  %v1604 = vsel %vm1550, %v1485, %v1487
  %v1605 = vsel %vm1550, %v1487, %v1489
  %v1606 = vsel %vm1550, %v1491, %v1493
  %v1607 = vsel %vm1550, %v1493, %v1495
  %v1608 = vsel %vm1550, %v1495, %v1497
  %v1609 = vsel %vm1550, %v1497, %v1499
  %v1610 = vsel %vm1550, %v1499, %v1501
  %v1611 = vsel %vm1550, %v1503, %v1505
  %v1612 = vsel %vm1550, %v1505, %v1507
  %v1613 = vsel %vm1550, %v1507, %v1509
  %v1614 = vsel %vm1550, %v1509, %v1511
  %v1615 = vsel %vm1550, %v1511, %v1513
  %v1616 = vsel %vm1550, %v1515, %v1517
  %v1617 = vsel %vm1550, %v1517, %v1519
  %v1618 = vsel %vm1550, %v1519, %v1521
  %v1619 = vsel %vm1550, %v1521, %v1523
  %v1620 = vsel %vm1550, %v1523, %v1525
  %v1621 = vsel %vm1550, %v1527, %v1529
  %v1622 = vsel %vm1550, %v1529, %v1531
  %v1623 = vsel %vm1550, %v1531, %v1533
  %v1624 = vsel %vm1550, %v1533, %v1535
  %v1625 = vsel %vm1550, %v1535, %v1537
  %v1626 = vsel %vm1550, %v1539, %v1541
  %v1627 = vsel %vm1550, %v1541, %v1543
  %v1628 = vsel %vm1550, %v1543, %v1545
  %v1629 = vsel %vm1550, %v1545, %v1547
  %v1630 = vsel %vm1550, %v1547, %v1549
  %1711 = vrot.lane.b32.xlu0 %v38, 115
  %v1712 = vpop.permute.xlu0 %1711
  %1713 = vrot.lane.b32.xlu0 %v56, 115
  %v1714 = vpop.permute.xlu0 %1713
  %1715 = vrot.lane.b32.xlu0 %v57, 115
  %v1716 = vpop.permute.xlu0 %1715
  %1717 = vrot.lane.b32.xlu0 %v58, 115
  %v1718 = vpop.permute.xlu0 %1717
  %1719 = vrot.lane.b32.xlu0 %v368, 115
  %v1720 = vpop.permute.xlu0 %1719
  %1721 = vrot.lane.b32.xlu0 %v603, 115
  %v1722 = vpop.permute.xlu0 %1721
  %1723 = vrot.lane.b32.xlu0 %v602, 115
  %v1724 = vpop.permute.xlu0 %1723
  %1725 = vrot.lane.b32.xlu0 %v76, 115
  %v1726 = vpop.permute.xlu0 %1725
  %1727 = vrot.lane.b32.xlu0 %v77, 115
  %v1728 = vpop.permute.xlu0 %1727
  %1729 = vrot.lane.b32.xlu0 %v78, 115
  %v1730 = vpop.permute.xlu0 %1729
  %1731 = vrot.lane.b32.xlu0 %v587, 115
  %v1732 = vpop.permute.xlu0 %1731
  %1733 = vrot.lane.b32.xlu0 %v606, 115
  %v1734 = vpop.permute.xlu0 %1733
  %1735 = vrot.lane.b32.xlu0 %v605, 115
  %v1736 = vpop.permute.xlu0 %1735
  %1737 = vrot.lane.b32.xlu0 %v96, 115
  %v1738 = vpop.permute.xlu0 %1737
  %1739 = vrot.lane.b32.xlu0 %v97, 115
  %v1740 = vpop.permute.xlu0 %1739
  %1741 = vrot.lane.b32.xlu0 %v98, 115
  %v1742 = vpop.permute.xlu0 %1741
  %1743 = vrot.lane.b32.xlu0 %v590, 115
  %v1744 = vpop.permute.xlu0 %1743
  %1745 = vrot.lane.b32.xlu0 %v609, 115
  %v1746 = vpop.permute.xlu0 %1745
  %1747 = vrot.lane.b32.xlu0 %v608, 115
  %v1748 = vpop.permute.xlu0 %1747
  %1749 = vrot.lane.b32.xlu0 %v116, 115
  %v1750 = vpop.permute.xlu0 %1749
  %1751 = vrot.lane.b32.xlu0 %v117, 115
  %v1752 = vpop.permute.xlu0 %1751
  %1753 = vrot.lane.b32.xlu0 %v118, 115
  %v1754 = vpop.permute.xlu0 %1753
  %1755 = vrot.lane.b32.xlu0 %v593, 115
  %v1756 = vpop.permute.xlu0 %1755
  %1757 = vrot.lane.b32.xlu0 %v612, 115
  %v1758 = vpop.permute.xlu0 %1757
  %1759 = vrot.lane.b32.xlu0 %v611, 115
  %v1760 = vpop.permute.xlu0 %1759
  %1761 = vrot.lane.b32.xlu0 %v136, 115
  %v1762 = vpop.permute.xlu0 %1761
  %1763 = vrot.lane.b32.xlu0 %v137, 115
  %v1764 = vpop.permute.xlu0 %1763
  %1765 = vrot.lane.b32.xlu0 %v138, 115
  %v1766 = vpop.permute.xlu0 %1765
  %1767 = vrot.lane.b32.xlu0 %v596, 115
  %v1768 = vpop.permute.xlu0 %1767
  %1769 = vrot.lane.b32.xlu0 %v615, 115
  %v1770 = vpop.permute.xlu0 %1769
  %1771 = vrot.lane.b32.xlu0 %v614, 115
  %v1772 = vpop.permute.xlu0 %1771
  %1773 = vrot.lane.b32.xlu0 %v156, 115
  %v1774 = vpop.permute.xlu0 %1773
  %1775 = vrot.lane.b32.xlu0 %v157, 115
  %v1776 = vpop.permute.xlu0 %1775
  %1777 = vrot.lane.b32.xlu0 %v158, 115
  %v1778 = vpop.permute.xlu0 %1777
  %1779 = vrot.lane.b32.xlu0 %v620, 115
  %v1780 = vpop.permute.xlu0 %1779
  %1781 = vrot.lane.b32.xlu0 %v621, 115
  %v1782 = vpop.permute.xlu0 %1781
  %1783 = vrot.lane.b32.xlu0 %v619, 115
  %v1784 = vpop.permute.xlu0 %1783
  %1785 = vrot.lane.b32.xlu0 %v176, 115
  %v1786 = vpop.permute.xlu0 %1785
  %1787 = vrot.lane.b32.xlu0 %v177, 115
  %v1788 = vpop.permute.xlu0 %1787
  %1789 = vrot.lane.b32.xlu0 %v178, 115
  %v1790 = vpop.permute.xlu0 %1789
  %1791 = vrot.lane.b32.xlu0 %v626, 115
  %v1792 = vpop.permute.xlu0 %1791
  %1793 = vrot.lane.b32.xlu0 %v627, 115
  %v1794 = vpop.permute.xlu0 %1793
  %1795 = vrot.lane.b32.xlu0 %v625, 115
  %v1796 = vpop.permute.xlu0 %1795
  %1797 = vrot.lane.b32.xlu0 %v491, 115
  %v1798 = vpop.permute.xlu0 %1797
  %1799 = vrot.lane.b32.xlu0 %v492, 115
  %v1800 = vpop.permute.xlu0 %1799
  %1801 = vrot.lane.b32.xlu0 %v493, 115
  %v1802 = vpop.permute.xlu0 %1801
  %1803 = vrot.lane.b32.xlu0 %v494, 115
  %v1804 = vpop.permute.xlu0 %1803
  %1805 = vrot.lane.b32.xlu0 %v630, 115
  %v1806 = vpop.permute.xlu0 %1805
  %1807 = vrot.lane.b32.xlu0 %v629, 115
  %v1808 = vpop.permute.xlu0 %1807
  %1809 = vrot.lane.b32.xlu0 %v219, 115
  %v1810 = vpop.permute.xlu0 %1809
  %1811 = vrot.lane.b32.xlu0 %v220, 115
  %v1812 = vpop.permute.xlu0 %1811
  %1813 = vrot.lane.b32.xlu0 %v221, 115
  %v1814 = vpop.permute.xlu0 %1813
  %1815 = vrot.lane.b32.xlu0 %v222, 115
  %v1816 = vpop.permute.xlu0 %1815
  %1817 = vrot.lane.b32.xlu0 %v633, 115
  %v1818 = vpop.permute.xlu0 %1817
  %1819 = vrot.lane.b32.xlu0 %v632, 115
  %v1820 = vpop.permute.xlu0 %1819
  %1821 = vrot.lane.b32.xlu0 %v242, 115
  %v1822 = vpop.permute.xlu0 %1821
  %1823 = vrot.lane.b32.xlu0 %v243, 115
  %v1824 = vpop.permute.xlu0 %1823
  %1825 = vrot.lane.b32.xlu0 %v244, 115
  %v1826 = vpop.permute.xlu0 %1825
  %1827 = vrot.lane.b32.xlu0 %v245, 115
  %v1828 = vpop.permute.xlu0 %1827
  %1829 = vrot.lane.b32.xlu0 %v636, 115
  %v1830 = vpop.permute.xlu0 %1829
  %1831 = vrot.lane.b32.xlu0 %v635, 115
  %v1832 = vpop.permute.xlu0 %1831
  %1833 = vrot.lane.b32.xlu0 %v265, 115
  %v1834 = vpop.permute.xlu0 %1833
  %1835 = vrot.lane.b32.xlu0 %v266, 115
  %v1836 = vpop.permute.xlu0 %1835
  %1837 = vrot.lane.b32.xlu0 %v267, 115
  %v1838 = vpop.permute.xlu0 %1837
  %1839 = vrot.lane.b32.xlu0 %v268, 115
  %v1840 = vpop.permute.xlu0 %1839
  %1841 = vrot.lane.b32.xlu0 %v639, 115
  %v1842 = vpop.permute.xlu0 %1841
  %1843 = vrot.lane.b32.xlu0 %v638, 115
  %v1844 = vpop.permute.xlu0 %1843
  %1845 = vrot.lane.b32.xlu0 %v288, 115
  %v1846 = vpop.permute.xlu0 %1845
  %1847 = vrot.lane.b32.xlu0 %v289, 115
  %v1848 = vpop.permute.xlu0 %1847
  %1849 = vrot.lane.b32.xlu0 %v290, 115
  %v1850 = vpop.permute.xlu0 %1849
  %1851 = vrot.lane.b32.xlu0 %v291, 115
  %v1852 = vpop.permute.xlu0 %1851
  %1853 = vrot.lane.b32.xlu0 %v642, 115
  %v1854 = vpop.permute.xlu0 %1853
  %1855 = vrot.lane.b32.xlu0 %v641, 115
  %v1856 = vpop.permute.xlu0 %1855
  %1857 = vrot.lane.b32.xlu0 %v311, 115
  %v1858 = vpop.permute.xlu0 %1857
  %1859 = vrot.lane.b32.xlu0 %v312, 115
  %v1860 = vpop.permute.xlu0 %1859
  %1861 = vrot.lane.b32.xlu0 %v313, 115
  %v1862 = vpop.permute.xlu0 %1861
  %1863 = vrot.lane.b32.xlu0 %v314, 115
  %v1864 = vpop.permute.xlu0 %1863
  %1865 = vrot.lane.b32.xlu0 %v645, 115
  %v1866 = vpop.permute.xlu0 %1865
  %1867 = vrot.lane.b32.xlu0 %v644, 115
  %v1868 = vpop.permute.xlu0 %1867
  %1869 = vrot.lane.b32.xlu0 %v334, 115
  %v1870 = vpop.permute.xlu0 %1869
  %1871 = vrot.lane.b32.xlu0 %v335, 115
  %v1872 = vpop.permute.xlu0 %1871
  %1873 = vrot.lane.b32.xlu0 %v336, 115
  %v1874 = vpop.permute.xlu0 %1873
  %1875 = vrot.lane.b32.xlu0 %v337, 115
  %v1876 = vpop.permute.xlu0 %1875
  %1877 = vrot.lane.b32.xlu0 %v648, 115
  %v1878 = vpop.permute.xlu0 %1877
  %1879 = vrot.lane.b32.xlu0 %v647, 115
  %v1880 = vpop.permute.xlu0 %1879
  %1881 = vrot.lane.b32.xlu0 %v357, 115
  %v1882 = vpop.permute.xlu0 %1881
  %1883 = vrot.lane.b32.xlu0 %v358, 115
  %v1884 = vpop.permute.xlu0 %1883
  %1885 = vrot.lane.b32.xlu0 %v359, 115
  %v1886 = vpop.permute.xlu0 %1885
  %1887 = vrot.lane.b32.xlu0 %v360, 115
  %v1888 = vpop.permute.xlu0 %1887
  %1889 = vrot.lane.b32.xlu0 %v651, 115
  %v1890 = vpop.permute.xlu0 %1889
  %1891 = vrot.lane.b32.xlu0 %v650, 115
  %v1892 = vpop.permute.xlu0 %1891
  %v1893 = vsel %vm381, %v380, %v1712
  %v1894 = vsel %vm381, %v1714, %v1716
  %v1895 = vsel %vm381, %v1716, %v1718
  %v1896 = vsel %vm381, %v1718, %v1720
  %v1897 = vsel %vm381, %v1720, %v1722
  %v1898 = vsel %vm381, %v1722, %v1724
  %v1899 = vsel %vm381, %v1726, %v1728
  %v1900 = vsel %vm381, %v1728, %v1730
  %v1901 = vsel %vm381, %v1730, %v1732
  %v1902 = vsel %vm381, %v1732, %v1734
  %v1903 = vsel %vm381, %v1734, %v1736
  %v1904 = vsel %vm381, %v1738, %v1740
  %v1905 = vsel %vm381, %v1740, %v1742
  %v1906 = vsel %vm381, %v1742, %v1744
  %v1907 = vsel %vm381, %v1744, %v1746
  %v1908 = vsel %vm381, %v1746, %v1748
  %v1909 = vsel %vm381, %v1750, %v1752
  %v1910 = vsel %vm381, %v1752, %v1754
  %v1911 = vsel %vm381, %v1754, %v1756
  %v1912 = vsel %vm381, %v1756, %v1758
  %v1913 = vsel %vm381, %v1758, %v1760
  %v1914 = vsel %vm381, %v1762, %v1764
  %v1915 = vsel %vm381, %v1764, %v1766
  %v1916 = vsel %vm381, %v1766, %v1768
  %v1917 = vsel %vm381, %v1768, %v1770
  %v1918 = vsel %vm381, %v1770, %v1772
  %v1919 = vsel %vm381, %v1774, %v1776
  %v1920 = vsel %vm381, %v1776, %v1778
  %v1921 = vsel %vm381, %v1778, %v1780
  %v1922 = vsel %vm381, %v1780, %v1782
  %v1923 = vsel %vm381, %v1782, %v1784
  %v1924 = vsel %vm381, %v1786, %v1788
  %v1925 = vsel %vm381, %v1788, %v1790
  %v1926 = vsel %vm381, %v1790, %v1792
  %v1927 = vsel %vm381, %v1792, %v1794
  %v1928 = vsel %vm381, %v1794, %v1796
  %v1929 = vsel %vm381, %v1798, %v1800
  %v1930 = vsel %vm381, %v1800, %v1802
  %v1931 = vsel %vm381, %v1802, %v1804
  %v1932 = vsel %vm381, %v1804, %v1806
  %v1933 = vsel %vm381, %v1806, %v1808
  %v1934 = vsel %vm381, %v1810, %v1812
  %v1935 = vsel %vm381, %v1812, %v1814
  %v1936 = vsel %vm381, %v1814, %v1816
  %v1937 = vsel %vm381, %v1816, %v1818
  %v1938 = vsel %vm381, %v1818, %v1820
  %v1939 = vsel %vm381, %v1822, %v1824
  %v1940 = vsel %vm381, %v1824, %v1826
  %v1941 = vsel %vm381, %v1826, %v1828
  %v1942 = vsel %vm381, %v1828, %v1830
  %v1943 = vsel %vm381, %v1830, %v1832
  %v1944 = vsel %vm381, %v1834, %v1836
  %v1945 = vsel %vm381, %v1836, %v1838
  %v1946 = vsel %vm381, %v1838, %v1840
  %v1947 = vsel %vm381, %v1840, %v1842
  %v1948 = vsel %vm381, %v1842, %v1844
  %v1949 = vsel %vm381, %v1846, %v1848
  %v1950 = vsel %vm381, %v1848, %v1850
  %v1951 = vsel %vm381, %v1850, %v1852
  %v1952 = vsel %vm381, %v1852, %v1854
  %v1953 = vsel %vm381, %v1854, %v1856
  %v1954 = vsel %vm381, %v1858, %v1860
  %v1955 = vsel %vm381, %v1860, %v1862
  %v1956 = vsel %vm381, %v1862, %v1864
  %v1957 = vsel %vm381, %v1864, %v1866
  %v1958 = vsel %vm381, %v1866, %v1868
  %v1959 = vsel %vm381, %v1870, %v1872
  %v1960 = vsel %vm381, %v1872, %v1874
  %v1961 = vsel %vm381, %v1874, %v1876
  %v1962 = vsel %vm381, %v1876, %v1878
  %v1963 = vsel %vm381, %v1878, %v1880
  %v1964 = vsel %vm381, %v1882, %v1884
  %v1965 = vsel %vm381, %v1884, %v1886
  %v1966 = vsel %vm381, %v1886, %v1888
  %v1967 = vsel %vm381, %v1888, %v1890
  %v1968 = vsel %vm381, %v1890, %v1892
  %2049 = vrot.lane.b32.xlu0 %v33, 88
  %v2050 = vpop.permute.xlu0 %2049
  %2051 = vrot.lane.b32.xlu0 %v34, 88
  %v2052 = vpop.permute.xlu0 %2051
  %2053 = vrot.lane.b32.xlu0 %v35, 88
  %v2054 = vpop.permute.xlu0 %2053
  %2055 = vrot.lane.b32.xlu0 %v36, 88
  %v2056 = vpop.permute.xlu0 %2055
  %2057 = vrot.lane.b32.xlu0 %v37, 88
  %v2058 = vpop.permute.xlu0 %2057
  %2059 = vrot.lane.b32.xlu0 %v38, 88
  %v2060 = vpop.permute.xlu0 %2059
  %vm2061 = vcmask 719872
  %v2062 = vsel %vm2061, %v2050, %v2052
  %v2063 = vsel %vm2061, %v2052, %v2054
  %v2064 = vsel %vm2061, %v2054, %v2056
  %v2065 = vsel %vm2061, %v2056, %v2058
  %v2066 = vsel %vm2061, %v2058, %v2060
  %v2072 = vld [vmem:[%s1] sm:$0xff]
  %v2073 = vld [vmem:[%s1 + $0x8] sm:$0xff]
  %v2074 = vld [vmem:[%s1 + $0x10] sm:$0xff]
  %v2075 = vld [vmem:[%s1 + $0x18] sm:$0xff]
  %v2076 = vld [vmem:[%s1 + $0x20] sm:$0xff]
  %v2077 = vld [vmem:[%s1 + $0x28] sm:$0xff]
  %v2078 = vld [vmem:[%s1 + $0x30] sm:$0xff]
  %v2079 = vld [vmem:[%s1 + $0x38] sm:$0xff]
  %v2080 = vld [vmem:[%s1 + $0x40] sm:$0xff]
  %v2081 = vld [vmem:[%s1 + $0x48] sm:$0xff]
  %v2082 = vld [vmem:[%s1 + $0x50] sm:$0xff]
  %v2083 = vld [vmem:[%s1 + $0x58] sm:$0xff]
  %v2084 = vld [vmem:[%s1 + $0x60] sm:$0xff]
  %v2085 = vld [vmem:[%s1 + $0x68] sm:$0xff]
  %v2086 = vld [vmem:[%s1 + $0x70] sm:$0xff]
  %v2087 = vld [vmem:[%s1 + $0x78] sm:$0xff]
  %v2088 = vld [vmem:[%s1 + $0x80] sm:$0xff]
  %v2089 = vld [vmem:[%s1 + $0x88] sm:$0xff]
  %v2090 = vld [vmem:[%s1 + $0x90] sm:$0xff]
  %v2091 = vld [vmem:[%s1 + $0x98] sm:$0xff]
  %v2092 = vld [vmem:[%s1 + $0xa0] sm:$0xff]
  %v2093 = vld [vmem:[%s1 + $0xa8] sm:$0xff]
  %v2094 = vld [vmem:[%s1 + $0xb0] sm:$0xff]
  %v2095 = vld [vmem:[%s1 + $0xb8] sm:$0xff]
  %v2096 = vld [vmem:[%s1 + $0xc0] sm:$0xff]
  %v2097 = vld [vmem:[%s1 + $0xc8] sm:$0xff]
  %v2098 = vld [vmem:[%s1 + $0xd0] sm:$0xff]
  %v2099 = vld [vmem:[%s1 + $0xd8] sm:$0xff]
  %v2100 = vld [vmem:[%s1 + $0xe0] sm:$0xff]
  %v2101 = vld [vmem:[%s1 + $0xe8] sm:$0xff]
  %v2102 = vld [vmem:[%s1 + $0xf0] sm:$0xff]
  %v2103 = vld [vmem:[%s1 + $0xf8] sm:$0xff]
  %v2104 = vld [vmem:[%s1 + $0x100] sm:$0xff]
  %v2105 = vld [vmem:[%s1 + $0x108] sm:$0xff]
  %v2106 = vld [vmem:[%s1 + $0x110] sm:$0xff]
  %v2107 = vld [vmem:[%s1 + $0x118] sm:$0xff]
  %v2108 = vld [vmem:[%s1 + $0x120] sm:$0xff]
  %v2109 = vld [vmem:[%s1 + $0x128] sm:$0xff]
  %v2110 = vld [vmem:[%s1 + $0x130] sm:$0xff]
  %v2111 = vld [vmem:[%s1 + $0x138] sm:$0xff]
  %v2112 = vld [vmem:[%s1 + $0x140] sm:$0xff]
  %v2113 = vld [vmem:[%s1 + $0x148] sm:$0xff]
  %v2114 = vld [vmem:[%s1 + $0x150] sm:$0xff]
  %v2115 = vld [vmem:[%s1 + $0x158] sm:$0xff]
  %v2116 = vld [vmem:[%s1 + $0x160] sm:$0xff]
  %v2117 = vld [vmem:[%s1 + $0x168] sm:$0xff]
  %v2118 = vld [vmem:[%s1 + $0x170] sm:$0xff]
  %v2119 = vld [vmem:[%s1 + $0x178] sm:$0xff]
  %v2120 = vld [vmem:[%s1 + $0x180] sm:$0xff]
  %v2121 = vld [vmem:[%s1 + $0x188] sm:$0xff]
  %v2122 = vld [vmem:[%s1 + $0x190] sm:$0xff]
  %v2123 = vld [vmem:[%s1 + $0x198] sm:$0xff]
  %v2124 = vld [vmem:[%s1 + $0x1a0] sm:$0xff]
  %v2125 = vld [vmem:[%s1 + $0x1a8] sm:$0xff]
  %v2126 = vld [vmem:[%s1 + $0x1b0] sm:$0xff]
  %v2127 = vld [vmem:[%s1 + $0x1b8] sm:$0xff]
  %v2128 = vld [vmem:[%s1 + $0x1c0] sm:$0xff]
  %v2129 = vld [vmem:[%s1 + $0x1c8] sm:$0xff]
  %v2130 = vld [vmem:[%s1 + $0x1d0] sm:$0xff]
  %v2131 = vld [vmem:[%s1 + $0x1d8] sm:$0xff]
  %v2132 = vld [vmem:[%s1 + $0x1e0] sm:$0xff]
  %v2133 = vld [vmem:[%s1 + $0x1e8] sm:$0xff]
  %v2134 = vld [vmem:[%s1 + $0x1f0] sm:$0xff]
  %v2135 = vld [vmem:[%s1 + $0x1f8] sm:$0xff]
  %v2136 = vld [vmem:[%s1 + $0x200] sm:$0xff]
  %v2137 = vld [vmem:[%s1 + $0x208] sm:$0xff]
  %v2138 = vld [vmem:[%s1 + $0x210] sm:$0xff]
  %v2139 = vld [vmem:[%s1 + $0x218] sm:$0xff]
  %v2140 = vld [vmem:[%s1 + $0x220] sm:$0xff]
  %v2141 = vld [vmem:[%s1 + $0x228] sm:$0xff]
  %v2142 = vld [vmem:[%s1 + $0x230] sm:$0xff]
  %v2143 = vld [vmem:[%s1 + $0x238] sm:$0xff]
  %v2144 = vld [vmem:[%s1 + $0x240] sm:$0xff]
  %v2145 = vld [vmem:[%s1 + $0x248] sm:$0xff]
  %v2146 = vld [vmem:[%s1 + $0x250] sm:$0xff]
  %v2147 = vld [vmem:[%s1 + $0x258] sm:$0xff]
  %v2148 = vld [vmem:[%s1 + $0x260] sm:$0xff]
  %v2149 = vld [vmem:[%s1 + $0x268] sm:$0xff]
  %v2150 = vld [vmem:[%s1 + $0x270] sm:$0xff]
  %v2151 = vld [vmem:[%s1 + $0x278] sm:$0xff]
  %v2152 = vld [vmem:[%s1 + $0x280] sm:$0xff]
  %v2153 = vld [vmem:[%s1 + $0x288] sm:$0xff]
  %v2154 = vld [vmem:[%s1 + $0x290] sm:$0xff]
  %v2155 = vld [vmem:[%s1 + $0x298] sm:$0xff]
  %v2156 = vld [vmem:[%s1 + $0x2a0] sm:$0xff]
  %v2157 = vld [vmem:[%s1 + $0x2a8] sm:$0xff]
  %v2158 = vld [vmem:[%s1 + $0x2b0] sm:$0xff]
  %v2159 = vld [vmem:[%s1 + $0x2b8] sm:$0xff]
  %v2160 = vld [vmem:[%s1 + $0x2c0] sm:$0xff]
  %v2161 = vld [vmem:[%s1 + $0x2c8] sm:$0xff]
  %v2162 = vld [vmem:[%s1 + $0x2d0] sm:$0xff]
  %v2163 = vld [vmem:[%s1 + $0x2d8] sm:$0xff]
  %v2164 = vld [vmem:[%s1 + $0x2e0] sm:$0xff]
  %v2165 = vld [vmem:[%s1 + $0x2e8] sm:$0xff]
  %v2166 = vld [vmem:[%s1 + $0x2f0] sm:$0xff]
  %v2167 = vld [vmem:[%s1 + $0x2f8] sm:$0xff]
  %v2168 = vld [vmem:[%s2] sm:$0xff]
  %v2169 = vld [vmem:[%s2 + $0x8] sm:$0xff]
  %v2170 = vld [vmem:[%s2 + $0x10] sm:$0xff]
  %v2171 = vld [vmem:[%s2 + $0x18] sm:$0xff]
  %v2172 = vld [vmem:[%s2 + $0x20] sm:$0xff]
  %v2173 = vld [vmem:[%s2 + $0x28] sm:$0xff]
  %v2174 = vld [vmem:[%s2 + $0x30] sm:$0xff]
  %v2175 = vld [vmem:[%s2 + $0x38] sm:$0xff]
  %v2176 = vld [vmem:[%s2 + $0x40] sm:$0xff]
  %v2177 = vld [vmem:[%s2 + $0x48] sm:$0xff]
  %v2178 = vld [vmem:[%s2 + $0x50] sm:$0xff]
  %v2179 = vld [vmem:[%s2 + $0x58] sm:$0xff]
  %v2180 = vld [vmem:[%s2 + $0x60] sm:$0xff]
  %v2181 = vld [vmem:[%s2 + $0x68] sm:$0xff]
  %v2182 = vld [vmem:[%s2 + $0x70] sm:$0xff]
  %v2183 = vld [vmem:[%s2 + $0x78] sm:$0xff]
  %2185 = vset.pattern.permute.xlu0 0
  %2186 = vperm.xlu0 %2185, %v2168
  %v2187 = vpop.permute.xlu0 %2186
  %2190 = vset.pattern.permute.xlu0 0
  %2191 = vperm.xlu0 %2190, %v2169
  %v2192 = vpop.permute.xlu0 %2191
  %2195 = vset.pattern.permute.xlu0 0
  %2196 = vperm.xlu0 %2195, %v2170
  %v2197 = vpop.permute.xlu0 %2196
  %2200 = vset.pattern.permute.xlu0 0
  %2201 = vperm.xlu0 %2200, %v2171
  %v2202 = vpop.permute.xlu0 %2201
  %2205 = vset.pattern.permute.xlu0 0
  %2206 = vperm.xlu0 %2205, %v2172
  %v2207 = vpop.permute.xlu0 %2206
  %2210 = vset.pattern.permute.xlu0 0
  %2211 = vperm.xlu0 %2210, %v2173
  %v2212 = vpop.permute.xlu0 %2211
  %2215 = vset.pattern.permute.xlu0 0
  %2216 = vperm.xlu0 %2215, %v2174
  %v2217 = vpop.permute.xlu0 %2216
  %2220 = vset.pattern.permute.xlu0 0
  %2221 = vperm.xlu0 %2220, %v2175
  %v2222 = vpop.permute.xlu0 %2221
  %2225 = vset.pattern.permute.xlu0 0
  %2226 = vperm.xlu0 %2225, %v2176
  %v2227 = vpop.permute.xlu0 %2226
  %2230 = vset.pattern.permute.xlu0 0
  %2231 = vperm.xlu0 %2230, %v2177
  %v2232 = vpop.permute.xlu0 %2231
  %2235 = vset.pattern.permute.xlu0 0
  %2236 = vperm.xlu0 %2235, %v2178
  %v2237 = vpop.permute.xlu0 %2236
  %2240 = vset.pattern.permute.xlu0 0
  %2241 = vperm.xlu0 %2240, %v2179
  %v2242 = vpop.permute.xlu0 %2241
  %2245 = vset.pattern.permute.xlu0 0
  %2246 = vperm.xlu0 %2245, %v2180
  %v2247 = vpop.permute.xlu0 %2246
  %2250 = vset.pattern.permute.xlu0 0
  %2251 = vperm.xlu0 %2250, %v2181
  %v2252 = vpop.permute.xlu0 %2251
  %2255 = vset.pattern.permute.xlu0 0
  %2256 = vperm.xlu0 %2255, %v2182
  %v2257 = vpop.permute.xlu0 %2256
  %2260 = vset.pattern.permute.xlu0 0
  %2261 = vperm.xlu0 %2260, %v2183
  %v2262 = vpop.permute.xlu0 %2261
  %vm2264 = vcmask 64512
  %v2266 = vsel %vm2264, %v2077, 0
  %v2269 = vsel %vm2264, %v2083, 0
  %v2272 = vsel %vm2264, %v2089, 0
  %v2275 = vsel %vm2264, %v2095, 0
  %v2278 = vsel %vm2264, %v2101, 0
  %v2281 = vsel %vm2264, %v2107, 0
  %v2284 = vsel %vm2264, %v2113, 0
  %v2287 = vsel %vm2264, %v2119, 0
  %v2290 = vsel %vm2264, %v2125, 0
  %v2293 = vsel %vm2264, %v2131, 0
  %v2296 = vsel %vm2264, %v2137, 0
  %v2299 = vsel %vm2264, %v2143, 0
  %v2302 = vsel %vm2264, %v2149, 0
  %v2305 = vsel %vm2264, %v2155, 0
  %v2308 = vsel %vm2264, %v2161, 0
  %v2311 = vsel %vm2264, %v2167, 0
  %2313 = vmatprep.subr.mxu0 %v33
  %2314 = vmatpush1.msra.mxu0 %v32
  %2315 = vmatprep.subr.mxu0 %v56
  %2316 = vmatpush1.msra.mxu0 %v55
  %2317 = vmatprep.subr.mxu0 %v76
  %2318 = vmatpush1.msra.mxu0 %v75
  %2319 = vmatprep.subr.mxu0 %v96
  %2320 = vmatpush1.msra.mxu0 %v95
  %2321 = vmatprep.subr.mxu0 %v116
  %2322 = vmatpush1.msra.mxu0 %v115
  %2323 = vmatprep.subr.mxu0 %v136
  %2324 = vmatpush1.msra.mxu0 %v135
  %2325 = vmatprep.subr.mxu0 %v156
  %2326 = vmatpush1.msra.mxu0 %v155
  %2327 = vmatprep.subr.mxu0 %v176
  %2328 = vmatpush1.msra.mxu0 %v175
  %2329 = vmatprep.subr.mxu0 %v196
  %2330 = vmatpush1.msra.mxu0 %v195
  %2331 = vmatprep.subr.mxu0 %v219
  %2332 = vmatpush1.msra.mxu0 %v218
  %2333 = vmatprep.subr.mxu0 %v242
  %2334 = vmatpush1.msra.mxu0 %v241
  %2335 = vmatprep.subr.mxu0 %v265
  %2336 = vmatpush1.msra.mxu0 %v264
  %2337 = vmatprep.subr.mxu0 %v288
  %2338 = vmatpush1.msra.mxu0 %v287
  %2339 = vmatprep.subr.mxu0 %v311
  %2340 = vmatpush1.msra.mxu0 %v310
  %2341 = vmatprep.subr.mxu0 %v334
  %2342 = vmatpush1.msra.mxu0 %v333
  %2343 = vmatprep.subr.mxu0 %v357
  %2344 = vmatpush1.msra.mxu0 %v356
  %2345 = vmatprep.subr.mxu0 %v846
  %2346 = vmatpush1.msra.mxu0 %v845
  %2347 = vmatprep.subr.mxu0 %v851
  %2348 = vmatpush1.msra.mxu0 %v850
  %2349 = vmatprep.subr.mxu0 %v856
  %2350 = vmatpush1.msra.mxu0 %v855
  %2351 = vmatprep.subr.mxu0 %v861
  %2352 = vmatpush1.msra.mxu0 %v860
  %2353 = vmatprep.subr.mxu0 %v866
  %2354 = vmatpush1.msra.mxu0 %v865
  %2355 = vmatprep.subr.mxu0 %v871
  %2356 = vmatpush1.msra.mxu0 %v870
  %2357 = vmatprep.subr.mxu0 %v876
  %2358 = vmatpush1.msra.mxu0 %v875
  %2359 = vmatprep.subr.mxu0 %v881
  %2360 = vmatpush1.msra.mxu0 %v880
  %2361 = vmatprep.subr.mxu0 %v886
  %2362 = vmatpush1.msra.mxu0 %v885
  %2363 = vmatprep.subr.mxu0 %v891
  %2364 = vmatpush1.msra.mxu0 %v890
  %2365 = vmatprep.subr.mxu0 %v896
  %2366 = vmatpush1.msra.mxu0 %v895
  %2367 = vmatprep.subr.mxu0 %v901
  %2368 = vmatpush1.msra.mxu0 %v900
  %2369 = vmatprep.subr.mxu0 %v906
  %2370 = vmatpush1.msra.mxu0 %v905
  %2371 = vmatprep.subr.mxu0 %v911
  %2372 = vmatpush1.msra.mxu0 %v910
  %2373 = vmatprep.subr.mxu0 %v916
  %2374 = vmatpush1.msra.mxu0 %v915
  %2375 = vmatprep.subr.mxu0 %v921
  %2376 = vmatpush1.msra.mxu0 %v920
  %2377 = vmatprep.mubr.f32.mxu0 %v2073
  %2378 = vmatmul.mubr.f32.gmra.mrb[0].mxu0 %v2072
  %v2379 = vpop.f32.mrb[0].mxu0
  %v2380 = vadd.f32 %v2187, %v2379
  %v2381 = vpop.f32.mrb[0].mxu0
  %v2382 = vadd.f32 %v2187, %v2381
  %2383 = vmatprep.mubr.f32.mxu0 %v2079
  %2384 = vmatmul.mubr.f32.gmra.mrb[0].mxu0 %v2078
  %v2385 = vpop.f32.mrb[0].mxu0
  %v2386 = vadd.f32 %v2192, %v2385
  %v2387 = vpop.f32.mrb[0].mxu0
  %v2388 = vadd.f32 %v2192, %v2387
  %2389 = vmatprep.mubr.f32.mxu0 %v2085
  %2390 = vmatmul.mubr.f32.gmra.mrb[0].mxu0 %v2084
  %v2391 = vpop.f32.mrb[0].mxu0
  %v2392 = vadd.f32 %v2197, %v2391
  %v2393 = vpop.f32.mrb[0].mxu0
  %v2394 = vadd.f32 %v2197, %v2393
  %2395 = vmatprep.mubr.f32.mxu0 %v2091
  %2396 = vmatmul.mubr.f32.gmra.mrb[0].mxu0 %v2090
  %v2397 = vpop.f32.mrb[0].mxu0
  %v2398 = vadd.f32 %v2202, %v2397
  %v2399 = vpop.f32.mrb[0].mxu0
  %v2400 = vadd.f32 %v2202, %v2399
  %2401 = vmatprep.mubr.f32.mxu0 %v2097
  %2402 = vmatmul.mubr.f32.gmra.mrb[0].mxu0 %v2096
  %v2403 = vpop.f32.mrb[0].mxu0
  %v2404 = vadd.f32 %v2207, %v2403
  %v2405 = vpop.f32.mrb[0].mxu0
  %v2406 = vadd.f32 %v2207, %v2405
  %2407 = vmatprep.mubr.f32.mxu0 %v2103
  %2408 = vmatmul.mubr.f32.gmra.mrb[0].mxu0 %v2102
  %v2409 = vpop.f32.mrb[0].mxu0
  %v2410 = vadd.f32 %v2212, %v2409
  %v2411 = vpop.f32.mrb[0].mxu0
  %v2412 = vadd.f32 %v2212, %v2411
  %2413 = vmatprep.mubr.f32.mxu0 %v2109
  %2414 = vmatmul.mubr.f32.gmra.mrb[0].mxu0 %v2108
  %v2415 = vpop.f32.mrb[0].mxu0
  %v2416 = vadd.f32 %v2217, %v2415
  %v2417 = vpop.f32.mrb[0].mxu0
  %v2418 = vadd.f32 %v2217, %v2417
  %2419 = vmatprep.mubr.f32.mxu0 %v2115
  %2420 = vmatmul.mubr.f32.gmra.mrb[0].mxu0 %v2114
  %v2421 = vpop.f32.mrb[0].mxu0
  %v2422 = vadd.f32 %v2222, %v2421
  %v2423 = vpop.f32.mrb[0].mxu0
  %v2424 = vadd.f32 %v2222, %v2423
  %2425 = vmatprep.mubr.f32.mxu0 %v2121
  %2426 = vmatmul.mubr.f32.gmra.mrb[0].mxu0 %v2120
  %v2427 = vpop.f32.mrb[0].mxu0
  %v2428 = vadd.f32 %v2227, %v2427
  %v2429 = vpop.f32.mrb[0].mxu0
  %v2430 = vadd.f32 %v2227, %v2429
  %2431 = vmatprep.mubr.f32.mxu0 %v2127
  %2432 = vmatmul.mubr.f32.gmra.mrb[0].mxu0 %v2126
  %v2433 = vpop.f32.mrb[0].mxu0
  %v2434 = vadd.f32 %v2232, %v2433
  %v2435 = vpop.f32.mrb[0].mxu0
  %v2436 = vadd.f32 %v2232, %v2435
  %2437 = vmatprep.mubr.f32.mxu0 %v2133
  %2438 = vmatmul.mubr.f32.gmra.mrb[0].mxu0 %v2132
  %v2439 = vpop.f32.mrb[0].mxu0
  %v2440 = vadd.f32 %v2237, %v2439
  %v2441 = vpop.f32.mrb[0].mxu0
  %v2442 = vadd.f32 %v2237, %v2441
  %2443 = vmatprep.mubr.f32.mxu0 %v2139
  %2444 = vmatmul.mubr.f32.gmra.mrb[0].mxu0 %v2138
  %v2445 = vpop.f32.mrb[0].mxu0
  %v2446 = vadd.f32 %v2242, %v2445
  %v2447 = vpop.f32.mrb[0].mxu0
  %v2448 = vadd.f32 %v2242, %v2447
  %2449 = vmatprep.mubr.f32.mxu0 %v2145
  %2450 = vmatmul.mubr.f32.gmra.mrb[0].mxu0 %v2144
  %v2451 = vpop.f32.mrb[0].mxu0
  %v2452 = vadd.f32 %v2247, %v2451
  %v2453 = vpop.f32.mrb[0].mxu0
  %v2454 = vadd.f32 %v2247, %v2453
  %2455 = vmatprep.mubr.f32.mxu0 %v2151
  %2456 = vmatmul.mubr.f32.gmra.mrb[0].mxu0 %v2150
  %v2457 = vpop.f32.mrb[0].mxu0
  %v2458 = vadd.f32 %v2252, %v2457
  %v2459 = vpop.f32.mrb[0].mxu0
  %v2460 = vadd.f32 %v2252, %v2459
  %2461 = vmatprep.mubr.f32.mxu0 %v2157
  %2462 = vmatmul.mubr.f32.gmra.mrb[0].mxu0 %v2156
  %v2463 = vpop.f32.mrb[0].mxu0
  %v2464 = vadd.f32 %v2257, %v2463
  %v2465 = vpop.f32.mrb[0].mxu0
  %v2466 = vadd.f32 %v2257, %v2465
  %2467 = vmatprep.mubr.f32.mxu0 %v2163
  %2468 = vmatmul.mubr.f32.gmra.mrb[0].mxu0 %v2162
  %v2469 = vpop.f32.mrb[0].mxu0
  %v2470 = vadd.f32 %v2262, %v2469
  %v2471 = vpop.f32.mrb[0].mxu0
  %v2472 = vadd.f32 %v2262, %v2471
  %2473 = vdwg.mxu0
  %2474 = vmatprep.subr.mxu0 %v1199
  %2475 = vmatpush1.msra.mxu0 %v1198
  %2476 = vmatprep.subr.mxu0 %v1204
  %2477 = vmatpush1.msra.mxu0 %v1203
  %2478 = vmatprep.subr.mxu0 %v1209
  %2479 = vmatpush1.msra.mxu0 %v1208
  %2480 = vmatprep.subr.mxu0 %v1214
  %2481 = vmatpush1.msra.mxu0 %v1213
  %2482 = vmatprep.subr.mxu0 %v1219
  %2483 = vmatpush1.msra.mxu0 %v1218
  %2484 = vmatprep.subr.mxu0 %v1224
  %2485 = vmatpush1.msra.mxu0 %v1223
  %2486 = vmatprep.subr.mxu0 %v1229
  %2487 = vmatpush1.msra.mxu0 %v1228
  %2488 = vmatprep.subr.mxu0 %v1234
  %2489 = vmatpush1.msra.mxu0 %v1233
  %2490 = vmatprep.subr.mxu0 %v1239
  %2491 = vmatpush1.msra.mxu0 %v1238
  %2492 = vmatprep.subr.mxu0 %v1244
  %2493 = vmatpush1.msra.mxu0 %v1243
  %2494 = vmatprep.subr.mxu0 %v1249
  %2495 = vmatpush1.msra.mxu0 %v1248
  %2496 = vmatprep.subr.mxu0 %v1254
  %2497 = vmatpush1.msra.mxu0 %v1253
  %2498 = vmatprep.subr.mxu0 %v1259
  %2499 = vmatpush1.msra.mxu0 %v1258
  %2500 = vmatprep.subr.mxu0 %v1264
  %2501 = vmatpush1.msra.mxu0 %v1263
  %2502 = vmatprep.subr.mxu0 %v1269
  %2503 = vmatpush1.msra.mxu0 %v1268
  %2504 = vmatprep.subr.mxu0 %v1274
  %2505 = vmatpush1.msra.mxu0 %v1273
  %2506 = vmatprep.subr.mxu0 %v1552
  %2507 = vmatpush1.msra.mxu0 %v1551
  %2508 = vmatprep.subr.mxu0 %v1557
  %2509 = vmatpush1.msra.mxu0 %v1556
  %2510 = vmatprep.subr.mxu0 %v1562
  %2511 = vmatpush1.msra.mxu0 %v1561
  %2512 = vmatprep.subr.mxu0 %v1567
  %2513 = vmatpush1.msra.mxu0 %v1566
  %2514 = vmatprep.subr.mxu0 %v1572
  %2515 = vmatpush1.msra.mxu0 %v1571
  %2516 = vmatprep.subr.mxu0 %v1577
  %2517 = vmatpush1.msra.mxu0 %v1576
  %2518 = vmatprep.subr.mxu0 %v1582
  %2519 = vmatpush1.msra.mxu0 %v1581
  %2520 = vmatprep.subr.mxu0 %v1587
  %2521 = vmatpush1.msra.mxu0 %v1586
  %2522 = vmatprep.subr.mxu0 %v1592
  %2523 = vmatpush1.msra.mxu0 %v1591
  %2524 = vmatprep.subr.mxu0 %v1597
  %2525 = vmatpush1.msra.mxu0 %v1596
  %2526 = vmatprep.subr.mxu0 %v1602
  %2527 = vmatpush1.msra.mxu0 %v1601
  %2528 = vmatprep.subr.mxu0 %v1607
  %2529 = vmatpush1.msra.mxu0 %v1606
  %2530 = vmatprep.subr.mxu0 %v1612
  %2531 = vmatpush1.msra.mxu0 %v1611
  %2532 = vmatprep.subr.mxu0 %v1617
  %2533 = vmatpush1.msra.mxu0 %v1616
  %2534 = vmatprep.subr.mxu0 %v1622
  %2535 = vmatpush1.msra.mxu0 %v1621
  %2536 = vmatprep.subr.mxu0 %v1627
  %2537 = vmatpush1.msra.mxu0 %v1626
  %2538 = vmatprep.mubr.f32.mxu0 %v2075
  %2539 = vmatmul.mubr.f32.gmra.mrb[0].mxu0 %v2074
  %v2540 = vpop.f32.mrb[0].mxu0
  %v2541 = vadd.f32 %v2380, %v2540
  %v2542 = vpop.f32.mrb[0].mxu0
  %v2543 = vadd.f32 %v2382, %v2542
  %2544 = vmatprep.mubr.f32.mxu0 %v2081
  %2545 = vmatmul.mubr.f32.gmra.mrb[0].mxu0 %v2080
  %v2546 = vpop.f32.mrb[0].mxu0
  %v2547 = vadd.f32 %v2386, %v2546
  %v2548 = vpop.f32.mrb[0].mxu0
  %v2549 = vadd.f32 %v2388, %v2548
  %2550 = vmatprep.mubr.f32.mxu0 %v2087
  %2551 = vmatmul.mubr.f32.gmra.mrb[0].mxu0 %v2086
  %v2552 = vpop.f32.mrb[0].mxu0
  %v2553 = vadd.f32 %v2392, %v2552
  %v2554 = vpop.f32.mrb[0].mxu0
  %v2555 = vadd.f32 %v2394, %v2554
  %2556 = vmatprep.mubr.f32.mxu0 %v2093
  %2557 = vmatmul.mubr.f32.gmra.mrb[0].mxu0 %v2092
  %v2558 = vpop.f32.mrb[0].mxu0
  %v2559 = vadd.f32 %v2398, %v2558
  %v2560 = vpop.f32.mrb[0].mxu0
  %v2561 = vadd.f32 %v2400, %v2560
  %2562 = vmatprep.mubr.f32.mxu0 %v2099
  %2563 = vmatmul.mubr.f32.gmra.mrb[0].mxu0 %v2098
  %v2564 = vpop.f32.mrb[0].mxu0
  %v2565 = vadd.f32 %v2404, %v2564
  %v2566 = vpop.f32.mrb[0].mxu0
  %v2567 = vadd.f32 %v2406, %v2566
  %2568 = vmatprep.mubr.f32.mxu0 %v2105
  %2569 = vmatmul.mubr.f32.gmra.mrb[0].mxu0 %v2104
  %v2570 = vpop.f32.mrb[0].mxu0
  %v2571 = vadd.f32 %v2410, %v2570
  %v2572 = vpop.f32.mrb[0].mxu0
  %v2573 = vadd.f32 %v2412, %v2572
  %2574 = vmatprep.mubr.f32.mxu0 %v2111
  %2575 = vmatmul.mubr.f32.gmra.mrb[0].mxu0 %v2110
  %v2576 = vpop.f32.mrb[0].mxu0
  %v2577 = vadd.f32 %v2416, %v2576
  %v2578 = vpop.f32.mrb[0].mxu0
  %v2579 = vadd.f32 %v2418, %v2578
  %2580 = vmatprep.mubr.f32.mxu0 %v2117
  %2581 = vmatmul.mubr.f32.gmra.mrb[0].mxu0 %v2116
  %v2582 = vpop.f32.mrb[0].mxu0
  %v2583 = vadd.f32 %v2422, %v2582
  %v2584 = vpop.f32.mrb[0].mxu0
  %v2585 = vadd.f32 %v2424, %v2584
  %2586 = vmatprep.mubr.f32.mxu0 %v2123
  %2587 = vmatmul.mubr.f32.gmra.mrb[0].mxu0 %v2122
  %v2588 = vpop.f32.mrb[0].mxu0
  %v2589 = vadd.f32 %v2428, %v2588
  %v2590 = vpop.f32.mrb[0].mxu0
  %v2591 = vadd.f32 %v2430, %v2590
  %2592 = vmatprep.mubr.f32.mxu0 %v2129
  %2593 = vmatmul.mubr.f32.gmra.mrb[0].mxu0 %v2128
  %v2594 = vpop.f32.mrb[0].mxu0
  %v2595 = vadd.f32 %v2434, %v2594
  %v2596 = vpop.f32.mrb[0].mxu0
  %v2597 = vadd.f32 %v2436, %v2596
  %2598 = vmatprep.mubr.f32.mxu0 %v2135
  %2599 = vmatmul.mubr.f32.gmra.mrb[0].mxu0 %v2134
  %v2600 = vpop.f32.mrb[0].mxu0
  %v2601 = vadd.f32 %v2440, %v2600
  %v2602 = vpop.f32.mrb[0].mxu0
  %v2603 = vadd.f32 %v2442, %v2602
  %2604 = vmatprep.mubr.f32.mxu0 %v2141
  %2605 = vmatmul.mubr.f32.gmra.mrb[0].mxu0 %v2140
  %v2606 = vpop.f32.mrb[0].mxu0
  %v2607 = vadd.f32 %v2446, %v2606
  %v2608 = vpop.f32.mrb[0].mxu0
  %v2609 = vadd.f32 %v2448, %v2608
  %2610 = vmatprep.mubr.f32.mxu0 %v2147
  %2611 = vmatmul.mubr.f32.gmra.mrb[0].mxu0 %v2146
  %v2612 = vpop.f32.mrb[0].mxu0
  %v2613 = vadd.f32 %v2452, %v2612
  %v2614 = vpop.f32.mrb[0].mxu0
  %v2615 = vadd.f32 %v2454, %v2614
  %2616 = vmatprep.mubr.f32.mxu0 %v2153
  %2617 = vmatmul.mubr.f32.gmra.mrb[0].mxu0 %v2152
  %v2618 = vpop.f32.mrb[0].mxu0
  %v2619 = vadd.f32 %v2458, %v2618
  %v2620 = vpop.f32.mrb[0].mxu0
  %v2621 = vadd.f32 %v2460, %v2620
  %2622 = vmatprep.mubr.f32.mxu0 %v2159
  %2623 = vmatmul.mubr.f32.gmra.mrb[0].mxu0 %v2158
  %v2624 = vpop.f32.mrb[0].mxu0
  %v2625 = vadd.f32 %v2464, %v2624
  %v2626 = vpop.f32.mrb[0].mxu0
  %v2627 = vadd.f32 %v2466, %v2626
  %2628 = vmatprep.mubr.f32.mxu0 %v2165
  %2629 = vmatmul.mubr.f32.gmra.mrb[0].mxu0 %v2164
  %v2630 = vpop.f32.mrb[0].mxu0
  %v2631 = vadd.f32 %v2470, %v2630
  %v2632 = vpop.f32.mrb[0].mxu0
  %v2633 = vadd.f32 %v2472, %v2632
  %2634 = vdwg.mxu0
  %2635 = vmatprep.subr.mxu0 %v384
  %2636 = vmatpush1.msra.mxu0 %v383
  %2637 = vmatprep.subr.mxu0 %v1895
  %2638 = vmatpush1.msra.mxu0 %v1894
  %2639 = vmatprep.subr.mxu0 %v1900
  %2640 = vmatpush1.msra.mxu0 %v1899
  %2641 = vmatprep.subr.mxu0 %v1905
  %2642 = vmatpush1.msra.mxu0 %v1904
  %2643 = vmatprep.subr.mxu0 %v1910
  %2644 = vmatpush1.msra.mxu0 %v1909
  %2645 = vmatprep.subr.mxu0 %v1915
  %2646 = vmatpush1.msra.mxu0 %v1914
  %2647 = vmatprep.subr.mxu0 %v1920
  %2648 = vmatpush1.msra.mxu0 %v1919
  %2649 = vmatprep.subr.mxu0 %v1925
  %2650 = vmatpush1.msra.mxu0 %v1924
  %2651 = vmatprep.subr.mxu0 %v1930
  %2652 = vmatpush1.msra.mxu0 %v1929
  %2653 = vmatprep.subr.mxu0 %v1935
  %2654 = vmatpush1.msra.mxu0 %v1934
  %2655 = vmatprep.subr.mxu0 %v1940
  %2656 = vmatpush1.msra.mxu0 %v1939
  %2657 = vmatprep.subr.mxu0 %v1945
  %2658 = vmatpush1.msra.mxu0 %v1944
  %2659 = vmatprep.subr.mxu0 %v1950
  %2660 = vmatpush1.msra.mxu0 %v1949
  %2661 = vmatprep.subr.mxu0 %v1955
  %2662 = vmatpush1.msra.mxu0 %v1954
  %2663 = vmatprep.subr.mxu0 %v1960
  %2664 = vmatpush1.msra.mxu0 %v1959
  %2665 = vmatprep.subr.mxu0 %v1965
  %2666 = vmatpush1.msra.mxu0 %v1964
  %2667 = vmatprep.subr.mxu0 %v2063
  %2668 = vmatpush1.msra.mxu0 %v2062
  %2669 = vmatprep.subr.mxu0 0.0
  %2670 = vmatpush1.msra.mxu0 0.0
  %2671 = vmatprep.subr.mxu0 0.0
  %2672 = vmatpush1.msra.mxu0 0.0
  %2673 = vmatprep.subr.mxu0 0.0
  %2674 = vmatpush1.msra.mxu0 0.0
  %2675 = vmatprep.subr.mxu0 0.0
  %2676 = vmatpush1.msra.mxu0 0.0
  %2677 = vmatprep.subr.mxu0 0.0
  %2678 = vmatpush1.msra.mxu0 0.0
  %2679 = vmatprep.subr.mxu0 0.0
  %2680 = vmatpush1.msra.mxu0 0.0
  %2681 = vmatprep.subr.mxu0 0.0
  %2682 = vmatpush1.msra.mxu0 0.0
  %2683 = vmatprep.subr.mxu0 0.0
  %2684 = vmatpush1.msra.mxu0 0.0
  %2685 = vmatprep.subr.mxu0 0.0
  %2686 = vmatpush1.msra.mxu0 0.0
  %2687 = vmatprep.subr.mxu0 0.0
  %2688 = vmatpush1.msra.mxu0 0.0
  %2689 = vmatprep.subr.mxu0 0.0
  %2690 = vmatpush1.msra.mxu0 0.0
  %2691 = vmatprep.subr.mxu0 0.0
  %2692 = vmatpush1.msra.mxu0 0.0
  %2693 = vmatprep.subr.mxu0 0.0
  %2694 = vmatpush1.msra.mxu0 0.0
  %2695 = vmatprep.subr.mxu0 0.0
  %2696 = vmatpush1.msra.mxu0 0.0
  %2697 = vmatprep.subr.mxu0 0.0
  %2698 = vmatpush1.msra.mxu0 0.0
  %2699 = vmatprep.mubr.f32.mxu0 %v2266
  %2700 = vmatmul.mubr.f32.gmra.mrb[0].mxu0 %v2076
  %v2701 = vpop.f32.mrb[0].mxu0
  %v2702 = vadd.f32 %v2541, %v2701
  %v2703 = vpop.f32.mrb[0].mxu0
  %v2704 = vadd.f32 %v2543, %v2703
  %2705 = vmatprep.mubr.f32.mxu0 %v2269
  %2706 = vmatmul.mubr.f32.gmra.mrb[0].mxu0 %v2082
  %v2707 = vpop.f32.mrb[0].mxu0
  %v2708 = vadd.f32 %v2547, %v2707
  %v2709 = vpop.f32.mrb[0].mxu0
  %v2710 = vadd.f32 %v2549, %v2709
  %2711 = vmatprep.mubr.f32.mxu0 %v2272
  %2712 = vmatmul.mubr.f32.gmra.mrb[0].mxu0 %v2088
  %v2713 = vpop.f32.mrb[0].mxu0
  %v2714 = vadd.f32 %v2553, %v2713
  %v2715 = vpop.f32.mrb[0].mxu0
  %v2716 = vadd.f32 %v2555, %v2715
  %2717 = vmatprep.mubr.f32.mxu0 %v2275
  %2718 = vmatmul.mubr.f32.gmra.mrb[0].mxu0 %v2094
  %v2719 = vpop.f32.mrb[0].mxu0
  %v2720 = vadd.f32 %v2559, %v2719
  %v2721 = vpop.f32.mrb[0].mxu0
  %v2722 = vadd.f32 %v2561, %v2721
  %2723 = vmatprep.mubr.f32.mxu0 %v2278
  %2724 = vmatmul.mubr.f32.gmra.mrb[0].mxu0 %v2100
  %v2725 = vpop.f32.mrb[0].mxu0
  %v2726 = vadd.f32 %v2565, %v2725
  %v2727 = vpop.f32.mrb[0].mxu0
  %v2728 = vadd.f32 %v2567, %v2727
  %2729 = vmatprep.mubr.f32.mxu0 %v2281
  %2730 = vmatmul.mubr.f32.gmra.mrb[0].mxu0 %v2106
  %v2731 = vpop.f32.mrb[0].mxu0
  %v2732 = vadd.f32 %v2571, %v2731
  %v2733 = vpop.f32.mrb[0].mxu0
  %v2734 = vadd.f32 %v2573, %v2733
  %2735 = vmatprep.mubr.f32.mxu0 %v2284
  %2736 = vmatmul.mubr.f32.gmra.mrb[0].mxu0 %v2112
  %v2737 = vpop.f32.mrb[0].mxu0
  %v2738 = vadd.f32 %v2577, %v2737
  %v2739 = vpop.f32.mrb[0].mxu0
  %v2740 = vadd.f32 %v2579, %v2739
  %2741 = vmatprep.mubr.f32.mxu0 %v2287
  %2742 = vmatmul.mubr.f32.gmra.mrb[0].mxu0 %v2118
  %v2743 = vpop.f32.mrb[0].mxu0
  %v2744 = vadd.f32 %v2583, %v2743
  %v2745 = vpop.f32.mrb[0].mxu0
  %v2746 = vadd.f32 %v2585, %v2745
  %2747 = vmatprep.mubr.f32.mxu0 %v2290
  %2748 = vmatmul.mubr.f32.gmra.mrb[0].mxu0 %v2124
  %v2749 = vpop.f32.mrb[0].mxu0
  %v2750 = vadd.f32 %v2589, %v2749
  %v2751 = vpop.f32.mrb[0].mxu0
  %v2752 = vadd.f32 %v2591, %v2751
  %2753 = vmatprep.mubr.f32.mxu0 %v2293
  %2754 = vmatmul.mubr.f32.gmra.mrb[0].mxu0 %v2130
  %v2755 = vpop.f32.mrb[0].mxu0
  %v2756 = vadd.f32 %v2595, %v2755
  %v2757 = vpop.f32.mrb[0].mxu0
  %v2758 = vadd.f32 %v2597, %v2757
  %2759 = vmatprep.mubr.f32.mxu0 %v2296
  %2760 = vmatmul.mubr.f32.gmra.mrb[0].mxu0 %v2136
  %v2761 = vpop.f32.mrb[0].mxu0
  %v2762 = vadd.f32 %v2601, %v2761
  %v2763 = vpop.f32.mrb[0].mxu0
  %v2764 = vadd.f32 %v2603, %v2763
  %2765 = vmatprep.mubr.f32.mxu0 %v2299
  %2766 = vmatmul.mubr.f32.gmra.mrb[0].mxu0 %v2142
  %v2767 = vpop.f32.mrb[0].mxu0
  %v2768 = vadd.f32 %v2607, %v2767
  %v2769 = vpop.f32.mrb[0].mxu0
  %v2770 = vadd.f32 %v2609, %v2769
  %2771 = vmatprep.mubr.f32.mxu0 %v2302
  %2772 = vmatmul.mubr.f32.gmra.mrb[0].mxu0 %v2148
  %v2773 = vpop.f32.mrb[0].mxu0
  %v2774 = vadd.f32 %v2613, %v2773
  %v2775 = vpop.f32.mrb[0].mxu0
  %v2776 = vadd.f32 %v2615, %v2775
  %2777 = vmatprep.mubr.f32.mxu0 %v2305
  %2778 = vmatmul.mubr.f32.gmra.mrb[0].mxu0 %v2154
  %v2779 = vpop.f32.mrb[0].mxu0
  %v2780 = vadd.f32 %v2619, %v2779
  %v2781 = vpop.f32.mrb[0].mxu0
  %v2782 = vadd.f32 %v2621, %v2781
  %2783 = vmatprep.mubr.f32.mxu0 %v2308
  %2784 = vmatmul.mubr.f32.gmra.mrb[0].mxu0 %v2160
  %v2785 = vpop.f32.mrb[0].mxu0
  %v2786 = vadd.f32 %v2625, %v2785
  %v2787 = vpop.f32.mrb[0].mxu0
  %v2788 = vadd.f32 %v2627, %v2787
  %2789 = vmatprep.mubr.f32.mxu0 %v2311
  %2790 = vmatmul.mubr.f32.gmra.mrb[0].mxu0 %v2166
  %v2791 = vpop.f32.mrb[0].mxu0
  %v2792 = vadd.f32 %v2631, %v2791
  %v2793 = vpop.f32.mrb[0].mxu0
  %v2794 = vadd.f32 %v2633, %v2793
  %2795 = vdwg.mxu0
  %2796 = vmatprep.subr.mxu0 %v35
  %2797 = vmatpush1.msra.mxu0 %v34
  %2798 = vmatprep.subr.mxu0 %v58
  %2799 = vmatpush1.msra.mxu0 %v57
  %2800 = vmatprep.subr.mxu0 %v78
  %2801 = vmatpush1.msra.mxu0 %v77
  %2802 = vmatprep.subr.mxu0 %v98
  %2803 = vmatpush1.msra.mxu0 %v97
  %2804 = vmatprep.subr.mxu0 %v118
  %2805 = vmatpush1.msra.mxu0 %v117
  %2806 = vmatprep.subr.mxu0 %v138
  %2807 = vmatpush1.msra.mxu0 %v137
  %2808 = vmatprep.subr.mxu0 %v158
  %2809 = vmatpush1.msra.mxu0 %v157
  %2810 = vmatprep.subr.mxu0 %v178
  %2811 = vmatpush1.msra.mxu0 %v177
  %2812 = vmatprep.subr.mxu0 %v198
  %2813 = vmatpush1.msra.mxu0 %v197
  %2814 = vmatprep.subr.mxu0 %v221
  %2815 = vmatpush1.msra.mxu0 %v220
  %2816 = vmatprep.subr.mxu0 %v244
  %2817 = vmatpush1.msra.mxu0 %v243
  %2818 = vmatprep.subr.mxu0 %v267
  %2819 = vmatpush1.msra.mxu0 %v266
  %2820 = vmatprep.subr.mxu0 %v290
  %2821 = vmatpush1.msra.mxu0 %v289
  %2822 = vmatprep.subr.mxu0 %v313
  %2823 = vmatpush1.msra.mxu0 %v312
  %2824 = vmatprep.subr.mxu0 %v336
  %2825 = vmatpush1.msra.mxu0 %v335
  %2826 = vmatprep.subr.mxu0 %v359
  %2827 = vmatpush1.msra.mxu0 %v358
  %2828 = vmatprep.subr.mxu0 %v848
  %2829 = vmatpush1.msra.mxu0 %v847
  %2830 = vmatprep.subr.mxu0 %v853
  %2831 = vmatpush1.msra.mxu0 %v852
  %2832 = vmatprep.subr.mxu0 %v858
  %2833 = vmatpush1.msra.mxu0 %v857
  %2834 = vmatprep.subr.mxu0 %v863
  %2835 = vmatpush1.msra.mxu0 %v862
  %2836 = vmatprep.subr.mxu0 %v868
  %2837 = vmatpush1.msra.mxu0 %v867
  %2838 = vmatprep.subr.mxu0 %v873
  %2839 = vmatpush1.msra.mxu0 %v872
  %2840 = vmatprep.subr.mxu0 %v878
  %2841 = vmatpush1.msra.mxu0 %v877
  %2842 = vmatprep.subr.mxu0 %v883
  %2843 = vmatpush1.msra.mxu0 %v882
  %2844 = vmatprep.subr.mxu0 %v888
  %2845 = vmatpush1.msra.mxu0 %v887
  %2846 = vmatprep.subr.mxu0 %v893
  %2847 = vmatpush1.msra.mxu0 %v892
  %2848 = vmatprep.subr.mxu0 %v898
  %2849 = vmatpush1.msra.mxu0 %v897
  %2850 = vmatprep.subr.mxu0 %v903
  %2851 = vmatpush1.msra.mxu0 %v902
  %2852 = vmatprep.subr.mxu0 %v908
  %2853 = vmatpush1.msra.mxu0 %v907
  %2854 = vmatprep.subr.mxu0 %v913
  %2855 = vmatpush1.msra.mxu0 %v912
  %2856 = vmatprep.subr.mxu0 %v918
  %2857 = vmatpush1.msra.mxu0 %v917
  %2858 = vmatprep.subr.mxu0 %v923
  %2859 = vmatpush1.msra.mxu0 %v922
  %2860 = vmatprep.mubr.f32.mxu0 %v2073
  %2861 = vmatmul.mubr.f32.gmra.mrb[0].mxu0 %v2072
  %v2862 = vpop.f32.mrb[0].mxu0
  %v2863 = vadd.f32 %v2187, %v2862
  %v2864 = vpop.f32.mrb[0].mxu0
  %v2865 = vadd.f32 %v2187, %v2864
  %2866 = vmatprep.mubr.f32.mxu0 %v2079
  %2867 = vmatmul.mubr.f32.gmra.mrb[0].mxu0 %v2078
  %v2868 = vpop.f32.mrb[0].mxu0
  %v2869 = vadd.f32 %v2192, %v2868
  %v2870 = vpop.f32.mrb[0].mxu0
  %v2871 = vadd.f32 %v2192, %v2870
  %2872 = vmatprep.mubr.f32.mxu0 %v2085
  %2873 = vmatmul.mubr.f32.gmra.mrb[0].mxu0 %v2084
  %v2874 = vpop.f32.mrb[0].mxu0
  %v2875 = vadd.f32 %v2197, %v2874
  %v2876 = vpop.f32.mrb[0].mxu0
  %v2877 = vadd.f32 %v2197, %v2876
  %2878 = vmatprep.mubr.f32.mxu0 %v2091
  %2879 = vmatmul.mubr.f32.gmra.mrb[0].mxu0 %v2090
  %v2880 = vpop.f32.mrb[0].mxu0
  %v2881 = vadd.f32 %v2202, %v2880
  %v2882 = vpop.f32.mrb[0].mxu0
  %v2883 = vadd.f32 %v2202, %v2882
  %2884 = vmatprep.mubr.f32.mxu0 %v2097
  %2885 = vmatmul.mubr.f32.gmra.mrb[0].mxu0 %v2096
  %v2886 = vpop.f32.mrb[0].mxu0
  %v2887 = vadd.f32 %v2207, %v2886
  %v2888 = vpop.f32.mrb[0].mxu0
  %v2889 = vadd.f32 %v2207, %v2888
  %2890 = vmatprep.mubr.f32.mxu0 %v2103
  %2891 = vmatmul.mubr.f32.gmra.mrb[0].mxu0 %v2102
  %v2892 = vpop.f32.mrb[0].mxu0
  %v2893 = vadd.f32 %v2212, %v2892
  %v2894 = vpop.f32.mrb[0].mxu0
  %v2895 = vadd.f32 %v2212, %v2894
  %2896 = vmatprep.mubr.f32.mxu0 %v2109
  %2897 = vmatmul.mubr.f32.gmra.mrb[0].mxu0 %v2108
  %v2898 = vpop.f32.mrb[0].mxu0
  %v2899 = vadd.f32 %v2217, %v2898
  %v2900 = vpop.f32.mrb[0].mxu0
  %v2901 = vadd.f32 %v2217, %v2900
  %2902 = vmatprep.mubr.f32.mxu0 %v2115
  %2903 = vmatmul.mubr.f32.gmra.mrb[0].mxu0 %v2114
  %v2904 = vpop.f32.mrb[0].mxu0
  %v2905 = vadd.f32 %v2222, %v2904
  %v2906 = vpop.f32.mrb[0].mxu0
  %v2907 = vadd.f32 %v2222, %v2906
  %2908 = vmatprep.mubr.f32.mxu0 %v2121
  %2909 = vmatmul.mubr.f32.gmra.mrb[0].mxu0 %v2120
  %v2910 = vpop.f32.mrb[0].mxu0
  %v2911 = vadd.f32 %v2227, %v2910
  %v2912 = vpop.f32.mrb[0].mxu0
  %v2913 = vadd.f32 %v2227, %v2912
  %2914 = vmatprep.mubr.f32.mxu0 %v2127
  %2915 = vmatmul.mubr.f32.gmra.mrb[0].mxu0 %v2126
  %v2916 = vpop.f32.mrb[0].mxu0
  %v2917 = vadd.f32 %v2232, %v2916
  %v2918 = vpop.f32.mrb[0].mxu0
  %v2919 = vadd.f32 %v2232, %v2918
  %2920 = vmatprep.mubr.f32.mxu0 %v2133
  %2921 = vmatmul.mubr.f32.gmra.mrb[0].mxu0 %v2132
  %v2922 = vpop.f32.mrb[0].mxu0
  %v2923 = vadd.f32 %v2237, %v2922
  %v2924 = vpop.f32.mrb[0].mxu0
  %v2925 = vadd.f32 %v2237, %v2924
  %2926 = vmatprep.mubr.f32.mxu0 %v2139
  %2927 = vmatmul.mubr.f32.gmra.mrb[0].mxu0 %v2138
  %v2928 = vpop.f32.mrb[0].mxu0
  %v2929 = vadd.f32 %v2242, %v2928
  %v2930 = vpop.f32.mrb[0].mxu0
  %v2931 = vadd.f32 %v2242, %v2930
  %2932 = vmatprep.mubr.f32.mxu0 %v2145
  %2933 = vmatmul.mubr.f32.gmra.mrb[0].mxu0 %v2144
  %v2934 = vpop.f32.mrb[0].mxu0
  %v2935 = vadd.f32 %v2247, %v2934
  %v2936 = vpop.f32.mrb[0].mxu0
  %v2937 = vadd.f32 %v2247, %v2936
  %2938 = vmatprep.mubr.f32.mxu0 %v2151
  %2939 = vmatmul.mubr.f32.gmra.mrb[0].mxu0 %v2150
  %v2940 = vpop.f32.mrb[0].mxu0
  %v2941 = vadd.f32 %v2252, %v2940
  %v2942 = vpop.f32.mrb[0].mxu0
  %v2943 = vadd.f32 %v2252, %v2942
  %2944 = vmatprep.mubr.f32.mxu0 %v2157
  %2945 = vmatmul.mubr.f32.gmra.mrb[0].mxu0 %v2156
  %v2946 = vpop.f32.mrb[0].mxu0
  %v2947 = vadd.f32 %v2257, %v2946
  %v2948 = vpop.f32.mrb[0].mxu0
  %v2949 = vadd.f32 %v2257, %v2948
  %2950 = vmatprep.mubr.f32.mxu0 %v2163
  %2951 = vmatmul.mubr.f32.gmra.mrb[0].mxu0 %v2162
  %v2952 = vpop.f32.mrb[0].mxu0
  %v2953 = vadd.f32 %v2262, %v2952
  %v2954 = vpop.f32.mrb[0].mxu0
  %v2955 = vadd.f32 %v2262, %v2954
  %2956 = vdwg.mxu0
  %2957 = vmatprep.subr.mxu0 %v1201
  %2958 = vmatpush1.msra.mxu0 %v1200
  %2959 = vmatprep.subr.mxu0 %v1206
  %2960 = vmatpush1.msra.mxu0 %v1205
  %2961 = vmatprep.subr.mxu0 %v1211
  %2962 = vmatpush1.msra.mxu0 %v1210
  %2963 = vmatprep.subr.mxu0 %v1216
  %2964 = vmatpush1.msra.mxu0 %v1215
  %2965 = vmatprep.subr.mxu0 %v1221
  %2966 = vmatpush1.msra.mxu0 %v1220
  %2967 = vmatprep.subr.mxu0 %v1226
  %2968 = vmatpush1.msra.mxu0 %v1225
  %2969 = vmatprep.subr.mxu0 %v1231
  %2970 = vmatpush1.msra.mxu0 %v1230
  %2971 = vmatprep.subr.mxu0 %v1236
  %2972 = vmatpush1.msra.mxu0 %v1235
  %2973 = vmatprep.subr.mxu0 %v1241
  %2974 = vmatpush1.msra.mxu0 %v1240
  %2975 = vmatprep.subr.mxu0 %v1246
  %2976 = vmatpush1.msra.mxu0 %v1245
  %2977 = vmatprep.subr.mxu0 %v1251
  %2978 = vmatpush1.msra.mxu0 %v1250
  %2979 = vmatprep.subr.mxu0 %v1256
  %2980 = vmatpush1.msra.mxu0 %v1255
  %2981 = vmatprep.subr.mxu0 %v1261
  %2982 = vmatpush1.msra.mxu0 %v1260
  %2983 = vmatprep.subr.mxu0 %v1266
  %2984 = vmatpush1.msra.mxu0 %v1265
  %2985 = vmatprep.subr.mxu0 %v1271
  %2986 = vmatpush1.msra.mxu0 %v1270
  %2987 = vmatprep.subr.mxu0 %v1276
  %2988 = vmatpush1.msra.mxu0 %v1275
  %2989 = vmatprep.subr.mxu0 %v1554
  %2990 = vmatpush1.msra.mxu0 %v1553
  %2991 = vmatprep.subr.mxu0 %v1559
  %2992 = vmatpush1.msra.mxu0 %v1558
  %2993 = vmatprep.subr.mxu0 %v1564
  %2994 = vmatpush1.msra.mxu0 %v1563
  %2995 = vmatprep.subr.mxu0 %v1569
  %2996 = vmatpush1.msra.mxu0 %v1568
  %2997 = vmatprep.subr.mxu0 %v1574
  %2998 = vmatpush1.msra.mxu0 %v1573
  %2999 = vmatprep.subr.mxu0 %v1579
  %3000 = vmatpush1.msra.mxu0 %v1578
  %3001 = vmatprep.subr.mxu0 %v1584
  %3002 = vmatpush1.msra.mxu0 %v1583
  %3003 = vmatprep.subr.mxu0 %v1589
  %3004 = vmatpush1.msra.mxu0 %v1588
  %3005 = vmatprep.subr.mxu0 %v1594
  %3006 = vmatpush1.msra.mxu0 %v1593
  %3007 = vmatprep.subr.mxu0 %v1599
  %3008 = vmatpush1.msra.mxu0 %v1598
  %3009 = vmatprep.subr.mxu0 %v1604
  %3010 = vmatpush1.msra.mxu0 %v1603
  %3011 = vmatprep.subr.mxu0 %v1609
  %3012 = vmatpush1.msra.mxu0 %v1608
  %3013 = vmatprep.subr.mxu0 %v1614
  %3014 = vmatpush1.msra.mxu0 %v1613
  %3015 = vmatprep.subr.mxu0 %v1619
  %3016 = vmatpush1.msra.mxu0 %v1618
  %3017 = vmatprep.subr.mxu0 %v1624
  %3018 = vmatpush1.msra.mxu0 %v1623
  %3019 = vmatprep.subr.mxu0 %v1629
  %3020 = vmatpush1.msra.mxu0 %v1628
  %3021 = vmatprep.mubr.f32.mxu0 %v2075
  %3022 = vmatmul.mubr.f32.gmra.mrb[0].mxu0 %v2074
  %v3023 = vpop.f32.mrb[0].mxu0
  %v3024 = vadd.f32 %v2863, %v3023
  %v3025 = vpop.f32.mrb[0].mxu0
  %v3026 = vadd.f32 %v2865, %v3025
  %3027 = vmatprep.mubr.f32.mxu0 %v2081
  %3028 = vmatmul.mubr.f32.gmra.mrb[0].mxu0 %v2080
  %v3029 = vpop.f32.mrb[0].mxu0
  %v3030 = vadd.f32 %v2869, %v3029
  %v3031 = vpop.f32.mrb[0].mxu0
  %v3032 = vadd.f32 %v2871, %v3031
  %3033 = vmatprep.mubr.f32.mxu0 %v2087
  %3034 = vmatmul.mubr.f32.gmra.mrb[0].mxu0 %v2086
  %v3035 = vpop.f32.mrb[0].mxu0
  %v3036 = vadd.f32 %v2875, %v3035
  %v3037 = vpop.f32.mrb[0].mxu0
  %v3038 = vadd.f32 %v2877, %v3037
  %3039 = vmatprep.mubr.f32.mxu0 %v2093
  %3040 = vmatmul.mubr.f32.gmra.mrb[0].mxu0 %v2092
  %v3041 = vpop.f32.mrb[0].mxu0
  %v3042 = vadd.f32 %v2881, %v3041
  %v3043 = vpop.f32.mrb[0].mxu0
  %v3044 = vadd.f32 %v2883, %v3043
  %3045 = vmatprep.mubr.f32.mxu0 %v2099
  %3046 = vmatmul.mubr.f32.gmra.mrb[0].mxu0 %v2098
  %v3047 = vpop.f32.mrb[0].mxu0
  %v3048 = vadd.f32 %v2887, %v3047
  %v3049 = vpop.f32.mrb[0].mxu0
  %v3050 = vadd.f32 %v2889, %v3049
  %3051 = vmatprep.mubr.f32.mxu0 %v2105
  %3052 = vmatmul.mubr.f32.gmra.mrb[0].mxu0 %v2104
  %v3053 = vpop.f32.mrb[0].mxu0
  %v3054 = vadd.f32 %v2893, %v3053
  %v3055 = vpop.f32.mrb[0].mxu0
  %v3056 = vadd.f32 %v2895, %v3055
  %3057 = vmatprep.mubr.f32.mxu0 %v2111
  %3058 = vmatmul.mubr.f32.gmra.mrb[0].mxu0 %v2110
  %v3059 = vpop.f32.mrb[0].mxu0
  %v3060 = vadd.f32 %v2899, %v3059
  %v3061 = vpop.f32.mrb[0].mxu0
  %v3062 = vadd.f32 %v2901, %v3061
  %3063 = vmatprep.mubr.f32.mxu0 %v2117
  %3064 = vmatmul.mubr.f32.gmra.mrb[0].mxu0 %v2116
  %v3065 = vpop.f32.mrb[0].mxu0
  %v3066 = vadd.f32 %v2905, %v3065
  %v3067 = vpop.f32.mrb[0].mxu0
  %v3068 = vadd.f32 %v2907, %v3067
  %3069 = vmatprep.mubr.f32.mxu0 %v2123
  %3070 = vmatmul.mubr.f32.gmra.mrb[0].mxu0 %v2122
  %v3071 = vpop.f32.mrb[0].mxu0
  %v3072 = vadd.f32 %v2911, %v3071
  %v3073 = vpop.f32.mrb[0].mxu0
  %v3074 = vadd.f32 %v2913, %v3073
  %3075 = vmatprep.mubr.f32.mxu0 %v2129
  %3076 = vmatmul.mubr.f32.gmra.mrb[0].mxu0 %v2128
  %v3077 = vpop.f32.mrb[0].mxu0
  %v3078 = vadd.f32 %v2917, %v3077
  %v3079 = vpop.f32.mrb[0].mxu0
  %v3080 = vadd.f32 %v2919, %v3079
  %3081 = vmatprep.mubr.f32.mxu0 %v2135
  %3082 = vmatmul.mubr.f32.gmra.mrb[0].mxu0 %v2134
  %v3083 = vpop.f32.mrb[0].mxu0
  %v3084 = vadd.f32 %v2923, %v3083
  %v3085 = vpop.f32.mrb[0].mxu0
  %v3086 = vadd.f32 %v2925, %v3085
  %3087 = vmatprep.mubr.f32.mxu0 %v2141
  %3088 = vmatmul.mubr.f32.gmra.mrb[0].mxu0 %v2140
  %v3089 = vpop.f32.mrb[0].mxu0
  %v3090 = vadd.f32 %v2929, %v3089
  %v3091 = vpop.f32.mrb[0].mxu0
  %v3092 = vadd.f32 %v2931, %v3091
  %3093 = vmatprep.mubr.f32.mxu0 %v2147
  %3094 = vmatmul.mubr.f32.gmra.mrb[0].mxu0 %v2146
  %v3095 = vpop.f32.mrb[0].mxu0
  %v3096 = vadd.f32 %v2935, %v3095
  %v3097 = vpop.f32.mrb[0].mxu0
  %v3098 = vadd.f32 %v2937, %v3097
  %3099 = vmatprep.mubr.f32.mxu0 %v2153
  %3100 = vmatmul.mubr.f32.gmra.mrb[0].mxu0 %v2152
  %v3101 = vpop.f32.mrb[0].mxu0
  %v3102 = vadd.f32 %v2941, %v3101
  %v3103 = vpop.f32.mrb[0].mxu0
  %v3104 = vadd.f32 %v2943, %v3103
  %3105 = vmatprep.mubr.f32.mxu0 %v2159
  %3106 = vmatmul.mubr.f32.gmra.mrb[0].mxu0 %v2158
  %v3107 = vpop.f32.mrb[0].mxu0
  %v3108 = vadd.f32 %v2947, %v3107
  %v3109 = vpop.f32.mrb[0].mxu0
  %v3110 = vadd.f32 %v2949, %v3109
  %3111 = vmatprep.mubr.f32.mxu0 %v2165
  %3112 = vmatmul.mubr.f32.gmra.mrb[0].mxu0 %v2164
  %v3113 = vpop.f32.mrb[0].mxu0
  %v3114 = vadd.f32 %v2953, %v3113
  %v3115 = vpop.f32.mrb[0].mxu0
  %v3116 = vadd.f32 %v2955, %v3115
  %3117 = vdwg.mxu0
  %3118 = vmatprep.subr.mxu0 %v386
  %3119 = vmatpush1.msra.mxu0 %v385
  %3120 = vmatprep.subr.mxu0 %v1897
  %3121 = vmatpush1.msra.mxu0 %v1896
  %3122 = vmatprep.subr.mxu0 %v1902
  %3123 = vmatpush1.msra.mxu0 %v1901
  %3124 = vmatprep.subr.mxu0 %v1907
  %3125 = vmatpush1.msra.mxu0 %v1906
  %3126 = vmatprep.subr.mxu0 %v1912
  %3127 = vmatpush1.msra.mxu0 %v1911
  %3128 = vmatprep.subr.mxu0 %v1917
  %3129 = vmatpush1.msra.mxu0 %v1916
  %3130 = vmatprep.subr.mxu0 %v1922
  %3131 = vmatpush1.msra.mxu0 %v1921
  %3132 = vmatprep.subr.mxu0 %v1927
  %3133 = vmatpush1.msra.mxu0 %v1926
  %3134 = vmatprep.subr.mxu0 %v1932
  %3135 = vmatpush1.msra.mxu0 %v1931
  %3136 = vmatprep.subr.mxu0 %v1937
  %3137 = vmatpush1.msra.mxu0 %v1936
  %3138 = vmatprep.subr.mxu0 %v1942
  %3139 = vmatpush1.msra.mxu0 %v1941
  %3140 = vmatprep.subr.mxu0 %v1947
  %3141 = vmatpush1.msra.mxu0 %v1946
  %3142 = vmatprep.subr.mxu0 %v1952
  %3143 = vmatpush1.msra.mxu0 %v1951
  %3144 = vmatprep.subr.mxu0 %v1957
  %3145 = vmatpush1.msra.mxu0 %v1956
  %3146 = vmatprep.subr.mxu0 %v1962
  %3147 = vmatpush1.msra.mxu0 %v1961
  %3148 = vmatprep.subr.mxu0 %v1967
  %3149 = vmatpush1.msra.mxu0 %v1966
  %3150 = vmatprep.subr.mxu0 %v2065
  %3151 = vmatpush1.msra.mxu0 %v2064
  %3152 = vmatprep.subr.mxu0 0.0
  %3153 = vmatpush1.msra.mxu0 0.0
  %3154 = vmatprep.subr.mxu0 0.0
  %3155 = vmatpush1.msra.mxu0 0.0
  %3156 = vmatprep.subr.mxu0 0.0
  %3157 = vmatpush1.msra.mxu0 0.0
  %3158 = vmatprep.subr.mxu0 0.0
  %3159 = vmatpush1.msra.mxu0 0.0
  %3160 = vmatprep.subr.mxu0 0.0
  %3161 = vmatpush1.msra.mxu0 0.0
  %3162 = vmatprep.subr.mxu0 0.0
  %3163 = vmatpush1.msra.mxu0 0.0
  %3164 = vmatprep.subr.mxu0 0.0
  %3165 = vmatpush1.msra.mxu0 0.0
  %3166 = vmatprep.subr.mxu0 0.0
  %3167 = vmatpush1.msra.mxu0 0.0
  %3168 = vmatprep.subr.mxu0 0.0
  %3169 = vmatpush1.msra.mxu0 0.0
  %3170 = vmatprep.subr.mxu0 0.0
  %3171 = vmatpush1.msra.mxu0 0.0
  %3172 = vmatprep.subr.mxu0 0.0
  %3173 = vmatpush1.msra.mxu0 0.0
  %3174 = vmatprep.subr.mxu0 0.0
  %3175 = vmatpush1.msra.mxu0 0.0
  %3176 = vmatprep.subr.mxu0 0.0
  %3177 = vmatpush1.msra.mxu0 0.0
  %3178 = vmatprep.subr.mxu0 0.0
  %3179 = vmatpush1.msra.mxu0 0.0
  %3180 = vmatprep.subr.mxu0 0.0
  %3181 = vmatpush1.msra.mxu0 0.0
  %3182 = vmatprep.mubr.f32.mxu0 %v2266
  %3183 = vmatmul.mubr.f32.gmra.mrb[0].mxu0 %v2076
  %v3184 = vpop.f32.mrb[0].mxu0
  %v3185 = vadd.f32 %v3024, %v3184
  %v3186 = vpop.f32.mrb[0].mxu0
  %v3187 = vadd.f32 %v3026, %v3186
  %3188 = vmatprep.mubr.f32.mxu0 %v2269
  %3189 = vmatmul.mubr.f32.gmra.mrb[0].mxu0 %v2082
  %v3190 = vpop.f32.mrb[0].mxu0
  %v3191 = vadd.f32 %v3030, %v3190
  %v3192 = vpop.f32.mrb[0].mxu0
  %v3193 = vadd.f32 %v3032, %v3192
  %3194 = vmatprep.mubr.f32.mxu0 %v2272
  %3195 = vmatmul.mubr.f32.gmra.mrb[0].mxu0 %v2088
  %v3196 = vpop.f32.mrb[0].mxu0
  %v3197 = vadd.f32 %v3036, %v3196
  %v3198 = vpop.f32.mrb[0].mxu0
  %v3199 = vadd.f32 %v3038, %v3198
  %3200 = vmatprep.mubr.f32.mxu0 %v2275
  %3201 = vmatmul.mubr.f32.gmra.mrb[0].mxu0 %v2094
  %v3202 = vpop.f32.mrb[0].mxu0
  %v3203 = vadd.f32 %v3042, %v3202
  %v3204 = vpop.f32.mrb[0].mxu0
  %v3205 = vadd.f32 %v3044, %v3204
  %3206 = vmatprep.mubr.f32.mxu0 %v2278
  %3207 = vmatmul.mubr.f32.gmra.mrb[0].mxu0 %v2100
  %v3208 = vpop.f32.mrb[0].mxu0
  %v3209 = vadd.f32 %v3048, %v3208
  %v3210 = vpop.f32.mrb[0].mxu0
  %v3211 = vadd.f32 %v3050, %v3210
  %3212 = vmatprep.mubr.f32.mxu0 %v2281
  %3213 = vmatmul.mubr.f32.gmra.mrb[0].mxu0 %v2106
  %v3214 = vpop.f32.mrb[0].mxu0
  %v3215 = vadd.f32 %v3054, %v3214
  %v3216 = vpop.f32.mrb[0].mxu0
  %v3217 = vadd.f32 %v3056, %v3216
  %3218 = vmatprep.mubr.f32.mxu0 %v2284
  %3219 = vmatmul.mubr.f32.gmra.mrb[0].mxu0 %v2112
  %v3220 = vpop.f32.mrb[0].mxu0
  %v3221 = vadd.f32 %v3060, %v3220
  %v3222 = vpop.f32.mrb[0].mxu0
  %v3223 = vadd.f32 %v3062, %v3222
  %3224 = vmatprep.mubr.f32.mxu0 %v2287
  %3225 = vmatmul.mubr.f32.gmra.mrb[0].mxu0 %v2118
  %v3226 = vpop.f32.mrb[0].mxu0
  %v3227 = vadd.f32 %v3066, %v3226
  %v3228 = vpop.f32.mrb[0].mxu0
  %v3229 = vadd.f32 %v3068, %v3228
  %3230 = vmatprep.mubr.f32.mxu0 %v2290
  %3231 = vmatmul.mubr.f32.gmra.mrb[0].mxu0 %v2124
  %v3232 = vpop.f32.mrb[0].mxu0
  %v3233 = vadd.f32 %v3072, %v3232
  %v3234 = vpop.f32.mrb[0].mxu0
  %v3235 = vadd.f32 %v3074, %v3234
  %3236 = vmatprep.mubr.f32.mxu0 %v2293
  %3237 = vmatmul.mubr.f32.gmra.mrb[0].mxu0 %v2130
  %v3238 = vpop.f32.mrb[0].mxu0
  %v3239 = vadd.f32 %v3078, %v3238
  %v3240 = vpop.f32.mrb[0].mxu0
  %v3241 = vadd.f32 %v3080, %v3240
  %3242 = vmatprep.mubr.f32.mxu0 %v2296
  %3243 = vmatmul.mubr.f32.gmra.mrb[0].mxu0 %v2136
  %v3244 = vpop.f32.mrb[0].mxu0
  %v3245 = vadd.f32 %v3084, %v3244
  %v3246 = vpop.f32.mrb[0].mxu0
  %v3247 = vadd.f32 %v3086, %v3246
  %3248 = vmatprep.mubr.f32.mxu0 %v2299
  %3249 = vmatmul.mubr.f32.gmra.mrb[0].mxu0 %v2142
  %v3250 = vpop.f32.mrb[0].mxu0
  %v3251 = vadd.f32 %v3090, %v3250
  %v3252 = vpop.f32.mrb[0].mxu0
  %v3253 = vadd.f32 %v3092, %v3252
  %3254 = vmatprep.mubr.f32.mxu0 %v2302
  %3255 = vmatmul.mubr.f32.gmra.mrb[0].mxu0 %v2148
  %v3256 = vpop.f32.mrb[0].mxu0
  %v3257 = vadd.f32 %v3096, %v3256
  %v3258 = vpop.f32.mrb[0].mxu0
  %v3259 = vadd.f32 %v3098, %v3258
  %3260 = vmatprep.mubr.f32.mxu0 %v2305
  %3261 = vmatmul.mubr.f32.gmra.mrb[0].mxu0 %v2154
  %v3262 = vpop.f32.mrb[0].mxu0
  %v3263 = vadd.f32 %v3102, %v3262
  %v3264 = vpop.f32.mrb[0].mxu0
  %v3265 = vadd.f32 %v3104, %v3264
  %3266 = vmatprep.mubr.f32.mxu0 %v2308
  %3267 = vmatmul.mubr.f32.gmra.mrb[0].mxu0 %v2160
  %v3268 = vpop.f32.mrb[0].mxu0
  %v3269 = vadd.f32 %v3108, %v3268
  %v3270 = vpop.f32.mrb[0].mxu0
  %v3271 = vadd.f32 %v3110, %v3270
  %3272 = vmatprep.mubr.f32.mxu0 %v2311
  %3273 = vmatmul.mubr.f32.gmra.mrb[0].mxu0 %v2166
  %v3274 = vpop.f32.mrb[0].mxu0
  %v3275 = vadd.f32 %v3114, %v3274
  %v3276 = vpop.f32.mrb[0].mxu0
  %v3277 = vadd.f32 %v3116, %v3276
  %3278 = vdwg.mxu0
  %3279 = vmatprep.subr.mxu0 0.0
  %3280 = vmatpush1.msra.mxu0 %v36
  %3281 = vmatprep.subr.mxu0 0.0
  %3282 = vmatpush1.msra.mxu0 %v53
  %3283 = vmatprep.subr.mxu0 0.0
  %3284 = vmatpush1.msra.mxu0 %v73
  %3285 = vmatprep.subr.mxu0 0.0
  %3286 = vmatpush1.msra.mxu0 %v93
  %3287 = vmatprep.subr.mxu0 0.0
  %3288 = vmatpush1.msra.mxu0 %v113
  %3289 = vmatprep.subr.mxu0 0.0
  %3290 = vmatpush1.msra.mxu0 %v133
  %3291 = vmatprep.subr.mxu0 0.0
  %3292 = vmatpush1.msra.mxu0 %v153
  %3293 = vmatprep.subr.mxu0 0.0
  %3294 = vmatpush1.msra.mxu0 %v173
  %3295 = vmatprep.subr.mxu0 0.0
  %3296 = vmatpush1.msra.mxu0 %v193
  %3297 = vmatprep.subr.mxu0 0.0
  %3298 = vmatpush1.msra.mxu0 %v222
  %3299 = vmatprep.subr.mxu0 0.0
  %3300 = vmatpush1.msra.mxu0 %v245
  %3301 = vmatprep.subr.mxu0 0.0
  %3302 = vmatpush1.msra.mxu0 %v268
  %3303 = vmatprep.subr.mxu0 0.0
  %3304 = vmatpush1.msra.mxu0 %v291
  %3305 = vmatprep.subr.mxu0 0.0
  %3306 = vmatpush1.msra.mxu0 %v314
  %3307 = vmatprep.subr.mxu0 0.0
  %3308 = vmatpush1.msra.mxu0 %v337
  %3309 = vmatprep.subr.mxu0 0.0
  %3310 = vmatpush1.msra.mxu0 %v360
  %3311 = vmatprep.subr.mxu0 0.0
  %3312 = vmatpush1.msra.mxu0 %v849
  %3313 = vmatprep.subr.mxu0 0.0
  %3314 = vmatpush1.msra.mxu0 %v854
  %3315 = vmatprep.subr.mxu0 0.0
  %3316 = vmatpush1.msra.mxu0 %v859
  %3317 = vmatprep.subr.mxu0 0.0
  %3318 = vmatpush1.msra.mxu0 %v864
  %3319 = vmatprep.subr.mxu0 0.0
  %3320 = vmatpush1.msra.mxu0 %v869
  %3321 = vmatprep.subr.mxu0 0.0
  %3322 = vmatpush1.msra.mxu0 %v874
  %3323 = vmatprep.subr.mxu0 0.0
  %3324 = vmatpush1.msra.mxu0 %v879
  %3325 = vmatprep.subr.mxu0 0.0
  %3326 = vmatpush1.msra.mxu0 %v884
  %3327 = vmatprep.subr.mxu0 0.0
  %3328 = vmatpush1.msra.mxu0 %v889
  %3329 = vmatprep.subr.mxu0 0.0
  %3330 = vmatpush1.msra.mxu0 %v894
  %3331 = vmatprep.subr.mxu0 0.0
  %3332 = vmatpush1.msra.mxu0 %v899
  %3333 = vmatprep.subr.mxu0 0.0
  %3334 = vmatpush1.msra.mxu0 %v904
  %3335 = vmatprep.subr.mxu0 0.0
  %3336 = vmatpush1.msra.mxu0 %v909
  %3337 = vmatprep.subr.mxu0 0.0
  %3338 = vmatpush1.msra.mxu0 %v914
  %3339 = vmatprep.subr.mxu0 0.0
  %3340 = vmatpush1.msra.mxu0 %v919
  %3341 = vmatprep.subr.mxu0 0.0
  %3342 = vmatpush1.msra.mxu0 %v924
  %3343 = vmatprep.mubr.f32.mxu0 %v2073
  %3344 = vmatmul.mubr.f32.gmra.mrb[0].mxu0 %v2072
  %v3345 = vpop.f32.mrb[0].mxu0
  %v3346 = vadd.f32 %v2187, %v3345
  %v3347 = vpop.f32.mrb[0].mxu0
  %3348 = vmatprep.mubr.f32.mxu0 %v2079
  %3349 = vmatmul.mubr.f32.gmra.mrb[0].mxu0 %v2078
  %v3350 = vpop.f32.mrb[0].mxu0
  %v3351 = vadd.f32 %v2192, %v3350
  %v3352 = vpop.f32.mrb[0].mxu0
  %3353 = vmatprep.mubr.f32.mxu0 %v2085
  %3354 = vmatmul.mubr.f32.gmra.mrb[0].mxu0 %v2084
  %v3355 = vpop.f32.mrb[0].mxu0
  %v3356 = vadd.f32 %v2197, %v3355
  %v3357 = vpop.f32.mrb[0].mxu0
  %3358 = vmatprep.mubr.f32.mxu0 %v2091
  %3359 = vmatmul.mubr.f32.gmra.mrb[0].mxu0 %v2090
  %v3360 = vpop.f32.mrb[0].mxu0
  %v3361 = vadd.f32 %v2202, %v3360
  %v3362 = vpop.f32.mrb[0].mxu0
  %3363 = vmatprep.mubr.f32.mxu0 %v2097
  %3364 = vmatmul.mubr.f32.gmra.mrb[0].mxu0 %v2096
  %v3365 = vpop.f32.mrb[0].mxu0
  %v3366 = vadd.f32 %v2207, %v3365
  %v3367 = vpop.f32.mrb[0].mxu0
  %3368 = vmatprep.mubr.f32.mxu0 %v2103
  %3369 = vmatmul.mubr.f32.gmra.mrb[0].mxu0 %v2102
  %v3370 = vpop.f32.mrb[0].mxu0
  %v3371 = vadd.f32 %v2212, %v3370
  %v3372 = vpop.f32.mrb[0].mxu0
  %3373 = vmatprep.mubr.f32.mxu0 %v2109
  %3374 = vmatmul.mubr.f32.gmra.mrb[0].mxu0 %v2108
  %v3375 = vpop.f32.mrb[0].mxu0
  %v3376 = vadd.f32 %v2217, %v3375
  %v3377 = vpop.f32.mrb[0].mxu0
  %3378 = vmatprep.mubr.f32.mxu0 %v2115
  %3379 = vmatmul.mubr.f32.gmra.mrb[0].mxu0 %v2114
  %v3380 = vpop.f32.mrb[0].mxu0
  %v3381 = vadd.f32 %v2222, %v3380
  %v3382 = vpop.f32.mrb[0].mxu0
  %3383 = vmatprep.mubr.f32.mxu0 %v2121
  %3384 = vmatmul.mubr.f32.gmra.mrb[0].mxu0 %v2120
  %v3385 = vpop.f32.mrb[0].mxu0
  %v3386 = vadd.f32 %v2227, %v3385
  %v3387 = vpop.f32.mrb[0].mxu0
  %3388 = vmatprep.mubr.f32.mxu0 %v2127
  %3389 = vmatmul.mubr.f32.gmra.mrb[0].mxu0 %v2126
  %v3390 = vpop.f32.mrb[0].mxu0
  %v3391 = vadd.f32 %v2232, %v3390
  %v3392 = vpop.f32.mrb[0].mxu0
  %3393 = vmatprep.mubr.f32.mxu0 %v2133
  %3394 = vmatmul.mubr.f32.gmra.mrb[0].mxu0 %v2132
  %v3395 = vpop.f32.mrb[0].mxu0
  %v3396 = vadd.f32 %v2237, %v3395
  %v3397 = vpop.f32.mrb[0].mxu0
  %3398 = vmatprep.mubr.f32.mxu0 %v2139
  %3399 = vmatmul.mubr.f32.gmra.mrb[0].mxu0 %v2138
  %v3400 = vpop.f32.mrb[0].mxu0
  %v3401 = vadd.f32 %v2242, %v3400
  %v3402 = vpop.f32.mrb[0].mxu0
  %3403 = vmatprep.mubr.f32.mxu0 %v2145
  %3404 = vmatmul.mubr.f32.gmra.mrb[0].mxu0 %v2144
  %v3405 = vpop.f32.mrb[0].mxu0
  %v3406 = vadd.f32 %v2247, %v3405
  %v3407 = vpop.f32.mrb[0].mxu0
  %3408 = vmatprep.mubr.f32.mxu0 %v2151
  %3409 = vmatmul.mubr.f32.gmra.mrb[0].mxu0 %v2150
  %v3410 = vpop.f32.mrb[0].mxu0
  %v3411 = vadd.f32 %v2252, %v3410
  %v3412 = vpop.f32.mrb[0].mxu0
  %3413 = vmatprep.mubr.f32.mxu0 %v2157
  %3414 = vmatmul.mubr.f32.gmra.mrb[0].mxu0 %v2156
  %v3415 = vpop.f32.mrb[0].mxu0
  %v3416 = vadd.f32 %v2257, %v3415
  %v3417 = vpop.f32.mrb[0].mxu0
  %3418 = vmatprep.mubr.f32.mxu0 %v2163
  %3419 = vmatmul.mubr.f32.gmra.mrb[0].mxu0 %v2162
  %v3420 = vpop.f32.mrb[0].mxu0
  %v3421 = vadd.f32 %v2262, %v3420
  %v3422 = vpop.f32.mrb[0].mxu0
  %3423 = vdwg.mxu0
  %3424 = vmatprep.subr.mxu0 0.0
  %3425 = vmatpush1.msra.mxu0 %v1202
  %3426 = vmatprep.subr.mxu0 0.0
  %3427 = vmatpush1.msra.mxu0 %v1207
  %3428 = vmatprep.subr.mxu0 0.0
  %3429 = vmatpush1.msra.mxu0 %v1212
  %3430 = vmatprep.subr.mxu0 0.0
  %3431 = vmatpush1.msra.mxu0 %v1217
  %3432 = vmatprep.subr.mxu0 0.0
  %3433 = vmatpush1.msra.mxu0 %v1222
  %3434 = vmatprep.subr.mxu0 0.0
  %3435 = vmatpush1.msra.mxu0 %v1227
  %3436 = vmatprep.subr.mxu0 0.0
  %3437 = vmatpush1.msra.mxu0 %v1232
  %3438 = vmatprep.subr.mxu0 0.0
  %3439 = vmatpush1.msra.mxu0 %v1237
  %3440 = vmatprep.subr.mxu0 0.0
  %3441 = vmatpush1.msra.mxu0 %v1242
  %3442 = vmatprep.subr.mxu0 0.0
  %3443 = vmatpush1.msra.mxu0 %v1247
  %3444 = vmatprep.subr.mxu0 0.0
  %3445 = vmatpush1.msra.mxu0 %v1252
  %3446 = vmatprep.subr.mxu0 0.0
  %3447 = vmatpush1.msra.mxu0 %v1257
  %3448 = vmatprep.subr.mxu0 0.0
  %3449 = vmatpush1.msra.mxu0 %v1262
  %3450 = vmatprep.subr.mxu0 0.0
  %3451 = vmatpush1.msra.mxu0 %v1267
  %3452 = vmatprep.subr.mxu0 0.0
  %3453 = vmatpush1.msra.mxu0 %v1272
  %3454 = vmatprep.subr.mxu0 0.0
  %3455 = vmatpush1.msra.mxu0 %v1277
  %3456 = vmatprep.subr.mxu0 0.0
  %3457 = vmatpush1.msra.mxu0 %v1555
  %3458 = vmatprep.subr.mxu0 0.0
  %3459 = vmatpush1.msra.mxu0 %v1560
  %3460 = vmatprep.subr.mxu0 0.0
  %3461 = vmatpush1.msra.mxu0 %v1565
  %3462 = vmatprep.subr.mxu0 0.0
  %3463 = vmatpush1.msra.mxu0 %v1570
  %3464 = vmatprep.subr.mxu0 0.0
  %3465 = vmatpush1.msra.mxu0 %v1575
  %3466 = vmatprep.subr.mxu0 0.0
  %3467 = vmatpush1.msra.mxu0 %v1580
  %3468 = vmatprep.subr.mxu0 0.0
  %3469 = vmatpush1.msra.mxu0 %v1585
  %3470 = vmatprep.subr.mxu0 0.0
  %3471 = vmatpush1.msra.mxu0 %v1590
  %3472 = vmatprep.subr.mxu0 0.0
  %3473 = vmatpush1.msra.mxu0 %v1595
  %3474 = vmatprep.subr.mxu0 0.0
  %3475 = vmatpush1.msra.mxu0 %v1600
  %3476 = vmatprep.subr.mxu0 0.0
  %3477 = vmatpush1.msra.mxu0 %v1605
  %3478 = vmatprep.subr.mxu0 0.0
  %3479 = vmatpush1.msra.mxu0 %v1610
  %3480 = vmatprep.subr.mxu0 0.0
  %3481 = vmatpush1.msra.mxu0 %v1615
  %3482 = vmatprep.subr.mxu0 0.0
  %3483 = vmatpush1.msra.mxu0 %v1620
  %3484 = vmatprep.subr.mxu0 0.0
  %3485 = vmatpush1.msra.mxu0 %v1625
  %3486 = vmatprep.subr.mxu0 0.0
  %3487 = vmatpush1.msra.mxu0 %v1630
  %3488 = vmatprep.mubr.f32.mxu0 %v2075
  %3489 = vmatmul.mubr.f32.gmra.mrb[0].mxu0 %v2074
  %v3490 = vpop.f32.mrb[0].mxu0
  %v3491 = vadd.f32 %v3346, %v3490
  %v3492 = vpop.f32.mrb[0].mxu0
  %3493 = vmatprep.mubr.f32.mxu0 %v2081
  %3494 = vmatmul.mubr.f32.gmra.mrb[0].mxu0 %v2080
  %v3495 = vpop.f32.mrb[0].mxu0
  %v3496 = vadd.f32 %v3351, %v3495
  %v3497 = vpop.f32.mrb[0].mxu0
  %3498 = vmatprep.mubr.f32.mxu0 %v2087
  %3499 = vmatmul.mubr.f32.gmra.mrb[0].mxu0 %v2086
  %v3500 = vpop.f32.mrb[0].mxu0
  %v3501 = vadd.f32 %v3356, %v3500
  %v3502 = vpop.f32.mrb[0].mxu0
  %3503 = vmatprep.mubr.f32.mxu0 %v2093
  %3504 = vmatmul.mubr.f32.gmra.mrb[0].mxu0 %v2092
  %v3505 = vpop.f32.mrb[0].mxu0
  %v3506 = vadd.f32 %v3361, %v3505
  %v3507 = vpop.f32.mrb[0].mxu0
  %3508 = vmatprep.mubr.f32.mxu0 %v2099
  %3509 = vmatmul.mubr.f32.gmra.mrb[0].mxu0 %v2098
  %v3510 = vpop.f32.mrb[0].mxu0
  %v3511 = vadd.f32 %v3366, %v3510
  %v3512 = vpop.f32.mrb[0].mxu0
  %3513 = vmatprep.mubr.f32.mxu0 %v2105
  %3514 = vmatmul.mubr.f32.gmra.mrb[0].mxu0 %v2104
  %v3515 = vpop.f32.mrb[0].mxu0
  %v3516 = vadd.f32 %v3371, %v3515
  %v3517 = vpop.f32.mrb[0].mxu0
  %3518 = vmatprep.mubr.f32.mxu0 %v2111
  %3519 = vmatmul.mubr.f32.gmra.mrb[0].mxu0 %v2110
  %v3520 = vpop.f32.mrb[0].mxu0
  %v3521 = vadd.f32 %v3376, %v3520
  %v3522 = vpop.f32.mrb[0].mxu0
  %3523 = vmatprep.mubr.f32.mxu0 %v2117
  %3524 = vmatmul.mubr.f32.gmra.mrb[0].mxu0 %v2116
  %v3525 = vpop.f32.mrb[0].mxu0
  %v3526 = vadd.f32 %v3381, %v3525
  %v3527 = vpop.f32.mrb[0].mxu0
  %3528 = vmatprep.mubr.f32.mxu0 %v2123
  %3529 = vmatmul.mubr.f32.gmra.mrb[0].mxu0 %v2122
  %v3530 = vpop.f32.mrb[0].mxu0
  %v3531 = vadd.f32 %v3386, %v3530
  %v3532 = vpop.f32.mrb[0].mxu0
  %3533 = vmatprep.mubr.f32.mxu0 %v2129
  %3534 = vmatmul.mubr.f32.gmra.mrb[0].mxu0 %v2128
  %v3535 = vpop.f32.mrb[0].mxu0
  %v3536 = vadd.f32 %v3391, %v3535
  %v3537 = vpop.f32.mrb[0].mxu0
  %3538 = vmatprep.mubr.f32.mxu0 %v2135
  %3539 = vmatmul.mubr.f32.gmra.mrb[0].mxu0 %v2134
  %v3540 = vpop.f32.mrb[0].mxu0
  %v3541 = vadd.f32 %v3396, %v3540
  %v3542 = vpop.f32.mrb[0].mxu0
  %3543 = vmatprep.mubr.f32.mxu0 %v2141
  %3544 = vmatmul.mubr.f32.gmra.mrb[0].mxu0 %v2140
  %v3545 = vpop.f32.mrb[0].mxu0
  %v3546 = vadd.f32 %v3401, %v3545
  %v3547 = vpop.f32.mrb[0].mxu0
  %3548 = vmatprep.mubr.f32.mxu0 %v2147
  %3549 = vmatmul.mubr.f32.gmra.mrb[0].mxu0 %v2146
  %v3550 = vpop.f32.mrb[0].mxu0
  %v3551 = vadd.f32 %v3406, %v3550
  %v3552 = vpop.f32.mrb[0].mxu0
  %3553 = vmatprep.mubr.f32.mxu0 %v2153
  %3554 = vmatmul.mubr.f32.gmra.mrb[0].mxu0 %v2152
  %v3555 = vpop.f32.mrb[0].mxu0
  %v3556 = vadd.f32 %v3411, %v3555
  %v3557 = vpop.f32.mrb[0].mxu0
  %3558 = vmatprep.mubr.f32.mxu0 %v2159
  %3559 = vmatmul.mubr.f32.gmra.mrb[0].mxu0 %v2158
  %v3560 = vpop.f32.mrb[0].mxu0
  %v3561 = vadd.f32 %v3416, %v3560
  %v3562 = vpop.f32.mrb[0].mxu0
  %3563 = vmatprep.mubr.f32.mxu0 %v2165
  %3564 = vmatmul.mubr.f32.gmra.mrb[0].mxu0 %v2164
  %v3565 = vpop.f32.mrb[0].mxu0
  %v3566 = vadd.f32 %v3421, %v3565
  %v3567 = vpop.f32.mrb[0].mxu0
  %3568 = vdwg.mxu0
  %3569 = vmatprep.subr.mxu0 0.0
  %3570 = vmatpush1.msra.mxu0 %v1893
  %3571 = vmatprep.subr.mxu0 0.0
  %3572 = vmatpush1.msra.mxu0 %v1898
  %3573 = vmatprep.subr.mxu0 0.0
  %3574 = vmatpush1.msra.mxu0 %v1903
  %3575 = vmatprep.subr.mxu0 0.0
  %3576 = vmatpush1.msra.mxu0 %v1908
  %3577 = vmatprep.subr.mxu0 0.0
  %3578 = vmatpush1.msra.mxu0 %v1913
  %3579 = vmatprep.subr.mxu0 0.0
  %3580 = vmatpush1.msra.mxu0 %v1918
  %3581 = vmatprep.subr.mxu0 0.0
  %3582 = vmatpush1.msra.mxu0 %v1923
  %3583 = vmatprep.subr.mxu0 0.0
  %3584 = vmatpush1.msra.mxu0 %v1928
  %3585 = vmatprep.subr.mxu0 0.0
  %3586 = vmatpush1.msra.mxu0 %v1933
  %3587 = vmatprep.subr.mxu0 0.0
  %3588 = vmatpush1.msra.mxu0 %v1938
  %3589 = vmatprep.subr.mxu0 0.0
  %3590 = vmatpush1.msra.mxu0 %v1943
  %3591 = vmatprep.subr.mxu0 0.0
  %3592 = vmatpush1.msra.mxu0 %v1948
  %3593 = vmatprep.subr.mxu0 0.0
  %3594 = vmatpush1.msra.mxu0 %v1953
  %3595 = vmatprep.subr.mxu0 0.0
  %3596 = vmatpush1.msra.mxu0 %v1958
  %3597 = vmatprep.subr.mxu0 0.0
  %3598 = vmatpush1.msra.mxu0 %v1963
  %3599 = vmatprep.subr.mxu0 0.0
  %3600 = vmatpush1.msra.mxu0 %v1968
  %3601 = vmatprep.subr.mxu0 0.0
  %3602 = vmatpush1.msra.mxu0 %v2066
  %3603 = vmatprep.subr.mxu0 0.0
  %3604 = vmatpush1.msra.mxu0 0.0
  %3605 = vmatprep.subr.mxu0 0.0
  %3606 = vmatpush1.msra.mxu0 0.0
  %3607 = vmatprep.subr.mxu0 0.0
  %3608 = vmatpush1.msra.mxu0 0.0
  %3609 = vmatprep.subr.mxu0 0.0
  %3610 = vmatpush1.msra.mxu0 0.0
  %3611 = vmatprep.subr.mxu0 0.0
  %3612 = vmatpush1.msra.mxu0 0.0
  %3613 = vmatprep.subr.mxu0 0.0
  %3614 = vmatpush1.msra.mxu0 0.0
  %3615 = vmatprep.subr.mxu0 0.0
  %3616 = vmatpush1.msra.mxu0 0.0
  %3617 = vmatprep.subr.mxu0 0.0
  %3618 = vmatpush1.msra.mxu0 0.0
  %3619 = vmatprep.subr.mxu0 0.0
  %3620 = vmatpush1.msra.mxu0 0.0
  %3621 = vmatprep.subr.mxu0 0.0
  %3622 = vmatpush1.msra.mxu0 0.0
  %3623 = vmatprep.subr.mxu0 0.0
  %3624 = vmatpush1.msra.mxu0 0.0
  %3625 = vmatprep.subr.mxu0 0.0
  %3626 = vmatpush1.msra.mxu0 0.0
  %3627 = vmatprep.subr.mxu0 0.0
  %3628 = vmatpush1.msra.mxu0 0.0
  %3629 = vmatprep.subr.mxu0 0.0
  %3630 = vmatpush1.msra.mxu0 0.0
  %3631 = vmatprep.subr.mxu0 0.0
  %3632 = vmatpush1.msra.mxu0 0.0
  %3633 = vmatprep.mubr.f32.mxu0 %v2266
  %3634 = vmatmul.mubr.f32.gmra.mrb[0].mxu0 %v2076
  %v3635 = vpop.f32.mrb[0].mxu0
  %v3636 = vadd.f32 %v3491, %v3635
  %v3637 = vpop.f32.mrb[0].mxu0
  %3638 = vmatprep.mubr.f32.mxu0 %v2269
  %3639 = vmatmul.mubr.f32.gmra.mrb[0].mxu0 %v2082
  %v3640 = vpop.f32.mrb[0].mxu0
  %v3641 = vadd.f32 %v3496, %v3640
  %v3642 = vpop.f32.mrb[0].mxu0
  %3643 = vmatprep.mubr.f32.mxu0 %v2272
  %3644 = vmatmul.mubr.f32.gmra.mrb[0].mxu0 %v2088
  %v3645 = vpop.f32.mrb[0].mxu0
  %v3646 = vadd.f32 %v3501, %v3645
  %v3647 = vpop.f32.mrb[0].mxu0
  %3648 = vmatprep.mubr.f32.mxu0 %v2275
  %3649 = vmatmul.mubr.f32.gmra.mrb[0].mxu0 %v2094
  %v3650 = vpop.f32.mrb[0].mxu0
  %v3651 = vadd.f32 %v3506, %v3650
  %v3652 = vpop.f32.mrb[0].mxu0
  %3653 = vmatprep.mubr.f32.mxu0 %v2278
  %3654 = vmatmul.mubr.f32.gmra.mrb[0].mxu0 %v2100
  %v3655 = vpop.f32.mrb[0].mxu0
  %v3656 = vadd.f32 %v3511, %v3655
  %v3657 = vpop.f32.mrb[0].mxu0
  %3658 = vmatprep.mubr.f32.mxu0 %v2281
  %3659 = vmatmul.mubr.f32.gmra.mrb[0].mxu0 %v2106
  %v3660 = vpop.f32.mrb[0].mxu0
  %v3661 = vadd.f32 %v3516, %v3660
  %v3662 = vpop.f32.mrb[0].mxu0
  %3663 = vmatprep.mubr.f32.mxu0 %v2284
  %3664 = vmatmul.mubr.f32.gmra.mrb[0].mxu0 %v2112
  %v3665 = vpop.f32.mrb[0].mxu0
  %v3666 = vadd.f32 %v3521, %v3665
  %v3667 = vpop.f32.mrb[0].mxu0
  %3668 = vmatprep.mubr.f32.mxu0 %v2287
  %3669 = vmatmul.mubr.f32.gmra.mrb[0].mxu0 %v2118
  %v3670 = vpop.f32.mrb[0].mxu0
  %v3671 = vadd.f32 %v3526, %v3670
  %v3672 = vpop.f32.mrb[0].mxu0
  %3673 = vmatprep.mubr.f32.mxu0 %v2290
  %3674 = vmatmul.mubr.f32.gmra.mrb[0].mxu0 %v2124
  %v3675 = vpop.f32.mrb[0].mxu0
  %v3676 = vadd.f32 %v3531, %v3675
  %v3677 = vpop.f32.mrb[0].mxu0
  %3678 = vmatprep.mubr.f32.mxu0 %v2293
  %3679 = vmatmul.mubr.f32.gmra.mrb[0].mxu0 %v2130
  %v3680 = vpop.f32.mrb[0].mxu0
  %v3681 = vadd.f32 %v3536, %v3680
  %v3682 = vpop.f32.mrb[0].mxu0
  %3683 = vmatprep.mubr.f32.mxu0 %v2296
  %3684 = vmatmul.mubr.f32.gmra.mrb[0].mxu0 %v2136
  %v3685 = vpop.f32.mrb[0].mxu0
  %v3686 = vadd.f32 %v3541, %v3685
  %v3687 = vpop.f32.mrb[0].mxu0
  %3688 = vmatprep.mubr.f32.mxu0 %v2299
  %3689 = vmatmul.mubr.f32.gmra.mrb[0].mxu0 %v2142
  %v3690 = vpop.f32.mrb[0].mxu0
  %v3691 = vadd.f32 %v3546, %v3690
  %v3692 = vpop.f32.mrb[0].mxu0
  %3693 = vmatprep.mubr.f32.mxu0 %v2302
  %3694 = vmatmul.mubr.f32.gmra.mrb[0].mxu0 %v2148
  %v3695 = vpop.f32.mrb[0].mxu0
  %v3696 = vadd.f32 %v3551, %v3695
  %v3697 = vpop.f32.mrb[0].mxu0
  %3698 = vmatprep.mubr.f32.mxu0 %v2305
  %3699 = vmatmul.mubr.f32.gmra.mrb[0].mxu0 %v2154
  %v3700 = vpop.f32.mrb[0].mxu0
  %v3701 = vadd.f32 %v3556, %v3700
  %v3702 = vpop.f32.mrb[0].mxu0
  %3703 = vmatprep.mubr.f32.mxu0 %v2308
  %3704 = vmatmul.mubr.f32.gmra.mrb[0].mxu0 %v2160
  %v3705 = vpop.f32.mrb[0].mxu0
  %v3706 = vadd.f32 %v3561, %v3705
  %v3707 = vpop.f32.mrb[0].mxu0
  %3708 = vmatprep.mubr.f32.mxu0 %v2311
  %3709 = vmatmul.mubr.f32.gmra.mrb[0].mxu0 %v2166
  %v3710 = vpop.f32.mrb[0].mxu0
  %v3711 = vadd.f32 %v3566, %v3710
  %v3712 = vpop.f32.mrb[0].mxu0
  %3713 = vdwg.mxu0
  %v3714 = vmax.f32 %v2702, 0.0
  %v3715 = vmax.f32 %v2704, 0.0
  %v3716 = vmax.f32 %v3185, 0.0
  %v3717 = vmax.f32 %v3187, 0.0
  %v3718 = vmax.f32 %v3636, 0.0
  %v3719 = vmax.f32 %v2708, 0.0
  %v3720 = vmax.f32 %v2710, 0.0
  %v3721 = vmax.f32 %v3191, 0.0
  %v3722 = vmax.f32 %v3193, 0.0
  %v3723 = vmax.f32 %v3641, 0.0
  %v3724 = vmax.f32 %v2714, 0.0
  %v3725 = vmax.f32 %v2716, 0.0
  %v3726 = vmax.f32 %v3197, 0.0
  %v3727 = vmax.f32 %v3199, 0.0
  %v3728 = vmax.f32 %v3646, 0.0
  %v3729 = vmax.f32 %v2720, 0.0
  %v3730 = vmax.f32 %v2722, 0.0
  %v3731 = vmax.f32 %v3203, 0.0
  %v3732 = vmax.f32 %v3205, 0.0
  %v3733 = vmax.f32 %v3651, 0.0
  %v3734 = vmax.f32 %v2726, 0.0
  %v3735 = vmax.f32 %v2728, 0.0
  %v3736 = vmax.f32 %v3209, 0.0
  %v3737 = vmax.f32 %v3211, 0.0
  %v3738 = vmax.f32 %v3656, 0.0
  %v3739 = vmax.f32 %v2732, 0.0
  %v3740 = vmax.f32 %v2734, 0.0
  %v3741 = vmax.f32 %v3215, 0.0
  %v3742 = vmax.f32 %v3217, 0.0
  %v3743 = vmax.f32 %v3661, 0.0
  %v3744 = vmax.f32 %v2738, 0.0
  %v3745 = vmax.f32 %v2740, 0.0
  %v3746 = vmax.f32 %v3221, 0.0
  %v3747 = vmax.f32 %v3223, 0.0
  %v3748 = vmax.f32 %v3666, 0.0
  %v3749 = vmax.f32 %v2744, 0.0
  %v3750 = vmax.f32 %v2746, 0.0
  %v3751 = vmax.f32 %v3227, 0.0
  %v3752 = vmax.f32 %v3229, 0.0
  %v3753 = vmax.f32 %v3671, 0.0
  %v3754 = vmax.f32 %v2750, 0.0
  %v3755 = vmax.f32 %v2752, 0.0
  %v3756 = vmax.f32 %v3233, 0.0
  %v3757 = vmax.f32 %v3235, 0.0
  %v3758 = vmax.f32 %v3676, 0.0
  %v3759 = vmax.f32 %v2756, 0.0
  %v3760 = vmax.f32 %v2758, 0.0
  %v3761 = vmax.f32 %v3239, 0.0
  %v3762 = vmax.f32 %v3241, 0.0
  %v3763 = vmax.f32 %v3681, 0.0
  %v3764 = vmax.f32 %v2762, 0.0
  %v3765 = vmax.f32 %v2764, 0.0
  %v3766 = vmax.f32 %v3245, 0.0
  %v3767 = vmax.f32 %v3247, 0.0
  %v3768 = vmax.f32 %v3686, 0.0
  %v3769 = vmax.f32 %v2768, 0.0
  %v3770 = vmax.f32 %v2770, 0.0
  %v3771 = vmax.f32 %v3251, 0.0
  %v3772 = vmax.f32 %v3253, 0.0
  %v3773 = vmax.f32 %v3691, 0.0
  %v3774 = vmax.f32 %v2774, 0.0
  %v3775 = vmax.f32 %v2776, 0.0
  %v3776 = vmax.f32 %v3257, 0.0
  %v3777 = vmax.f32 %v3259, 0.0
  %v3778 = vmax.f32 %v3696, 0.0
  %v3779 = vmax.f32 %v2780, 0.0
  %v3780 = vmax.f32 %v2782, 0.0
  %v3781 = vmax.f32 %v3263, 0.0
  %v3782 = vmax.f32 %v3265, 0.0
  %v3783 = vmax.f32 %v3701, 0.0
  %v3784 = vmax.f32 %v2786, 0.0
  %v3785 = vmax.f32 %v2788, 0.0
  %v3786 = vmax.f32 %v3269, 0.0
  %v3787 = vmax.f32 %v3271, 0.0
  %v3788 = vmax.f32 %v3706, 0.0
  %v3789 = vmax.f32 %v2792, 0.0
  %v3790 = vmax.f32 %v2794, 0.0
  %v3791 = vmax.f32 %v3275, 0.0
  %v3792 = vmax.f32 %v3277, 0.0
  %v3793 = vmax.f32 %v3711, 0.0
  %v3794 = vld [vmem:[%s3] sm:$0xff]
  %v3795 = vld [vmem:[%s3 + $0x8] sm:$0xff]
  %v3796 = vld [vmem:[%s3 + $0x10] sm:$0xff]
  %v3797 = vld [vmem:[%s3 + $0x18] sm:$0xff]
  %v3798 = vld [vmem:[%s3 + $0x20] sm:$0xff]
  %v3799 = vld [vmem:[%s3 + $0x28] sm:$0xff]
  %v3800 = vld [vmem:[%s3 + $0x30] sm:$0xff]
  %v3801 = vld [vmem:[%s3 + $0x38] sm:$0xff]
  %v3802 = vld [vmem:[%s4] sm:$0xff]
  %v3803 = vld [vmem:[%s4 + $0x8] sm:$0xff]
  %v3804 = vld [vmem:[%s4 + $0x10] sm:$0xff]
  %v3805 = vld [vmem:[%s4 + $0x18] sm:$0xff]
  %v3806 = vld [vmem:[%s4 + $0x20] sm:$0xff]
  %v3807 = vld [vmem:[%s4 + $0x28] sm:$0xff]
  %v3808 = vld [vmem:[%s4 + $0x30] sm:$0xff]
  %v3809 = vld [vmem:[%s4 + $0x38] sm:$0xff]
  %3811 = vset.pattern.permute.xlu0 0
  %3812 = vperm.xlu0 %3811, %v3802
  %v3813 = vpop.permute.xlu0 %3812
  %3816 = vset.pattern.permute.xlu0 0
  %3817 = vperm.xlu0 %3816, %v3803
  %v3818 = vpop.permute.xlu0 %3817
  %3821 = vset.pattern.permute.xlu0 0
  %3822 = vperm.xlu0 %3821, %v3804
  %v3823 = vpop.permute.xlu0 %3822
  %3826 = vset.pattern.permute.xlu0 0
  %3827 = vperm.xlu0 %3826, %v3805
  %v3828 = vpop.permute.xlu0 %3827
  %3831 = vset.pattern.permute.xlu0 0
  %3832 = vperm.xlu0 %3831, %v3806
  %v3833 = vpop.permute.xlu0 %3832
  %3836 = vset.pattern.permute.xlu0 0
  %3837 = vperm.xlu0 %3836, %v3807
  %v3838 = vpop.permute.xlu0 %3837
  %3841 = vset.pattern.permute.xlu0 0
  %3842 = vperm.xlu0 %3841, %v3808
  %v3843 = vpop.permute.xlu0 %3842
  %3846 = vset.pattern.permute.xlu0 0
  %3847 = vperm.xlu0 %3846, %v3809
  %v3848 = vpop.permute.xlu0 %3847
  %3850 = vmatprep.subr.mxu0 %v3715
  %3851 = vmatpush1.msra.mxu0 %v3714
  %3852 = vmatprep.subr.mxu0 %v3720
  %3853 = vmatpush1.msra.mxu0 %v3719
  %3854 = vmatprep.subr.mxu0 %v3725
  %3855 = vmatpush1.msra.mxu0 %v3724
  %3856 = vmatprep.subr.mxu0 %v3730
  %3857 = vmatpush1.msra.mxu0 %v3729
  %3858 = vmatprep.subr.mxu0 %v3735
  %3859 = vmatpush1.msra.mxu0 %v3734
  %3860 = vmatprep.subr.mxu0 %v3740
  %3861 = vmatpush1.msra.mxu0 %v3739
  %3862 = vmatprep.subr.mxu0 %v3745
  %3863 = vmatpush1.msra.mxu0 %v3744
  %3864 = vmatprep.subr.mxu0 %v3750
  %3865 = vmatpush1.msra.mxu0 %v3749
  %3866 = vmatprep.subr.mxu0 %v3755
  %3867 = vmatpush1.msra.mxu0 %v3754
  %3868 = vmatprep.subr.mxu0 %v3760
  %3869 = vmatpush1.msra.mxu0 %v3759
  %3870 = vmatprep.subr.mxu0 %v3765
  %3871 = vmatpush1.msra.mxu0 %v3764
  %3872 = vmatprep.subr.mxu0 %v3770
  %3873 = vmatpush1.msra.mxu0 %v3769
  %3874 = vmatprep.subr.mxu0 %v3775
  %3875 = vmatpush1.msra.mxu0 %v3774
  %3876 = vmatprep.subr.mxu0 %v3780
  %3877 = vmatpush1.msra.mxu0 %v3779
  %3878 = vmatprep.subr.mxu0 %v3785
  %3879 = vmatpush1.msra.mxu0 %v3784
  %3880 = vmatprep.subr.mxu0 %v3790
  %3881 = vmatpush1.msra.mxu0 %v3789
  %3882 = vmatprep.subr.mxu0 0.0
  %3883 = vmatpush1.msra.mxu0 0.0
  %3884 = vmatprep.subr.mxu0 0.0
  %3885 = vmatpush1.msra.mxu0 0.0
  %3886 = vmatprep.subr.mxu0 0.0
  %3887 = vmatpush1.msra.mxu0 0.0
  %3888 = vmatprep.subr.mxu0 0.0
  %3889 = vmatpush1.msra.mxu0 0.0
  %3890 = vmatprep.subr.mxu0 0.0
  %3891 = vmatpush1.msra.mxu0 0.0
  %3892 = vmatprep.subr.mxu0 0.0
  %3893 = vmatpush1.msra.mxu0 0.0
  %3894 = vmatprep.subr.mxu0 0.0
  %3895 = vmatpush1.msra.mxu0 0.0
  %3896 = vmatprep.subr.mxu0 0.0
  %3897 = vmatpush1.msra.mxu0 0.0
  %3898 = vmatprep.subr.mxu0 0.0
  %3899 = vmatpush1.msra.mxu0 0.0
  %3900 = vmatprep.subr.mxu0 0.0
  %3901 = vmatpush1.msra.mxu0 0.0
  %3902 = vmatprep.subr.mxu0 0.0
  %3903 = vmatpush1.msra.mxu0 0.0
  %3904 = vmatprep.subr.mxu0 0.0
  %3905 = vmatpush1.msra.mxu0 0.0
  %3906 = vmatprep.subr.mxu0 0.0
  %3907 = vmatpush1.msra.mxu0 0.0
  %3908 = vmatprep.subr.mxu0 0.0
  %3909 = vmatpush1.msra.mxu0 0.0
  %3910 = vmatprep.subr.mxu0 0.0
  %3911 = vmatpush1.msra.mxu0 0.0
  %3912 = vmatprep.subr.mxu0 0.0
  %3913 = vmatpush1.msra.mxu0 0.0
  %3914 = vmatprep.mubr.f32.mxu0 0.0
  %3915 = vmatmul.mubr.f32.gmra.mrb[0].mxu0 %v3794
  %v3916 = vpop.f32.mrb[0].mxu0
  %v3917 = vadd.f32 %v3813, %v3916
  %v3918 = vpop.f32.mrb[0].mxu0
  %v3919 = vadd.f32 %v3813, %v3918
  %3920 = vmatprep.mubr.f32.mxu0 0.0
  %3921 = vmatmul.mubr.f32.gmra.mrb[0].mxu0 %v3795
  %v3922 = vpop.f32.mrb[0].mxu0
  %v3923 = vadd.f32 %v3818, %v3922
  %v3924 = vpop.f32.mrb[0].mxu0
  %v3925 = vadd.f32 %v3818, %v3924
  %3926 = vmatprep.mubr.f32.mxu0 0.0
  %3927 = vmatmul.mubr.f32.gmra.mrb[0].mxu0 %v3796
  %v3928 = vpop.f32.mrb[0].mxu0
  %v3929 = vadd.f32 %v3823, %v3928
  %v3930 = vpop.f32.mrb[0].mxu0
  %v3931 = vadd.f32 %v3823, %v3930
  %3932 = vmatprep.mubr.f32.mxu0 0.0
  %3933 = vmatmul.mubr.f32.gmra.mrb[0].mxu0 %v3797
  %v3934 = vpop.f32.mrb[0].mxu0
  %v3935 = vadd.f32 %v3828, %v3934
  %v3936 = vpop.f32.mrb[0].mxu0
  %v3937 = vadd.f32 %v3828, %v3936
  %3938 = vmatprep.mubr.f32.mxu0 0.0
  %3939 = vmatmul.mubr.f32.gmra.mrb[0].mxu0 %v3798
  %v3940 = vpop.f32.mrb[0].mxu0
  %v3941 = vadd.f32 %v3833, %v3940
  %v3942 = vpop.f32.mrb[0].mxu0
  %v3943 = vadd.f32 %v3833, %v3942
  %3944 = vmatprep.mubr.f32.mxu0 0.0
  %3945 = vmatmul.mubr.f32.gmra.mrb[0].mxu0 %v3799
  %v3946 = vpop.f32.mrb[0].mxu0
  %v3947 = vadd.f32 %v3838, %v3946
  %v3948 = vpop.f32.mrb[0].mxu0
  %v3949 = vadd.f32 %v3838, %v3948
  %3950 = vmatprep.mubr.f32.mxu0 0.0
  %3951 = vmatmul.mubr.f32.gmra.mrb[0].mxu0 %v3800
  %v3952 = vpop.f32.mrb[0].mxu0
  %v3953 = vadd.f32 %v3843, %v3952
  %v3954 = vpop.f32.mrb[0].mxu0
  %v3955 = vadd.f32 %v3843, %v3954
  %3956 = vmatprep.mubr.f32.mxu0 0.0
  %3957 = vmatmul.mubr.f32.gmra.mrb[0].mxu0 %v3801
  %v3958 = vpop.f32.mrb[0].mxu0
  %v3959 = vadd.f32 %v3848, %v3958
  %v3960 = vpop.f32.mrb[0].mxu0
  %v3961 = vadd.f32 %v3848, %v3960
  %3962 = vdwg.mxu0
  %3963 = vmatprep.subr.mxu0 %v3717
  %3964 = vmatpush1.msra.mxu0 %v3716
  %3965 = vmatprep.subr.mxu0 %v3722
  %3966 = vmatpush1.msra.mxu0 %v3721
  %3967 = vmatprep.subr.mxu0 %v3727
  %3968 = vmatpush1.msra.mxu0 %v3726
  %3969 = vmatprep.subr.mxu0 %v3732
  %3970 = vmatpush1.msra.mxu0 %v3731
  %3971 = vmatprep.subr.mxu0 %v3737
  %3972 = vmatpush1.msra.mxu0 %v3736
  %3973 = vmatprep.subr.mxu0 %v3742
  %3974 = vmatpush1.msra.mxu0 %v3741
  %3975 = vmatprep.subr.mxu0 %v3747
  %3976 = vmatpush1.msra.mxu0 %v3746
  %3977 = vmatprep.subr.mxu0 %v3752
  %3978 = vmatpush1.msra.mxu0 %v3751
  %3979 = vmatprep.subr.mxu0 %v3757
  %3980 = vmatpush1.msra.mxu0 %v3756
  %3981 = vmatprep.subr.mxu0 %v3762
  %3982 = vmatpush1.msra.mxu0 %v3761
  %3983 = vmatprep.subr.mxu0 %v3767
  %3984 = vmatpush1.msra.mxu0 %v3766
  %3985 = vmatprep.subr.mxu0 %v3772
  %3986 = vmatpush1.msra.mxu0 %v3771
  %3987 = vmatprep.subr.mxu0 %v3777
  %3988 = vmatpush1.msra.mxu0 %v3776
  %3989 = vmatprep.subr.mxu0 %v3782
  %3990 = vmatpush1.msra.mxu0 %v3781
  %3991 = vmatprep.subr.mxu0 %v3787
  %3992 = vmatpush1.msra.mxu0 %v3786
  %3993 = vmatprep.subr.mxu0 %v3792
  %3994 = vmatpush1.msra.mxu0 %v3791
  %3995 = vmatprep.subr.mxu0 0.0
  %3996 = vmatpush1.msra.mxu0 0.0
  %3997 = vmatprep.subr.mxu0 0.0
  %3998 = vmatpush1.msra.mxu0 0.0
  %3999 = vmatprep.subr.mxu0 0.0
  %4000 = vmatpush1.msra.mxu0 0.0
  %4001 = vmatprep.subr.mxu0 0.0
  %4002 = vmatpush1.msra.mxu0 0.0
  %4003 = vmatprep.subr.mxu0 0.0
  %4004 = vmatpush1.msra.mxu0 0.0
  %4005 = vmatprep.subr.mxu0 0.0
  %4006 = vmatpush1.msra.mxu0 0.0
  %4007 = vmatprep.subr.mxu0 0.0
  %4008 = vmatpush1.msra.mxu0 0.0
  %4009 = vmatprep.subr.mxu0 0.0
  %4010 = vmatpush1.msra.mxu0 0.0
  %4011 = vmatprep.subr.mxu0 0.0
  %4012 = vmatpush1.msra.mxu0 0.0
  %4013 = vmatprep.subr.mxu0 0.0
  %4014 = vmatpush1.msra.mxu0 0.0
  %4015 = vmatprep.subr.mxu0 0.0
  %4016 = vmatpush1.msra.mxu0 0.0
  %4017 = vmatprep.subr.mxu0 0.0
  %4018 = vmatpush1.msra.mxu0 0.0
  %4019 = vmatprep.subr.mxu0 0.0
  %4020 = vmatpush1.msra.mxu0 0.0
  %4021 = vmatprep.subr.mxu0 0.0
  %4022 = vmatpush1.msra.mxu0 0.0
  %4023 = vmatprep.subr.mxu0 0.0
  %4024 = vmatpush1.msra.mxu0 0.0
  %4025 = vmatprep.subr.mxu0 0.0
  %4026 = vmatpush1.msra.mxu0 0.0
  %4027 = vmatprep.mubr.f32.mxu0 0.0
  %4028 = vmatmul.mubr.f32.gmra.mrb[0].mxu0 %v3794
  %v4029 = vpop.f32.mrb[0].mxu0
  %v4030 = vadd.f32 %v3813, %v4029
  %v4031 = vpop.f32.mrb[0].mxu0
  %v4032 = vadd.f32 %v3813, %v4031
  %4033 = vmatprep.mubr.f32.mxu0 0.0
  %4034 = vmatmul.mubr.f32.gmra.mrb[0].mxu0 %v3795
  %v4035 = vpop.f32.mrb[0].mxu0
  %v4036 = vadd.f32 %v3818, %v4035
  %v4037 = vpop.f32.mrb[0].mxu0
  %v4038 = vadd.f32 %v3818, %v4037
  %4039 = vmatprep.mubr.f32.mxu0 0.0
  %4040 = vmatmul.mubr.f32.gmra.mrb[0].mxu0 %v3796
  %v4041 = vpop.f32.mrb[0].mxu0
  %v4042 = vadd.f32 %v3823, %v4041
  %v4043 = vpop.f32.mrb[0].mxu0
  %v4044 = vadd.f32 %v3823, %v4043
  %4045 = vmatprep.mubr.f32.mxu0 0.0
  %4046 = vmatmul.mubr.f32.gmra.mrb[0].mxu0 %v3797
  %v4047 = vpop.f32.mrb[0].mxu0
  %v4048 = vadd.f32 %v3828, %v4047
  %v4049 = vpop.f32.mrb[0].mxu0
  %v4050 = vadd.f32 %v3828, %v4049
  %4051 = vmatprep.mubr.f32.mxu0 0.0
  %4052 = vmatmul.mubr.f32.gmra.mrb[0].mxu0 %v3798
  %v4053 = vpop.f32.mrb[0].mxu0
  %v4054 = vadd.f32 %v3833, %v4053
  %v4055 = vpop.f32.mrb[0].mxu0
  %v4056 = vadd.f32 %v3833, %v4055
  %4057 = vmatprep.mubr.f32.mxu0 0.0
  %4058 = vmatmul.mubr.f32.gmra.mrb[0].mxu0 %v3799
  %v4059 = vpop.f32.mrb[0].mxu0
  %v4060 = vadd.f32 %v3838, %v4059
  %v4061 = vpop.f32.mrb[0].mxu0
  %v4062 = vadd.f32 %v3838, %v4061
  %4063 = vmatprep.mubr.f32.mxu0 0.0
  %4064 = vmatmul.mubr.f32.gmra.mrb[0].mxu0 %v3800
  %v4065 = vpop.f32.mrb[0].mxu0
  %v4066 = vadd.f32 %v3843, %v4065
  %v4067 = vpop.f32.mrb[0].mxu0
  %v4068 = vadd.f32 %v3843, %v4067
  %4069 = vmatprep.mubr.f32.mxu0 0.0
  %4070 = vmatmul.mubr.f32.gmra.mrb[0].mxu0 %v3801
  %v4071 = vpop.f32.mrb[0].mxu0
  %v4072 = vadd.f32 %v3848, %v4071
  %v4073 = vpop.f32.mrb[0].mxu0
  %v4074 = vadd.f32 %v3848, %v4073
  %4075 = vdwg.mxu0
  %4076 = vmatprep.subr.mxu0 0.0
  %4077 = vmatpush1.msra.mxu0 %v3718
  %4078 = vmatprep.subr.mxu0 0.0
  %4079 = vmatpush1.msra.mxu0 %v3723
  %4080 = vmatprep.subr.mxu0 0.0
  %4081 = vmatpush1.msra.mxu0 %v3728
  %4082 = vmatprep.subr.mxu0 0.0
  %4083 = vmatpush1.msra.mxu0 %v3733
  %4084 = vmatprep.subr.mxu0 0.0
  %4085 = vmatpush1.msra.mxu0 %v3738
  %4086 = vmatprep.subr.mxu0 0.0
  %4087 = vmatpush1.msra.mxu0 %v3743
  %4088 = vmatprep.subr.mxu0 0.0
  %4089 = vmatpush1.msra.mxu0 %v3748
  %4090 = vmatprep.subr.mxu0 0.0
  %4091 = vmatpush1.msra.mxu0 %v3753
  %4092 = vmatprep.subr.mxu0 0.0
  %4093 = vmatpush1.msra.mxu0 %v3758
  %4094 = vmatprep.subr.mxu0 0.0
  %4095 = vmatpush1.msra.mxu0 %v3763
  %4096 = vmatprep.subr.mxu0 0.0
  %4097 = vmatpush1.msra.mxu0 %v3768
  %4098 = vmatprep.subr.mxu0 0.0
  %4099 = vmatpush1.msra.mxu0 %v3773
  %4100 = vmatprep.subr.mxu0 0.0
  %4101 = vmatpush1.msra.mxu0 %v3778
  %4102 = vmatprep.subr.mxu0 0.0
  %4103 = vmatpush1.msra.mxu0 %v3783
  %4104 = vmatprep.subr.mxu0 0.0
  %4105 = vmatpush1.msra.mxu0 %v3788
  %4106 = vmatprep.subr.mxu0 0.0
  %4107 = vmatpush1.msra.mxu0 %v3793
  %4108 = vmatprep.subr.mxu0 0.0
  %4109 = vmatpush1.msra.mxu0 0.0
  %4110 = vmatprep.subr.mxu0 0.0
  %4111 = vmatpush1.msra.mxu0 0.0
  %4112 = vmatprep.subr.mxu0 0.0
  %4113 = vmatpush1.msra.mxu0 0.0
  %4114 = vmatprep.subr.mxu0 0.0
  %4115 = vmatpush1.msra.mxu0 0.0
  %4116 = vmatprep.subr.mxu0 0.0
  %4117 = vmatpush1.msra.mxu0 0.0
  %4118 = vmatprep.subr.mxu0 0.0
  %4119 = vmatpush1.msra.mxu0 0.0
  %4120 = vmatprep.subr.mxu0 0.0
  %4121 = vmatpush1.msra.mxu0 0.0
  %4122 = vmatprep.subr.mxu0 0.0
  %4123 = vmatpush1.msra.mxu0 0.0
  %4124 = vmatprep.subr.mxu0 0.0
  %4125 = vmatpush1.msra.mxu0 0.0
  %4126 = vmatprep.subr.mxu0 0.0
  %4127 = vmatpush1.msra.mxu0 0.0
  %4128 = vmatprep.subr.mxu0 0.0
  %4129 = vmatpush1.msra.mxu0 0.0
  %4130 = vmatprep.subr.mxu0 0.0
  %4131 = vmatpush1.msra.mxu0 0.0
  %4132 = vmatprep.subr.mxu0 0.0
  %4133 = vmatpush1.msra.mxu0 0.0
  %4134 = vmatprep.subr.mxu0 0.0
  %4135 = vmatpush1.msra.mxu0 0.0
  %4136 = vmatprep.subr.mxu0 0.0
  %4137 = vmatpush1.msra.mxu0 0.0
  %4138 = vmatprep.subr.mxu0 0.0
  %4139 = vmatpush1.msra.mxu0 0.0
  %4140 = vmatprep.mubr.f32.mxu0 0.0
  %4141 = vmatmul.mubr.f32.gmra.mrb[0].mxu0 %v3794
  %v4142 = vpop.f32.mrb[0].mxu0
  %v4143 = vadd.f32 %v3813, %v4142
  %v4144 = vpop.f32.mrb[0].mxu0
  %4145 = vmatprep.mubr.f32.mxu0 0.0
  %4146 = vmatmul.mubr.f32.gmra.mrb[0].mxu0 %v3795
  %v4147 = vpop.f32.mrb[0].mxu0
  %v4148 = vadd.f32 %v3818, %v4147
  %v4149 = vpop.f32.mrb[0].mxu0
  %4150 = vmatprep.mubr.f32.mxu0 0.0
  %4151 = vmatmul.mubr.f32.gmra.mrb[0].mxu0 %v3796
  %v4152 = vpop.f32.mrb[0].mxu0
  %v4153 = vadd.f32 %v3823, %v4152
  %v4154 = vpop.f32.mrb[0].mxu0
  %4155 = vmatprep.mubr.f32.mxu0 0.0
  %4156 = vmatmul.mubr.f32.gmra.mrb[0].mxu0 %v3797
  %v4157 = vpop.f32.mrb[0].mxu0
  %v4158 = vadd.f32 %v3828, %v4157
  %v4159 = vpop.f32.mrb[0].mxu0
  %4160 = vmatprep.mubr.f32.mxu0 0.0
  %4161 = vmatmul.mubr.f32.gmra.mrb[0].mxu0 %v3798
  %v4162 = vpop.f32.mrb[0].mxu0
  %v4163 = vadd.f32 %v3833, %v4162
  %v4164 = vpop.f32.mrb[0].mxu0
  %4165 = vmatprep.mubr.f32.mxu0 0.0
  %4166 = vmatmul.mubr.f32.gmra.mrb[0].mxu0 %v3799
  %v4167 = vpop.f32.mrb[0].mxu0
  %v4168 = vadd.f32 %v3838, %v4167
  %v4169 = vpop.f32.mrb[0].mxu0
  %4170 = vmatprep.mubr.f32.mxu0 0.0
  %4171 = vmatmul.mubr.f32.gmra.mrb[0].mxu0 %v3800
  %v4172 = vpop.f32.mrb[0].mxu0
  %v4173 = vadd.f32 %v3843, %v4172
  %v4174 = vpop.f32.mrb[0].mxu0
  %4175 = vmatprep.mubr.f32.mxu0 0.0
  %4176 = vmatmul.mubr.f32.gmra.mrb[0].mxu0 %v3801
  %v4177 = vpop.f32.mrb[0].mxu0
  %v4178 = vadd.f32 %v3848, %v4177
  %v4179 = vpop.f32.mrb[0].mxu0
  %4180 = vdwg.mxu0
  %v4181 = vmax.f32 %v3917, 0.0
  %v4182 = vmax.f32 %v3919, 0.0
  %v4183 = vmax.f32 %v4030, 0.0
  %v4184 = vmax.f32 %v4032, 0.0
  %v4185 = vmax.f32 %v4143, 0.0
  %v4186 = vmax.f32 %v3923, 0.0
  %v4187 = vmax.f32 %v3925, 0.0
  %v4188 = vmax.f32 %v4036, 0.0
  %v4189 = vmax.f32 %v4038, 0.0
  %v4190 = vmax.f32 %v4148, 0.0
  %v4191 = vmax.f32 %v3929, 0.0
  %v4192 = vmax.f32 %v3931, 0.0
  %v4193 = vmax.f32 %v4042, 0.0
  %v4194 = vmax.f32 %v4044, 0.0
  %v4195 = vmax.f32 %v4153, 0.0
  %v4196 = vmax.f32 %v3935, 0.0
  %v4197 = vmax.f32 %v3937, 0.0
  %v4198 = vmax.f32 %v4048, 0.0
  %v4199 = vmax.f32 %v4050, 0.0
  %v4200 = vmax.f32 %v4158, 0.0
  %v4201 = vmax.f32 %v3941, 0.0
  %v4202 = vmax.f32 %v3943, 0.0
  %v4203 = vmax.f32 %v4054, 0.0
  %v4204 = vmax.f32 %v4056, 0.0
  %v4205 = vmax.f32 %v4163, 0.0
  %v4206 = vmax.f32 %v3947, 0.0
  %v4207 = vmax.f32 %v3949, 0.0
  %v4208 = vmax.f32 %v4060, 0.0
  %v4209 = vmax.f32 %v4062, 0.0
  %v4210 = vmax.f32 %v4168, 0.0
  %v4211 = vmax.f32 %v3953, 0.0
  %v4212 = vmax.f32 %v3955, 0.0
  %v4213 = vmax.f32 %v4066, 0.0
  %v4214 = vmax.f32 %v4068, 0.0
  %v4215 = vmax.f32 %v4173, 0.0
  %v4216 = vmax.f32 %v3959, 0.0
  %v4217 = vmax.f32 %v3961, 0.0
  %v4218 = vmax.f32 %v4072, 0.0
  %v4219 = vmax.f32 %v4074, 0.0
  %v4220 = vmax.f32 %v4178, 0.0
  %v4221 = vld [vmem:[%s7] sm:$0x7f]
  %v4222 = vmax.f32 %v3802, 0.0
  %v4223 = vmax.f32 %v3803, 0.0
  %v4224 = vmax.f32 %v3804, 0.0
  %v4225 = vmax.f32 %v3805, 0.0
  %v4226 = vmax.f32 %v3806, 0.0
  %v4227 = vmax.f32 %v3807, 0.0
  %v4228 = vmax.f32 %v3808, 0.0
  %v4229 = vmax.f32 %v3809, 0.0
  %v4231 = vlaneseq
  %v4232 = vshrl.u32 %v4231, 7
  %v4233 = vsub.s32 0, %v4232
  %v4234 = vrot.slane %v4221, %v4233
  %v4235 = vlaneseq
  %v4236 = vshrl.u32 %v4235, 7
  %v4237 = vsub.s32 1, %v4236
  %v4238 = vrot.slane %v4221, %v4237
  %v4239 = vlaneseq
  %v4240 = vshrl.u32 %v4239, 7
  %v4241 = vsub.s32 2, %v4240
  %v4242 = vrot.slane %v4221, %v4241
  %v4243 = vlaneseq
  %v4244 = vshrl.u32 %v4243, 7
  %v4245 = vsub.s32 3, %v4244
  %v4246 = vrot.slane %v4221, %v4245
  %v4247 = vlaneseq
  %v4248 = vshrl.u32 %v4247, 7
  %v4249 = vsub.s32 4, %v4248
  %v4250 = vrot.slane %v4221, %v4249
  %v4251 = vlaneseq
  %v4252 = vshrl.u32 %v4251, 7
  %v4253 = vsub.s32 5, %v4252
  %v4254 = vrot.slane %v4221, %v4253
  %v4255 = vlaneseq
  %v4256 = vshrl.u32 %v4255, 7
  %v4257 = vsub.s32 6, %v4256
  %v4258 = vrot.slane %v4221, %v4257
  %4267 = vset.pattern.permute.xlu0 0
  %4268 = vperm.xlu0 %4267, %v4222
  %v4269 = vpop.permute.xlu0 %4268
  %4272 = vset.pattern.permute.xlu0 0
  %4273 = vperm.xlu0 %4272, %v4223
  %v4274 = vpop.permute.xlu0 %4273
  %4277 = vset.pattern.permute.xlu0 0
  %4278 = vperm.xlu0 %4277, %v4224
  %v4279 = vpop.permute.xlu0 %4278
  %4282 = vset.pattern.permute.xlu0 0
  %4283 = vperm.xlu0 %4282, %v4225
  %v4284 = vpop.permute.xlu0 %4283
  %4287 = vset.pattern.permute.xlu0 0
  %4288 = vperm.xlu0 %4287, %v4226
  %v4289 = vpop.permute.xlu0 %4288
  %4292 = vset.pattern.permute.xlu0 0
  %4293 = vperm.xlu0 %4292, %v4227
  %v4294 = vpop.permute.xlu0 %4293
  %4297 = vset.pattern.permute.xlu0 0
  %4298 = vperm.xlu0 %4297, %v4228
  %v4299 = vpop.permute.xlu0 %4298
  %4302 = vset.pattern.permute.xlu0 0
  %4303 = vperm.xlu0 %4302, %v4229
  %v4304 = vpop.permute.xlu0 %4303
  %v4306 = vmul.f32 %v4234, %v4269
  %v4307 = vmul.f32 %v4238, %v4269
  %v4308 = vmul.f32 %v4242, %v4269
  %v4309 = vmul.f32 %v4246, %v4269
  %v4310 = vmul.f32 %v4250, %v4269
  %v4311 = vmul.f32 %v4254, %v4269
  %v4312 = vmul.f32 %v4258, %v4269
  %v4313 = vmul.f32 %v4234, %v4274
  %v4314 = vmul.f32 %v4238, %v4274
  %v4315 = vmul.f32 %v4242, %v4274
  %v4316 = vmul.f32 %v4246, %v4274
  %v4317 = vmul.f32 %v4250, %v4274
  %v4318 = vmul.f32 %v4254, %v4274
  %v4319 = vmul.f32 %v4258, %v4274
  %v4320 = vmul.f32 %v4234, %v4279
  %v4321 = vmul.f32 %v4238, %v4279
  %v4322 = vmul.f32 %v4242, %v4279
  %v4323 = vmul.f32 %v4246, %v4279
  %v4324 = vmul.f32 %v4250, %v4279
  %v4325 = vmul.f32 %v4254, %v4279
  %v4326 = vmul.f32 %v4258, %v4279
  %v4327 = vmul.f32 %v4234, %v4284
  %v4328 = vmul.f32 %v4238, %v4284
  %v4329 = vmul.f32 %v4242, %v4284
  %v4330 = vmul.f32 %v4246, %v4284
  %v4331 = vmul.f32 %v4250, %v4284
  %v4332 = vmul.f32 %v4254, %v4284
  %v4333 = vmul.f32 %v4258, %v4284
  %v4334 = vmul.f32 %v4234, %v4289
  %v4335 = vmul.f32 %v4238, %v4289
  %v4336 = vmul.f32 %v4242, %v4289
  %v4337 = vmul.f32 %v4246, %v4289
  %v4338 = vmul.f32 %v4250, %v4289
  %v4339 = vmul.f32 %v4254, %v4289
  %v4340 = vmul.f32 %v4258, %v4289
  %v4341 = vmul.f32 %v4234, %v4294
  %v4342 = vmul.f32 %v4238, %v4294
  %v4343 = vmul.f32 %v4242, %v4294
  %v4344 = vmul.f32 %v4246, %v4294
  %v4345 = vmul.f32 %v4250, %v4294
  %v4346 = vmul.f32 %v4254, %v4294
  %v4347 = vmul.f32 %v4258, %v4294
  %v4348 = vmul.f32 %v4234, %v4299
  %v4349 = vmul.f32 %v4238, %v4299
  %v4350 = vmul.f32 %v4242, %v4299
  %v4351 = vmul.f32 %v4246, %v4299
  %v4352 = vmul.f32 %v4250, %v4299
  %v4353 = vmul.f32 %v4254, %v4299
  %v4354 = vmul.f32 %v4258, %v4299
  %v4355 = vmul.f32 %v4234, %v4304
  %v4356 = vmul.f32 %v4238, %v4304
  %v4357 = vmul.f32 %v4242, %v4304
  %v4358 = vmul.f32 %v4246, %v4304
  %v4359 = vmul.f32 %v4250, %v4304
  %v4360 = vmul.f32 %v4254, %v4304
  %v4361 = vmul.f32 %v4258, %v4304
  %4362 = vst [vmem:[#allocation2] sm:$0xff] %v4306
  %4363 = vst [vmem:[#allocation2 + $0x8] sm:$0xff] %v4307
  %4364 = vst [vmem:[#allocation2 + $0x10] sm:$0xff] %v4308
  %4365 = vst [vmem:[#allocation2 + $0x18] sm:$0xff] %v4309
  %4366 = vst [vmem:[#allocation2 + $0x20] sm:$0xff] %v4310
  %4367 = vst [vmem:[#allocation2 + $0x28] sm:$0xff] %v4311
  %vm4368 = vcmask 261120
  %4369 = vst.msk [vmem:[#allocation2 + $0x30] sm:$0xff] %vm4368, %v4312
  %4370 = vst [vmem:[#allocation2 + $0x38] sm:$0xff] %v4313
  %4371 = vst [vmem:[#allocation2 + $0x40] sm:$0xff] %v4314
  %4372 = vst [vmem:[#allocation2 + $0x48] sm:$0xff] %v4315
  %4373 = vst [vmem:[#allocation2 + $0x50] sm:$0xff] %v4316
  %4374 = vst [vmem:[#allocation2 + $0x58] sm:$0xff] %v4317
  %4375 = vst [vmem:[#allocation2 + $0x60] sm:$0xff] %v4318
  %4376 = vst.msk [vmem:[#allocation2 + $0x68] sm:$0xff] %vm4368, %v4319
  %4377 = vst [vmem:[#allocation2 + $0x70] sm:$0xff] %v4320
  %4378 = vst [vmem:[#allocation2 + $0x78] sm:$0xff] %v4321
  %4379 = vst [vmem:[#allocation2 + $0x80] sm:$0xff] %v4322
  %4380 = vst [vmem:[#allocation2 + $0x88] sm:$0xff] %v4323
  %4381 = vst [vmem:[#allocation2 + $0x90] sm:$0xff] %v4324
  %4382 = vst [vmem:[#allocation2 + $0x98] sm:$0xff] %v4325
  %4383 = vst.msk [vmem:[#allocation2 + $0xa0] sm:$0xff] %vm4368, %v4326
  %4384 = vst [vmem:[#allocation2 + $0xa8] sm:$0xff] %v4327
  %4385 = vst [vmem:[#allocation2 + $0xb0] sm:$0xff] %v4328
  %4386 = vst [vmem:[#allocation2 + $0xb8] sm:$0xff] %v4329
  %4387 = vst [vmem:[#allocation2 + $0xc0] sm:$0xff] %v4330
  %4388 = vst [vmem:[#allocation2 + $0xc8] sm:$0xff] %v4331
  %4389 = vst [vmem:[#allocation2 + $0xd0] sm:$0xff] %v4332
  %4390 = vst.msk [vmem:[#allocation2 + $0xd8] sm:$0xff] %vm4368, %v4333
  %4391 = vst [vmem:[#allocation2 + $0xe0] sm:$0xff] %v4334
  %4392 = vst [vmem:[#allocation2 + $0xe8] sm:$0xff] %v4335
  %4393 = vst [vmem:[#allocation2 + $0xf0] sm:$0xff] %v4336
  %4394 = vst [vmem:[#allocation2 + $0xf8] sm:$0xff] %v4337
  %4395 = vst [vmem:[#allocation2 + $0x100] sm:$0xff] %v4338
  %4396 = vst [vmem:[#allocation2 + $0x108] sm:$0xff] %v4339
  %4397 = vst.msk [vmem:[#allocation2 + $0x110] sm:$0xff] %vm4368, %v4340
  %4398 = vst [vmem:[#allocation2 + $0x118] sm:$0xff] %v4341
  %4399 = vst [vmem:[#allocation2 + $0x120] sm:$0xff] %v4342
  %4400 = vst [vmem:[#allocation2 + $0x128] sm:$0xff] %v4343
  %4401 = vst [vmem:[#allocation2 + $0x130] sm:$0xff] %v4344
  %4402 = vst [vmem:[#allocation2 + $0x138] sm:$0xff] %v4345
  %4403 = vst [vmem:[#allocation2 + $0x140] sm:$0xff] %v4346
  %4404 = vst.msk [vmem:[#allocation2 + $0x148] sm:$0xff] %vm4368, %v4347
  %4405 = vst [vmem:[#allocation2 + $0x150] sm:$0xff] %v4348
  %4406 = vst [vmem:[#allocation2 + $0x158] sm:$0xff] %v4349
  %4407 = vst [vmem:[#allocation2 + $0x160] sm:$0xff] %v4350
  %4408 = vst [vmem:[#allocation2 + $0x168] sm:$0xff] %v4351
  %4409 = vst [vmem:[#allocation2 + $0x170] sm:$0xff] %v4352
  %4410 = vst [vmem:[#allocation2 + $0x178] sm:$0xff] %v4353
  %4411 = vst.msk [vmem:[#allocation2 + $0x180] sm:$0xff] %vm4368, %v4354
  %4412 = vst [vmem:[#allocation2 + $0x188] sm:$0xff] %v4355
  %4413 = vst [vmem:[#allocation2 + $0x190] sm:$0xff] %v4356
  %4414 = vst [vmem:[#allocation2 + $0x198] sm:$0xff] %v4357
  %4415 = vst [vmem:[#allocation2 + $0x1a0] sm:$0xff] %v4358
  %4416 = vst [vmem:[#allocation2 + $0x1a8] sm:$0xff] %v4359
  %4417 = vst [vmem:[#allocation2 + $0x1b0] sm:$0xff] %v4360
  %4418 = vst.msk [vmem:[#allocation2 + $0x1b8] sm:$0xff] %vm4368, %v4361
  %v4419 = vld [vmem:[#allocation2] sm:$0xff]
  %v4420 = vld [vmem:[#allocation2 + $0x8] sm:$0xff]
  %v4421 = vld [vmem:[#allocation2 + $0x10] sm:$0xff]
  %v4422 = vld [vmem:[#allocation2 + $0x18] sm:$0xff]
  %v4423 = vld [vmem:[#allocation2 + $0x20] sm:$0xff]
  %v4424 = vld [vmem:[#allocation2 + $0x28] sm:$0xff]
  %v4425 = vld [vmem:[#allocation2 + $0x38] sm:$0xff]
  %v4426 = vld [vmem:[#allocation2 + $0x40] sm:$0xff]
  %v4427 = vld [vmem:[#allocation2 + $0x48] sm:$0xff]
  %v4428 = vld [vmem:[#allocation2 + $0x50] sm:$0xff]
  %v4429 = vld [vmem:[#allocation2 + $0x58] sm:$0xff]
  %v4430 = vld [vmem:[#allocation2 + $0x60] sm:$0xff]
  %v4431 = vld [vmem:[#allocation2 + $0x70] sm:$0xff]
  %v4432 = vld [vmem:[#allocation2 + $0x78] sm:$0xff]
  %v4433 = vld [vmem:[#allocation2 + $0x80] sm:$0xff]
  %v4434 = vld [vmem:[#allocation2 + $0x88] sm:$0xff]
  %v4435 = vld [vmem:[#allocation2 + $0x90] sm:$0xff]
  %v4436 = vld [vmem:[#allocation2 + $0x98] sm:$0xff]
  %v4437 = vld [vmem:[#allocation2 + $0xa8] sm:$0xff]
  %v4438 = vld [vmem:[#allocation2 + $0xb0] sm:$0xff]
  %v4439 = vld [vmem:[#allocation2 + $0xb8] sm:$0xff]
  %v4440 = vld [vmem:[#allocation2 + $0xc0] sm:$0xff]
  %v4441 = vld [vmem:[#allocation2 + $0xc8] sm:$0xff]
  %v4442 = vld [vmem:[#allocation2 + $0xd0] sm:$0xff]
  %v4443 = vld [vmem:[#allocation2 + $0xe0] sm:$0xff]
  %v4444 = vld [vmem:[#allocation2 + $0xe8] sm:$0xff]
  %v4445 = vld [vmem:[#allocation2 + $0xf0] sm:$0xff]
  %v4446 = vld [vmem:[#allocation2 + $0xf8] sm:$0xff]
  %v4447 = vld [vmem:[#allocation2 + $0x100] sm:$0xff]
  %v4448 = vld [vmem:[#allocation2 + $0x108] sm:$0xff]
  %v4449 = vld [vmem:[#allocation2 + $0x118] sm:$0xff]
  %v4450 = vld [vmem:[#allocation2 + $0x120] sm:$0xff]
  %v4451 = vld [vmem:[#allocation2 + $0x128] sm:$0xff]
  %v4452 = vld [vmem:[#allocation2 + $0x130] sm:$0xff]
  %v4453 = vld [vmem:[#allocation2 + $0x138] sm:$0xff]
  %v4454 = vld [vmem:[#allocation2 + $0x140] sm:$0xff]
  %v4455 = vld [vmem:[#allocation2 + $0x150] sm:$0xff]
  %v4456 = vld [vmem:[#allocation2 + $0x158] sm:$0xff]
  %v4457 = vld [vmem:[#allocation2 + $0x160] sm:$0xff]
  %v4458 = vld [vmem:[#allocation2 + $0x168] sm:$0xff]
  %v4459 = vld [vmem:[#allocation2 + $0x170] sm:$0xff]
  %v4460 = vld [vmem:[#allocation2 + $0x178] sm:$0xff]
  %v4461 = vld [vmem:[#allocation2 + $0x188] sm:$0xff]
  %v4462 = vld [vmem:[#allocation2 + $0x190] sm:$0xff]
  %v4463 = vld [vmem:[#allocation2 + $0x198] sm:$0xff]
  %v4464 = vld [vmem:[#allocation2 + $0x1a0] sm:$0xff]
  %v4465 = vld [vmem:[#allocation2 + $0x1a8] sm:$0xff]
  %v4466 = vld [vmem:[#allocation2 + $0x1b0] sm:$0xff]
  %v4467 = vld [vmem:[%s8] sm:$0x1f]
  %vm4468 = vcmp.gt.f32.partialorder %v4467, 0.5
  %v4469 = vsel %vm4468, 1, 0
  %v4470 = vlaneseq
  %v4471 = vshrl.u32 %v4470, 7
  %v4472 = vsub.s32 0, %v4471
  %v4473 = vrot.slane %v4469, %v4472
  %v4474 = vlaneseq
  %v4475 = vshrl.u32 %v4474, 7
  %v4476 = vsub.s32 1, %v4475
  %v4477 = vrot.slane %v4469, %v4476
  %v4478 = vlaneseq
  %v4479 = vshrl.u32 %v4478, 7
  %v4480 = vsub.s32 2, %v4479
  %v4481 = vrot.slane %v4469, %v4480
  %v4482 = vlaneseq
  %v4483 = vshrl.u32 %v4482, 7
  %v4484 = vsub.s32 3, %v4483
  %v4485 = vrot.slane %v4469, %v4484
  %v4486 = vlaneseq
  %v4487 = vshrl.u32 %v4486, 7
  %v4488 = vsub.s32 4, %v4487
  %v4489 = vrot.slane %v4469, %v4488
  %vm4490 = vcmp.eq.s32.totalorder %v4473, 1
  %vm4491 = vcmp.eq.s32.totalorder %v4477, 1
  %vm4492 = vcmp.eq.s32.totalorder %v4481, 1
  %vm4493 = vcmp.eq.s32.totalorder %v4485, 1
  %vm4494 = vcmp.eq.s32.totalorder %v4489, 1
  %4543 = vrot.lane.b32.xlu0 %v4419, 44
  %v4544 = vpop.permute.xlu0 %4543
  %4545 = vrot.lane.b32.xlu0 %v4420, 44
  %v4546 = vpop.permute.xlu0 %4545
  %4547 = vrot.lane.b32.xlu0 %v4421, 44
  %v4548 = vpop.permute.xlu0 %4547
  %4549 = vrot.lane.b32.xlu0 %v4422, 44
  %v4550 = vpop.permute.xlu0 %4549
  %4551 = vrot.lane.b32.xlu0 %v4423, 44
  %v4552 = vpop.permute.xlu0 %4551
  %4553 = vrot.lane.b32.xlu0 %v4424, 44
  %v4554 = vpop.permute.xlu0 %4553
  %4555 = vrot.lane.b32.xlu0 %v4425, 44
  %v4556 = vpop.permute.xlu0 %4555
  %4557 = vrot.lane.b32.xlu0 %v4426, 44
  %v4558 = vpop.permute.xlu0 %4557
  %4559 = vrot.lane.b32.xlu0 %v4427, 44
  %v4560 = vpop.permute.xlu0 %4559
  %4561 = vrot.lane.b32.xlu0 %v4428, 44
  %v4562 = vpop.permute.xlu0 %4561
  %4563 = vrot.lane.b32.xlu0 %v4429, 44
  %v4564 = vpop.permute.xlu0 %4563
  %4565 = vrot.lane.b32.xlu0 %v4430, 44
  %v4566 = vpop.permute.xlu0 %4565
  %4567 = vrot.lane.b32.xlu0 %v4431, 44
  %v4568 = vpop.permute.xlu0 %4567
  %4569 = vrot.lane.b32.xlu0 %v4432, 44
  %v4570 = vpop.permute.xlu0 %4569
  %4571 = vrot.lane.b32.xlu0 %v4433, 44
  %v4572 = vpop.permute.xlu0 %4571
  %4573 = vrot.lane.b32.xlu0 %v4434, 44
  %v4574 = vpop.permute.xlu0 %4573
  %4575 = vrot.lane.b32.xlu0 %v4435, 44
  %v4576 = vpop.permute.xlu0 %4575
  %4577 = vrot.lane.b32.xlu0 %v4436, 44
  %v4578 = vpop.permute.xlu0 %4577
  %4579 = vrot.lane.b32.xlu0 %v4437, 44
  %v4580 = vpop.permute.xlu0 %4579
  %4581 = vrot.lane.b32.xlu0 %v4438, 44
  %v4582 = vpop.permute.xlu0 %4581
  %4583 = vrot.lane.b32.xlu0 %v4439, 44
  %v4584 = vpop.permute.xlu0 %4583
  %4585 = vrot.lane.b32.xlu0 %v4440, 44
  %v4586 = vpop.permute.xlu0 %4585
  %4587 = vrot.lane.b32.xlu0 %v4441, 44
  %v4588 = vpop.permute.xlu0 %4587
  %4589 = vrot.lane.b32.xlu0 %v4442, 44
  %v4590 = vpop.permute.xlu0 %4589
  %4591 = vrot.lane.b32.xlu0 %v4443, 44
  %v4592 = vpop.permute.xlu0 %4591
  %4593 = vrot.lane.b32.xlu0 %v4444, 44
  %v4594 = vpop.permute.xlu0 %4593
  %4595 = vrot.lane.b32.xlu0 %v4445, 44
  %v4596 = vpop.permute.xlu0 %4595
  %4597 = vrot.lane.b32.xlu0 %v4446, 44
  %v4598 = vpop.permute.xlu0 %4597
  %4599 = vrot.lane.b32.xlu0 %v4447, 44
  %v4600 = vpop.permute.xlu0 %4599
  %4601 = vrot.lane.b32.xlu0 %v4448, 44
  %v4602 = vpop.permute.xlu0 %4601
  %4603 = vrot.lane.b32.xlu0 %v4449, 44
  %v4604 = vpop.permute.xlu0 %4603
  %4605 = vrot.lane.b32.xlu0 %v4450, 44
  %v4606 = vpop.permute.xlu0 %4605
  %4607 = vrot.lane.b32.xlu0 %v4451, 44
  %v4608 = vpop.permute.xlu0 %4607
  %4609 = vrot.lane.b32.xlu0 %v4452, 44
  %v4610 = vpop.permute.xlu0 %4609
  %4611 = vrot.lane.b32.xlu0 %v4453, 44
  %v4612 = vpop.permute.xlu0 %4611
  %4613 = vrot.lane.b32.xlu0 %v4454, 44
  %v4614 = vpop.permute.xlu0 %4613
  %4615 = vrot.lane.b32.xlu0 %v4455, 44
  %v4616 = vpop.permute.xlu0 %4615
  %4617 = vrot.lane.b32.xlu0 %v4456, 44
  %v4618 = vpop.permute.xlu0 %4617
  %4619 = vrot.lane.b32.xlu0 %v4457, 44
  %v4620 = vpop.permute.xlu0 %4619
  %4621 = vrot.lane.b32.xlu0 %v4458, 44
  %v4622 = vpop.permute.xlu0 %4621
  %4623 = vrot.lane.b32.xlu0 %v4459, 44
  %v4624 = vpop.permute.xlu0 %4623
  %4625 = vrot.lane.b32.xlu0 %v4460, 44
  %v4626 = vpop.permute.xlu0 %4625
  %4627 = vrot.lane.b32.xlu0 %v4461, 44
  %v4628 = vpop.permute.xlu0 %4627
  %4629 = vrot.lane.b32.xlu0 %v4462, 44
  %v4630 = vpop.permute.xlu0 %4629
  %4631 = vrot.lane.b32.xlu0 %v4463, 44
  %v4632 = vpop.permute.xlu0 %4631
  %4633 = vrot.lane.b32.xlu0 %v4464, 44
  %v4634 = vpop.permute.xlu0 %4633
  %4635 = vrot.lane.b32.xlu0 %v4465, 44
  %v4636 = vpop.permute.xlu0 %4635
  %4637 = vrot.lane.b32.xlu0 %v4466, 44
  %v4638 = vpop.permute.xlu0 %4637
  %vm4639 = vcmask 359424
  %v4640 = vsel %vm4639, %v4544, %v4546
  %v4641 = vsel %vm4639, %v4546, %v4548
  %v4642 = vsel %vm4639, %v4548, %v4550
  %v4643 = vsel %vm4639, %v4550, %v4552
  %v4644 = vsel %vm4639, %v4552, %v4554
  %v4645 = vsel %vm4639, %v4556, %v4558
  %v4646 = vsel %vm4639, %v4558, %v4560
  %v4647 = vsel %vm4639, %v4560, %v4562
  %v4648 = vsel %vm4639, %v4562, %v4564
  %v4649 = vsel %vm4639, %v4564, %v4566
  %v4650 = vsel %vm4639, %v4568, %v4570
  %v4651 = vsel %vm4639, %v4570, %v4572
  %v4652 = vsel %vm4639, %v4572, %v4574
  %v4653 = vsel %vm4639, %v4574, %v4576
  %v4654 = vsel %vm4639, %v4576, %v4578
  %v4655 = vsel %vm4639, %v4580, %v4582
  %v4656 = vsel %vm4639, %v4582, %v4584
  %v4657 = vsel %vm4639, %v4584, %v4586
  %v4658 = vsel %vm4639, %v4586, %v4588
  %v4659 = vsel %vm4639, %v4588, %v4590
  %v4660 = vsel %vm4639, %v4592, %v4594
  %v4661 = vsel %vm4639, %v4594, %v4596
  %v4662 = vsel %vm4639, %v4596, %v4598
  %v4663 = vsel %vm4639, %v4598, %v4600
  %v4664 = vsel %vm4639, %v4600, %v4602
  %v4665 = vsel %vm4639, %v4604, %v4606
  %v4666 = vsel %vm4639, %v4606, %v4608
  %v4667 = vsel %vm4639, %v4608, %v4610
  %v4668 = vsel %vm4639, %v4610, %v4612
  %v4669 = vsel %vm4639, %v4612, %v4614
  %v4670 = vsel %vm4639, %v4616, %v4618
  %v4671 = vsel %vm4639, %v4618, %v4620
  %v4672 = vsel %vm4639, %v4620, %v4622
  %v4673 = vsel %vm4639, %v4622, %v4624
  %v4674 = vsel %vm4639, %v4624, %v4626
  %v4675 = vsel %vm4639, %v4628, %v4630
  %v4676 = vsel %vm4639, %v4630, %v4632
  %v4677 = vsel %vm4639, %v4632, %v4634
  %v4678 = vsel %vm4639, %v4634, %v4636
  %v4679 = vsel %vm4639, %v4636, %v4638
  %v4720 = vsel %vm4490, %v4181, %v4640
  %v4721 = vsel %vm4491, %v4182, %v4641
  %v4722 = vsel %vm4492, %v4183, %v4642
  %v4723 = vsel %vm4493, %v4184, %v4643
  %v4724 = vsel %vm4494, %v4185, %v4644
  %v4725 = vsel %vm4490, %v4186, %v4645
  %v4726 = vsel %vm4491, %v4187, %v4646
  %v4727 = vsel %vm4492, %v4188, %v4647
  %v4728 = vsel %vm4493, %v4189, %v4648
  %v4729 = vsel %vm4494, %v4190, %v4649
  %v4730 = vsel %vm4490, %v4191, %v4650
  %v4731 = vsel %vm4491, %v4192, %v4651
  %v4732 = vsel %vm4492, %v4193, %v4652
  %v4733 = vsel %vm4493, %v4194, %v4653
  %v4734 = vsel %vm4494, %v4195, %v4654
  %v4735 = vsel %vm4490, %v4196, %v4655
  %v4736 = vsel %vm4491, %v4197, %v4656
  %v4737 = vsel %vm4492, %v4198, %v4657
  %v4738 = vsel %vm4493, %v4199, %v4658
  %v4739 = vsel %vm4494, %v4200, %v4659
  %v4740 = vsel %vm4490, %v4201, %v4660
  %v4741 = vsel %vm4491, %v4202, %v4661
  %v4742 = vsel %vm4492, %v4203, %v4662
  %v4743 = vsel %vm4493, %v4204, %v4663
  %v4744 = vsel %vm4494, %v4205, %v4664
  %v4745 = vsel %vm4490, %v4206, %v4665
  %v4746 = vsel %vm4491, %v4207, %v4666
  %v4747 = vsel %vm4492, %v4208, %v4667
  %v4748 = vsel %vm4493, %v4209, %v4668
  %v4749 = vsel %vm4494, %v4210, %v4669
  %v4750 = vsel %vm4490, %v4211, %v4670
  %v4751 = vsel %vm4491, %v4212, %v4671
  %v4752 = vsel %vm4492, %v4213, %v4672
  %v4753 = vsel %vm4493, %v4214, %v4673
  %v4754 = vsel %vm4494, %v4215, %v4674
  %v4755 = vsel %vm4490, %v4216, %v4675
  %v4756 = vsel %vm4491, %v4217, %v4676
  %v4757 = vsel %vm4492, %v4218, %v4677
  %v4758 = vsel %vm4493, %v4219, %v4678
  %v4759 = vsel %vm4494, %v4220, %v4679
  %4800 = vrot.lane.b32.xlu0 %v4720, 84
  %v4801 = vpop.permute.xlu0 %4800
  %4802 = vrot.lane.b32.xlu0 %v4721, 84
  %v4803 = vpop.permute.xlu0 %4802
  %4804 = vrot.lane.b32.xlu0 %v4722, 84
  %v4805 = vpop.permute.xlu0 %4804
  %4806 = vrot.lane.b32.xlu0 %v4723, 84
  %v4807 = vpop.permute.xlu0 %4806
  %4808 = vrot.lane.b32.xlu0 %v4724, 84
  %v4809 = vpop.permute.xlu0 %4808
  %4810 = vrot.lane.b32.xlu0 %v4725, 84
  %v4811 = vpop.permute.xlu0 %4810
  %4812 = vrot.lane.b32.xlu0 %v4726, 84
  %v4813 = vpop.permute.xlu0 %4812
  %4814 = vrot.lane.b32.xlu0 %v4727, 84
  %v4815 = vpop.permute.xlu0 %4814
  %4816 = vrot.lane.b32.xlu0 %v4728, 84
  %v4817 = vpop.permute.xlu0 %4816
  %4818 = vrot.lane.b32.xlu0 %v4729, 84
  %v4819 = vpop.permute.xlu0 %4818
  %4820 = vrot.lane.b32.xlu0 %v4730, 84
  %v4821 = vpop.permute.xlu0 %4820
  %4822 = vrot.lane.b32.xlu0 %v4731, 84
  %v4823 = vpop.permute.xlu0 %4822
  %4824 = vrot.lane.b32.xlu0 %v4732, 84
  %v4825 = vpop.permute.xlu0 %4824
  %4826 = vrot.lane.b32.xlu0 %v4733, 84
  %v4827 = vpop.permute.xlu0 %4826
  %4828 = vrot.lane.b32.xlu0 %v4734, 84
  %v4829 = vpop.permute.xlu0 %4828
  %4830 = vrot.lane.b32.xlu0 %v4735, 84
  %v4831 = vpop.permute.xlu0 %4830
  %4832 = vrot.lane.b32.xlu0 %v4736, 84
  %v4833 = vpop.permute.xlu0 %4832
  %4834 = vrot.lane.b32.xlu0 %v4737, 84
  %v4835 = vpop.permute.xlu0 %4834
  %4836 = vrot.lane.b32.xlu0 %v4738, 84
  %v4837 = vpop.permute.xlu0 %4836
  %4838 = vrot.lane.b32.xlu0 %v4739, 84
  %v4839 = vpop.permute.xlu0 %4838
  %4840 = vrot.lane.b32.xlu0 %v4740, 84
  %v4841 = vpop.permute.xlu0 %4840
  %4842 = vrot.lane.b32.xlu0 %v4741, 84
  %v4843 = vpop.permute.xlu0 %4842
  %4844 = vrot.lane.b32.xlu0 %v4742, 84
  %v4845 = vpop.permute.xlu0 %4844
  %4846 = vrot.lane.b32.xlu0 %v4743, 84
  %v4847 = vpop.permute.xlu0 %4846
  %4848 = vrot.lane.b32.xlu0 %v4744, 84
  %v4849 = vpop.permute.xlu0 %4848
  %4850 = vrot.lane.b32.xlu0 %v4745, 84
  %v4851 = vpop.permute.xlu0 %4850
  %4852 = vrot.lane.b32.xlu0 %v4746, 84
  %v4853 = vpop.permute.xlu0 %4852
  %4854 = vrot.lane.b32.xlu0 %v4747, 84
  %v4855 = vpop.permute.xlu0 %4854
  %4856 = vrot.lane.b32.xlu0 %v4748, 84
  %v4857 = vpop.permute.xlu0 %4856
  %4858 = vrot.lane.b32.xlu0 %v4749, 84
  %v4859 = vpop.permute.xlu0 %4858
  %4860 = vrot.lane.b32.xlu0 %v4750, 84
  %v4861 = vpop.permute.xlu0 %4860
  %4862 = vrot.lane.b32.xlu0 %v4751, 84
  %v4863 = vpop.permute.xlu0 %4862
  %4864 = vrot.lane.b32.xlu0 %v4752, 84
  %v4865 = vpop.permute.xlu0 %4864
  %4866 = vrot.lane.b32.xlu0 %v4753, 84
  %v4867 = vpop.permute.xlu0 %4866
  %4868 = vrot.lane.b32.xlu0 %v4754, 84
  %v4869 = vpop.permute.xlu0 %4868
  %4870 = vrot.lane.b32.xlu0 %v4755, 84
  %v4871 = vpop.permute.xlu0 %4870
  %4872 = vrot.lane.b32.xlu0 %v4756, 84
  %v4873 = vpop.permute.xlu0 %4872
  %4874 = vrot.lane.b32.xlu0 %v4757, 84
  %v4875 = vpop.permute.xlu0 %4874
  %4876 = vrot.lane.b32.xlu0 %v4758, 84
  %v4877 = vpop.permute.xlu0 %4876
  %4878 = vrot.lane.b32.xlu0 %v4759, 84
  %v4879 = vpop.permute.xlu0 %4878
  %vm4880 = vcmask 687104
  %v4881 = vsel %vm4880, %v4801, %v4803
  %v4882 = vsel %vm4880, %v4803, %v4805
  %v4883 = vsel %vm4880, %v4805, %v4807
  %v4884 = vsel %vm4880, %v4807, %v4809
  %v4885 = vsel %vm4880, %v4811, %v4813
  %v4886 = vsel %vm4880, %v4813, %v4815
  %v4887 = vsel %vm4880, %v4815, %v4817
  %v4888 = vsel %vm4880, %v4817, %v4819
  %v4889 = vsel %vm4880, %v4821, %v4823
  %v4890 = vsel %vm4880, %v4823, %v4825
  %v4891 = vsel %vm4880, %v4825, %v4827
  %v4892 = vsel %vm4880, %v4827, %v4829
  %v4893 = vsel %vm4880, %v4831, %v4833
  %v4894 = vsel %vm4880, %v4833, %v4835
  %v4895 = vsel %vm4880, %v4835, %v4837
  %v4896 = vsel %vm4880, %v4837, %v4839
  %v4897 = vsel %vm4880, %v4841, %v4843
  %v4898 = vsel %vm4880, %v4843, %v4845
  %v4899 = vsel %vm4880, %v4845, %v4847
  %v4900 = vsel %vm4880, %v4847, %v4849
  %v4901 = vsel %vm4880, %v4851, %v4853
  %v4902 = vsel %vm4880, %v4853, %v4855
  %v4903 = vsel %vm4880, %v4855, %v4857
  %v4904 = vsel %vm4880, %v4857, %v4859
  %v4905 = vsel %vm4880, %v4861, %v4863
  %v4906 = vsel %vm4880, %v4863, %v4865
  %v4907 = vsel %vm4880, %v4865, %v4867
  %v4908 = vsel %vm4880, %v4867, %v4869
  %v4909 = vsel %vm4880, %v4871, %v4873
  %v4910 = vsel %vm4880, %v4873, %v4875
  %v4911 = vsel %vm4880, %v4875, %v4877
  %v4912 = vsel %vm4880, %v4877, %v4879
  %vm4961 = vcmask 1048224
  %4962 = vst.msk [vmem:[#allocation2] sm:$0xff] %vm4961, %v4801
  %4963 = vst [vmem:[#allocation2 + $0x8] sm:$0xff] %v4881
  %4964 = vst [vmem:[#allocation2 + $0x10] sm:$0xff] %v4882
  %4965 = vst [vmem:[#allocation2 + $0x18] sm:$0xff] %v4883
  %4966 = vst [vmem:[#allocation2 + $0x20] sm:$0xff] %v4884
  %vm4967 = vcmask 621568
  %4968 = vst.msk [vmem:[#allocation2 + $0x28] sm:$0xff] %vm4967, %v4809
  %4969 = vst.msk [vmem:[#allocation2 + $0x38] sm:$0xff] %vm4961, %v4811
  %4970 = vst [vmem:[#allocation2 + $0x40] sm:$0xff] %v4885
  %4971 = vst [vmem:[#allocation2 + $0x48] sm:$0xff] %v4886
  %4972 = vst [vmem:[#allocation2 + $0x50] sm:$0xff] %v4887
  %4973 = vst [vmem:[#allocation2 + $0x58] sm:$0xff] %v4888
  %4974 = vst.msk [vmem:[#allocation2 + $0x60] sm:$0xff] %vm4967, %v4819
  %4975 = vst.msk [vmem:[#allocation2 + $0x70] sm:$0xff] %vm4961, %v4821
  %4976 = vst [vmem:[#allocation2 + $0x78] sm:$0xff] %v4889
  %4977 = vst [vmem:[#allocation2 + $0x80] sm:$0xff] %v4890
  %4978 = vst [vmem:[#allocation2 + $0x88] sm:$0xff] %v4891
  %4979 = vst [vmem:[#allocation2 + $0x90] sm:$0xff] %v4892
  %4980 = vst.msk [vmem:[#allocation2 + $0x98] sm:$0xff] %vm4967, %v4829
  %4981 = vst.msk [vmem:[#allocation2 + $0xa8] sm:$0xff] %vm4961, %v4831
  %4982 = vst [vmem:[#allocation2 + $0xb0] sm:$0xff] %v4893
  %4983 = vst [vmem:[#allocation2 + $0xb8] sm:$0xff] %v4894
  %4984 = vst [vmem:[#allocation2 + $0xc0] sm:$0xff] %v4895
  %4985 = vst [vmem:[#allocation2 + $0xc8] sm:$0xff] %v4896
  %4986 = vst.msk [vmem:[#allocation2 + $0xd0] sm:$0xff] %vm4967, %v4839
  %4987 = vst.msk [vmem:[#allocation2 + $0xe0] sm:$0xff] %vm4961, %v4841
  %4988 = vst [vmem:[#allocation2 + $0xe8] sm:$0xff] %v4897
  %4989 = vst [vmem:[#allocation2 + $0xf0] sm:$0xff] %v4898
  %4990 = vst [vmem:[#allocation2 + $0xf8] sm:$0xff] %v4899
  %4991 = vst [vmem:[#allocation2 + $0x100] sm:$0xff] %v4900
  %4992 = vst.msk [vmem:[#allocation2 + $0x108] sm:$0xff] %vm4967, %v4849
  %4993 = vst.msk [vmem:[#allocation2 + $0x118] sm:$0xff] %vm4961, %v4851
  %4994 = vst [vmem:[#allocation2 + $0x120] sm:$0xff] %v4901
  %4995 = vst [vmem:[#allocation2 + $0x128] sm:$0xff] %v4902
  %4996 = vst [vmem:[#allocation2 + $0x130] sm:$0xff] %v4903
  %4997 = vst [vmem:[#allocation2 + $0x138] sm:$0xff] %v4904
  %4998 = vst.msk [vmem:[#allocation2 + $0x140] sm:$0xff] %vm4967, %v4859
  %4999 = vst.msk [vmem:[#allocation2 + $0x150] sm:$0xff] %vm4961, %v4861
  %5000 = vst [vmem:[#allocation2 + $0x158] sm:$0xff] %v4905
  %5001 = vst [vmem:[#allocation2 + $0x160] sm:$0xff] %v4906
  %5002 = vst [vmem:[#allocation2 + $0x168] sm:$0xff] %v4907
  %5003 = vst [vmem:[#allocation2 + $0x170] sm:$0xff] %v4908
  %5004 = vst.msk [vmem:[#allocation2 + $0x178] sm:$0xff] %vm4967, %v4869
  %5005 = vst.msk [vmem:[#allocation2 + $0x188] sm:$0xff] %vm4961, %v4871
  %5006 = vst [vmem:[#allocation2 + $0x190] sm:$0xff] %v4909
  %5007 = vst [vmem:[#allocation2 + $0x198] sm:$0xff] %v4910
  %5008 = vst [vmem:[#allocation2 + $0x1a0] sm:$0xff] %v4911
  %5009 = vst [vmem:[#allocation2 + $0x1a8] sm:$0xff] %v4912
  %5010 = vst.msk [vmem:[#allocation2 + $0x1b0] sm:$0xff] %vm4967, %v4879
  %v5011 = vld [vmem:[#allocation2] sm:$0xff]
  %v5012 = vld [vmem:[#allocation2 + $0x8] sm:$0xff]
  %v5013 = vld [vmem:[#allocation2 + $0x10] sm:$0xff]
  %v5014 = vld [vmem:[#allocation2 + $0x18] sm:$0xff]
  %v5015 = vld [vmem:[#allocation2 + $0x20] sm:$0xff]
  %v5016 = vld [vmem:[#allocation2 + $0x28] sm:$0xff]
  %v5017 = vld [vmem:[#allocation2 + $0x38] sm:$0xff]
  %v5018 = vld [vmem:[#allocation2 + $0x40] sm:$0xff]
  %v5019 = vld [vmem:[#allocation2 + $0x48] sm:$0xff]
  %v5020 = vld [vmem:[#allocation2 + $0x50] sm:$0xff]
  %v5021 = vld [vmem:[#allocation2 + $0x58] sm:$0xff]
  %v5022 = vld [vmem:[#allocation2 + $0x60] sm:$0xff]
  %v5023 = vld [vmem:[#allocation2 + $0x70] sm:$0xff]
  %v5024 = vld [vmem:[#allocation2 + $0x78] sm:$0xff]
  %v5025 = vld [vmem:[#allocation2 + $0x80] sm:$0xff]
  %v5026 = vld [vmem:[#allocation2 + $0x88] sm:$0xff]
  %v5027 = vld [vmem:[#allocation2 + $0x90] sm:$0xff]
  %v5028 = vld [vmem:[#allocation2 + $0x98] sm:$0xff]
  %v5029 = vld [vmem:[#allocation2 + $0xa8] sm:$0xff]
  %v5030 = vld [vmem:[#allocation2 + $0xb0] sm:$0xff]
  %v5031 = vld [vmem:[#allocation2 + $0xb8] sm:$0xff]
  %v5032 = vld [vmem:[#allocation2 + $0xc0] sm:$0xff]
  %v5033 = vld [vmem:[#allocation2 + $0xc8] sm:$0xff]
  %v5034 = vld [vmem:[#allocation2 + $0xd0] sm:$0xff]
  %v5035 = vld [vmem:[#allocation2 + $0xe0] sm:$0xff]
  %v5036 = vld [vmem:[#allocation2 + $0xe8] sm:$0xff]
  %v5037 = vld [vmem:[#allocation2 + $0xf0] sm:$0xff]
  %v5038 = vld [vmem:[#allocation2 + $0xf8] sm:$0xff]
  %v5039 = vld [vmem:[#allocation2 + $0x100] sm:$0xff]
  %v5040 = vld [vmem:[#allocation2 + $0x108] sm:$0xff]
  %v5041 = vld [vmem:[#allocation2 + $0x118] sm:$0xff]
  %v5042 = vld [vmem:[#allocation2 + $0x120] sm:$0xff]
  %v5043 = vld [vmem:[#allocation2 + $0x128] sm:$0xff]
  %v5044 = vld [vmem:[#allocation2 + $0x130] sm:$0xff]
  %v5045 = vld [vmem:[#allocation2 + $0x138] sm:$0xff]
  %v5046 = vld [vmem:[#allocation2 + $0x140] sm:$0xff]
  %v5047 = vld [vmem:[#allocation2 + $0x150] sm:$0xff]
  %v5048 = vld [vmem:[#allocation2 + $0x158] sm:$0xff]
  %v5049 = vld [vmem:[#allocation2 + $0x160] sm:$0xff]
  %v5050 = vld [vmem:[#allocation2 + $0x168] sm:$0xff]
  %v5051 = vld [vmem:[#allocation2 + $0x170] sm:$0xff]
  %v5052 = vld [vmem:[#allocation2 + $0x178] sm:$0xff]
  %v5053 = vld [vmem:[#allocation2 + $0x188] sm:$0xff]
  %v5054 = vld [vmem:[#allocation2 + $0x190] sm:$0xff]
  %v5055 = vld [vmem:[#allocation2 + $0x198] sm:$0xff]
  %v5056 = vld [vmem:[#allocation2 + $0x1a0] sm:$0xff]
  %v5057 = vld [vmem:[#allocation2 + $0x1a8] sm:$0xff]
  %v5058 = vld [vmem:[#allocation2 + $0x1b0] sm:$0xff]
  %v5059 = vld [vmem:[#allocation2 + $0x30] sm:$0xff]
  %v5060 = vld [vmem:[#allocation2 + $0x68] sm:$0xff]
  %v5061 = vld [vmem:[#allocation2 + $0xa0] sm:$0xff]
  %v5062 = vld [vmem:[#allocation2 + $0xd8] sm:$0xff]
  %v5063 = vld [vmem:[#allocation2 + $0x110] sm:$0xff]
  %v5064 = vld [vmem:[#allocation2 + $0x148] sm:$0xff]
  %v5065 = vld [vmem:[#allocation2 + $0x180] sm:$0xff]
  %v5066 = vld [vmem:[#allocation2 + $0x1b8] sm:$0xff]
  %5115 = vrot.lane.b32.xlu0 %v5011, 127
  %v5116 = vpop.permute.xlu0 %5115
  %5117 = vrot.lane.b32.xlu0 %v5012, 127
  %v5118 = vpop.permute.xlu0 %5117
  %5119 = vrot.lane.b32.xlu0 %v5013, 127
  %v5120 = vpop.permute.xlu0 %5119
  %5121 = vrot.lane.b32.xlu0 %v5014, 127
  %v5122 = vpop.permute.xlu0 %5121
  %5123 = vrot.lane.b32.xlu0 %v5015, 127
  %v5124 = vpop.permute.xlu0 %5123
  %5125 = vrot.lane.b32.xlu0 %v5016, 127
  %v5126 = vpop.permute.xlu0 %5125
  %5127 = vrot.lane.b32.xlu0 %v5017, 127
  %v5128 = vpop.permute.xlu0 %5127
  %5129 = vrot.lane.b32.xlu0 %v5018, 127
  %v5130 = vpop.permute.xlu0 %5129
  %5131 = vrot.lane.b32.xlu0 %v5019, 127
  %v5132 = vpop.permute.xlu0 %5131
  %5133 = vrot.lane.b32.xlu0 %v5020, 127
  %v5134 = vpop.permute.xlu0 %5133
  %5135 = vrot.lane.b32.xlu0 %v5021, 127
  %v5136 = vpop.permute.xlu0 %5135
  %5137 = vrot.lane.b32.xlu0 %v5022, 127
  %v5138 = vpop.permute.xlu0 %5137
  %5139 = vrot.lane.b32.xlu0 %v5023, 127
  %v5140 = vpop.permute.xlu0 %5139
  %5141 = vrot.lane.b32.xlu0 %v5024, 127
  %v5142 = vpop.permute.xlu0 %5141
  %5143 = vrot.lane.b32.xlu0 %v5025, 127
  %v5144 = vpop.permute.xlu0 %5143
  %5145 = vrot.lane.b32.xlu0 %v5026, 127
  %v5146 = vpop.permute.xlu0 %5145
  %5147 = vrot.lane.b32.xlu0 %v5027, 127
  %v5148 = vpop.permute.xlu0 %5147
  %5149 = vrot.lane.b32.xlu0 %v5028, 127
  %v5150 = vpop.permute.xlu0 %5149
  %5151 = vrot.lane.b32.xlu0 %v5029, 127
  %v5152 = vpop.permute.xlu0 %5151
  %5153 = vrot.lane.b32.xlu0 %v5030, 127
  %v5154 = vpop.permute.xlu0 %5153
  %5155 = vrot.lane.b32.xlu0 %v5031, 127
  %v5156 = vpop.permute.xlu0 %5155
  %5157 = vrot.lane.b32.xlu0 %v5032, 127
  %v5158 = vpop.permute.xlu0 %5157
  %5159 = vrot.lane.b32.xlu0 %v5033, 127
  %v5160 = vpop.permute.xlu0 %5159
  %5161 = vrot.lane.b32.xlu0 %v5034, 127
  %v5162 = vpop.permute.xlu0 %5161
  %5163 = vrot.lane.b32.xlu0 %v5035, 127
  %v5164 = vpop.permute.xlu0 %5163
  %5165 = vrot.lane.b32.xlu0 %v5036, 127
  %v5166 = vpop.permute.xlu0 %5165
  %5167 = vrot.lane.b32.xlu0 %v5037, 127
  %v5168 = vpop.permute.xlu0 %5167
  %5169 = vrot.lane.b32.xlu0 %v5038, 127
  %v5170 = vpop.permute.xlu0 %5169
  %5171 = vrot.lane.b32.xlu0 %v5039, 127
  %v5172 = vpop.permute.xlu0 %5171
  %5173 = vrot.lane.b32.xlu0 %v5040, 127
  %v5174 = vpop.permute.xlu0 %5173
  %5175 = vrot.lane.b32.xlu0 %v5041, 127
  %v5176 = vpop.permute.xlu0 %5175
  %5177 = vrot.lane.b32.xlu0 %v5042, 127
  %v5178 = vpop.permute.xlu0 %5177
  %5179 = vrot.lane.b32.xlu0 %v5043, 127
  %v5180 = vpop.permute.xlu0 %5179
  %5181 = vrot.lane.b32.xlu0 %v5044, 127
  %v5182 = vpop.permute.xlu0 %5181
  %5183 = vrot.lane.b32.xlu0 %v5045, 127
  %v5184 = vpop.permute.xlu0 %5183
  %5185 = vrot.lane.b32.xlu0 %v5046, 127
  %v5186 = vpop.permute.xlu0 %5185
  %5187 = vrot.lane.b32.xlu0 %v5047, 127
  %v5188 = vpop.permute.xlu0 %5187
  %5189 = vrot.lane.b32.xlu0 %v5048, 127
  %v5190 = vpop.permute.xlu0 %5189
  %5191 = vrot.lane.b32.xlu0 %v5049, 127
  %v5192 = vpop.permute.xlu0 %5191
  %5193 = vrot.lane.b32.xlu0 %v5050, 127
  %v5194 = vpop.permute.xlu0 %5193
  %5195 = vrot.lane.b32.xlu0 %v5051, 127
  %v5196 = vpop.permute.xlu0 %5195
  %5197 = vrot.lane.b32.xlu0 %v5052, 127
  %v5198 = vpop.permute.xlu0 %5197
  %5199 = vrot.lane.b32.xlu0 %v5053, 127
  %v5200 = vpop.permute.xlu0 %5199
  %5201 = vrot.lane.b32.xlu0 %v5054, 127
  %v5202 = vpop.permute.xlu0 %5201
  %5203 = vrot.lane.b32.xlu0 %v5055, 127
  %v5204 = vpop.permute.xlu0 %5203
  %5205 = vrot.lane.b32.xlu0 %v5056, 127
  %v5206 = vpop.permute.xlu0 %5205
  %5207 = vrot.lane.b32.xlu0 %v5057, 127
  %v5208 = vpop.permute.xlu0 %5207
  %5209 = vrot.lane.b32.xlu0 %v5058, 127
  %v5210 = vpop.permute.xlu0 %5209
  %v5211 = vsel %vm54, %v5116, %v5118
  %v5212 = vsel %vm54, %v5118, %v5120
  %v5213 = vsel %vm54, %v5120, %v5122
  %v5214 = vsel %vm54, %v5122, %v5124
  %v5215 = vsel %vm54, %v5124, %v5126
  %v5216 = vsel %vm54, %v5128, %v5130
  %v5217 = vsel %vm54, %v5130, %v5132
  %v5218 = vsel %vm54, %v5132, %v5134
  %v5219 = vsel %vm54, %v5134, %v5136
  %v5220 = vsel %vm54, %v5136, %v5138
  %v5221 = vsel %vm54, %v5140, %v5142
  %v5222 = vsel %vm54, %v5142, %v5144
  %v5223 = vsel %vm54, %v5144, %v5146
  %v5224 = vsel %vm54, %v5146, %v5148
  %v5225 = vsel %vm54, %v5148, %v5150
  %v5226 = vsel %vm54, %v5152, %v5154
  %v5227 = vsel %vm54, %v5154, %v5156
  %v5228 = vsel %vm54, %v5156, %v5158
  %v5229 = vsel %vm54, %v5158, %v5160
  %v5230 = vsel %vm54, %v5160, %v5162
  %v5231 = vsel %vm54, %v5164, %v5166
  %v5232 = vsel %vm54, %v5166, %v5168
  %v5233 = vsel %vm54, %v5168, %v5170
  %v5234 = vsel %vm54, %v5170, %v5172
  %v5235 = vsel %vm54, %v5172, %v5174
  %v5236 = vsel %vm54, %v5176, %v5178
  %v5237 = vsel %vm54, %v5178, %v5180
  %v5238 = vsel %vm54, %v5180, %v5182
  %v5239 = vsel %vm54, %v5182, %v5184
  %v5240 = vsel %vm54, %v5184, %v5186
  %v5241 = vsel %vm54, %v5188, %v5190
  %v5242 = vsel %vm54, %v5190, %v5192
  %v5243 = vsel %vm54, %v5192, %v5194
  %v5244 = vsel %vm54, %v5194, %v5196
  %v5245 = vsel %vm54, %v5196, %v5198
  %v5246 = vsel %vm54, %v5200, %v5202
  %v5247 = vsel %vm54, %v5202, %v5204
  %v5248 = vsel %vm54, %v5204, %v5206
  %v5249 = vsel %vm54, %v5206, %v5208
  %v5250 = vsel %vm54, %v5208, %v5210
  %5299 = vrot.lane.b32.xlu0 %v5011, 126
  %v5300 = vpop.permute.xlu0 %5299
  %5301 = vrot.lane.b32.xlu0 %v5012, 126
  %v5302 = vpop.permute.xlu0 %5301
  %5303 = vrot.lane.b32.xlu0 %v5013, 126
  %v5304 = vpop.permute.xlu0 %5303
  %5305 = vrot.lane.b32.xlu0 %v5014, 126
  %v5306 = vpop.permute.xlu0 %5305
  %5307 = vrot.lane.b32.xlu0 %v5015, 126
  %v5308 = vpop.permute.xlu0 %5307
  %5309 = vrot.lane.b32.xlu0 %v5016, 126
  %v5310 = vpop.permute.xlu0 %5309
  %5311 = vrot.lane.b32.xlu0 %v5017, 126
  %v5312 = vpop.permute.xlu0 %5311
  %5313 = vrot.lane.b32.xlu0 %v5018, 126
  %v5314 = vpop.permute.xlu0 %5313
  %5315 = vrot.lane.b32.xlu0 %v5019, 126
  %v5316 = vpop.permute.xlu0 %5315
  %5317 = vrot.lane.b32.xlu0 %v5020, 126
  %v5318 = vpop.permute.xlu0 %5317
  %5319 = vrot.lane.b32.xlu0 %v5021, 126
  %v5320 = vpop.permute.xlu0 %5319
  %5321 = vrot.lane.b32.xlu0 %v5022, 126
  %v5322 = vpop.permute.xlu0 %5321
  %5323 = vrot.lane.b32.xlu0 %v5023, 126
  %v5324 = vpop.permute.xlu0 %5323
  %5325 = vrot.lane.b32.xlu0 %v5024, 126
  %v5326 = vpop.permute.xlu0 %5325
  %5327 = vrot.lane.b32.xlu0 %v5025, 126
  %v5328 = vpop.permute.xlu0 %5327
  %5329 = vrot.lane.b32.xlu0 %v5026, 126
  %v5330 = vpop.permute.xlu0 %5329
  %5331 = vrot.lane.b32.xlu0 %v5027, 126
  %v5332 = vpop.permute.xlu0 %5331
  %5333 = vrot.lane.b32.xlu0 %v5028, 126
  %v5334 = vpop.permute.xlu0 %5333
  %5335 = vrot.lane.b32.xlu0 %v5029, 126
  %v5336 = vpop.permute.xlu0 %5335
  %5337 = vrot.lane.b32.xlu0 %v5030, 126
  %v5338 = vpop.permute.xlu0 %5337
  %5339 = vrot.lane.b32.xlu0 %v5031, 126
  %v5340 = vpop.permute.xlu0 %5339
  %5341 = vrot.lane.b32.xlu0 %v5032, 126
  %v5342 = vpop.permute.xlu0 %5341
  %5343 = vrot.lane.b32.xlu0 %v5033, 126
  %v5344 = vpop.permute.xlu0 %5343
  %5345 = vrot.lane.b32.xlu0 %v5034, 126
  %v5346 = vpop.permute.xlu0 %5345
  %5347 = vrot.lane.b32.xlu0 %v5035, 126
  %v5348 = vpop.permute.xlu0 %5347
  %5349 = vrot.lane.b32.xlu0 %v5036, 126
  %v5350 = vpop.permute.xlu0 %5349
  %5351 = vrot.lane.b32.xlu0 %v5037, 126
  %v5352 = vpop.permute.xlu0 %5351
  %5353 = vrot.lane.b32.xlu0 %v5038, 126
  %v5354 = vpop.permute.xlu0 %5353
  %5355 = vrot.lane.b32.xlu0 %v5039, 126
  %v5356 = vpop.permute.xlu0 %5355
  %5357 = vrot.lane.b32.xlu0 %v5040, 126
  %v5358 = vpop.permute.xlu0 %5357
  %5359 = vrot.lane.b32.xlu0 %v5041, 126
  %v5360 = vpop.permute.xlu0 %5359
  %5361 = vrot.lane.b32.xlu0 %v5042, 126
  %v5362 = vpop.permute.xlu0 %5361
  %5363 = vrot.lane.b32.xlu0 %v5043, 126
  %v5364 = vpop.permute.xlu0 %5363
  %5365 = vrot.lane.b32.xlu0 %v5044, 126
  %v5366 = vpop.permute.xlu0 %5365
  %5367 = vrot.lane.b32.xlu0 %v5045, 126
  %v5368 = vpop.permute.xlu0 %5367
  %5369 = vrot.lane.b32.xlu0 %v5046, 126
  %v5370 = vpop.permute.xlu0 %5369
  %5371 = vrot.lane.b32.xlu0 %v5047, 126
  %v5372 = vpop.permute.xlu0 %5371
  %5373 = vrot.lane.b32.xlu0 %v5048, 126
  %v5374 = vpop.permute.xlu0 %5373
  %5375 = vrot.lane.b32.xlu0 %v5049, 126
  %v5376 = vpop.permute.xlu0 %5375
  %5377 = vrot.lane.b32.xlu0 %v5050, 126
  %v5378 = vpop.permute.xlu0 %5377
  %5379 = vrot.lane.b32.xlu0 %v5051, 126
  %v5380 = vpop.permute.xlu0 %5379
  %5381 = vrot.lane.b32.xlu0 %v5052, 126
  %v5382 = vpop.permute.xlu0 %5381
  %5383 = vrot.lane.b32.xlu0 %v5053, 126
  %v5384 = vpop.permute.xlu0 %5383
  %5385 = vrot.lane.b32.xlu0 %v5054, 126
  %v5386 = vpop.permute.xlu0 %5385
  %5387 = vrot.lane.b32.xlu0 %v5055, 126
  %v5388 = vpop.permute.xlu0 %5387
  %5389 = vrot.lane.b32.xlu0 %v5056, 126
  %v5390 = vpop.permute.xlu0 %5389
  %5391 = vrot.lane.b32.xlu0 %v5057, 126
  %v5392 = vpop.permute.xlu0 %5391
  %5393 = vrot.lane.b32.xlu0 %v5058, 126
  %v5394 = vpop.permute.xlu0 %5393
  %v5395 = vsel %vm74, %v5300, %v5302
  %v5396 = vsel %vm74, %v5302, %v5304
  %v5397 = vsel %vm74, %v5304, %v5306
  %v5398 = vsel %vm74, %v5306, %v5308
  %v5399 = vsel %vm74, %v5308, %v5310
  %v5400 = vsel %vm74, %v5312, %v5314
  %v5401 = vsel %vm74, %v5314, %v5316
  %v5402 = vsel %vm74, %v5316, %v5318
  %v5403 = vsel %vm74, %v5318, %v5320
  %v5404 = vsel %vm74, %v5320, %v5322
  %v5405 = vsel %vm74, %v5324, %v5326
  %v5406 = vsel %vm74, %v5326, %v5328
  %v5407 = vsel %vm74, %v5328, %v5330
  %v5408 = vsel %vm74, %v5330, %v5332
  %v5409 = vsel %vm74, %v5332, %v5334
  %v5410 = vsel %vm74, %v5336, %v5338
  %v5411 = vsel %vm74, %v5338, %v5340
  %v5412 = vsel %vm74, %v5340, %v5342
  %v5413 = vsel %vm74, %v5342, %v5344
  %v5414 = vsel %vm74, %v5344, %v5346
  %v5415 = vsel %vm74, %v5348, %v5350
  %v5416 = vsel %vm74, %v5350, %v5352
  %v5417 = vsel %vm74, %v5352, %v5354
  %v5418 = vsel %vm74, %v5354, %v5356
  %v5419 = vsel %vm74, %v5356, %v5358
  %v5420 = vsel %vm74, %v5360, %v5362
  %v5421 = vsel %vm74, %v5362, %v5364
  %v5422 = vsel %vm74, %v5364, %v5366
  %v5423 = vsel %vm74, %v5366, %v5368
  %v5424 = vsel %vm74, %v5368, %v5370
  %v5425 = vsel %vm74, %v5372, %v5374
  %v5426 = vsel %vm74, %v5374, %v5376
  %v5427 = vsel %vm74, %v5376, %v5378
  %v5428 = vsel %vm74, %v5378, %v5380
  %v5429 = vsel %vm74, %v5380, %v5382
  %v5430 = vsel %vm74, %v5384, %v5386
  %v5431 = vsel %vm74, %v5386, %v5388
  %v5432 = vsel %vm74, %v5388, %v5390
  %v5433 = vsel %vm74, %v5390, %v5392
  %v5434 = vsel %vm74, %v5392, %v5394
  %5483 = vrot.lane.b32.xlu0 %v5011, 125
  %v5484 = vpop.permute.xlu0 %5483
  %5485 = vrot.lane.b32.xlu0 %v5012, 125
  %v5486 = vpop.permute.xlu0 %5485
  %5487 = vrot.lane.b32.xlu0 %v5013, 125
  %v5488 = vpop.permute.xlu0 %5487
  %5489 = vrot.lane.b32.xlu0 %v5014, 125
  %v5490 = vpop.permute.xlu0 %5489
  %5491 = vrot.lane.b32.xlu0 %v5015, 125
  %v5492 = vpop.permute.xlu0 %5491
  %5493 = vrot.lane.b32.xlu0 %v5016, 125
  %v5494 = vpop.permute.xlu0 %5493
  %5495 = vrot.lane.b32.xlu0 %v5017, 125
  %v5496 = vpop.permute.xlu0 %5495
  %5497 = vrot.lane.b32.xlu0 %v5018, 125
  %v5498 = vpop.permute.xlu0 %5497
  %5499 = vrot.lane.b32.xlu0 %v5019, 125
  %v5500 = vpop.permute.xlu0 %5499
  %5501 = vrot.lane.b32.xlu0 %v5020, 125
  %v5502 = vpop.permute.xlu0 %5501
  %5503 = vrot.lane.b32.xlu0 %v5021, 125
  %v5504 = vpop.permute.xlu0 %5503
  %5505 = vrot.lane.b32.xlu0 %v5022, 125
  %v5506 = vpop.permute.xlu0 %5505
  %5507 = vrot.lane.b32.xlu0 %v5023, 125
  %v5508 = vpop.permute.xlu0 %5507
  %5509 = vrot.lane.b32.xlu0 %v5024, 125
  %v5510 = vpop.permute.xlu0 %5509
  %5511 = vrot.lane.b32.xlu0 %v5025, 125
  %v5512 = vpop.permute.xlu0 %5511
  %5513 = vrot.lane.b32.xlu0 %v5026, 125
  %v5514 = vpop.permute.xlu0 %5513
  %5515 = vrot.lane.b32.xlu0 %v5027, 125
  %v5516 = vpop.permute.xlu0 %5515
  %5517 = vrot.lane.b32.xlu0 %v5028, 125
  %v5518 = vpop.permute.xlu0 %5517
  %5519 = vrot.lane.b32.xlu0 %v5029, 125
  %v5520 = vpop.permute.xlu0 %5519
  %5521 = vrot.lane.b32.xlu0 %v5030, 125
  %v5522 = vpop.permute.xlu0 %5521
  %5523 = vrot.lane.b32.xlu0 %v5031, 125
  %v5524 = vpop.permute.xlu0 %5523
  %5525 = vrot.lane.b32.xlu0 %v5032, 125
  %v5526 = vpop.permute.xlu0 %5525
  %5527 = vrot.lane.b32.xlu0 %v5033, 125
  %v5528 = vpop.permute.xlu0 %5527
  %5529 = vrot.lane.b32.xlu0 %v5034, 125
  %v5530 = vpop.permute.xlu0 %5529
  %5531 = vrot.lane.b32.xlu0 %v5035, 125
  %v5532 = vpop.permute.xlu0 %5531
  %5533 = vrot.lane.b32.xlu0 %v5036, 125
  %v5534 = vpop.permute.xlu0 %5533
  %5535 = vrot.lane.b32.xlu0 %v5037, 125
  %v5536 = vpop.permute.xlu0 %5535
  %5537 = vrot.lane.b32.xlu0 %v5038, 125
  %v5538 = vpop.permute.xlu0 %5537
  %5539 = vrot.lane.b32.xlu0 %v5039, 125
  %v5540 = vpop.permute.xlu0 %5539
  %5541 = vrot.lane.b32.xlu0 %v5040, 125
  %v5542 = vpop.permute.xlu0 %5541
  %5543 = vrot.lane.b32.xlu0 %v5041, 125
  %v5544 = vpop.permute.xlu0 %5543
  %5545 = vrot.lane.b32.xlu0 %v5042, 125
  %v5546 = vpop.permute.xlu0 %5545
  %5547 = vrot.lane.b32.xlu0 %v5043, 125
  %v5548 = vpop.permute.xlu0 %5547
  %5549 = vrot.lane.b32.xlu0 %v5044, 125
  %v5550 = vpop.permute.xlu0 %5549
  %5551 = vrot.lane.b32.xlu0 %v5045, 125
  %v5552 = vpop.permute.xlu0 %5551
  %5553 = vrot.lane.b32.xlu0 %v5046, 125
  %v5554 = vpop.permute.xlu0 %5553
  %5555 = vrot.lane.b32.xlu0 %v5047, 125
  %v5556 = vpop.permute.xlu0 %5555
  %5557 = vrot.lane.b32.xlu0 %v5048, 125
  %v5558 = vpop.permute.xlu0 %5557
  %5559 = vrot.lane.b32.xlu0 %v5049, 125
  %v5560 = vpop.permute.xlu0 %5559
  %5561 = vrot.lane.b32.xlu0 %v5050, 125
  %v5562 = vpop.permute.xlu0 %5561
  %5563 = vrot.lane.b32.xlu0 %v5051, 125
  %v5564 = vpop.permute.xlu0 %5563
  %5565 = vrot.lane.b32.xlu0 %v5052, 125
  %v5566 = vpop.permute.xlu0 %5565
  %5567 = vrot.lane.b32.xlu0 %v5053, 125
  %v5568 = vpop.permute.xlu0 %5567
  %5569 = vrot.lane.b32.xlu0 %v5054, 125
  %v5570 = vpop.permute.xlu0 %5569
  %5571 = vrot.lane.b32.xlu0 %v5055, 125
  %v5572 = vpop.permute.xlu0 %5571
  %5573 = vrot.lane.b32.xlu0 %v5056, 125
  %v5574 = vpop.permute.xlu0 %5573
  %5575 = vrot.lane.b32.xlu0 %v5057, 125
  %v5576 = vpop.permute.xlu0 %5575
  %5577 = vrot.lane.b32.xlu0 %v5058, 125
  %v5578 = vpop.permute.xlu0 %5577
  %v5579 = vsel %vm94, %v5484, %v5486
  %v5580 = vsel %vm94, %v5486, %v5488
  %v5581 = vsel %vm94, %v5488, %v5490
  %v5582 = vsel %vm94, %v5490, %v5492
  %v5583 = vsel %vm94, %v5492, %v5494
  %v5584 = vsel %vm94, %v5496, %v5498
  %v5585 = vsel %vm94, %v5498, %v5500
  %v5586 = vsel %vm94, %v5500, %v5502
  %v5587 = vsel %vm94, %v5502, %v5504
  %v5588 = vsel %vm94, %v5504, %v5506
  %v5589 = vsel %vm94, %v5508, %v5510
  %v5590 = vsel %vm94, %v5510, %v5512
  %v5591 = vsel %vm94, %v5512, %v5514
  %v5592 = vsel %vm94, %v5514, %v5516
  %v5593 = vsel %vm94, %v5516, %v5518
  %v5594 = vsel %vm94, %v5520, %v5522
  %v5595 = vsel %vm94, %v5522, %v5524
  %v5596 = vsel %vm94, %v5524, %v5526
  %v5597 = vsel %vm94, %v5526, %v5528
  %v5598 = vsel %vm94, %v5528, %v5530
  %v5599 = vsel %vm94, %v5532, %v5534
  %v5600 = vsel %vm94, %v5534, %v5536
  %v5601 = vsel %vm94, %v5536, %v5538
  %v5602 = vsel %vm94, %v5538, %v5540
  %v5603 = vsel %vm94, %v5540, %v5542
  %v5604 = vsel %vm94, %v5544, %v5546
  %v5605 = vsel %vm94, %v5546, %v5548
  %v5606 = vsel %vm94, %v5548, %v5550
  %v5607 = vsel %vm94, %v5550, %v5552
  %v5608 = vsel %vm94, %v5552, %v5554
  %v5609 = vsel %vm94, %v5556, %v5558
  %v5610 = vsel %vm94, %v5558, %v5560
  %v5611 = vsel %vm94, %v5560, %v5562
  %v5612 = vsel %vm94, %v5562, %v5564
  %v5613 = vsel %vm94, %v5564, %v5566
  %v5614 = vsel %vm94, %v5568, %v5570
  %v5615 = vsel %vm94, %v5570, %v5572
  %v5616 = vsel %vm94, %v5572, %v5574
  %v5617 = vsel %vm94, %v5574, %v5576
  %v5618 = vsel %vm94, %v5576, %v5578
  %5667 = vrot.lane.b32.xlu0 %v5011, 124
  %v5668 = vpop.permute.xlu0 %5667
  %5669 = vrot.lane.b32.xlu0 %v5012, 124
  %v5670 = vpop.permute.xlu0 %5669
  %5671 = vrot.lane.b32.xlu0 %v5013, 124
  %v5672 = vpop.permute.xlu0 %5671
  %5673 = vrot.lane.b32.xlu0 %v5014, 124
  %v5674 = vpop.permute.xlu0 %5673
  %5675 = vrot.lane.b32.xlu0 %v5015, 124
  %v5676 = vpop.permute.xlu0 %5675
  %5677 = vrot.lane.b32.xlu0 %v5016, 124
  %v5678 = vpop.permute.xlu0 %5677
  %5679 = vrot.lane.b32.xlu0 %v5017, 124
  %v5680 = vpop.permute.xlu0 %5679
  %5681 = vrot.lane.b32.xlu0 %v5018, 124
  %v5682 = vpop.permute.xlu0 %5681
  %5683 = vrot.lane.b32.xlu0 %v5019, 124
  %v5684 = vpop.permute.xlu0 %5683
  %5685 = vrot.lane.b32.xlu0 %v5020, 124
  %v5686 = vpop.permute.xlu0 %5685
  %5687 = vrot.lane.b32.xlu0 %v5021, 124
  %v5688 = vpop.permute.xlu0 %5687
  %5689 = vrot.lane.b32.xlu0 %v5022, 124
  %v5690 = vpop.permute.xlu0 %5689
  %5691 = vrot.lane.b32.xlu0 %v5023, 124
  %v5692 = vpop.permute.xlu0 %5691
  %5693 = vrot.lane.b32.xlu0 %v5024, 124
  %v5694 = vpop.permute.xlu0 %5693
  %5695 = vrot.lane.b32.xlu0 %v5025, 124
  %v5696 = vpop.permute.xlu0 %5695
  %5697 = vrot.lane.b32.xlu0 %v5026, 124
  %v5698 = vpop.permute.xlu0 %5697
  %5699 = vrot.lane.b32.xlu0 %v5027, 124
  %v5700 = vpop.permute.xlu0 %5699
  %5701 = vrot.lane.b32.xlu0 %v5028, 124
  %v5702 = vpop.permute.xlu0 %5701
  %5703 = vrot.lane.b32.xlu0 %v5029, 124
  %v5704 = vpop.permute.xlu0 %5703
  %5705 = vrot.lane.b32.xlu0 %v5030, 124
  %v5706 = vpop.permute.xlu0 %5705
  %5707 = vrot.lane.b32.xlu0 %v5031, 124
  %v5708 = vpop.permute.xlu0 %5707
  %5709 = vrot.lane.b32.xlu0 %v5032, 124
  %v5710 = vpop.permute.xlu0 %5709
  %5711 = vrot.lane.b32.xlu0 %v5033, 124
  %v5712 = vpop.permute.xlu0 %5711
  %5713 = vrot.lane.b32.xlu0 %v5034, 124
  %v5714 = vpop.permute.xlu0 %5713
  %5715 = vrot.lane.b32.xlu0 %v5035, 124
  %v5716 = vpop.permute.xlu0 %5715
  %5717 = vrot.lane.b32.xlu0 %v5036, 124
  %v5718 = vpop.permute.xlu0 %5717
  %5719 = vrot.lane.b32.xlu0 %v5037, 124
  %v5720 = vpop.permute.xlu0 %5719
  %5721 = vrot.lane.b32.xlu0 %v5038, 124
  %v5722 = vpop.permute.xlu0 %5721
  %5723 = vrot.lane.b32.xlu0 %v5039, 124
  %v5724 = vpop.permute.xlu0 %5723
  %5725 = vrot.lane.b32.xlu0 %v5040, 124
  %v5726 = vpop.permute.xlu0 %5725
  %5727 = vrot.lane.b32.xlu0 %v5041, 124
  %v5728 = vpop.permute.xlu0 %5727
  %5729 = vrot.lane.b32.xlu0 %v5042, 124
  %v5730 = vpop.permute.xlu0 %5729
  %5731 = vrot.lane.b32.xlu0 %v5043, 124
  %v5732 = vpop.permute.xlu0 %5731
  %5733 = vrot.lane.b32.xlu0 %v5044, 124
  %v5734 = vpop.permute.xlu0 %5733
  %5735 = vrot.lane.b32.xlu0 %v5045, 124
  %v5736 = vpop.permute.xlu0 %5735
  %5737 = vrot.lane.b32.xlu0 %v5046, 124
  %v5738 = vpop.permute.xlu0 %5737
  %5739 = vrot.lane.b32.xlu0 %v5047, 124
  %v5740 = vpop.permute.xlu0 %5739
  %5741 = vrot.lane.b32.xlu0 %v5048, 124
  %v5742 = vpop.permute.xlu0 %5741
  %5743 = vrot.lane.b32.xlu0 %v5049, 124
  %v5744 = vpop.permute.xlu0 %5743
  %5745 = vrot.lane.b32.xlu0 %v5050, 124
  %v5746 = vpop.permute.xlu0 %5745
  %5747 = vrot.lane.b32.xlu0 %v5051, 124
  %v5748 = vpop.permute.xlu0 %5747
  %5749 = vrot.lane.b32.xlu0 %v5052, 124
  %v5750 = vpop.permute.xlu0 %5749
  %5751 = vrot.lane.b32.xlu0 %v5053, 124
  %v5752 = vpop.permute.xlu0 %5751
  %5753 = vrot.lane.b32.xlu0 %v5054, 124
  %v5754 = vpop.permute.xlu0 %5753
  %5755 = vrot.lane.b32.xlu0 %v5055, 124
  %v5756 = vpop.permute.xlu0 %5755
  %5757 = vrot.lane.b32.xlu0 %v5056, 124
  %v5758 = vpop.permute.xlu0 %5757
  %5759 = vrot.lane.b32.xlu0 %v5057, 124
  %v5760 = vpop.permute.xlu0 %5759
  %5761 = vrot.lane.b32.xlu0 %v5058, 124
  %v5762 = vpop.permute.xlu0 %5761
  %v5763 = vsel %vm114, %v5668, %v5670
  %v5764 = vsel %vm114, %v5670, %v5672
  %v5765 = vsel %vm114, %v5672, %v5674
  %v5766 = vsel %vm114, %v5674, %v5676
  %v5767 = vsel %vm114, %v5676, %v5678
  %v5768 = vsel %vm114, %v5680, %v5682
  %v5769 = vsel %vm114, %v5682, %v5684
  %v5770 = vsel %vm114, %v5684, %v5686
  %v5771 = vsel %vm114, %v5686, %v5688
  %v5772 = vsel %vm114, %v5688, %v5690
  %v5773 = vsel %vm114, %v5692, %v5694
  %v5774 = vsel %vm114, %v5694, %v5696
  %v5775 = vsel %vm114, %v5696, %v5698
  %v5776 = vsel %vm114, %v5698, %v5700
  %v5777 = vsel %vm114, %v5700, %v5702
  %v5778 = vsel %vm114, %v5704, %v5706
  %v5779 = vsel %vm114, %v5706, %v5708
  %v5780 = vsel %vm114, %v5708, %v5710
  %v5781 = vsel %vm114, %v5710, %v5712
  %v5782 = vsel %vm114, %v5712, %v5714
  %v5783 = vsel %vm114, %v5716, %v5718
  %v5784 = vsel %vm114, %v5718, %v5720
  %v5785 = vsel %vm114, %v5720, %v5722
  %v5786 = vsel %vm114, %v5722, %v5724
  %v5787 = vsel %vm114, %v5724, %v5726
  %v5788 = vsel %vm114, %v5728, %v5730
  %v5789 = vsel %vm114, %v5730, %v5732
  %v5790 = vsel %vm114, %v5732, %v5734
  %v5791 = vsel %vm114, %v5734, %v5736
  %v5792 = vsel %vm114, %v5736, %v5738
  %v5793 = vsel %vm114, %v5740, %v5742
  %v5794 = vsel %vm114, %v5742, %v5744
  %v5795 = vsel %vm114, %v5744, %v5746
  %v5796 = vsel %vm114, %v5746, %v5748
  %v5797 = vsel %vm114, %v5748, %v5750
  %v5798 = vsel %vm114, %v5752, %v5754
  %v5799 = vsel %vm114, %v5754, %v5756
  %v5800 = vsel %vm114, %v5756, %v5758
  %v5801 = vsel %vm114, %v5758, %v5760
  %v5802 = vsel %vm114, %v5760, %v5762
  %5851 = vrot.lane.b32.xlu0 %v5011, 108
  %v5852 = vpop.permute.xlu0 %5851
  %5853 = vrot.lane.b32.xlu0 %v5012, 108
  %v5854 = vpop.permute.xlu0 %5853
  %5855 = vrot.lane.b32.xlu0 %v5013, 108
  %v5856 = vpop.permute.xlu0 %5855
  %5857 = vrot.lane.b32.xlu0 %v5014, 108
  %v5858 = vpop.permute.xlu0 %5857
  %5859 = vrot.lane.b32.xlu0 %v5015, 108
  %v5860 = vpop.permute.xlu0 %5859
  %5861 = vrot.lane.b32.xlu0 %v5016, 108
  %v5862 = vpop.permute.xlu0 %5861
  %5863 = vrot.lane.b32.xlu0 %v5017, 108
  %v5864 = vpop.permute.xlu0 %5863
  %5865 = vrot.lane.b32.xlu0 %v5018, 108
  %v5866 = vpop.permute.xlu0 %5865
  %5867 = vrot.lane.b32.xlu0 %v5019, 108
  %v5868 = vpop.permute.xlu0 %5867
  %5869 = vrot.lane.b32.xlu0 %v5020, 108
  %v5870 = vpop.permute.xlu0 %5869
  %5871 = vrot.lane.b32.xlu0 %v5021, 108
  %v5872 = vpop.permute.xlu0 %5871
  %5873 = vrot.lane.b32.xlu0 %v5022, 108
  %v5874 = vpop.permute.xlu0 %5873
  %5875 = vrot.lane.b32.xlu0 %v5023, 108
  %v5876 = vpop.permute.xlu0 %5875
  %5877 = vrot.lane.b32.xlu0 %v5024, 108
  %v5878 = vpop.permute.xlu0 %5877
  %5879 = vrot.lane.b32.xlu0 %v5025, 108
  %v5880 = vpop.permute.xlu0 %5879
  %5881 = vrot.lane.b32.xlu0 %v5026, 108
  %v5882 = vpop.permute.xlu0 %5881
  %5883 = vrot.lane.b32.xlu0 %v5027, 108
  %v5884 = vpop.permute.xlu0 %5883
  %5885 = vrot.lane.b32.xlu0 %v5028, 108
  %v5886 = vpop.permute.xlu0 %5885
  %5887 = vrot.lane.b32.xlu0 %v5029, 108
  %v5888 = vpop.permute.xlu0 %5887
  %5889 = vrot.lane.b32.xlu0 %v5030, 108
  %v5890 = vpop.permute.xlu0 %5889
  %5891 = vrot.lane.b32.xlu0 %v5031, 108
  %v5892 = vpop.permute.xlu0 %5891
  %5893 = vrot.lane.b32.xlu0 %v5032, 108
  %v5894 = vpop.permute.xlu0 %5893
  %5895 = vrot.lane.b32.xlu0 %v5033, 108
  %v5896 = vpop.permute.xlu0 %5895
  %5897 = vrot.lane.b32.xlu0 %v5034, 108
  %v5898 = vpop.permute.xlu0 %5897
  %5899 = vrot.lane.b32.xlu0 %v5035, 108
  %v5900 = vpop.permute.xlu0 %5899
  %5901 = vrot.lane.b32.xlu0 %v5036, 108
  %v5902 = vpop.permute.xlu0 %5901
  %5903 = vrot.lane.b32.xlu0 %v5037, 108
  %v5904 = vpop.permute.xlu0 %5903
  %5905 = vrot.lane.b32.xlu0 %v5038, 108
  %v5906 = vpop.permute.xlu0 %5905
  %5907 = vrot.lane.b32.xlu0 %v5039, 108
  %v5908 = vpop.permute.xlu0 %5907
  %5909 = vrot.lane.b32.xlu0 %v5040, 108
  %v5910 = vpop.permute.xlu0 %5909
  %5911 = vrot.lane.b32.xlu0 %v5041, 108
  %v5912 = vpop.permute.xlu0 %5911
  %5913 = vrot.lane.b32.xlu0 %v5042, 108
  %v5914 = vpop.permute.xlu0 %5913
  %5915 = vrot.lane.b32.xlu0 %v5043, 108
  %v5916 = vpop.permute.xlu0 %5915
  %5917 = vrot.lane.b32.xlu0 %v5044, 108
  %v5918 = vpop.permute.xlu0 %5917
  %5919 = vrot.lane.b32.xlu0 %v5045, 108
  %v5920 = vpop.permute.xlu0 %5919
  %5921 = vrot.lane.b32.xlu0 %v5046, 108
  %v5922 = vpop.permute.xlu0 %5921
  %5923 = vrot.lane.b32.xlu0 %v5047, 108
  %v5924 = vpop.permute.xlu0 %5923
  %5925 = vrot.lane.b32.xlu0 %v5048, 108
  %v5926 = vpop.permute.xlu0 %5925
  %5927 = vrot.lane.b32.xlu0 %v5049, 108
  %v5928 = vpop.permute.xlu0 %5927
  %5929 = vrot.lane.b32.xlu0 %v5050, 108
  %v5930 = vpop.permute.xlu0 %5929
  %5931 = vrot.lane.b32.xlu0 %v5051, 108
  %v5932 = vpop.permute.xlu0 %5931
  %5933 = vrot.lane.b32.xlu0 %v5052, 108
  %v5934 = vpop.permute.xlu0 %5933
  %5935 = vrot.lane.b32.xlu0 %v5053, 108
  %v5936 = vpop.permute.xlu0 %5935
  %5937 = vrot.lane.b32.xlu0 %v5054, 108
  %v5938 = vpop.permute.xlu0 %5937
  %5939 = vrot.lane.b32.xlu0 %v5055, 108
  %v5940 = vpop.permute.xlu0 %5939
  %5941 = vrot.lane.b32.xlu0 %v5056, 108
  %v5942 = vpop.permute.xlu0 %5941
  %5943 = vrot.lane.b32.xlu0 %v5057, 108
  %v5944 = vpop.permute.xlu0 %5943
  %5945 = vrot.lane.b32.xlu0 %v5058, 108
  %v5946 = vpop.permute.xlu0 %5945
  %v5947 = vsel %vm217, %v5852, %v5854
  %v5948 = vsel %vm217, %v5854, %v5856
  %v5949 = vsel %vm217, %v5856, %v5858
  %v5950 = vsel %vm217, %v5858, %v5860
  %v5951 = vsel %vm217, %v5860, %v5862
  %v5952 = vsel %vm217, %v5864, %v5866
  %v5953 = vsel %vm217, %v5866, %v5868
  %v5954 = vsel %vm217, %v5868, %v5870
  %v5955 = vsel %vm217, %v5870, %v5872
  %v5956 = vsel %vm217, %v5872, %v5874
  %v5957 = vsel %vm217, %v5876, %v5878
  %v5958 = vsel %vm217, %v5878, %v5880
  %v5959 = vsel %vm217, %v5880, %v5882
  %v5960 = vsel %vm217, %v5882, %v5884
  %v5961 = vsel %vm217, %v5884, %v5886
  %v5962 = vsel %vm217, %v5888, %v5890
  %v5963 = vsel %vm217, %v5890, %v5892
  %v5964 = vsel %vm217, %v5892, %v5894
  %v5965 = vsel %vm217, %v5894, %v5896
  %v5966 = vsel %vm217, %v5896, %v5898
  %v5967 = vsel %vm217, %v5900, %v5902
  %v5968 = vsel %vm217, %v5902, %v5904
  %v5969 = vsel %vm217, %v5904, %v5906
  %v5970 = vsel %vm217, %v5906, %v5908
  %v5971 = vsel %vm217, %v5908, %v5910
  %v5972 = vsel %vm217, %v5912, %v5914
  %v5973 = vsel %vm217, %v5914, %v5916
  %v5974 = vsel %vm217, %v5916, %v5918
  %v5975 = vsel %vm217, %v5918, %v5920
  %v5976 = vsel %vm217, %v5920, %v5922
  %v5977 = vsel %vm217, %v5924, %v5926
  %v5978 = vsel %vm217, %v5926, %v5928
  %v5979 = vsel %vm217, %v5928, %v5930
  %v5980 = vsel %vm217, %v5930, %v5932
  %v5981 = vsel %vm217, %v5932, %v5934
  %v5982 = vsel %vm217, %v5936, %v5938
  %v5983 = vsel %vm217, %v5938, %v5940
  %v5984 = vsel %vm217, %v5940, %v5942
  %v5985 = vsel %vm217, %v5942, %v5944
  %v5986 = vsel %vm217, %v5944, %v5946
  %6035 = vrot.lane.b32.xlu0 %v5011, 107
  %v6036 = vpop.permute.xlu0 %6035
  %6037 = vrot.lane.b32.xlu0 %v5012, 107
  %v6038 = vpop.permute.xlu0 %6037
  %6039 = vrot.lane.b32.xlu0 %v5013, 107
  %v6040 = vpop.permute.xlu0 %6039
  %6041 = vrot.lane.b32.xlu0 %v5014, 107
  %v6042 = vpop.permute.xlu0 %6041
  %6043 = vrot.lane.b32.xlu0 %v5015, 107
  %v6044 = vpop.permute.xlu0 %6043
  %6045 = vrot.lane.b32.xlu0 %v5016, 107
  %v6046 = vpop.permute.xlu0 %6045
  %6047 = vrot.lane.b32.xlu0 %v5017, 107
  %v6048 = vpop.permute.xlu0 %6047
  %6049 = vrot.lane.b32.xlu0 %v5018, 107
  %v6050 = vpop.permute.xlu0 %6049
  %6051 = vrot.lane.b32.xlu0 %v5019, 107
  %v6052 = vpop.permute.xlu0 %6051
  %6053 = vrot.lane.b32.xlu0 %v5020, 107
  %v6054 = vpop.permute.xlu0 %6053
  %6055 = vrot.lane.b32.xlu0 %v5021, 107
  %v6056 = vpop.permute.xlu0 %6055
  %6057 = vrot.lane.b32.xlu0 %v5022, 107
  %v6058 = vpop.permute.xlu0 %6057
  %6059 = vrot.lane.b32.xlu0 %v5023, 107
  %v6060 = vpop.permute.xlu0 %6059
  %6061 = vrot.lane.b32.xlu0 %v5024, 107
  %v6062 = vpop.permute.xlu0 %6061
  %6063 = vrot.lane.b32.xlu0 %v5025, 107
  %v6064 = vpop.permute.xlu0 %6063
  %6065 = vrot.lane.b32.xlu0 %v5026, 107
  %v6066 = vpop.permute.xlu0 %6065
  %6067 = vrot.lane.b32.xlu0 %v5027, 107
  %v6068 = vpop.permute.xlu0 %6067
  %6069 = vrot.lane.b32.xlu0 %v5028, 107
  %v6070 = vpop.permute.xlu0 %6069
  %6071 = vrot.lane.b32.xlu0 %v5029, 107
  %v6072 = vpop.permute.xlu0 %6071
  %6073 = vrot.lane.b32.xlu0 %v5030, 107
  %v6074 = vpop.permute.xlu0 %6073
  %6075 = vrot.lane.b32.xlu0 %v5031, 107
  %v6076 = vpop.permute.xlu0 %6075
  %6077 = vrot.lane.b32.xlu0 %v5032, 107
  %v6078 = vpop.permute.xlu0 %6077
  %6079 = vrot.lane.b32.xlu0 %v5033, 107
  %v6080 = vpop.permute.xlu0 %6079
  %6081 = vrot.lane.b32.xlu0 %v5034, 107
  %v6082 = vpop.permute.xlu0 %6081
  %6083 = vrot.lane.b32.xlu0 %v5035, 107
  %v6084 = vpop.permute.xlu0 %6083
  %6085 = vrot.lane.b32.xlu0 %v5036, 107
  %v6086 = vpop.permute.xlu0 %6085
  %6087 = vrot.lane.b32.xlu0 %v5037, 107
  %v6088 = vpop.permute.xlu0 %6087
  %6089 = vrot.lane.b32.xlu0 %v5038, 107
  %v6090 = vpop.permute.xlu0 %6089
  %6091 = vrot.lane.b32.xlu0 %v5039, 107
  %v6092 = vpop.permute.xlu0 %6091
  %6093 = vrot.lane.b32.xlu0 %v5040, 107
  %v6094 = vpop.permute.xlu0 %6093
  %6095 = vrot.lane.b32.xlu0 %v5041, 107
  %v6096 = vpop.permute.xlu0 %6095
  %6097 = vrot.lane.b32.xlu0 %v5042, 107
  %v6098 = vpop.permute.xlu0 %6097
  %6099 = vrot.lane.b32.xlu0 %v5043, 107
  %v6100 = vpop.permute.xlu0 %6099
  %6101 = vrot.lane.b32.xlu0 %v5044, 107
  %v6102 = vpop.permute.xlu0 %6101
  %6103 = vrot.lane.b32.xlu0 %v5045, 107
  %v6104 = vpop.permute.xlu0 %6103
  %6105 = vrot.lane.b32.xlu0 %v5046, 107
  %v6106 = vpop.permute.xlu0 %6105
  %6107 = vrot.lane.b32.xlu0 %v5047, 107
  %v6108 = vpop.permute.xlu0 %6107
  %6109 = vrot.lane.b32.xlu0 %v5048, 107
  %v6110 = vpop.permute.xlu0 %6109
  %6111 = vrot.lane.b32.xlu0 %v5049, 107
  %v6112 = vpop.permute.xlu0 %6111
  %6113 = vrot.lane.b32.xlu0 %v5050, 107
  %v6114 = vpop.permute.xlu0 %6113
  %6115 = vrot.lane.b32.xlu0 %v5051, 107
  %v6116 = vpop.permute.xlu0 %6115
  %6117 = vrot.lane.b32.xlu0 %v5052, 107
  %v6118 = vpop.permute.xlu0 %6117
  %6119 = vrot.lane.b32.xlu0 %v5053, 107
  %v6120 = vpop.permute.xlu0 %6119
  %6121 = vrot.lane.b32.xlu0 %v5054, 107
  %v6122 = vpop.permute.xlu0 %6121
  %6123 = vrot.lane.b32.xlu0 %v5055, 107
  %v6124 = vpop.permute.xlu0 %6123
  %6125 = vrot.lane.b32.xlu0 %v5056, 107
  %v6126 = vpop.permute.xlu0 %6125
  %6127 = vrot.lane.b32.xlu0 %v5057, 107
  %v6128 = vpop.permute.xlu0 %6127
  %6129 = vrot.lane.b32.xlu0 %v5058, 107
  %v6130 = vpop.permute.xlu0 %6129
  %v6131 = vsel %vm240, %v6036, %v6038
  %v6132 = vsel %vm240, %v6038, %v6040
  %v6133 = vsel %vm240, %v6040, %v6042
  %v6134 = vsel %vm240, %v6042, %v6044
  %v6135 = vsel %vm240, %v6044, %v6046
  %v6136 = vsel %vm240, %v6048, %v6050
  %v6137 = vsel %vm240, %v6050, %v6052
  %v6138 = vsel %vm240, %v6052, %v6054
  %v6139 = vsel %vm240, %v6054, %v6056
  %v6140 = vsel %vm240, %v6056, %v6058
  %v6141 = vsel %vm240, %v6060, %v6062
  %v6142 = vsel %vm240, %v6062, %v6064
  %v6143 = vsel %vm240, %v6064, %v6066
  %v6144 = vsel %vm240, %v6066, %v6068
  %v6145 = vsel %vm240, %v6068, %v6070
  %v6146 = vsel %vm240, %v6072, %v6074
  %v6147 = vsel %vm240, %v6074, %v6076
  %v6148 = vsel %vm240, %v6076, %v6078
  %v6149 = vsel %vm240, %v6078, %v6080
  %v6150 = vsel %vm240, %v6080, %v6082
  %v6151 = vsel %vm240, %v6084, %v6086
  %v6152 = vsel %vm240, %v6086, %v6088
  %v6153 = vsel %vm240, %v6088, %v6090
  %v6154 = vsel %vm240, %v6090, %v6092
  %v6155 = vsel %vm240, %v6092, %v6094
  %v6156 = vsel %vm240, %v6096, %v6098
  %v6157 = vsel %vm240, %v6098, %v6100
  %v6158 = vsel %vm240, %v6100, %v6102
  %v6159 = vsel %vm240, %v6102, %v6104
  %v6160 = vsel %vm240, %v6104, %v6106
  %v6161 = vsel %vm240, %v6108, %v6110
  %v6162 = vsel %vm240, %v6110, %v6112
  %v6163 = vsel %vm240, %v6112, %v6114
  %v6164 = vsel %vm240, %v6114, %v6116
  %v6165 = vsel %vm240, %v6116, %v6118
  %v6166 = vsel %vm240, %v6120, %v6122
  %v6167 = vsel %vm240, %v6122, %v6124
  %v6168 = vsel %vm240, %v6124, %v6126
  %v6169 = vsel %vm240, %v6126, %v6128
  %v6170 = vsel %vm240, %v6128, %v6130
  %6219 = vrot.lane.b32.xlu0 %v5011, 106
  %v6220 = vpop.permute.xlu0 %6219
  %6221 = vrot.lane.b32.xlu0 %v5012, 106
  %v6222 = vpop.permute.xlu0 %6221
  %6223 = vrot.lane.b32.xlu0 %v5013, 106
  %v6224 = vpop.permute.xlu0 %6223
  %6225 = vrot.lane.b32.xlu0 %v5014, 106
  %v6226 = vpop.permute.xlu0 %6225
  %6227 = vrot.lane.b32.xlu0 %v5015, 106
  %v6228 = vpop.permute.xlu0 %6227
  %6229 = vrot.lane.b32.xlu0 %v5016, 106
  %v6230 = vpop.permute.xlu0 %6229
  %6231 = vrot.lane.b32.xlu0 %v5017, 106
  %v6232 = vpop.permute.xlu0 %6231
  %6233 = vrot.lane.b32.xlu0 %v5018, 106
  %v6234 = vpop.permute.xlu0 %6233
  %6235 = vrot.lane.b32.xlu0 %v5019, 106
  %v6236 = vpop.permute.xlu0 %6235
  %6237 = vrot.lane.b32.xlu0 %v5020, 106
  %v6238 = vpop.permute.xlu0 %6237
  %6239 = vrot.lane.b32.xlu0 %v5021, 106
  %v6240 = vpop.permute.xlu0 %6239
  %6241 = vrot.lane.b32.xlu0 %v5022, 106
  %v6242 = vpop.permute.xlu0 %6241
  %6243 = vrot.lane.b32.xlu0 %v5023, 106
  %v6244 = vpop.permute.xlu0 %6243
  %6245 = vrot.lane.b32.xlu0 %v5024, 106
  %v6246 = vpop.permute.xlu0 %6245
  %6247 = vrot.lane.b32.xlu0 %v5025, 106
  %v6248 = vpop.permute.xlu0 %6247
  %6249 = vrot.lane.b32.xlu0 %v5026, 106
  %v6250 = vpop.permute.xlu0 %6249
  %6251 = vrot.lane.b32.xlu0 %v5027, 106
  %v6252 = vpop.permute.xlu0 %6251
  %6253 = vrot.lane.b32.xlu0 %v5028, 106
  %v6254 = vpop.permute.xlu0 %6253
  %6255 = vrot.lane.b32.xlu0 %v5029, 106
  %v6256 = vpop.permute.xlu0 %6255
  %6257 = vrot.lane.b32.xlu0 %v5030, 106
  %v6258 = vpop.permute.xlu0 %6257
  %6259 = vrot.lane.b32.xlu0 %v5031, 106
  %v6260 = vpop.permute.xlu0 %6259
  %6261 = vrot.lane.b32.xlu0 %v5032, 106
  %v6262 = vpop.permute.xlu0 %6261
  %6263 = vrot.lane.b32.xlu0 %v5033, 106
  %v6264 = vpop.permute.xlu0 %6263
  %6265 = vrot.lane.b32.xlu0 %v5034, 106
  %v6266 = vpop.permute.xlu0 %6265
  %6267 = vrot.lane.b32.xlu0 %v5035, 106
  %v6268 = vpop.permute.xlu0 %6267
  %6269 = vrot.lane.b32.xlu0 %v5036, 106
  %v6270 = vpop.permute.xlu0 %6269
  %6271 = vrot.lane.b32.xlu0 %v5037, 106
  %v6272 = vpop.permute.xlu0 %6271
  %6273 = vrot.lane.b32.xlu0 %v5038, 106
  %v6274 = vpop.permute.xlu0 %6273
  %6275 = vrot.lane.b32.xlu0 %v5039, 106
  %v6276 = vpop.permute.xlu0 %6275
  %6277 = vrot.lane.b32.xlu0 %v5040, 106
  %v6278 = vpop.permute.xlu0 %6277
  %6279 = vrot.lane.b32.xlu0 %v5041, 106
  %v6280 = vpop.permute.xlu0 %6279
  %6281 = vrot.lane.b32.xlu0 %v5042, 106
  %v6282 = vpop.permute.xlu0 %6281
  %6283 = vrot.lane.b32.xlu0 %v5043, 106
  %v6284 = vpop.permute.xlu0 %6283
  %6285 = vrot.lane.b32.xlu0 %v5044, 106
  %v6286 = vpop.permute.xlu0 %6285
  %6287 = vrot.lane.b32.xlu0 %v5045, 106
  %v6288 = vpop.permute.xlu0 %6287
  %6289 = vrot.lane.b32.xlu0 %v5046, 106
  %v6290 = vpop.permute.xlu0 %6289
  %6291 = vrot.lane.b32.xlu0 %v5047, 106
  %v6292 = vpop.permute.xlu0 %6291
  %6293 = vrot.lane.b32.xlu0 %v5048, 106
  %v6294 = vpop.permute.xlu0 %6293
  %6295 = vrot.lane.b32.xlu0 %v5049, 106
  %v6296 = vpop.permute.xlu0 %6295
  %6297 = vrot.lane.b32.xlu0 %v5050, 106
  %v6298 = vpop.permute.xlu0 %6297
  %6299 = vrot.lane.b32.xlu0 %v5051, 106
  %v6300 = vpop.permute.xlu0 %6299
  %6301 = vrot.lane.b32.xlu0 %v5052, 106
  %v6302 = vpop.permute.xlu0 %6301
  %6303 = vrot.lane.b32.xlu0 %v5053, 106
  %v6304 = vpop.permute.xlu0 %6303
  %6305 = vrot.lane.b32.xlu0 %v5054, 106
  %v6306 = vpop.permute.xlu0 %6305
  %6307 = vrot.lane.b32.xlu0 %v5055, 106
  %v6308 = vpop.permute.xlu0 %6307
  %6309 = vrot.lane.b32.xlu0 %v5056, 106
  %v6310 = vpop.permute.xlu0 %6309
  %6311 = vrot.lane.b32.xlu0 %v5057, 106
  %v6312 = vpop.permute.xlu0 %6311
  %6313 = vrot.lane.b32.xlu0 %v5058, 106
  %v6314 = vpop.permute.xlu0 %6313
  %v6315 = vsel %vm263, %v6220, %v6222
  %v6316 = vsel %vm263, %v6222, %v6224
  %v6317 = vsel %vm263, %v6224, %v6226
  %v6318 = vsel %vm263, %v6226, %v6228
  %v6319 = vsel %vm263, %v6228, %v6230
  %v6320 = vsel %vm263, %v6232, %v6234
  %v6321 = vsel %vm263, %v6234, %v6236
  %v6322 = vsel %vm263, %v6236, %v6238
  %v6323 = vsel %vm263, %v6238, %v6240
  %v6324 = vsel %vm263, %v6240, %v6242
  %v6325 = vsel %vm263, %v6244, %v6246
  %v6326 = vsel %vm263, %v6246, %v6248
  %v6327 = vsel %vm263, %v6248, %v6250
  %v6328 = vsel %vm263, %v6250, %v6252
  %v6329 = vsel %vm263, %v6252, %v6254
  %v6330 = vsel %vm263, %v6256, %v6258
  %v6331 = vsel %vm263, %v6258, %v6260
  %v6332 = vsel %vm263, %v6260, %v6262
  %v6333 = vsel %vm263, %v6262, %v6264
  %v6334 = vsel %vm263, %v6264, %v6266
  %v6335 = vsel %vm263, %v6268, %v6270
  %v6336 = vsel %vm263, %v6270, %v6272
  %v6337 = vsel %vm263, %v6272, %v6274
  %v6338 = vsel %vm263, %v6274, %v6276
  %v6339 = vsel %vm263, %v6276, %v6278
  %v6340 = vsel %vm263, %v6280, %v6282
  %v6341 = vsel %vm263, %v6282, %v6284
  %v6342 = vsel %vm263, %v6284, %v6286
  %v6343 = vsel %vm263, %v6286, %v6288
  %v6344 = vsel %vm263, %v6288, %v6290
  %v6345 = vsel %vm263, %v6292, %v6294
  %v6346 = vsel %vm263, %v6294, %v6296
  %v6347 = vsel %vm263, %v6296, %v6298
  %v6348 = vsel %vm263, %v6298, %v6300
  %v6349 = vsel %vm263, %v6300, %v6302
  %v6350 = vsel %vm263, %v6304, %v6306
  %v6351 = vsel %vm263, %v6306, %v6308
  %v6352 = vsel %vm263, %v6308, %v6310
  %v6353 = vsel %vm263, %v6310, %v6312
  %v6354 = vsel %vm263, %v6312, %v6314
  %6403 = vrot.lane.b32.xlu0 %v5011, 105
  %v6404 = vpop.permute.xlu0 %6403
  %6405 = vrot.lane.b32.xlu0 %v5012, 105
  %v6406 = vpop.permute.xlu0 %6405
  %6407 = vrot.lane.b32.xlu0 %v5013, 105
  %v6408 = vpop.permute.xlu0 %6407
  %6409 = vrot.lane.b32.xlu0 %v5014, 105
  %v6410 = vpop.permute.xlu0 %6409
  %6411 = vrot.lane.b32.xlu0 %v5015, 105
  %v6412 = vpop.permute.xlu0 %6411
  %6413 = vrot.lane.b32.xlu0 %v5016, 105
  %v6414 = vpop.permute.xlu0 %6413
  %6415 = vrot.lane.b32.xlu0 %v5017, 105
  %v6416 = vpop.permute.xlu0 %6415
  %6417 = vrot.lane.b32.xlu0 %v5018, 105
  %v6418 = vpop.permute.xlu0 %6417
  %6419 = vrot.lane.b32.xlu0 %v5019, 105
  %v6420 = vpop.permute.xlu0 %6419
  %6421 = vrot.lane.b32.xlu0 %v5020, 105
  %v6422 = vpop.permute.xlu0 %6421
  %6423 = vrot.lane.b32.xlu0 %v5021, 105
  %v6424 = vpop.permute.xlu0 %6423
  %6425 = vrot.lane.b32.xlu0 %v5022, 105
  %v6426 = vpop.permute.xlu0 %6425
  %6427 = vrot.lane.b32.xlu0 %v5023, 105
  %v6428 = vpop.permute.xlu0 %6427
  %6429 = vrot.lane.b32.xlu0 %v5024, 105
  %v6430 = vpop.permute.xlu0 %6429
  %6431 = vrot.lane.b32.xlu0 %v5025, 105
  %v6432 = vpop.permute.xlu0 %6431
  %6433 = vrot.lane.b32.xlu0 %v5026, 105
  %v6434 = vpop.permute.xlu0 %6433
  %6435 = vrot.lane.b32.xlu0 %v5027, 105
  %v6436 = vpop.permute.xlu0 %6435
  %6437 = vrot.lane.b32.xlu0 %v5028, 105
  %v6438 = vpop.permute.xlu0 %6437
  %6439 = vrot.lane.b32.xlu0 %v5029, 105
  %v6440 = vpop.permute.xlu0 %6439
  %6441 = vrot.lane.b32.xlu0 %v5030, 105
  %v6442 = vpop.permute.xlu0 %6441
  %6443 = vrot.lane.b32.xlu0 %v5031, 105
  %v6444 = vpop.permute.xlu0 %6443
  %6445 = vrot.lane.b32.xlu0 %v5032, 105
  %v6446 = vpop.permute.xlu0 %6445
  %6447 = vrot.lane.b32.xlu0 %v5033, 105
  %v6448 = vpop.permute.xlu0 %6447
  %6449 = vrot.lane.b32.xlu0 %v5034, 105
  %v6450 = vpop.permute.xlu0 %6449
  %6451 = vrot.lane.b32.xlu0 %v5035, 105
  %v6452 = vpop.permute.xlu0 %6451
  %6453 = vrot.lane.b32.xlu0 %v5036, 105
  %v6454 = vpop.permute.xlu0 %6453
  %6455 = vrot.lane.b32.xlu0 %v5037, 105
  %v6456 = vpop.permute.xlu0 %6455
  %6457 = vrot.lane.b32.xlu0 %v5038, 105
  %v6458 = vpop.permute.xlu0 %6457
  %6459 = vrot.lane.b32.xlu0 %v5039, 105
  %v6460 = vpop.permute.xlu0 %6459
  %6461 = vrot.lane.b32.xlu0 %v5040, 105
  %v6462 = vpop.permute.xlu0 %6461
  %6463 = vrot.lane.b32.xlu0 %v5041, 105
  %v6464 = vpop.permute.xlu0 %6463
  %6465 = vrot.lane.b32.xlu0 %v5042, 105
  %v6466 = vpop.permute.xlu0 %6465
  %6467 = vrot.lane.b32.xlu0 %v5043, 105
  %v6468 = vpop.permute.xlu0 %6467
  %6469 = vrot.lane.b32.xlu0 %v5044, 105
  %v6470 = vpop.permute.xlu0 %6469
  %6471 = vrot.lane.b32.xlu0 %v5045, 105
  %v6472 = vpop.permute.xlu0 %6471
  %6473 = vrot.lane.b32.xlu0 %v5046, 105
  %v6474 = vpop.permute.xlu0 %6473
  %6475 = vrot.lane.b32.xlu0 %v5047, 105
  %v6476 = vpop.permute.xlu0 %6475
  %6477 = vrot.lane.b32.xlu0 %v5048, 105
  %v6478 = vpop.permute.xlu0 %6477
  %6479 = vrot.lane.b32.xlu0 %v5049, 105
  %v6480 = vpop.permute.xlu0 %6479
  %6481 = vrot.lane.b32.xlu0 %v5050, 105
  %v6482 = vpop.permute.xlu0 %6481
  %6483 = vrot.lane.b32.xlu0 %v5051, 105
  %v6484 = vpop.permute.xlu0 %6483
  %6485 = vrot.lane.b32.xlu0 %v5052, 105
  %v6486 = vpop.permute.xlu0 %6485
  %6487 = vrot.lane.b32.xlu0 %v5053, 105
  %v6488 = vpop.permute.xlu0 %6487
  %6489 = vrot.lane.b32.xlu0 %v5054, 105
  %v6490 = vpop.permute.xlu0 %6489
  %6491 = vrot.lane.b32.xlu0 %v5055, 105
  %v6492 = vpop.permute.xlu0 %6491
  %6493 = vrot.lane.b32.xlu0 %v5056, 105
  %v6494 = vpop.permute.xlu0 %6493
  %6495 = vrot.lane.b32.xlu0 %v5057, 105
  %v6496 = vpop.permute.xlu0 %6495
  %6497 = vrot.lane.b32.xlu0 %v5058, 105
  %v6498 = vpop.permute.xlu0 %6497
  %v6499 = vsel %vm286, %v6404, %v6406
  %v6500 = vsel %vm286, %v6406, %v6408
  %v6501 = vsel %vm286, %v6408, %v6410
  %v6502 = vsel %vm286, %v6410, %v6412
  %v6503 = vsel %vm286, %v6412, %v6414
  %v6504 = vsel %vm286, %v6416, %v6418
  %v6505 = vsel %vm286, %v6418, %v6420
  %v6506 = vsel %vm286, %v6420, %v6422
  %v6507 = vsel %vm286, %v6422, %v6424
  %v6508 = vsel %vm286, %v6424, %v6426
  %v6509 = vsel %vm286, %v6428, %v6430
  %v6510 = vsel %vm286, %v6430, %v6432
  %v6511 = vsel %vm286, %v6432, %v6434
  %v6512 = vsel %vm286, %v6434, %v6436
  %v6513 = vsel %vm286, %v6436, %v6438
  %v6514 = vsel %vm286, %v6440, %v6442
  %v6515 = vsel %vm286, %v6442, %v6444
  %v6516 = vsel %vm286, %v6444, %v6446
  %v6517 = vsel %vm286, %v6446, %v6448
  %v6518 = vsel %vm286, %v6448, %v6450
  %v6519 = vsel %vm286, %v6452, %v6454
  %v6520 = vsel %vm286, %v6454, %v6456
  %v6521 = vsel %vm286, %v6456, %v6458
  %v6522 = vsel %vm286, %v6458, %v6460
  %v6523 = vsel %vm286, %v6460, %v6462
  %v6524 = vsel %vm286, %v6464, %v6466
  %v6525 = vsel %vm286, %v6466, %v6468
  %v6526 = vsel %vm286, %v6468, %v6470
  %v6527 = vsel %vm286, %v6470, %v6472
  %v6528 = vsel %vm286, %v6472, %v6474
  %v6529 = vsel %vm286, %v6476, %v6478
  %v6530 = vsel %vm286, %v6478, %v6480
  %v6531 = vsel %vm286, %v6480, %v6482
  %v6532 = vsel %vm286, %v6482, %v6484
  %v6533 = vsel %vm286, %v6484, %v6486
  %v6534 = vsel %vm286, %v6488, %v6490
  %v6535 = vsel %vm286, %v6490, %v6492
  %v6536 = vsel %vm286, %v6492, %v6494
  %v6537 = vsel %vm286, %v6494, %v6496
  %v6538 = vsel %vm286, %v6496, %v6498
  %6587 = vrot.lane.b32.xlu0 %v5011, 104
  %v6588 = vpop.permute.xlu0 %6587
  %6589 = vrot.lane.b32.xlu0 %v5012, 104
  %v6590 = vpop.permute.xlu0 %6589
  %6591 = vrot.lane.b32.xlu0 %v5013, 104
  %v6592 = vpop.permute.xlu0 %6591
  %6593 = vrot.lane.b32.xlu0 %v5014, 104
  %v6594 = vpop.permute.xlu0 %6593
  %6595 = vrot.lane.b32.xlu0 %v5015, 104
  %v6596 = vpop.permute.xlu0 %6595
  %6597 = vrot.lane.b32.xlu0 %v5016, 104
  %v6598 = vpop.permute.xlu0 %6597
  %6599 = vrot.lane.b32.xlu0 %v5017, 104
  %v6600 = vpop.permute.xlu0 %6599
  %6601 = vrot.lane.b32.xlu0 %v5018, 104
  %v6602 = vpop.permute.xlu0 %6601
  %6603 = vrot.lane.b32.xlu0 %v5019, 104
  %v6604 = vpop.permute.xlu0 %6603
  %6605 = vrot.lane.b32.xlu0 %v5020, 104
  %v6606 = vpop.permute.xlu0 %6605
  %6607 = vrot.lane.b32.xlu0 %v5021, 104
  %v6608 = vpop.permute.xlu0 %6607
  %6609 = vrot.lane.b32.xlu0 %v5022, 104
  %v6610 = vpop.permute.xlu0 %6609
  %6611 = vrot.lane.b32.xlu0 %v5023, 104
  %v6612 = vpop.permute.xlu0 %6611
  %6613 = vrot.lane.b32.xlu0 %v5024, 104
  %v6614 = vpop.permute.xlu0 %6613
  %6615 = vrot.lane.b32.xlu0 %v5025, 104
  %v6616 = vpop.permute.xlu0 %6615
  %6617 = vrot.lane.b32.xlu0 %v5026, 104
  %v6618 = vpop.permute.xlu0 %6617
  %6619 = vrot.lane.b32.xlu0 %v5027, 104
  %v6620 = vpop.permute.xlu0 %6619
  %6621 = vrot.lane.b32.xlu0 %v5028, 104
  %v6622 = vpop.permute.xlu0 %6621
  %6623 = vrot.lane.b32.xlu0 %v5029, 104
  %v6624 = vpop.permute.xlu0 %6623
  %6625 = vrot.lane.b32.xlu0 %v5030, 104
  %v6626 = vpop.permute.xlu0 %6625
  %6627 = vrot.lane.b32.xlu0 %v5031, 104
  %v6628 = vpop.permute.xlu0 %6627
  %6629 = vrot.lane.b32.xlu0 %v5032, 104
  %v6630 = vpop.permute.xlu0 %6629
  %6631 = vrot.lane.b32.xlu0 %v5033, 104
  %v6632 = vpop.permute.xlu0 %6631
  %6633 = vrot.lane.b32.xlu0 %v5034, 104
  %v6634 = vpop.permute.xlu0 %6633
  %6635 = vrot.lane.b32.xlu0 %v5035, 104
  %v6636 = vpop.permute.xlu0 %6635
  %6637 = vrot.lane.b32.xlu0 %v5036, 104
  %v6638 = vpop.permute.xlu0 %6637
  %6639 = vrot.lane.b32.xlu0 %v5037, 104
  %v6640 = vpop.permute.xlu0 %6639
  %6641 = vrot.lane.b32.xlu0 %v5038, 104
  %v6642 = vpop.permute.xlu0 %6641
  %6643 = vrot.lane.b32.xlu0 %v5039, 104
  %v6644 = vpop.permute.xlu0 %6643
  %6645 = vrot.lane.b32.xlu0 %v5040, 104
  %v6646 = vpop.permute.xlu0 %6645
  %6647 = vrot.lane.b32.xlu0 %v5041, 104
  %v6648 = vpop.permute.xlu0 %6647
  %6649 = vrot.lane.b32.xlu0 %v5042, 104
  %v6650 = vpop.permute.xlu0 %6649
  %6651 = vrot.lane.b32.xlu0 %v5043, 104
  %v6652 = vpop.permute.xlu0 %6651
  %6653 = vrot.lane.b32.xlu0 %v5044, 104
  %v6654 = vpop.permute.xlu0 %6653
  %6655 = vrot.lane.b32.xlu0 %v5045, 104
  %v6656 = vpop.permute.xlu0 %6655
  %6657 = vrot.lane.b32.xlu0 %v5046, 104
  %v6658 = vpop.permute.xlu0 %6657
  %6659 = vrot.lane.b32.xlu0 %v5047, 104
  %v6660 = vpop.permute.xlu0 %6659
  %6661 = vrot.lane.b32.xlu0 %v5048, 104
  %v6662 = vpop.permute.xlu0 %6661
  %6663 = vrot.lane.b32.xlu0 %v5049, 104
  %v6664 = vpop.permute.xlu0 %6663
  %6665 = vrot.lane.b32.xlu0 %v5050, 104
  %v6666 = vpop.permute.xlu0 %6665
  %6667 = vrot.lane.b32.xlu0 %v5051, 104
  %v6668 = vpop.permute.xlu0 %6667
  %6669 = vrot.lane.b32.xlu0 %v5052, 104
  %v6670 = vpop.permute.xlu0 %6669
  %6671 = vrot.lane.b32.xlu0 %v5053, 104
  %v6672 = vpop.permute.xlu0 %6671
  %6673 = vrot.lane.b32.xlu0 %v5054, 104
  %v6674 = vpop.permute.xlu0 %6673
  %6675 = vrot.lane.b32.xlu0 %v5055, 104
  %v6676 = vpop.permute.xlu0 %6675
  %6677 = vrot.lane.b32.xlu0 %v5056, 104
  %v6678 = vpop.permute.xlu0 %6677
  %6679 = vrot.lane.b32.xlu0 %v5057, 104
  %v6680 = vpop.permute.xlu0 %6679
  %6681 = vrot.lane.b32.xlu0 %v5058, 104
  %v6682 = vpop.permute.xlu0 %6681
  %v6683 = vsel %vm309, %v6588, %v6590
  %v6684 = vsel %vm309, %v6590, %v6592
  %v6685 = vsel %vm309, %v6592, %v6594
  %v6686 = vsel %vm309, %v6594, %v6596
  %v6687 = vsel %vm309, %v6596, %v6598
  %v6688 = vsel %vm309, %v6600, %v6602
  %v6689 = vsel %vm309, %v6602, %v6604
  %v6690 = vsel %vm309, %v6604, %v6606
  %v6691 = vsel %vm309, %v6606, %v6608
  %v6692 = vsel %vm309, %v6608, %v6610
  %v6693 = vsel %vm309, %v6612, %v6614
  %v6694 = vsel %vm309, %v6614, %v6616
  %v6695 = vsel %vm309, %v6616, %v6618
  %v6696 = vsel %vm309, %v6618, %v6620
  %v6697 = vsel %vm309, %v6620, %v6622
  %v6698 = vsel %vm309, %v6624, %v6626
  %v6699 = vsel %vm309, %v6626, %v6628
  %v6700 = vsel %vm309, %v6628, %v6630
  %v6701 = vsel %vm309, %v6630, %v6632
  %v6702 = vsel %vm309, %v6632, %v6634
  %v6703 = vsel %vm309, %v6636, %v6638
  %v6704 = vsel %vm309, %v6638, %v6640
  %v6705 = vsel %vm309, %v6640, %v6642
  %v6706 = vsel %vm309, %v6642, %v6644
  %v6707 = vsel %vm309, %v6644, %v6646
  %v6708 = vsel %vm309, %v6648, %v6650
  %v6709 = vsel %vm309, %v6650, %v6652
  %v6710 = vsel %vm309, %v6652, %v6654
  %v6711 = vsel %vm309, %v6654, %v6656
  %v6712 = vsel %vm309, %v6656, %v6658
  %v6713 = vsel %vm309, %v6660, %v6662
  %v6714 = vsel %vm309, %v6662, %v6664
  %v6715 = vsel %vm309, %v6664, %v6666
  %v6716 = vsel %vm309, %v6666, %v6668
  %v6717 = vsel %vm309, %v6668, %v6670
  %v6718 = vsel %vm309, %v6672, %v6674
  %v6719 = vsel %vm309, %v6674, %v6676
  %v6720 = vsel %vm309, %v6676, %v6678
  %v6721 = vsel %vm309, %v6678, %v6680
  %v6722 = vsel %vm309, %v6680, %v6682
  %6771 = vrot.lane.b32.xlu0 %v5011, 88
  %v6772 = vpop.permute.xlu0 %6771
  %6773 = vrot.lane.b32.xlu0 %v5012, 88
  %v6774 = vpop.permute.xlu0 %6773
  %6775 = vrot.lane.b32.xlu0 %v5013, 88
  %v6776 = vpop.permute.xlu0 %6775
  %6777 = vrot.lane.b32.xlu0 %v5014, 88
  %v6778 = vpop.permute.xlu0 %6777
  %6779 = vrot.lane.b32.xlu0 %v5015, 88
  %v6780 = vpop.permute.xlu0 %6779
  %6781 = vrot.lane.b32.xlu0 %v5016, 88
  %v6782 = vpop.permute.xlu0 %6781
  %6783 = vrot.lane.b32.xlu0 %v5017, 88
  %v6784 = vpop.permute.xlu0 %6783
  %6785 = vrot.lane.b32.xlu0 %v5018, 88
  %v6786 = vpop.permute.xlu0 %6785
  %6787 = vrot.lane.b32.xlu0 %v5019, 88
  %v6788 = vpop.permute.xlu0 %6787
  %6789 = vrot.lane.b32.xlu0 %v5020, 88
  %v6790 = vpop.permute.xlu0 %6789
  %6791 = vrot.lane.b32.xlu0 %v5021, 88
  %v6792 = vpop.permute.xlu0 %6791
  %6793 = vrot.lane.b32.xlu0 %v5022, 88
  %v6794 = vpop.permute.xlu0 %6793
  %6795 = vrot.lane.b32.xlu0 %v5023, 88
  %v6796 = vpop.permute.xlu0 %6795
  %6797 = vrot.lane.b32.xlu0 %v5024, 88
  %v6798 = vpop.permute.xlu0 %6797
  %6799 = vrot.lane.b32.xlu0 %v5025, 88
  %v6800 = vpop.permute.xlu0 %6799
  %6801 = vrot.lane.b32.xlu0 %v5026, 88
  %v6802 = vpop.permute.xlu0 %6801
  %6803 = vrot.lane.b32.xlu0 %v5027, 88
  %v6804 = vpop.permute.xlu0 %6803
  %6805 = vrot.lane.b32.xlu0 %v5028, 88
  %v6806 = vpop.permute.xlu0 %6805
  %6807 = vrot.lane.b32.xlu0 %v5029, 88
  %v6808 = vpop.permute.xlu0 %6807
  %6809 = vrot.lane.b32.xlu0 %v5030, 88
  %v6810 = vpop.permute.xlu0 %6809
  %6811 = vrot.lane.b32.xlu0 %v5031, 88
  %v6812 = vpop.permute.xlu0 %6811
  %6813 = vrot.lane.b32.xlu0 %v5032, 88
  %v6814 = vpop.permute.xlu0 %6813
  %6815 = vrot.lane.b32.xlu0 %v5033, 88
  %v6816 = vpop.permute.xlu0 %6815
  %6817 = vrot.lane.b32.xlu0 %v5034, 88
  %v6818 = vpop.permute.xlu0 %6817
  %6819 = vrot.lane.b32.xlu0 %v5035, 88
  %v6820 = vpop.permute.xlu0 %6819
  %6821 = vrot.lane.b32.xlu0 %v5036, 88
  %v6822 = vpop.permute.xlu0 %6821
  %6823 = vrot.lane.b32.xlu0 %v5037, 88
  %v6824 = vpop.permute.xlu0 %6823
  %6825 = vrot.lane.b32.xlu0 %v5038, 88
  %v6826 = vpop.permute.xlu0 %6825
  %6827 = vrot.lane.b32.xlu0 %v5039, 88
  %v6828 = vpop.permute.xlu0 %6827
  %6829 = vrot.lane.b32.xlu0 %v5040, 88
  %v6830 = vpop.permute.xlu0 %6829
  %6831 = vrot.lane.b32.xlu0 %v5041, 88
  %v6832 = vpop.permute.xlu0 %6831
  %6833 = vrot.lane.b32.xlu0 %v5042, 88
  %v6834 = vpop.permute.xlu0 %6833
  %6835 = vrot.lane.b32.xlu0 %v5043, 88
  %v6836 = vpop.permute.xlu0 %6835
  %6837 = vrot.lane.b32.xlu0 %v5044, 88
  %v6838 = vpop.permute.xlu0 %6837
  %6839 = vrot.lane.b32.xlu0 %v5045, 88
  %v6840 = vpop.permute.xlu0 %6839
  %6841 = vrot.lane.b32.xlu0 %v5046, 88
  %v6842 = vpop.permute.xlu0 %6841
  %6843 = vrot.lane.b32.xlu0 %v5047, 88
  %v6844 = vpop.permute.xlu0 %6843
  %6845 = vrot.lane.b32.xlu0 %v5048, 88
  %v6846 = vpop.permute.xlu0 %6845
  %6847 = vrot.lane.b32.xlu0 %v5049, 88
  %v6848 = vpop.permute.xlu0 %6847
  %6849 = vrot.lane.b32.xlu0 %v5050, 88
  %v6850 = vpop.permute.xlu0 %6849
  %6851 = vrot.lane.b32.xlu0 %v5051, 88
  %v6852 = vpop.permute.xlu0 %6851
  %6853 = vrot.lane.b32.xlu0 %v5052, 88
  %v6854 = vpop.permute.xlu0 %6853
  %6855 = vrot.lane.b32.xlu0 %v5053, 88
  %v6856 = vpop.permute.xlu0 %6855
  %6857 = vrot.lane.b32.xlu0 %v5054, 88
  %v6858 = vpop.permute.xlu0 %6857
  %6859 = vrot.lane.b32.xlu0 %v5055, 88
  %v6860 = vpop.permute.xlu0 %6859
  %6861 = vrot.lane.b32.xlu0 %v5056, 88
  %v6862 = vpop.permute.xlu0 %6861
  %6863 = vrot.lane.b32.xlu0 %v5057, 88
  %v6864 = vpop.permute.xlu0 %6863
  %6865 = vrot.lane.b32.xlu0 %v5058, 88
  %v6866 = vpop.permute.xlu0 %6865
  %v6867 = vsel %vm2061, %v6772, %v6774
  %v6868 = vsel %vm2061, %v6774, %v6776
  %v6869 = vsel %vm2061, %v6776, %v6778
  %v6870 = vsel %vm2061, %v6778, %v6780
  %v6871 = vsel %vm2061, %v6780, %v6782
  %v6872 = vsel %vm2061, %v6784, %v6786
  %v6873 = vsel %vm2061, %v6786, %v6788
  %v6874 = vsel %vm2061, %v6788, %v6790
  %v6875 = vsel %vm2061, %v6790, %v6792
  %v6876 = vsel %vm2061, %v6792, %v6794
  %v6877 = vsel %vm2061, %v6796, %v6798
  %v6878 = vsel %vm2061, %v6798, %v6800
  %v6879 = vsel %vm2061, %v6800, %v6802
  %v6880 = vsel %vm2061, %v6802, %v6804
  %v6881 = vsel %vm2061, %v6804, %v6806
  %v6882 = vsel %vm2061, %v6808, %v6810
  %v6883 = vsel %vm2061, %v6810, %v6812
  %v6884 = vsel %vm2061, %v6812, %v6814
  %v6885 = vsel %vm2061, %v6814, %v6816
  %v6886 = vsel %vm2061, %v6816, %v6818
  %v6887 = vsel %vm2061, %v6820, %v6822
  %v6888 = vsel %vm2061, %v6822, %v6824
  %v6889 = vsel %vm2061, %v6824, %v6826
  %v6890 = vsel %vm2061, %v6826, %v6828
  %v6891 = vsel %vm2061, %v6828, %v6830
  %v6892 = vsel %vm2061, %v6832, %v6834
  %v6893 = vsel %vm2061, %v6834, %v6836
  %v6894 = vsel %vm2061, %v6836, %v6838
  %v6895 = vsel %vm2061, %v6838, %v6840
  %v6896 = vsel %vm2061, %v6840, %v6842
  %v6897 = vsel %vm2061, %v6844, %v6846
  %v6898 = vsel %vm2061, %v6846, %v6848
  %v6899 = vsel %vm2061, %v6848, %v6850
  %v6900 = vsel %vm2061, %v6850, %v6852
  %v6901 = vsel %vm2061, %v6852, %v6854
  %v6902 = vsel %vm2061, %v6856, %v6858
  %v6903 = vsel %vm2061, %v6858, %v6860
  %v6904 = vsel %vm2061, %v6860, %v6862
  %v6905 = vsel %vm2061, %v6862, %v6864
  %v6906 = vsel %vm2061, %v6864, %v6866
  %6955 = vrot.lane.b32.xlu0 %v5011, 87
  %v6956 = vpop.permute.xlu0 %6955
  %6957 = vrot.lane.b32.xlu0 %v5012, 87
  %v6958 = vpop.permute.xlu0 %6957
  %6959 = vrot.lane.b32.xlu0 %v5013, 87
  %v6960 = vpop.permute.xlu0 %6959
  %6961 = vrot.lane.b32.xlu0 %v5014, 87
  %v6962 = vpop.permute.xlu0 %6961
  %6963 = vrot.lane.b32.xlu0 %v5015, 87
  %v6964 = vpop.permute.xlu0 %6963
  %6965 = vrot.lane.b32.xlu0 %v5016, 87
  %v6966 = vpop.permute.xlu0 %6965
  %6967 = vrot.lane.b32.xlu0 %v5017, 87
  %v6968 = vpop.permute.xlu0 %6967
  %6969 = vrot.lane.b32.xlu0 %v5018, 87
  %v6970 = vpop.permute.xlu0 %6969
  %6971 = vrot.lane.b32.xlu0 %v5019, 87
  %v6972 = vpop.permute.xlu0 %6971
  %6973 = vrot.lane.b32.xlu0 %v5020, 87
  %v6974 = vpop.permute.xlu0 %6973
  %6975 = vrot.lane.b32.xlu0 %v5021, 87
  %v6976 = vpop.permute.xlu0 %6975
  %6977 = vrot.lane.b32.xlu0 %v5022, 87
  %v6978 = vpop.permute.xlu0 %6977
  %6979 = vrot.lane.b32.xlu0 %v5023, 87
  %v6980 = vpop.permute.xlu0 %6979
  %6981 = vrot.lane.b32.xlu0 %v5024, 87
  %v6982 = vpop.permute.xlu0 %6981
  %6983 = vrot.lane.b32.xlu0 %v5025, 87
  %v6984 = vpop.permute.xlu0 %6983
  %6985 = vrot.lane.b32.xlu0 %v5026, 87
  %v6986 = vpop.permute.xlu0 %6985
  %6987 = vrot.lane.b32.xlu0 %v5027, 87
  %v6988 = vpop.permute.xlu0 %6987
  %6989 = vrot.lane.b32.xlu0 %v5028, 87
  %v6990 = vpop.permute.xlu0 %6989
  %6991 = vrot.lane.b32.xlu0 %v5029, 87
  %v6992 = vpop.permute.xlu0 %6991
  %6993 = vrot.lane.b32.xlu0 %v5030, 87
  %v6994 = vpop.permute.xlu0 %6993
  %6995 = vrot.lane.b32.xlu0 %v5031, 87
  %v6996 = vpop.permute.xlu0 %6995
  %6997 = vrot.lane.b32.xlu0 %v5032, 87
  %v6998 = vpop.permute.xlu0 %6997
  %6999 = vrot.lane.b32.xlu0 %v5033, 87
  %v7000 = vpop.permute.xlu0 %6999
  %7001 = vrot.lane.b32.xlu0 %v5034, 87
  %v7002 = vpop.permute.xlu0 %7001
  %7003 = vrot.lane.b32.xlu0 %v5035, 87
  %v7004 = vpop.permute.xlu0 %7003
  %7005 = vrot.lane.b32.xlu0 %v5036, 87
  %v7006 = vpop.permute.xlu0 %7005
  %7007 = vrot.lane.b32.xlu0 %v5037, 87
  %v7008 = vpop.permute.xlu0 %7007
  %7009 = vrot.lane.b32.xlu0 %v5038, 87
  %v7010 = vpop.permute.xlu0 %7009
  %7011 = vrot.lane.b32.xlu0 %v5039, 87
  %v7012 = vpop.permute.xlu0 %7011
  %7013 = vrot.lane.b32.xlu0 %v5040, 87
  %v7014 = vpop.permute.xlu0 %7013
  %7015 = vrot.lane.b32.xlu0 %v5041, 87
  %v7016 = vpop.permute.xlu0 %7015
  %7017 = vrot.lane.b32.xlu0 %v5042, 87
  %v7018 = vpop.permute.xlu0 %7017
  %7019 = vrot.lane.b32.xlu0 %v5043, 87
  %v7020 = vpop.permute.xlu0 %7019
  %7021 = vrot.lane.b32.xlu0 %v5044, 87
  %v7022 = vpop.permute.xlu0 %7021
  %7023 = vrot.lane.b32.xlu0 %v5045, 87
  %v7024 = vpop.permute.xlu0 %7023
  %7025 = vrot.lane.b32.xlu0 %v5046, 87
  %v7026 = vpop.permute.xlu0 %7025
  %7027 = vrot.lane.b32.xlu0 %v5047, 87
  %v7028 = vpop.permute.xlu0 %7027
  %7029 = vrot.lane.b32.xlu0 %v5048, 87
  %v7030 = vpop.permute.xlu0 %7029
  %7031 = vrot.lane.b32.xlu0 %v5049, 87
  %v7032 = vpop.permute.xlu0 %7031
  %7033 = vrot.lane.b32.xlu0 %v5050, 87
  %v7034 = vpop.permute.xlu0 %7033
  %7035 = vrot.lane.b32.xlu0 %v5051, 87
  %v7036 = vpop.permute.xlu0 %7035
  %7037 = vrot.lane.b32.xlu0 %v5052, 87
  %v7038 = vpop.permute.xlu0 %7037
  %7039 = vrot.lane.b32.xlu0 %v5053, 87
  %v7040 = vpop.permute.xlu0 %7039
  %7041 = vrot.lane.b32.xlu0 %v5054, 87
  %v7042 = vpop.permute.xlu0 %7041
  %7043 = vrot.lane.b32.xlu0 %v5055, 87
  %v7044 = vpop.permute.xlu0 %7043
  %7045 = vrot.lane.b32.xlu0 %v5056, 87
  %v7046 = vpop.permute.xlu0 %7045
  %7047 = vrot.lane.b32.xlu0 %v5057, 87
  %v7048 = vpop.permute.xlu0 %7047
  %7049 = vrot.lane.b32.xlu0 %v5058, 87
  %v7050 = vpop.permute.xlu0 %7049
  %vm7051 = vcmask 711680
  %v7052 = vsel %vm7051, %v6956, %v6958
  %v7053 = vsel %vm7051, %v6958, %v6960
  %v7054 = vsel %vm7051, %v6960, %v6962
  %v7055 = vsel %vm7051, %v6962, %v6964
  %v7056 = vsel %vm7051, %v6964, %v6966
  %v7057 = vsel %vm7051, %v6968, %v6970
  %v7058 = vsel %vm7051, %v6970, %v6972
  %v7059 = vsel %vm7051, %v6972, %v6974
  %v7060 = vsel %vm7051, %v6974, %v6976
  %v7061 = vsel %vm7051, %v6976, %v6978
  %v7062 = vsel %vm7051, %v6980, %v6982
  %v7063 = vsel %vm7051, %v6982, %v6984
  %v7064 = vsel %vm7051, %v6984, %v6986
  %v7065 = vsel %vm7051, %v6986, %v6988
  %v7066 = vsel %vm7051, %v6988, %v6990
  %v7067 = vsel %vm7051, %v6992, %v6994
  %v7068 = vsel %vm7051, %v6994, %v6996
  %v7069 = vsel %vm7051, %v6996, %v6998
  %v7070 = vsel %vm7051, %v6998, %v7000
  %v7071 = vsel %vm7051, %v7000, %v7002
  %v7072 = vsel %vm7051, %v7004, %v7006
  %v7073 = vsel %vm7051, %v7006, %v7008
  %v7074 = vsel %vm7051, %v7008, %v7010
  %v7075 = vsel %vm7051, %v7010, %v7012
  %v7076 = vsel %vm7051, %v7012, %v7014
  %v7077 = vsel %vm7051, %v7016, %v7018
  %v7078 = vsel %vm7051, %v7018, %v7020
  %v7079 = vsel %vm7051, %v7020, %v7022
  %v7080 = vsel %vm7051, %v7022, %v7024
  %v7081 = vsel %vm7051, %v7024, %v7026
  %v7082 = vsel %vm7051, %v7028, %v7030
  %v7083 = vsel %vm7051, %v7030, %v7032
  %v7084 = vsel %vm7051, %v7032, %v7034
  %v7085 = vsel %vm7051, %v7034, %v7036
  %v7086 = vsel %vm7051, %v7036, %v7038
  %v7087 = vsel %vm7051, %v7040, %v7042
  %v7088 = vsel %vm7051, %v7042, %v7044
  %v7089 = vsel %vm7051, %v7044, %v7046
  %v7090 = vsel %vm7051, %v7046, %v7048
  %v7091 = vsel %vm7051, %v7048, %v7050
  %7140 = vrot.lane.b32.xlu0 %v5011, 86
  %v7141 = vpop.permute.xlu0 %7140
  %7142 = vrot.lane.b32.xlu0 %v5012, 86
  %v7143 = vpop.permute.xlu0 %7142
  %7144 = vrot.lane.b32.xlu0 %v5013, 86
  %v7145 = vpop.permute.xlu0 %7144
  %7146 = vrot.lane.b32.xlu0 %v5014, 86
  %v7147 = vpop.permute.xlu0 %7146
  %7148 = vrot.lane.b32.xlu0 %v5015, 86
  %v7149 = vpop.permute.xlu0 %7148
  %7150 = vrot.lane.b32.xlu0 %v5016, 86
  %v7151 = vpop.permute.xlu0 %7150
  %7152 = vrot.lane.b32.xlu0 %v5017, 86
  %v7153 = vpop.permute.xlu0 %7152
  %7154 = vrot.lane.b32.xlu0 %v5018, 86
  %v7155 = vpop.permute.xlu0 %7154
  %7156 = vrot.lane.b32.xlu0 %v5019, 86
  %v7157 = vpop.permute.xlu0 %7156
  %7158 = vrot.lane.b32.xlu0 %v5020, 86
  %v7159 = vpop.permute.xlu0 %7158
  %7160 = vrot.lane.b32.xlu0 %v5021, 86
  %v7161 = vpop.permute.xlu0 %7160
  %7162 = vrot.lane.b32.xlu0 %v5022, 86
  %v7163 = vpop.permute.xlu0 %7162
  %7164 = vrot.lane.b32.xlu0 %v5023, 86
  %v7165 = vpop.permute.xlu0 %7164
  %7166 = vrot.lane.b32.xlu0 %v5024, 86
  %v7167 = vpop.permute.xlu0 %7166
  %7168 = vrot.lane.b32.xlu0 %v5025, 86
  %v7169 = vpop.permute.xlu0 %7168
  %7170 = vrot.lane.b32.xlu0 %v5026, 86
  %v7171 = vpop.permute.xlu0 %7170
  %7172 = vrot.lane.b32.xlu0 %v5027, 86
  %v7173 = vpop.permute.xlu0 %7172
  %7174 = vrot.lane.b32.xlu0 %v5028, 86
  %v7175 = vpop.permute.xlu0 %7174
  %7176 = vrot.lane.b32.xlu0 %v5029, 86
  %v7177 = vpop.permute.xlu0 %7176
  %7178 = vrot.lane.b32.xlu0 %v5030, 86
  %v7179 = vpop.permute.xlu0 %7178
  %7180 = vrot.lane.b32.xlu0 %v5031, 86
  %v7181 = vpop.permute.xlu0 %7180
  %7182 = vrot.lane.b32.xlu0 %v5032, 86
  %v7183 = vpop.permute.xlu0 %7182
  %7184 = vrot.lane.b32.xlu0 %v5033, 86
  %v7185 = vpop.permute.xlu0 %7184
  %7186 = vrot.lane.b32.xlu0 %v5034, 86
  %v7187 = vpop.permute.xlu0 %7186
  %7188 = vrot.lane.b32.xlu0 %v5035, 86
  %v7189 = vpop.permute.xlu0 %7188
  %7190 = vrot.lane.b32.xlu0 %v5036, 86
  %v7191 = vpop.permute.xlu0 %7190
  %7192 = vrot.lane.b32.xlu0 %v5037, 86
  %v7193 = vpop.permute.xlu0 %7192
  %7194 = vrot.lane.b32.xlu0 %v5038, 86
  %v7195 = vpop.permute.xlu0 %7194
  %7196 = vrot.lane.b32.xlu0 %v5039, 86
  %v7197 = vpop.permute.xlu0 %7196
  %7198 = vrot.lane.b32.xlu0 %v5040, 86
  %v7199 = vpop.permute.xlu0 %7198
  %7200 = vrot.lane.b32.xlu0 %v5041, 86
  %v7201 = vpop.permute.xlu0 %7200
  %7202 = vrot.lane.b32.xlu0 %v5042, 86
  %v7203 = vpop.permute.xlu0 %7202
  %7204 = vrot.lane.b32.xlu0 %v5043, 86
  %v7205 = vpop.permute.xlu0 %7204
  %7206 = vrot.lane.b32.xlu0 %v5044, 86
  %v7207 = vpop.permute.xlu0 %7206
  %7208 = vrot.lane.b32.xlu0 %v5045, 86
  %v7209 = vpop.permute.xlu0 %7208
  %7210 = vrot.lane.b32.xlu0 %v5046, 86
  %v7211 = vpop.permute.xlu0 %7210
  %7212 = vrot.lane.b32.xlu0 %v5047, 86
  %v7213 = vpop.permute.xlu0 %7212
  %7214 = vrot.lane.b32.xlu0 %v5048, 86
  %v7215 = vpop.permute.xlu0 %7214
  %7216 = vrot.lane.b32.xlu0 %v5049, 86
  %v7217 = vpop.permute.xlu0 %7216
  %7218 = vrot.lane.b32.xlu0 %v5050, 86
  %v7219 = vpop.permute.xlu0 %7218
  %7220 = vrot.lane.b32.xlu0 %v5051, 86
  %v7221 = vpop.permute.xlu0 %7220
  %7222 = vrot.lane.b32.xlu0 %v5052, 86
  %v7223 = vpop.permute.xlu0 %7222
  %7224 = vrot.lane.b32.xlu0 %v5053, 86
  %v7225 = vpop.permute.xlu0 %7224
  %7226 = vrot.lane.b32.xlu0 %v5054, 86
  %v7227 = vpop.permute.xlu0 %7226
  %7228 = vrot.lane.b32.xlu0 %v5055, 86
  %v7229 = vpop.permute.xlu0 %7228
  %7230 = vrot.lane.b32.xlu0 %v5056, 86
  %v7231 = vpop.permute.xlu0 %7230
  %7232 = vrot.lane.b32.xlu0 %v5057, 86
  %v7233 = vpop.permute.xlu0 %7232
  %7234 = vrot.lane.b32.xlu0 %v5058, 86
  %v7235 = vpop.permute.xlu0 %7234
  %vm7236 = vcmask 703488
  %v7237 = vsel %vm7236, %v7141, %v7143
  %v7238 = vsel %vm7236, %v7143, %v7145
  %v7239 = vsel %vm7236, %v7145, %v7147
  %v7240 = vsel %vm7236, %v7147, %v7149
  %v7241 = vsel %vm7236, %v7149, %v7151
  %v7242 = vsel %vm7236, %v7153, %v7155
  %v7243 = vsel %vm7236, %v7155, %v7157
  %v7244 = vsel %vm7236, %v7157, %v7159
  %v7245 = vsel %vm7236, %v7159, %v7161
  %v7246 = vsel %vm7236, %v7161, %v7163
  %v7247 = vsel %vm7236, %v7165, %v7167
  %v7248 = vsel %vm7236, %v7167, %v7169
  %v7249 = vsel %vm7236, %v7169, %v7171
  %v7250 = vsel %vm7236, %v7171, %v7173
  %v7251 = vsel %vm7236, %v7173, %v7175
  %v7252 = vsel %vm7236, %v7177, %v7179
  %v7253 = vsel %vm7236, %v7179, %v7181
  %v7254 = vsel %vm7236, %v7181, %v7183
  %v7255 = vsel %vm7236, %v7183, %v7185
  %v7256 = vsel %vm7236, %v7185, %v7187
  %v7257 = vsel %vm7236, %v7189, %v7191
  %v7258 = vsel %vm7236, %v7191, %v7193
  %v7259 = vsel %vm7236, %v7193, %v7195
  %v7260 = vsel %vm7236, %v7195, %v7197
  %v7261 = vsel %vm7236, %v7197, %v7199
  %v7262 = vsel %vm7236, %v7201, %v7203
  %v7263 = vsel %vm7236, %v7203, %v7205
  %v7264 = vsel %vm7236, %v7205, %v7207
  %v7265 = vsel %vm7236, %v7207, %v7209
  %v7266 = vsel %vm7236, %v7209, %v7211
  %v7267 = vsel %vm7236, %v7213, %v7215
  %v7268 = vsel %vm7236, %v7215, %v7217
  %v7269 = vsel %vm7236, %v7217, %v7219
  %v7270 = vsel %vm7236, %v7219, %v7221
  %v7271 = vsel %vm7236, %v7221, %v7223
  %v7272 = vsel %vm7236, %v7225, %v7227
  %v7273 = vsel %vm7236, %v7227, %v7229
  %v7274 = vsel %vm7236, %v7229, %v7231
  %v7275 = vsel %vm7236, %v7231, %v7233
  %v7276 = vsel %vm7236, %v7233, %v7235
  %7325 = vrot.lane.b32.xlu0 %v5011, 85
  %v7326 = vpop.permute.xlu0 %7325
  %7327 = vrot.lane.b32.xlu0 %v5012, 85
  %v7328 = vpop.permute.xlu0 %7327
  %7329 = vrot.lane.b32.xlu0 %v5013, 85
  %v7330 = vpop.permute.xlu0 %7329
  %7331 = vrot.lane.b32.xlu0 %v5014, 85
  %v7332 = vpop.permute.xlu0 %7331
  %7333 = vrot.lane.b32.xlu0 %v5015, 85
  %v7334 = vpop.permute.xlu0 %7333
  %7335 = vrot.lane.b32.xlu0 %v5016, 85
  %v7336 = vpop.permute.xlu0 %7335
  %7337 = vrot.lane.b32.xlu0 %v5017, 85
  %v7338 = vpop.permute.xlu0 %7337
  %7339 = vrot.lane.b32.xlu0 %v5018, 85
  %v7340 = vpop.permute.xlu0 %7339
  %7341 = vrot.lane.b32.xlu0 %v5019, 85
  %v7342 = vpop.permute.xlu0 %7341
  %7343 = vrot.lane.b32.xlu0 %v5020, 85
  %v7344 = vpop.permute.xlu0 %7343
  %7345 = vrot.lane.b32.xlu0 %v5021, 85
  %v7346 = vpop.permute.xlu0 %7345
  %7347 = vrot.lane.b32.xlu0 %v5022, 85
  %v7348 = vpop.permute.xlu0 %7347
  %7349 = vrot.lane.b32.xlu0 %v5023, 85
  %v7350 = vpop.permute.xlu0 %7349
  %7351 = vrot.lane.b32.xlu0 %v5024, 85
  %v7352 = vpop.permute.xlu0 %7351
  %7353 = vrot.lane.b32.xlu0 %v5025, 85
  %v7354 = vpop.permute.xlu0 %7353
  %7355 = vrot.lane.b32.xlu0 %v5026, 85
  %v7356 = vpop.permute.xlu0 %7355
  %7357 = vrot.lane.b32.xlu0 %v5027, 85
  %v7358 = vpop.permute.xlu0 %7357
  %7359 = vrot.lane.b32.xlu0 %v5028, 85
  %v7360 = vpop.permute.xlu0 %7359
  %7361 = vrot.lane.b32.xlu0 %v5029, 85
  %v7362 = vpop.permute.xlu0 %7361
  %7363 = vrot.lane.b32.xlu0 %v5030, 85
  %v7364 = vpop.permute.xlu0 %7363
  %7365 = vrot.lane.b32.xlu0 %v5031, 85
  %v7366 = vpop.permute.xlu0 %7365
  %7367 = vrot.lane.b32.xlu0 %v5032, 85
  %v7368 = vpop.permute.xlu0 %7367
  %7369 = vrot.lane.b32.xlu0 %v5033, 85
  %v7370 = vpop.permute.xlu0 %7369
  %7371 = vrot.lane.b32.xlu0 %v5034, 85
  %v7372 = vpop.permute.xlu0 %7371
  %7373 = vrot.lane.b32.xlu0 %v5035, 85
  %v7374 = vpop.permute.xlu0 %7373
  %7375 = vrot.lane.b32.xlu0 %v5036, 85
  %v7376 = vpop.permute.xlu0 %7375
  %7377 = vrot.lane.b32.xlu0 %v5037, 85
  %v7378 = vpop.permute.xlu0 %7377
  %7379 = vrot.lane.b32.xlu0 %v5038, 85
  %v7380 = vpop.permute.xlu0 %7379
  %7381 = vrot.lane.b32.xlu0 %v5039, 85
  %v7382 = vpop.permute.xlu0 %7381
  %7383 = vrot.lane.b32.xlu0 %v5040, 85
  %v7384 = vpop.permute.xlu0 %7383
  %7385 = vrot.lane.b32.xlu0 %v5041, 85
  %v7386 = vpop.permute.xlu0 %7385
  %7387 = vrot.lane.b32.xlu0 %v5042, 85
  %v7388 = vpop.permute.xlu0 %7387
  %7389 = vrot.lane.b32.xlu0 %v5043, 85
  %v7390 = vpop.permute.xlu0 %7389
  %7391 = vrot.lane.b32.xlu0 %v5044, 85
  %v7392 = vpop.permute.xlu0 %7391
  %7393 = vrot.lane.b32.xlu0 %v5045, 85
  %v7394 = vpop.permute.xlu0 %7393
  %7395 = vrot.lane.b32.xlu0 %v5046, 85
  %v7396 = vpop.permute.xlu0 %7395
  %7397 = vrot.lane.b32.xlu0 %v5047, 85
  %v7398 = vpop.permute.xlu0 %7397
  %7399 = vrot.lane.b32.xlu0 %v5048, 85
  %v7400 = vpop.permute.xlu0 %7399
  %7401 = vrot.lane.b32.xlu0 %v5049, 85
  %v7402 = vpop.permute.xlu0 %7401
  %7403 = vrot.lane.b32.xlu0 %v5050, 85
  %v7404 = vpop.permute.xlu0 %7403
  %7405 = vrot.lane.b32.xlu0 %v5051, 85
  %v7406 = vpop.permute.xlu0 %7405
  %7407 = vrot.lane.b32.xlu0 %v5052, 85
  %v7408 = vpop.permute.xlu0 %7407
  %7409 = vrot.lane.b32.xlu0 %v5053, 85
  %v7410 = vpop.permute.xlu0 %7409
  %7411 = vrot.lane.b32.xlu0 %v5054, 85
  %v7412 = vpop.permute.xlu0 %7411
  %7413 = vrot.lane.b32.xlu0 %v5055, 85
  %v7414 = vpop.permute.xlu0 %7413
  %7415 = vrot.lane.b32.xlu0 %v5056, 85
  %v7416 = vpop.permute.xlu0 %7415
  %7417 = vrot.lane.b32.xlu0 %v5057, 85
  %v7418 = vpop.permute.xlu0 %7417
  %7419 = vrot.lane.b32.xlu0 %v5058, 85
  %v7420 = vpop.permute.xlu0 %7419
  %vm7421 = vcmask 695296
  %v7422 = vsel %vm7421, %v7326, %v7328
  %v7423 = vsel %vm7421, %v7328, %v7330
  %v7424 = vsel %vm7421, %v7330, %v7332
  %v7425 = vsel %vm7421, %v7332, %v7334
  %v7426 = vsel %vm7421, %v7334, %v7336
  %v7427 = vsel %vm7421, %v7338, %v7340
  %v7428 = vsel %vm7421, %v7340, %v7342
  %v7429 = vsel %vm7421, %v7342, %v7344
  %v7430 = vsel %vm7421, %v7344, %v7346
  %v7431 = vsel %vm7421, %v7346, %v7348
  %v7432 = vsel %vm7421, %v7350, %v7352
  %v7433 = vsel %vm7421, %v7352, %v7354
  %v7434 = vsel %vm7421, %v7354, %v7356
  %v7435 = vsel %vm7421, %v7356, %v7358
  %v7436 = vsel %vm7421, %v7358, %v7360
  %v7437 = vsel %vm7421, %v7362, %v7364
  %v7438 = vsel %vm7421, %v7364, %v7366
  %v7439 = vsel %vm7421, %v7366, %v7368
  %v7440 = vsel %vm7421, %v7368, %v7370
  %v7441 = vsel %vm7421, %v7370, %v7372
  %v7442 = vsel %vm7421, %v7374, %v7376
  %v7443 = vsel %vm7421, %v7376, %v7378
  %v7444 = vsel %vm7421, %v7378, %v7380
  %v7445 = vsel %vm7421, %v7380, %v7382
  %v7446 = vsel %vm7421, %v7382, %v7384
  %v7447 = vsel %vm7421, %v7386, %v7388
  %v7448 = vsel %vm7421, %v7388, %v7390
  %v7449 = vsel %vm7421, %v7390, %v7392
  %v7450 = vsel %vm7421, %v7392, %v7394
  %v7451 = vsel %vm7421, %v7394, %v7396
  %v7452 = vsel %vm7421, %v7398, %v7400
  %v7453 = vsel %vm7421, %v7400, %v7402
  %v7454 = vsel %vm7421, %v7402, %v7404
  %v7455 = vsel %vm7421, %v7404, %v7406
  %v7456 = vsel %vm7421, %v7406, %v7408
  %v7457 = vsel %vm7421, %v7410, %v7412
  %v7458 = vsel %vm7421, %v7412, %v7414
  %v7459 = vsel %vm7421, %v7414, %v7416
  %v7460 = vsel %vm7421, %v7416, %v7418
  %v7461 = vsel %vm7421, %v7418, %v7420
  %7510 = vrot.lane.b32.xlu0 %v5011, 84
  %v7511 = vpop.permute.xlu0 %7510
  %7512 = vrot.lane.b32.xlu0 %v5012, 84
  %v7513 = vpop.permute.xlu0 %7512
  %7514 = vrot.lane.b32.xlu0 %v5013, 84
  %v7515 = vpop.permute.xlu0 %7514
  %7516 = vrot.lane.b32.xlu0 %v5014, 84
  %v7517 = vpop.permute.xlu0 %7516
  %7518 = vrot.lane.b32.xlu0 %v5015, 84
  %v7519 = vpop.permute.xlu0 %7518
  %7520 = vrot.lane.b32.xlu0 %v5016, 84
  %v7521 = vpop.permute.xlu0 %7520
  %7522 = vrot.lane.b32.xlu0 %v5017, 84
  %v7523 = vpop.permute.xlu0 %7522
  %7524 = vrot.lane.b32.xlu0 %v5018, 84
  %v7525 = vpop.permute.xlu0 %7524
  %7526 = vrot.lane.b32.xlu0 %v5019, 84
  %v7527 = vpop.permute.xlu0 %7526
  %7528 = vrot.lane.b32.xlu0 %v5020, 84
  %v7529 = vpop.permute.xlu0 %7528
  %7530 = vrot.lane.b32.xlu0 %v5021, 84
  %v7531 = vpop.permute.xlu0 %7530
  %7532 = vrot.lane.b32.xlu0 %v5022, 84
  %v7533 = vpop.permute.xlu0 %7532
  %7534 = vrot.lane.b32.xlu0 %v5023, 84
  %v7535 = vpop.permute.xlu0 %7534
  %7536 = vrot.lane.b32.xlu0 %v5024, 84
  %v7537 = vpop.permute.xlu0 %7536
  %7538 = vrot.lane.b32.xlu0 %v5025, 84
  %v7539 = vpop.permute.xlu0 %7538
  %7540 = vrot.lane.b32.xlu0 %v5026, 84
  %v7541 = vpop.permute.xlu0 %7540
  %7542 = vrot.lane.b32.xlu0 %v5027, 84
  %v7543 = vpop.permute.xlu0 %7542
  %7544 = vrot.lane.b32.xlu0 %v5028, 84
  %v7545 = vpop.permute.xlu0 %7544
  %7546 = vrot.lane.b32.xlu0 %v5029, 84
  %v7547 = vpop.permute.xlu0 %7546
  %7548 = vrot.lane.b32.xlu0 %v5030, 84
  %v7549 = vpop.permute.xlu0 %7548
  %7550 = vrot.lane.b32.xlu0 %v5031, 84
  %v7551 = vpop.permute.xlu0 %7550
  %7552 = vrot.lane.b32.xlu0 %v5032, 84
  %v7553 = vpop.permute.xlu0 %7552
  %7554 = vrot.lane.b32.xlu0 %v5033, 84
  %v7555 = vpop.permute.xlu0 %7554
  %7556 = vrot.lane.b32.xlu0 %v5034, 84
  %v7557 = vpop.permute.xlu0 %7556
  %7558 = vrot.lane.b32.xlu0 %v5035, 84
  %v7559 = vpop.permute.xlu0 %7558
  %7560 = vrot.lane.b32.xlu0 %v5036, 84
  %v7561 = vpop.permute.xlu0 %7560
  %7562 = vrot.lane.b32.xlu0 %v5037, 84
  %v7563 = vpop.permute.xlu0 %7562
  %7564 = vrot.lane.b32.xlu0 %v5038, 84
  %v7565 = vpop.permute.xlu0 %7564
  %7566 = vrot.lane.b32.xlu0 %v5039, 84
  %v7567 = vpop.permute.xlu0 %7566
  %7568 = vrot.lane.b32.xlu0 %v5040, 84
  %v7569 = vpop.permute.xlu0 %7568
  %7570 = vrot.lane.b32.xlu0 %v5041, 84
  %v7571 = vpop.permute.xlu0 %7570
  %7572 = vrot.lane.b32.xlu0 %v5042, 84
  %v7573 = vpop.permute.xlu0 %7572
  %7574 = vrot.lane.b32.xlu0 %v5043, 84
  %v7575 = vpop.permute.xlu0 %7574
  %7576 = vrot.lane.b32.xlu0 %v5044, 84
  %v7577 = vpop.permute.xlu0 %7576
  %7578 = vrot.lane.b32.xlu0 %v5045, 84
  %v7579 = vpop.permute.xlu0 %7578
  %7580 = vrot.lane.b32.xlu0 %v5046, 84
  %v7581 = vpop.permute.xlu0 %7580
  %7582 = vrot.lane.b32.xlu0 %v5047, 84
  %v7583 = vpop.permute.xlu0 %7582
  %7584 = vrot.lane.b32.xlu0 %v5048, 84
  %v7585 = vpop.permute.xlu0 %7584
  %7586 = vrot.lane.b32.xlu0 %v5049, 84
  %v7587 = vpop.permute.xlu0 %7586
  %7588 = vrot.lane.b32.xlu0 %v5050, 84
  %v7589 = vpop.permute.xlu0 %7588
  %7590 = vrot.lane.b32.xlu0 %v5051, 84
  %v7591 = vpop.permute.xlu0 %7590
  %7592 = vrot.lane.b32.xlu0 %v5052, 84
  %v7593 = vpop.permute.xlu0 %7592
  %7594 = vrot.lane.b32.xlu0 %v5053, 84
  %v7595 = vpop.permute.xlu0 %7594
  %7596 = vrot.lane.b32.xlu0 %v5054, 84
  %v7597 = vpop.permute.xlu0 %7596
  %7598 = vrot.lane.b32.xlu0 %v5055, 84
  %v7599 = vpop.permute.xlu0 %7598
  %7600 = vrot.lane.b32.xlu0 %v5056, 84
  %v7601 = vpop.permute.xlu0 %7600
  %7602 = vrot.lane.b32.xlu0 %v5057, 84
  %v7603 = vpop.permute.xlu0 %7602
  %7604 = vrot.lane.b32.xlu0 %v5058, 84
  %v7605 = vpop.permute.xlu0 %7604
  %v7606 = vsel %vm4880, %v7511, %v7513
  %v7607 = vsel %vm4880, %v7513, %v7515
  %v7608 = vsel %vm4880, %v7515, %v7517
  %v7609 = vsel %vm4880, %v7517, %v7519
  %v7610 = vsel %vm4880, %v7519, %v7521
  %v7611 = vsel %vm4880, %v7523, %v7525
  %v7612 = vsel %vm4880, %v7525, %v7527
  %v7613 = vsel %vm4880, %v7527, %v7529
  %v7614 = vsel %vm4880, %v7529, %v7531
  %v7615 = vsel %vm4880, %v7531, %v7533
  %v7616 = vsel %vm4880, %v7535, %v7537
  %v7617 = vsel %vm4880, %v7537, %v7539
  %v7618 = vsel %vm4880, %v7539, %v7541
  %v7619 = vsel %vm4880, %v7541, %v7543
  %v7620 = vsel %vm4880, %v7543, %v7545
  %v7621 = vsel %vm4880, %v7547, %v7549
  %v7622 = vsel %vm4880, %v7549, %v7551
  %v7623 = vsel %vm4880, %v7551, %v7553
  %v7624 = vsel %vm4880, %v7553, %v7555
  %v7625 = vsel %vm4880, %v7555, %v7557
  %v7626 = vsel %vm4880, %v7559, %v7561
  %v7627 = vsel %vm4880, %v7561, %v7563
  %v7628 = vsel %vm4880, %v7563, %v7565
  %v7629 = vsel %vm4880, %v7565, %v7567
  %v7630 = vsel %vm4880, %v7567, %v7569
  %v7631 = vsel %vm4880, %v7571, %v7573
  %v7632 = vsel %vm4880, %v7573, %v7575
  %v7633 = vsel %vm4880, %v7575, %v7577
  %v7634 = vsel %vm4880, %v7577, %v7579
  %v7635 = vsel %vm4880, %v7579, %v7581
  %v7636 = vsel %vm4880, %v7583, %v7585
  %v7637 = vsel %vm4880, %v7585, %v7587
  %v7638 = vsel %vm4880, %v7587, %v7589
  %v7639 = vsel %vm4880, %v7589, %v7591
  %v7640 = vsel %vm4880, %v7591, %v7593
  %v7641 = vsel %vm4880, %v7595, %v7597
  %v7642 = vsel %vm4880, %v7597, %v7599
  %v7643 = vsel %vm4880, %v7599, %v7601
  %v7644 = vsel %vm4880, %v7601, %v7603
  %v7645 = vsel %vm4880, %v7603, %v7605
  %7702 = vrot.lane.b32.xlu0 %v5011, 68
  %v7703 = vpop.permute.xlu0 %7702
  %7704 = vrot.lane.b32.xlu0 %v5012, 68
  %v7705 = vpop.permute.xlu0 %7704
  %7706 = vrot.lane.b32.xlu0 %v5013, 68
  %v7707 = vpop.permute.xlu0 %7706
  %7708 = vrot.lane.b32.xlu0 %v5014, 68
  %v7709 = vpop.permute.xlu0 %7708
  %7710 = vrot.lane.b32.xlu0 %v5015, 68
  %v7711 = vpop.permute.xlu0 %7710
  %7712 = vrot.lane.b32.xlu0 %v5016, 68
  %v7713 = vpop.permute.xlu0 %7712
  %7714 = vrot.lane.b32.xlu0 %v5059, 68
  %v7715 = vpop.permute.xlu0 %7714
  %7716 = vrot.lane.b32.xlu0 %v5017, 68
  %v7717 = vpop.permute.xlu0 %7716
  %7718 = vrot.lane.b32.xlu0 %v5018, 68
  %v7719 = vpop.permute.xlu0 %7718
  %7720 = vrot.lane.b32.xlu0 %v5019, 68
  %v7721 = vpop.permute.xlu0 %7720
  %7722 = vrot.lane.b32.xlu0 %v5020, 68
  %v7723 = vpop.permute.xlu0 %7722
  %7724 = vrot.lane.b32.xlu0 %v5021, 68
  %v7725 = vpop.permute.xlu0 %7724
  %7726 = vrot.lane.b32.xlu0 %v5022, 68
  %v7727 = vpop.permute.xlu0 %7726
  %7728 = vrot.lane.b32.xlu0 %v5060, 68
  %v7729 = vpop.permute.xlu0 %7728
  %7730 = vrot.lane.b32.xlu0 %v5023, 68
  %v7731 = vpop.permute.xlu0 %7730
  %7732 = vrot.lane.b32.xlu0 %v5024, 68
  %v7733 = vpop.permute.xlu0 %7732
  %7734 = vrot.lane.b32.xlu0 %v5025, 68
  %v7735 = vpop.permute.xlu0 %7734
  %7736 = vrot.lane.b32.xlu0 %v5026, 68
  %v7737 = vpop.permute.xlu0 %7736
  %7738 = vrot.lane.b32.xlu0 %v5027, 68
  %v7739 = vpop.permute.xlu0 %7738
  %7740 = vrot.lane.b32.xlu0 %v5028, 68
  %v7741 = vpop.permute.xlu0 %7740
  %7742 = vrot.lane.b32.xlu0 %v5061, 68
  %v7743 = vpop.permute.xlu0 %7742
  %7744 = vrot.lane.b32.xlu0 %v5029, 68
  %v7745 = vpop.permute.xlu0 %7744
  %7746 = vrot.lane.b32.xlu0 %v5030, 68
  %v7747 = vpop.permute.xlu0 %7746
  %7748 = vrot.lane.b32.xlu0 %v5031, 68
  %v7749 = vpop.permute.xlu0 %7748
  %7750 = vrot.lane.b32.xlu0 %v5032, 68
  %v7751 = vpop.permute.xlu0 %7750
  %7752 = vrot.lane.b32.xlu0 %v5033, 68
  %v7753 = vpop.permute.xlu0 %7752
  %7754 = vrot.lane.b32.xlu0 %v5034, 68
  %v7755 = vpop.permute.xlu0 %7754
  %7756 = vrot.lane.b32.xlu0 %v5062, 68
  %v7757 = vpop.permute.xlu0 %7756
  %7758 = vrot.lane.b32.xlu0 %v5035, 68
  %v7759 = vpop.permute.xlu0 %7758
  %7760 = vrot.lane.b32.xlu0 %v5036, 68
  %v7761 = vpop.permute.xlu0 %7760
  %7762 = vrot.lane.b32.xlu0 %v5037, 68
  %v7763 = vpop.permute.xlu0 %7762
  %7764 = vrot.lane.b32.xlu0 %v5038, 68
  %v7765 = vpop.permute.xlu0 %7764
  %7766 = vrot.lane.b32.xlu0 %v5039, 68
  %v7767 = vpop.permute.xlu0 %7766
  %7768 = vrot.lane.b32.xlu0 %v5040, 68
  %v7769 = vpop.permute.xlu0 %7768
  %7770 = vrot.lane.b32.xlu0 %v5063, 68
  %v7771 = vpop.permute.xlu0 %7770
  %7772 = vrot.lane.b32.xlu0 %v5041, 68
  %v7773 = vpop.permute.xlu0 %7772
  %7774 = vrot.lane.b32.xlu0 %v5042, 68
  %v7775 = vpop.permute.xlu0 %7774
  %7776 = vrot.lane.b32.xlu0 %v5043, 68
  %v7777 = vpop.permute.xlu0 %7776
  %7778 = vrot.lane.b32.xlu0 %v5044, 68
  %v7779 = vpop.permute.xlu0 %7778
  %7780 = vrot.lane.b32.xlu0 %v5045, 68
  %v7781 = vpop.permute.xlu0 %7780
  %7782 = vrot.lane.b32.xlu0 %v5046, 68
  %v7783 = vpop.permute.xlu0 %7782
  %7784 = vrot.lane.b32.xlu0 %v5064, 68
  %v7785 = vpop.permute.xlu0 %7784
  %7786 = vrot.lane.b32.xlu0 %v5047, 68
  %v7787 = vpop.permute.xlu0 %7786
  %7788 = vrot.lane.b32.xlu0 %v5048, 68
  %v7789 = vpop.permute.xlu0 %7788
  %7790 = vrot.lane.b32.xlu0 %v5049, 68
  %v7791 = vpop.permute.xlu0 %7790
  %7792 = vrot.lane.b32.xlu0 %v5050, 68
  %v7793 = vpop.permute.xlu0 %7792
  %7794 = vrot.lane.b32.xlu0 %v5051, 68
  %v7795 = vpop.permute.xlu0 %7794
  %7796 = vrot.lane.b32.xlu0 %v5052, 68
  %v7797 = vpop.permute.xlu0 %7796
  %7798 = vrot.lane.b32.xlu0 %v5065, 68
  %v7799 = vpop.permute.xlu0 %7798
  %7800 = vrot.lane.b32.xlu0 %v5053, 68
  %v7801 = vpop.permute.xlu0 %7800
  %7802 = vrot.lane.b32.xlu0 %v5054, 68
  %v7803 = vpop.permute.xlu0 %7802
  %7804 = vrot.lane.b32.xlu0 %v5055, 68
  %v7805 = vpop.permute.xlu0 %7804
  %7806 = vrot.lane.b32.xlu0 %v5056, 68
  %v7807 = vpop.permute.xlu0 %7806
  %7808 = vrot.lane.b32.xlu0 %v5057, 68
  %v7809 = vpop.permute.xlu0 %7808
  %7810 = vrot.lane.b32.xlu0 %v5058, 68
  %v7811 = vpop.permute.xlu0 %7810
  %7812 = vrot.lane.b32.xlu0 %v5066, 68
  %v7813 = vpop.permute.xlu0 %7812
  %vm7814 = vcmask 556032
  %v7815 = vsel %vm7814, %v7703, %v7705
  %v7816 = vsel %vm7814, %v7705, %v7707
  %v7817 = vsel %vm7814, %v7707, %v7709
  %v7818 = vsel %vm7814, %v7709, %v7711
  %v7819 = vsel %vm7814, %v7711, %v7713
  %v7820 = vsel %vm7814, %v7713, %v7715
  %v7821 = vsel %vm7814, %v7717, %v7719
  %v7822 = vsel %vm7814, %v7719, %v7721
  %v7823 = vsel %vm7814, %v7721, %v7723
  %v7824 = vsel %vm7814, %v7723, %v7725
  %v7825 = vsel %vm7814, %v7725, %v7727
  %v7826 = vsel %vm7814, %v7727, %v7729
  %v7827 = vsel %vm7814, %v7731, %v7733
  %v7828 = vsel %vm7814, %v7733, %v7735
  %v7829 = vsel %vm7814, %v7735, %v7737
  %v7830 = vsel %vm7814, %v7737, %v7739
  %v7831 = vsel %vm7814, %v7739, %v7741
  %v7832 = vsel %vm7814, %v7741, %v7743
  %v7833 = vsel %vm7814, %v7745, %v7747
  %v7834 = vsel %vm7814, %v7747, %v7749
  %v7835 = vsel %vm7814, %v7749, %v7751
  %v7836 = vsel %vm7814, %v7751, %v7753
  %v7837 = vsel %vm7814, %v7753, %v7755
  %v7838 = vsel %vm7814, %v7755, %v7757
  %v7839 = vsel %vm7814, %v7759, %v7761
  %v7840 = vsel %vm7814, %v7761, %v7763
  %v7841 = vsel %vm7814, %v7763, %v7765
  %v7842 = vsel %vm7814, %v7765, %v7767
  %v7843 = vsel %vm7814, %v7767, %v7769
  %v7844 = vsel %vm7814, %v7769, %v7771
  %v7845 = vsel %vm7814, %v7773, %v7775
  %v7846 = vsel %vm7814, %v7775, %v7777
  %v7847 = vsel %vm7814, %v7777, %v7779
  %v7848 = vsel %vm7814, %v7779, %v7781
  %v7849 = vsel %vm7814, %v7781, %v7783
  %v7850 = vsel %vm7814, %v7783, %v7785
  %v7851 = vsel %vm7814, %v7787, %v7789
  %v7852 = vsel %vm7814, %v7789, %v7791
  %v7853 = vsel %vm7814, %v7791, %v7793
  %v7854 = vsel %vm7814, %v7793, %v7795
  %v7855 = vsel %vm7814, %v7795, %v7797
  %v7856 = vsel %vm7814, %v7797, %v7799
  %v7857 = vsel %vm7814, %v7801, %v7803
  %v7858 = vsel %vm7814, %v7803, %v7805
  %v7859 = vsel %vm7814, %v7805, %v7807
  %v7860 = vsel %vm7814, %v7807, %v7809
  %v7861 = vsel %vm7814, %v7809, %v7811
  %v7862 = vsel %vm7814, %v7811, %v7813
  %7911 = vrot.lane.b32.xlu0 %v5059, 127
  %v7912 = vpop.permute.xlu0 %7911
  %7913 = vrot.lane.b32.xlu0 %v5060, 127
  %v7914 = vpop.permute.xlu0 %7913
  %7915 = vrot.lane.b32.xlu0 %v5061, 127
  %v7916 = vpop.permute.xlu0 %7915
  %7917 = vrot.lane.b32.xlu0 %v5062, 127
  %v7918 = vpop.permute.xlu0 %7917
  %7919 = vrot.lane.b32.xlu0 %v5063, 127
  %v7920 = vpop.permute.xlu0 %7919
  %7921 = vrot.lane.b32.xlu0 %v5064, 127
  %v7922 = vpop.permute.xlu0 %7921
  %7923 = vrot.lane.b32.xlu0 %v5065, 127
  %v7924 = vpop.permute.xlu0 %7923
  %7925 = vrot.lane.b32.xlu0 %v5066, 127
  %v7926 = vpop.permute.xlu0 %7925
  %v7927 = vsel %vm54, %v5126, %v7912
  %v7928 = vsel %vm54, %v5138, %v7914
  %v7929 = vsel %vm54, %v5150, %v7916
  %v7930 = vsel %vm54, %v5162, %v7918
  %v7931 = vsel %vm54, %v5174, %v7920
  %v7932 = vsel %vm54, %v5186, %v7922
  %v7933 = vsel %vm54, %v5198, %v7924
  %v7934 = vsel %vm54, %v5210, %v7926
  %7935 = vrot.lane.b32.xlu0 %v5059, 126
  %v7936 = vpop.permute.xlu0 %7935
  %7937 = vrot.lane.b32.xlu0 %v5060, 126
  %v7938 = vpop.permute.xlu0 %7937
  %7939 = vrot.lane.b32.xlu0 %v5061, 126
  %v7940 = vpop.permute.xlu0 %7939
  %7941 = vrot.lane.b32.xlu0 %v5062, 126
  %v7942 = vpop.permute.xlu0 %7941
  %7943 = vrot.lane.b32.xlu0 %v5063, 126
  %v7944 = vpop.permute.xlu0 %7943
  %7945 = vrot.lane.b32.xlu0 %v5064, 126
  %v7946 = vpop.permute.xlu0 %7945
  %7947 = vrot.lane.b32.xlu0 %v5065, 126
  %v7948 = vpop.permute.xlu0 %7947
  %7949 = vrot.lane.b32.xlu0 %v5066, 126
  %v7950 = vpop.permute.xlu0 %7949
  %v7951 = vsel %vm74, %v5310, %v7936
  %v7952 = vsel %vm74, %v5322, %v7938
  %v7953 = vsel %vm74, %v5334, %v7940
  %v7954 = vsel %vm74, %v5346, %v7942
  %v7955 = vsel %vm74, %v5358, %v7944
  %v7956 = vsel %vm74, %v5370, %v7946
  %v7957 = vsel %vm74, %v5382, %v7948
  %v7958 = vsel %vm74, %v5394, %v7950
  %7959 = vrot.lane.b32.xlu0 %v5059, 125
  %v7960 = vpop.permute.xlu0 %7959
  %7961 = vrot.lane.b32.xlu0 %v5060, 125
  %v7962 = vpop.permute.xlu0 %7961
  %7963 = vrot.lane.b32.xlu0 %v5061, 125
  %v7964 = vpop.permute.xlu0 %7963
  %7965 = vrot.lane.b32.xlu0 %v5062, 125
  %v7966 = vpop.permute.xlu0 %7965
  %7967 = vrot.lane.b32.xlu0 %v5063, 125
  %v7968 = vpop.permute.xlu0 %7967
  %7969 = vrot.lane.b32.xlu0 %v5064, 125
  %v7970 = vpop.permute.xlu0 %7969
  %7971 = vrot.lane.b32.xlu0 %v5065, 125
  %v7972 = vpop.permute.xlu0 %7971
  %7973 = vrot.lane.b32.xlu0 %v5066, 125
  %v7974 = vpop.permute.xlu0 %7973
  %v7975 = vsel %vm94, %v5494, %v7960
  %v7976 = vsel %vm94, %v5506, %v7962
  %v7977 = vsel %vm94, %v5518, %v7964
  %v7978 = vsel %vm94, %v5530, %v7966
  %v7979 = vsel %vm94, %v5542, %v7968
  %v7980 = vsel %vm94, %v5554, %v7970
  %v7981 = vsel %vm94, %v5566, %v7972
  %v7982 = vsel %vm94, %v5578, %v7974
  %7983 = vrot.lane.b32.xlu0 %v5011, 109
  %v7984 = vpop.permute.xlu0 %7983
  %7985 = vrot.lane.b32.xlu0 %v5012, 109
  %v7986 = vpop.permute.xlu0 %7985
  %7987 = vrot.lane.b32.xlu0 %v5013, 109
  %v7988 = vpop.permute.xlu0 %7987
  %7989 = vrot.lane.b32.xlu0 %v5014, 109
  %v7990 = vpop.permute.xlu0 %7989
  %7991 = vrot.lane.b32.xlu0 %v5015, 109
  %v7992 = vpop.permute.xlu0 %7991
  %7993 = vrot.lane.b32.xlu0 %v5016, 109
  %v7994 = vpop.permute.xlu0 %7993
  %7995 = vrot.lane.b32.xlu0 %v5059, 109
  %v7996 = vpop.permute.xlu0 %7995
  %7997 = vrot.lane.b32.xlu0 %v5017, 109
  %v7998 = vpop.permute.xlu0 %7997
  %7999 = vrot.lane.b32.xlu0 %v5018, 109
  %v8000 = vpop.permute.xlu0 %7999
  %8001 = vrot.lane.b32.xlu0 %v5019, 109
  %v8002 = vpop.permute.xlu0 %8001
  %8003 = vrot.lane.b32.xlu0 %v5020, 109
  %v8004 = vpop.permute.xlu0 %8003
  %8005 = vrot.lane.b32.xlu0 %v5021, 109
  %v8006 = vpop.permute.xlu0 %8005
  %8007 = vrot.lane.b32.xlu0 %v5022, 109
  %v8008 = vpop.permute.xlu0 %8007
  %8009 = vrot.lane.b32.xlu0 %v5060, 109
  %v8010 = vpop.permute.xlu0 %8009
  %8011 = vrot.lane.b32.xlu0 %v5023, 109
  %v8012 = vpop.permute.xlu0 %8011
  %8013 = vrot.lane.b32.xlu0 %v5024, 109
  %v8014 = vpop.permute.xlu0 %8013
  %8015 = vrot.lane.b32.xlu0 %v5025, 109
  %v8016 = vpop.permute.xlu0 %8015
  %8017 = vrot.lane.b32.xlu0 %v5026, 109
  %v8018 = vpop.permute.xlu0 %8017
  %8019 = vrot.lane.b32.xlu0 %v5027, 109
  %v8020 = vpop.permute.xlu0 %8019
  %8021 = vrot.lane.b32.xlu0 %v5028, 109
  %v8022 = vpop.permute.xlu0 %8021
  %8023 = vrot.lane.b32.xlu0 %v5061, 109
  %v8024 = vpop.permute.xlu0 %8023
  %8025 = vrot.lane.b32.xlu0 %v5029, 109
  %v8026 = vpop.permute.xlu0 %8025
  %8027 = vrot.lane.b32.xlu0 %v5030, 109
  %v8028 = vpop.permute.xlu0 %8027
  %8029 = vrot.lane.b32.xlu0 %v5031, 109
  %v8030 = vpop.permute.xlu0 %8029
  %8031 = vrot.lane.b32.xlu0 %v5032, 109
  %v8032 = vpop.permute.xlu0 %8031
  %8033 = vrot.lane.b32.xlu0 %v5033, 109
  %v8034 = vpop.permute.xlu0 %8033
  %8035 = vrot.lane.b32.xlu0 %v5034, 109
  %v8036 = vpop.permute.xlu0 %8035
  %8037 = vrot.lane.b32.xlu0 %v5062, 109
  %v8038 = vpop.permute.xlu0 %8037
  %8039 = vrot.lane.b32.xlu0 %v5035, 109
  %v8040 = vpop.permute.xlu0 %8039
  %8041 = vrot.lane.b32.xlu0 %v5036, 109
  %v8042 = vpop.permute.xlu0 %8041
  %8043 = vrot.lane.b32.xlu0 %v5037, 109
  %v8044 = vpop.permute.xlu0 %8043
  %8045 = vrot.lane.b32.xlu0 %v5038, 109
  %v8046 = vpop.permute.xlu0 %8045
  %8047 = vrot.lane.b32.xlu0 %v5039, 109
  %v8048 = vpop.permute.xlu0 %8047
  %8049 = vrot.lane.b32.xlu0 %v5040, 109
  %v8050 = vpop.permute.xlu0 %8049
  %8051 = vrot.lane.b32.xlu0 %v5063, 109
  %v8052 = vpop.permute.xlu0 %8051
  %8053 = vrot.lane.b32.xlu0 %v5041, 109
  %v8054 = vpop.permute.xlu0 %8053
  %8055 = vrot.lane.b32.xlu0 %v5042, 109
  %v8056 = vpop.permute.xlu0 %8055
  %8057 = vrot.lane.b32.xlu0 %v5043, 109
  %v8058 = vpop.permute.xlu0 %8057
  %8059 = vrot.lane.b32.xlu0 %v5044, 109
  %v8060 = vpop.permute.xlu0 %8059
  %8061 = vrot.lane.b32.xlu0 %v5045, 109
  %v8062 = vpop.permute.xlu0 %8061
  %8063 = vrot.lane.b32.xlu0 %v5046, 109
  %v8064 = vpop.permute.xlu0 %8063
  %8065 = vrot.lane.b32.xlu0 %v5064, 109
  %v8066 = vpop.permute.xlu0 %8065
  %8067 = vrot.lane.b32.xlu0 %v5047, 109
  %v8068 = vpop.permute.xlu0 %8067
  %8069 = vrot.lane.b32.xlu0 %v5048, 109
  %v8070 = vpop.permute.xlu0 %8069
  %8071 = vrot.lane.b32.xlu0 %v5049, 109
  %v8072 = vpop.permute.xlu0 %8071
  %8073 = vrot.lane.b32.xlu0 %v5050, 109
  %v8074 = vpop.permute.xlu0 %8073
  %8075 = vrot.lane.b32.xlu0 %v5051, 109
  %v8076 = vpop.permute.xlu0 %8075
  %8077 = vrot.lane.b32.xlu0 %v5052, 109
  %v8078 = vpop.permute.xlu0 %8077
  %8079 = vrot.lane.b32.xlu0 %v5065, 109
  %v8080 = vpop.permute.xlu0 %8079
  %8081 = vrot.lane.b32.xlu0 %v5053, 109
  %v8082 = vpop.permute.xlu0 %8081
  %8083 = vrot.lane.b32.xlu0 %v5054, 109
  %v8084 = vpop.permute.xlu0 %8083
  %8085 = vrot.lane.b32.xlu0 %v5055, 109
  %v8086 = vpop.permute.xlu0 %8085
  %8087 = vrot.lane.b32.xlu0 %v5056, 109
  %v8088 = vpop.permute.xlu0 %8087
  %8089 = vrot.lane.b32.xlu0 %v5057, 109
  %v8090 = vpop.permute.xlu0 %8089
  %8091 = vrot.lane.b32.xlu0 %v5058, 109
  %v8092 = vpop.permute.xlu0 %8091
  %8093 = vrot.lane.b32.xlu0 %v5066, 109
  %v8094 = vpop.permute.xlu0 %8093
  %v8095 = vsel %vm489, %v7984, %v7986
  %v8096 = vsel %vm489, %v7986, %v7988
  %v8097 = vsel %vm489, %v7988, %v7990
  %v8098 = vsel %vm489, %v7990, %v7992
  %v8099 = vsel %vm489, %v7992, %v7994
  %v8100 = vsel %vm489, %v7994, %v7996
  %v8101 = vsel %vm489, %v7998, %v8000
  %v8102 = vsel %vm489, %v8000, %v8002
  %v8103 = vsel %vm489, %v8002, %v8004
  %v8104 = vsel %vm489, %v8004, %v8006
  %v8105 = vsel %vm489, %v8006, %v8008
  %v8106 = vsel %vm489, %v8008, %v8010
  %v8107 = vsel %vm489, %v8012, %v8014
  %v8108 = vsel %vm489, %v8014, %v8016
  %v8109 = vsel %vm489, %v8016, %v8018
  %v8110 = vsel %vm489, %v8018, %v8020
  %v8111 = vsel %vm489, %v8020, %v8022
  %v8112 = vsel %vm489, %v8022, %v8024
  %v8113 = vsel %vm489, %v8026, %v8028
  %v8114 = vsel %vm489, %v8028, %v8030
  %v8115 = vsel %vm489, %v8030, %v8032
  %v8116 = vsel %vm489, %v8032, %v8034
  %v8117 = vsel %vm489, %v8034, %v8036
  %v8118 = vsel %vm489, %v8036, %v8038
  %v8119 = vsel %vm489, %v8040, %v8042
  %v8120 = vsel %vm489, %v8042, %v8044
  %v8121 = vsel %vm489, %v8044, %v8046
  %v8122 = vsel %vm489, %v8046, %v8048
  %v8123 = vsel %vm489, %v8048, %v8050
  %v8124 = vsel %vm489, %v8050, %v8052
  %v8125 = vsel %vm489, %v8054, %v8056
  %v8126 = vsel %vm489, %v8056, %v8058
  %v8127 = vsel %vm489, %v8058, %v8060
  %v8128 = vsel %vm489, %v8060, %v8062
  %v8129 = vsel %vm489, %v8062, %v8064
  %v8130 = vsel %vm489, %v8064, %v8066
  %v8131 = vsel %vm489, %v8068, %v8070
  %v8132 = vsel %vm489, %v8070, %v8072
  %v8133 = vsel %vm489, %v8072, %v8074
  %v8134 = vsel %vm489, %v8074, %v8076
  %v8135 = vsel %vm489, %v8076, %v8078
  %v8136 = vsel %vm489, %v8078, %v8080
  %v8137 = vsel %vm489, %v8082, %v8084
  %v8138 = vsel %vm489, %v8084, %v8086
  %v8139 = vsel %vm489, %v8086, %v8088
  %v8140 = vsel %vm489, %v8088, %v8090
  %v8141 = vsel %vm489, %v8090, %v8092
  %v8142 = vsel %vm489, %v8092, %v8094
  %8143 = vrot.lane.b32.xlu0 %v5059, 108
  %v8144 = vpop.permute.xlu0 %8143
  %8145 = vrot.lane.b32.xlu0 %v5060, 108
  %v8146 = vpop.permute.xlu0 %8145
  %8147 = vrot.lane.b32.xlu0 %v5061, 108
  %v8148 = vpop.permute.xlu0 %8147
  %8149 = vrot.lane.b32.xlu0 %v5062, 108
  %v8150 = vpop.permute.xlu0 %8149
  %8151 = vrot.lane.b32.xlu0 %v5063, 108
  %v8152 = vpop.permute.xlu0 %8151
  %8153 = vrot.lane.b32.xlu0 %v5064, 108
  %v8154 = vpop.permute.xlu0 %8153
  %8155 = vrot.lane.b32.xlu0 %v5065, 108
  %v8156 = vpop.permute.xlu0 %8155
  %8157 = vrot.lane.b32.xlu0 %v5066, 108
  %v8158 = vpop.permute.xlu0 %8157
  %v8159 = vsel %vm217, %v5862, %v8144
  %v8160 = vsel %vm217, %v5874, %v8146
  %v8161 = vsel %vm217, %v5886, %v8148
  %v8162 = vsel %vm217, %v5898, %v8150
  %v8163 = vsel %vm217, %v5910, %v8152
  %v8164 = vsel %vm217, %v5922, %v8154
  %v8165 = vsel %vm217, %v5934, %v8156
  %v8166 = vsel %vm217, %v5946, %v8158
  %8167 = vrot.lane.b32.xlu0 %v5059, 107
  %v8168 = vpop.permute.xlu0 %8167
  %8169 = vrot.lane.b32.xlu0 %v5060, 107
  %v8170 = vpop.permute.xlu0 %8169
  %8171 = vrot.lane.b32.xlu0 %v5061, 107
  %v8172 = vpop.permute.xlu0 %8171
  %8173 = vrot.lane.b32.xlu0 %v5062, 107
  %v8174 = vpop.permute.xlu0 %8173
  %8175 = vrot.lane.b32.xlu0 %v5063, 107
  %v8176 = vpop.permute.xlu0 %8175
  %8177 = vrot.lane.b32.xlu0 %v5064, 107
  %v8178 = vpop.permute.xlu0 %8177
  %8179 = vrot.lane.b32.xlu0 %v5065, 107
  %v8180 = vpop.permute.xlu0 %8179
  %8181 = vrot.lane.b32.xlu0 %v5066, 107
  %v8182 = vpop.permute.xlu0 %8181
  %v8183 = vsel %vm240, %v6046, %v8168
  %v8184 = vsel %vm240, %v6058, %v8170
  %v8185 = vsel %vm240, %v6070, %v8172
  %v8186 = vsel %vm240, %v6082, %v8174
  %v8187 = vsel %vm240, %v6094, %v8176
  %v8188 = vsel %vm240, %v6106, %v8178
  %v8189 = vsel %vm240, %v6118, %v8180
  %v8190 = vsel %vm240, %v6130, %v8182
  %8191 = vrot.lane.b32.xlu0 %v5059, 106
  %v8192 = vpop.permute.xlu0 %8191
  %8193 = vrot.lane.b32.xlu0 %v5060, 106
  %v8194 = vpop.permute.xlu0 %8193
  %8195 = vrot.lane.b32.xlu0 %v5061, 106
  %v8196 = vpop.permute.xlu0 %8195
  %8197 = vrot.lane.b32.xlu0 %v5062, 106
  %v8198 = vpop.permute.xlu0 %8197
  %8199 = vrot.lane.b32.xlu0 %v5063, 106
  %v8200 = vpop.permute.xlu0 %8199
  %8201 = vrot.lane.b32.xlu0 %v5064, 106
  %v8202 = vpop.permute.xlu0 %8201
  %8203 = vrot.lane.b32.xlu0 %v5065, 106
  %v8204 = vpop.permute.xlu0 %8203
  %8205 = vrot.lane.b32.xlu0 %v5066, 106
  %v8206 = vpop.permute.xlu0 %8205
  %v8207 = vsel %vm263, %v6230, %v8192
  %v8208 = vsel %vm263, %v6242, %v8194
  %v8209 = vsel %vm263, %v6254, %v8196
  %v8210 = vsel %vm263, %v6266, %v8198
  %v8211 = vsel %vm263, %v6278, %v8200
  %v8212 = vsel %vm263, %v6290, %v8202
  %v8213 = vsel %vm263, %v6302, %v8204
  %v8214 = vsel %vm263, %v6314, %v8206
  %8215 = vrot.lane.b32.xlu0 %v5059, 105
  %v8216 = vpop.permute.xlu0 %8215
  %8217 = vrot.lane.b32.xlu0 %v5060, 105
  %v8218 = vpop.permute.xlu0 %8217
  %8219 = vrot.lane.b32.xlu0 %v5061, 105
  %v8220 = vpop.permute.xlu0 %8219
  %8221 = vrot.lane.b32.xlu0 %v5062, 105
  %v8222 = vpop.permute.xlu0 %8221
  %8223 = vrot.lane.b32.xlu0 %v5063, 105
  %v8224 = vpop.permute.xlu0 %8223
  %8225 = vrot.lane.b32.xlu0 %v5064, 105
  %v8226 = vpop.permute.xlu0 %8225
  %8227 = vrot.lane.b32.xlu0 %v5065, 105
  %v8228 = vpop.permute.xlu0 %8227
  %8229 = vrot.lane.b32.xlu0 %v5066, 105
  %v8230 = vpop.permute.xlu0 %8229
  %v8231 = vsel %vm286, %v6414, %v8216
  %v8232 = vsel %vm286, %v6426, %v8218
  %v8233 = vsel %vm286, %v6438, %v8220
  %v8234 = vsel %vm286, %v6450, %v8222
  %v8235 = vsel %vm286, %v6462, %v8224
  %v8236 = vsel %vm286, %v6474, %v8226
  %v8237 = vsel %vm286, %v6486, %v8228
  %v8238 = vsel %vm286, %v6498, %v8230
  %8239 = vrot.lane.b32.xlu0 %v5011, 67
  %v8240 = vpop.permute.xlu0 %8239
  %8241 = vrot.lane.b32.xlu0 %v5012, 67
  %v8242 = vpop.permute.xlu0 %8241
  %8243 = vrot.lane.b32.xlu0 %v5013, 67
  %v8244 = vpop.permute.xlu0 %8243
  %8245 = vrot.lane.b32.xlu0 %v5014, 67
  %v8246 = vpop.permute.xlu0 %8245
  %8247 = vrot.lane.b32.xlu0 %v5015, 67
  %v8248 = vpop.permute.xlu0 %8247
  %8249 = vrot.lane.b32.xlu0 %v5016, 67
  %v8250 = vpop.permute.xlu0 %8249
  %8251 = vrot.lane.b32.xlu0 %v5059, 67
  %v8252 = vpop.permute.xlu0 %8251
  %8253 = vrot.lane.b32.xlu0 %v5017, 67
  %v8254 = vpop.permute.xlu0 %8253
  %8255 = vrot.lane.b32.xlu0 %v5018, 67
  %v8256 = vpop.permute.xlu0 %8255
  %8257 = vrot.lane.b32.xlu0 %v5019, 67
  %v8258 = vpop.permute.xlu0 %8257
  %8259 = vrot.lane.b32.xlu0 %v5020, 67
  %v8260 = vpop.permute.xlu0 %8259
  %8261 = vrot.lane.b32.xlu0 %v5021, 67
  %v8262 = vpop.permute.xlu0 %8261
  %8263 = vrot.lane.b32.xlu0 %v5022, 67
  %v8264 = vpop.permute.xlu0 %8263
  %8265 = vrot.lane.b32.xlu0 %v5060, 67
  %v8266 = vpop.permute.xlu0 %8265
  %8267 = vrot.lane.b32.xlu0 %v5023, 67
  %v8268 = vpop.permute.xlu0 %8267
  %8269 = vrot.lane.b32.xlu0 %v5024, 67
  %v8270 = vpop.permute.xlu0 %8269
  %8271 = vrot.lane.b32.xlu0 %v5025, 67
  %v8272 = vpop.permute.xlu0 %8271
  %8273 = vrot.lane.b32.xlu0 %v5026, 67
  %v8274 = vpop.permute.xlu0 %8273
  %8275 = vrot.lane.b32.xlu0 %v5027, 67
  %v8276 = vpop.permute.xlu0 %8275
  %8277 = vrot.lane.b32.xlu0 %v5028, 67
  %v8278 = vpop.permute.xlu0 %8277
  %8279 = vrot.lane.b32.xlu0 %v5061, 67
  %v8280 = vpop.permute.xlu0 %8279
  %8281 = vrot.lane.b32.xlu0 %v5029, 67
  %v8282 = vpop.permute.xlu0 %8281
  %8283 = vrot.lane.b32.xlu0 %v5030, 67
  %v8284 = vpop.permute.xlu0 %8283
  %8285 = vrot.lane.b32.xlu0 %v5031, 67
  %v8286 = vpop.permute.xlu0 %8285
  %8287 = vrot.lane.b32.xlu0 %v5032, 67
  %v8288 = vpop.permute.xlu0 %8287
  %8289 = vrot.lane.b32.xlu0 %v5033, 67
  %v8290 = vpop.permute.xlu0 %8289
  %8291 = vrot.lane.b32.xlu0 %v5034, 67
  %v8292 = vpop.permute.xlu0 %8291
  %8293 = vrot.lane.b32.xlu0 %v5062, 67
  %v8294 = vpop.permute.xlu0 %8293
  %8295 = vrot.lane.b32.xlu0 %v5035, 67
  %v8296 = vpop.permute.xlu0 %8295
  %8297 = vrot.lane.b32.xlu0 %v5036, 67
  %v8298 = vpop.permute.xlu0 %8297
  %8299 = vrot.lane.b32.xlu0 %v5037, 67
  %v8300 = vpop.permute.xlu0 %8299
  %8301 = vrot.lane.b32.xlu0 %v5038, 67
  %v8302 = vpop.permute.xlu0 %8301
  %8303 = vrot.lane.b32.xlu0 %v5039, 67
  %v8304 = vpop.permute.xlu0 %8303
  %8305 = vrot.lane.b32.xlu0 %v5040, 67
  %v8306 = vpop.permute.xlu0 %8305
  %8307 = vrot.lane.b32.xlu0 %v5063, 67
  %v8308 = vpop.permute.xlu0 %8307
  %8309 = vrot.lane.b32.xlu0 %v5041, 67
  %v8310 = vpop.permute.xlu0 %8309
  %8311 = vrot.lane.b32.xlu0 %v5042, 67
  %v8312 = vpop.permute.xlu0 %8311
  %8313 = vrot.lane.b32.xlu0 %v5043, 67
  %v8314 = vpop.permute.xlu0 %8313
  %8315 = vrot.lane.b32.xlu0 %v5044, 67
  %v8316 = vpop.permute.xlu0 %8315
  %8317 = vrot.lane.b32.xlu0 %v5045, 67
  %v8318 = vpop.permute.xlu0 %8317
  %8319 = vrot.lane.b32.xlu0 %v5046, 67
  %v8320 = vpop.permute.xlu0 %8319
  %8321 = vrot.lane.b32.xlu0 %v5064, 67
  %v8322 = vpop.permute.xlu0 %8321
  %8323 = vrot.lane.b32.xlu0 %v5047, 67
  %v8324 = vpop.permute.xlu0 %8323
  %8325 = vrot.lane.b32.xlu0 %v5048, 67
  %v8326 = vpop.permute.xlu0 %8325
  %8327 = vrot.lane.b32.xlu0 %v5049, 67
  %v8328 = vpop.permute.xlu0 %8327
  %8329 = vrot.lane.b32.xlu0 %v5050, 67
  %v8330 = vpop.permute.xlu0 %8329
  %8331 = vrot.lane.b32.xlu0 %v5051, 67
  %v8332 = vpop.permute.xlu0 %8331
  %8333 = vrot.lane.b32.xlu0 %v5052, 67
  %v8334 = vpop.permute.xlu0 %8333
  %8335 = vrot.lane.b32.xlu0 %v5065, 67
  %v8336 = vpop.permute.xlu0 %8335
  %8337 = vrot.lane.b32.xlu0 %v5053, 67
  %v8338 = vpop.permute.xlu0 %8337
  %8339 = vrot.lane.b32.xlu0 %v5054, 67
  %v8340 = vpop.permute.xlu0 %8339
  %8341 = vrot.lane.b32.xlu0 %v5055, 67
  %v8342 = vpop.permute.xlu0 %8341
  %8343 = vrot.lane.b32.xlu0 %v5056, 67
  %v8344 = vpop.permute.xlu0 %8343
  %8345 = vrot.lane.b32.xlu0 %v5057, 67
  %v8346 = vpop.permute.xlu0 %8345
  %8347 = vrot.lane.b32.xlu0 %v5058, 67
  %v8348 = vpop.permute.xlu0 %8347
  %8349 = vrot.lane.b32.xlu0 %v5066, 67
  %v8350 = vpop.permute.xlu0 %8349
  %8351 = vrot.lane.b32.xlu0 %v5211, 67
  %v8352 = vpop.permute.xlu0 %8351
  %8353 = vrot.lane.b32.xlu0 %v5212, 67
  %v8354 = vpop.permute.xlu0 %8353
  %8355 = vrot.lane.b32.xlu0 %v5213, 67
  %v8356 = vpop.permute.xlu0 %8355
  %8357 = vrot.lane.b32.xlu0 %v5214, 67
  %v8358 = vpop.permute.xlu0 %8357
  %8359 = vrot.lane.b32.xlu0 %v5215, 67
  %v8360 = vpop.permute.xlu0 %8359
  %8361 = vrot.lane.b32.xlu0 %v7927, 67
  %v8362 = vpop.permute.xlu0 %8361
  %8363 = vrot.lane.b32.xlu0 %v7912, 67
  %v8364 = vpop.permute.xlu0 %8363
  %8365 = vrot.lane.b32.xlu0 %v5216, 67
  %v8366 = vpop.permute.xlu0 %8365
  %8367 = vrot.lane.b32.xlu0 %v5217, 67
  %v8368 = vpop.permute.xlu0 %8367
  %8369 = vrot.lane.b32.xlu0 %v5218, 67
  %v8370 = vpop.permute.xlu0 %8369
  %8371 = vrot.lane.b32.xlu0 %v5219, 67
  %v8372 = vpop.permute.xlu0 %8371
  %8373 = vrot.lane.b32.xlu0 %v5220, 67
  %v8374 = vpop.permute.xlu0 %8373
  %8375 = vrot.lane.b32.xlu0 %v7928, 67
  %v8376 = vpop.permute.xlu0 %8375
  %8377 = vrot.lane.b32.xlu0 %v7914, 67
  %v8378 = vpop.permute.xlu0 %8377
  %8379 = vrot.lane.b32.xlu0 %v5221, 67
  %v8380 = vpop.permute.xlu0 %8379
  %8381 = vrot.lane.b32.xlu0 %v5222, 67
  %v8382 = vpop.permute.xlu0 %8381
  %8383 = vrot.lane.b32.xlu0 %v5223, 67
  %v8384 = vpop.permute.xlu0 %8383
  %8385 = vrot.lane.b32.xlu0 %v5224, 67
  %v8386 = vpop.permute.xlu0 %8385
  %8387 = vrot.lane.b32.xlu0 %v5225, 67
  %v8388 = vpop.permute.xlu0 %8387
  %8389 = vrot.lane.b32.xlu0 %v7929, 67
  %v8390 = vpop.permute.xlu0 %8389
  %8391 = vrot.lane.b32.xlu0 %v7916, 67
  %v8392 = vpop.permute.xlu0 %8391
  %8393 = vrot.lane.b32.xlu0 %v5226, 67
  %v8394 = vpop.permute.xlu0 %8393
  %8395 = vrot.lane.b32.xlu0 %v5227, 67
  %v8396 = vpop.permute.xlu0 %8395
  %8397 = vrot.lane.b32.xlu0 %v5228, 67
  %v8398 = vpop.permute.xlu0 %8397
  %8399 = vrot.lane.b32.xlu0 %v5229, 67
  %v8400 = vpop.permute.xlu0 %8399
  %8401 = vrot.lane.b32.xlu0 %v5230, 67
  %v8402 = vpop.permute.xlu0 %8401
  %8403 = vrot.lane.b32.xlu0 %v7930, 67
  %v8404 = vpop.permute.xlu0 %8403
  %8405 = vrot.lane.b32.xlu0 %v7918, 67
  %v8406 = vpop.permute.xlu0 %8405
  %8407 = vrot.lane.b32.xlu0 %v5231, 67
  %v8408 = vpop.permute.xlu0 %8407
  %8409 = vrot.lane.b32.xlu0 %v5232, 67
  %v8410 = vpop.permute.xlu0 %8409
  %8411 = vrot.lane.b32.xlu0 %v5233, 67
  %v8412 = vpop.permute.xlu0 %8411
  %8413 = vrot.lane.b32.xlu0 %v5234, 67
  %v8414 = vpop.permute.xlu0 %8413
  %8415 = vrot.lane.b32.xlu0 %v5235, 67
  %v8416 = vpop.permute.xlu0 %8415
  %8417 = vrot.lane.b32.xlu0 %v7931, 67
  %v8418 = vpop.permute.xlu0 %8417
  %8419 = vrot.lane.b32.xlu0 %v7920, 67
  %v8420 = vpop.permute.xlu0 %8419
  %8421 = vrot.lane.b32.xlu0 %v5236, 67
  %v8422 = vpop.permute.xlu0 %8421
  %8423 = vrot.lane.b32.xlu0 %v5237, 67
  %v8424 = vpop.permute.xlu0 %8423
  %8425 = vrot.lane.b32.xlu0 %v5238, 67
  %v8426 = vpop.permute.xlu0 %8425
  %8427 = vrot.lane.b32.xlu0 %v5239, 67
  %v8428 = vpop.permute.xlu0 %8427
  %8429 = vrot.lane.b32.xlu0 %v5240, 67
  %v8430 = vpop.permute.xlu0 %8429
  %8431 = vrot.lane.b32.xlu0 %v7932, 67
  %v8432 = vpop.permute.xlu0 %8431
  %8433 = vrot.lane.b32.xlu0 %v7922, 67
  %v8434 = vpop.permute.xlu0 %8433
  %8435 = vrot.lane.b32.xlu0 %v5241, 67
  %v8436 = vpop.permute.xlu0 %8435
  %8437 = vrot.lane.b32.xlu0 %v5242, 67
  %v8438 = vpop.permute.xlu0 %8437
  %8439 = vrot.lane.b32.xlu0 %v5243, 67
  %v8440 = vpop.permute.xlu0 %8439
  %8441 = vrot.lane.b32.xlu0 %v5244, 67
  %v8442 = vpop.permute.xlu0 %8441
  %8443 = vrot.lane.b32.xlu0 %v5245, 67
  %v8444 = vpop.permute.xlu0 %8443
  %8445 = vrot.lane.b32.xlu0 %v7933, 67
  %v8446 = vpop.permute.xlu0 %8445
  %8447 = vrot.lane.b32.xlu0 %v7924, 67
  %v8448 = vpop.permute.xlu0 %8447
  %8449 = vrot.lane.b32.xlu0 %v5246, 67
  %v8450 = vpop.permute.xlu0 %8449
  %8451 = vrot.lane.b32.xlu0 %v5247, 67
  %v8452 = vpop.permute.xlu0 %8451
  %8453 = vrot.lane.b32.xlu0 %v5248, 67
  %v8454 = vpop.permute.xlu0 %8453
  %8455 = vrot.lane.b32.xlu0 %v5249, 67
  %v8456 = vpop.permute.xlu0 %8455
  %8457 = vrot.lane.b32.xlu0 %v5250, 67
  %v8458 = vpop.permute.xlu0 %8457
  %8459 = vrot.lane.b32.xlu0 %v7934, 67
  %v8460 = vpop.permute.xlu0 %8459
  %8461 = vrot.lane.b32.xlu0 %v7926, 67
  %v8462 = vpop.permute.xlu0 %8461
  %8463 = vrot.lane.b32.xlu0 %v5395, 67
  %v8464 = vpop.permute.xlu0 %8463
  %8465 = vrot.lane.b32.xlu0 %v5396, 67
  %v8466 = vpop.permute.xlu0 %8465
  %8467 = vrot.lane.b32.xlu0 %v5397, 67
  %v8468 = vpop.permute.xlu0 %8467
  %8469 = vrot.lane.b32.xlu0 %v5398, 67
  %v8470 = vpop.permute.xlu0 %8469
  %8471 = vrot.lane.b32.xlu0 %v5399, 67
  %v8472 = vpop.permute.xlu0 %8471
  %8473 = vrot.lane.b32.xlu0 %v7951, 67
  %v8474 = vpop.permute.xlu0 %8473
  %8475 = vrot.lane.b32.xlu0 %v7936, 67
  %v8476 = vpop.permute.xlu0 %8475
  %8477 = vrot.lane.b32.xlu0 %v5400, 67
  %v8478 = vpop.permute.xlu0 %8477
  %8479 = vrot.lane.b32.xlu0 %v5401, 67
  %v8480 = vpop.permute.xlu0 %8479
  %8481 = vrot.lane.b32.xlu0 %v5402, 67
  %v8482 = vpop.permute.xlu0 %8481
  %8483 = vrot.lane.b32.xlu0 %v5403, 67
  %v8484 = vpop.permute.xlu0 %8483
  %8485 = vrot.lane.b32.xlu0 %v5404, 67
  %v8486 = vpop.permute.xlu0 %8485
  %8487 = vrot.lane.b32.xlu0 %v7952, 67
  %v8488 = vpop.permute.xlu0 %8487
  %8489 = vrot.lane.b32.xlu0 %v7938, 67
  %v8490 = vpop.permute.xlu0 %8489
  %8491 = vrot.lane.b32.xlu0 %v5405, 67
  %v8492 = vpop.permute.xlu0 %8491
  %8493 = vrot.lane.b32.xlu0 %v5406, 67
  %v8494 = vpop.permute.xlu0 %8493
  %8495 = vrot.lane.b32.xlu0 %v5407, 67
  %v8496 = vpop.permute.xlu0 %8495
  %8497 = vrot.lane.b32.xlu0 %v5408, 67
  %v8498 = vpop.permute.xlu0 %8497
  %8499 = vrot.lane.b32.xlu0 %v5409, 67
  %v8500 = vpop.permute.xlu0 %8499
  %8501 = vrot.lane.b32.xlu0 %v7953, 67
  %v8502 = vpop.permute.xlu0 %8501
  %8503 = vrot.lane.b32.xlu0 %v7940, 67
  %v8504 = vpop.permute.xlu0 %8503
  %8505 = vrot.lane.b32.xlu0 %v5410, 67
  %v8506 = vpop.permute.xlu0 %8505
  %8507 = vrot.lane.b32.xlu0 %v5411, 67
  %v8508 = vpop.permute.xlu0 %8507
  %8509 = vrot.lane.b32.xlu0 %v5412, 67
  %v8510 = vpop.permute.xlu0 %8509
  %8511 = vrot.lane.b32.xlu0 %v5413, 67
  %v8512 = vpop.permute.xlu0 %8511
  %8513 = vrot.lane.b32.xlu0 %v5414, 67
  %v8514 = vpop.permute.xlu0 %8513
  %8515 = vrot.lane.b32.xlu0 %v7954, 67
  %v8516 = vpop.permute.xlu0 %8515
  %8517 = vrot.lane.b32.xlu0 %v7942, 67
  %v8518 = vpop.permute.xlu0 %8517
  %8519 = vrot.lane.b32.xlu0 %v5415, 67
  %v8520 = vpop.permute.xlu0 %8519
  %8521 = vrot.lane.b32.xlu0 %v5416, 67
  %v8522 = vpop.permute.xlu0 %8521
  %8523 = vrot.lane.b32.xlu0 %v5417, 67
  %v8524 = vpop.permute.xlu0 %8523
  %8525 = vrot.lane.b32.xlu0 %v5418, 67
  %v8526 = vpop.permute.xlu0 %8525
  %8527 = vrot.lane.b32.xlu0 %v5419, 67
  %v8528 = vpop.permute.xlu0 %8527
  %8529 = vrot.lane.b32.xlu0 %v7955, 67
  %v8530 = vpop.permute.xlu0 %8529
  %8531 = vrot.lane.b32.xlu0 %v7944, 67
  %v8532 = vpop.permute.xlu0 %8531
  %8533 = vrot.lane.b32.xlu0 %v5420, 67
  %v8534 = vpop.permute.xlu0 %8533
  %8535 = vrot.lane.b32.xlu0 %v5421, 67
  %v8536 = vpop.permute.xlu0 %8535
  %8537 = vrot.lane.b32.xlu0 %v5422, 67
  %v8538 = vpop.permute.xlu0 %8537
  %8539 = vrot.lane.b32.xlu0 %v5423, 67
  %v8540 = vpop.permute.xlu0 %8539
  %8541 = vrot.lane.b32.xlu0 %v5424, 67
  %v8542 = vpop.permute.xlu0 %8541
  %8543 = vrot.lane.b32.xlu0 %v7956, 67
  %v8544 = vpop.permute.xlu0 %8543
  %8545 = vrot.lane.b32.xlu0 %v7946, 67
  %v8546 = vpop.permute.xlu0 %8545
  %8547 = vrot.lane.b32.xlu0 %v5425, 67
  %v8548 = vpop.permute.xlu0 %8547
  %8549 = vrot.lane.b32.xlu0 %v5426, 67
  %v8550 = vpop.permute.xlu0 %8549
  %8551 = vrot.lane.b32.xlu0 %v5427, 67
  %v8552 = vpop.permute.xlu0 %8551
  %8553 = vrot.lane.b32.xlu0 %v5428, 67
  %v8554 = vpop.permute.xlu0 %8553
  %8555 = vrot.lane.b32.xlu0 %v5429, 67
  %v8556 = vpop.permute.xlu0 %8555
  %8557 = vrot.lane.b32.xlu0 %v7957, 67
  %v8558 = vpop.permute.xlu0 %8557
  %8559 = vrot.lane.b32.xlu0 %v7948, 67
  %v8560 = vpop.permute.xlu0 %8559
  %8561 = vrot.lane.b32.xlu0 %v5430, 67
  %v8562 = vpop.permute.xlu0 %8561
  %8563 = vrot.lane.b32.xlu0 %v5431, 67
  %v8564 = vpop.permute.xlu0 %8563
  %8565 = vrot.lane.b32.xlu0 %v5432, 67
  %v8566 = vpop.permute.xlu0 %8565
  %8567 = vrot.lane.b32.xlu0 %v5433, 67
  %v8568 = vpop.permute.xlu0 %8567
  %8569 = vrot.lane.b32.xlu0 %v5434, 67
  %v8570 = vpop.permute.xlu0 %8569
  %8571 = vrot.lane.b32.xlu0 %v7958, 67
  %v8572 = vpop.permute.xlu0 %8571
  %8573 = vrot.lane.b32.xlu0 %v7950, 67
  %v8574 = vpop.permute.xlu0 %8573
  %8575 = vrot.lane.b32.xlu0 %v5579, 67
  %v8576 = vpop.permute.xlu0 %8575
  %8577 = vrot.lane.b32.xlu0 %v5580, 67
  %v8578 = vpop.permute.xlu0 %8577
  %8579 = vrot.lane.b32.xlu0 %v5581, 67
  %v8580 = vpop.permute.xlu0 %8579
  %8581 = vrot.lane.b32.xlu0 %v5582, 67
  %v8582 = vpop.permute.xlu0 %8581
  %8583 = vrot.lane.b32.xlu0 %v5583, 67
  %v8584 = vpop.permute.xlu0 %8583
  %8585 = vrot.lane.b32.xlu0 %v7975, 67
  %v8586 = vpop.permute.xlu0 %8585
  %8587 = vrot.lane.b32.xlu0 %v7960, 67
  %v8588 = vpop.permute.xlu0 %8587
  %8589 = vrot.lane.b32.xlu0 %v5584, 67
  %v8590 = vpop.permute.xlu0 %8589
  %8591 = vrot.lane.b32.xlu0 %v5585, 67
  %v8592 = vpop.permute.xlu0 %8591
  %8593 = vrot.lane.b32.xlu0 %v5586, 67
  %v8594 = vpop.permute.xlu0 %8593
  %8595 = vrot.lane.b32.xlu0 %v5587, 67
  %v8596 = vpop.permute.xlu0 %8595
  %8597 = vrot.lane.b32.xlu0 %v5588, 67
  %v8598 = vpop.permute.xlu0 %8597
  %8599 = vrot.lane.b32.xlu0 %v7976, 67
  %v8600 = vpop.permute.xlu0 %8599
  %8601 = vrot.lane.b32.xlu0 %v7962, 67
  %v8602 = vpop.permute.xlu0 %8601
  %8603 = vrot.lane.b32.xlu0 %v5589, 67
  %v8604 = vpop.permute.xlu0 %8603
  %8605 = vrot.lane.b32.xlu0 %v5590, 67
  %v8606 = vpop.permute.xlu0 %8605
  %8607 = vrot.lane.b32.xlu0 %v5591, 67
  %v8608 = vpop.permute.xlu0 %8607
  %8609 = vrot.lane.b32.xlu0 %v5592, 67
  %v8610 = vpop.permute.xlu0 %8609
  %8611 = vrot.lane.b32.xlu0 %v5593, 67
  %v8612 = vpop.permute.xlu0 %8611
  %8613 = vrot.lane.b32.xlu0 %v7977, 67
  %v8614 = vpop.permute.xlu0 %8613
  %8615 = vrot.lane.b32.xlu0 %v7964, 67
  %v8616 = vpop.permute.xlu0 %8615
  %8617 = vrot.lane.b32.xlu0 %v5594, 67
  %v8618 = vpop.permute.xlu0 %8617
  %8619 = vrot.lane.b32.xlu0 %v5595, 67
  %v8620 = vpop.permute.xlu0 %8619
  %8621 = vrot.lane.b32.xlu0 %v5596, 67
  %v8622 = vpop.permute.xlu0 %8621
  %8623 = vrot.lane.b32.xlu0 %v5597, 67
  %v8624 = vpop.permute.xlu0 %8623
  %8625 = vrot.lane.b32.xlu0 %v5598, 67
  %v8626 = vpop.permute.xlu0 %8625
  %8627 = vrot.lane.b32.xlu0 %v7978, 67
  %v8628 = vpop.permute.xlu0 %8627
  %8629 = vrot.lane.b32.xlu0 %v7966, 67
  %v8630 = vpop.permute.xlu0 %8629
  %8631 = vrot.lane.b32.xlu0 %v5599, 67
  %v8632 = vpop.permute.xlu0 %8631
  %8633 = vrot.lane.b32.xlu0 %v5600, 67
  %v8634 = vpop.permute.xlu0 %8633
  %8635 = vrot.lane.b32.xlu0 %v5601, 67
  %v8636 = vpop.permute.xlu0 %8635
  %8637 = vrot.lane.b32.xlu0 %v5602, 67
  %v8638 = vpop.permute.xlu0 %8637
  %8639 = vrot.lane.b32.xlu0 %v5603, 67
  %v8640 = vpop.permute.xlu0 %8639
  %8641 = vrot.lane.b32.xlu0 %v7979, 67
  %v8642 = vpop.permute.xlu0 %8641
  %8643 = vrot.lane.b32.xlu0 %v7968, 67
  %v8644 = vpop.permute.xlu0 %8643
  %8645 = vrot.lane.b32.xlu0 %v5604, 67
  %v8646 = vpop.permute.xlu0 %8645
  %8647 = vrot.lane.b32.xlu0 %v5605, 67
  %v8648 = vpop.permute.xlu0 %8647
  %8649 = vrot.lane.b32.xlu0 %v5606, 67
  %v8650 = vpop.permute.xlu0 %8649
  %8651 = vrot.lane.b32.xlu0 %v5607, 67
  %v8652 = vpop.permute.xlu0 %8651
  %8653 = vrot.lane.b32.xlu0 %v5608, 67
  %v8654 = vpop.permute.xlu0 %8653
  %8655 = vrot.lane.b32.xlu0 %v7980, 67
  %v8656 = vpop.permute.xlu0 %8655
  %8657 = vrot.lane.b32.xlu0 %v7970, 67
  %v8658 = vpop.permute.xlu0 %8657
  %8659 = vrot.lane.b32.xlu0 %v5609, 67
  %v8660 = vpop.permute.xlu0 %8659
  %8661 = vrot.lane.b32.xlu0 %v5610, 67
  %v8662 = vpop.permute.xlu0 %8661
  %8663 = vrot.lane.b32.xlu0 %v5611, 67
  %v8664 = vpop.permute.xlu0 %8663
  %8665 = vrot.lane.b32.xlu0 %v5612, 67
  %v8666 = vpop.permute.xlu0 %8665
  %8667 = vrot.lane.b32.xlu0 %v5613, 67
  %v8668 = vpop.permute.xlu0 %8667
  %8669 = vrot.lane.b32.xlu0 %v7981, 67
  %v8670 = vpop.permute.xlu0 %8669
  %8671 = vrot.lane.b32.xlu0 %v7972, 67
  %v8672 = vpop.permute.xlu0 %8671
  %8673 = vrot.lane.b32.xlu0 %v5614, 67
  %v8674 = vpop.permute.xlu0 %8673
  %8675 = vrot.lane.b32.xlu0 %v5615, 67
  %v8676 = vpop.permute.xlu0 %8675
  %8677 = vrot.lane.b32.xlu0 %v5616, 67
  %v8678 = vpop.permute.xlu0 %8677
  %8679 = vrot.lane.b32.xlu0 %v5617, 67
  %v8680 = vpop.permute.xlu0 %8679
  %8681 = vrot.lane.b32.xlu0 %v5618, 67
  %v8682 = vpop.permute.xlu0 %8681
  %8683 = vrot.lane.b32.xlu0 %v7982, 67
  %v8684 = vpop.permute.xlu0 %8683
  %8685 = vrot.lane.b32.xlu0 %v7974, 67
  %v8686 = vpop.permute.xlu0 %8685
  %8687 = vrot.lane.b32.xlu0 %v8095, 67
  %v8688 = vpop.permute.xlu0 %8687
  %8689 = vrot.lane.b32.xlu0 %v8096, 67
  %v8690 = vpop.permute.xlu0 %8689
  %8691 = vrot.lane.b32.xlu0 %v8097, 67
  %v8692 = vpop.permute.xlu0 %8691
  %8693 = vrot.lane.b32.xlu0 %v8098, 67
  %v8694 = vpop.permute.xlu0 %8693
  %8695 = vrot.lane.b32.xlu0 %v8099, 67
  %v8696 = vpop.permute.xlu0 %8695
  %8697 = vrot.lane.b32.xlu0 %v8100, 67
  %v8698 = vpop.permute.xlu0 %8697
  %8699 = vrot.lane.b32.xlu0 %v7996, 67
  %v8700 = vpop.permute.xlu0 %8699
  %8701 = vrot.lane.b32.xlu0 %v8101, 67
  %v8702 = vpop.permute.xlu0 %8701
  %8703 = vrot.lane.b32.xlu0 %v8102, 67
  %v8704 = vpop.permute.xlu0 %8703
  %8705 = vrot.lane.b32.xlu0 %v8103, 67
  %v8706 = vpop.permute.xlu0 %8705
  %8707 = vrot.lane.b32.xlu0 %v8104, 67
  %v8708 = vpop.permute.xlu0 %8707
  %8709 = vrot.lane.b32.xlu0 %v8105, 67
  %v8710 = vpop.permute.xlu0 %8709
  %8711 = vrot.lane.b32.xlu0 %v8106, 67
  %v8712 = vpop.permute.xlu0 %8711
  %8713 = vrot.lane.b32.xlu0 %v8010, 67
  %v8714 = vpop.permute.xlu0 %8713
  %8715 = vrot.lane.b32.xlu0 %v8107, 67
  %v8716 = vpop.permute.xlu0 %8715
  %8717 = vrot.lane.b32.xlu0 %v8108, 67
  %v8718 = vpop.permute.xlu0 %8717
  %8719 = vrot.lane.b32.xlu0 %v8109, 67
  %v8720 = vpop.permute.xlu0 %8719
  %8721 = vrot.lane.b32.xlu0 %v8110, 67
  %v8722 = vpop.permute.xlu0 %8721
  %8723 = vrot.lane.b32.xlu0 %v8111, 67
  %v8724 = vpop.permute.xlu0 %8723
  %8725 = vrot.lane.b32.xlu0 %v8112, 67
  %v8726 = vpop.permute.xlu0 %8725
  %8727 = vrot.lane.b32.xlu0 %v8024, 67
  %v8728 = vpop.permute.xlu0 %8727
  %8729 = vrot.lane.b32.xlu0 %v8113, 67
  %v8730 = vpop.permute.xlu0 %8729
  %8731 = vrot.lane.b32.xlu0 %v8114, 67
  %v8732 = vpop.permute.xlu0 %8731
  %8733 = vrot.lane.b32.xlu0 %v8115, 67
  %v8734 = vpop.permute.xlu0 %8733
  %8735 = vrot.lane.b32.xlu0 %v8116, 67
  %v8736 = vpop.permute.xlu0 %8735
  %8737 = vrot.lane.b32.xlu0 %v8117, 67
  %v8738 = vpop.permute.xlu0 %8737
  %8739 = vrot.lane.b32.xlu0 %v8118, 67
  %v8740 = vpop.permute.xlu0 %8739
  %8741 = vrot.lane.b32.xlu0 %v8038, 67
  %v8742 = vpop.permute.xlu0 %8741
  %8743 = vrot.lane.b32.xlu0 %v8119, 67
  %v8744 = vpop.permute.xlu0 %8743
  %8745 = vrot.lane.b32.xlu0 %v8120, 67
  %v8746 = vpop.permute.xlu0 %8745
  %8747 = vrot.lane.b32.xlu0 %v8121, 67
  %v8748 = vpop.permute.xlu0 %8747
  %8749 = vrot.lane.b32.xlu0 %v8122, 67
  %v8750 = vpop.permute.xlu0 %8749
  %8751 = vrot.lane.b32.xlu0 %v8123, 67
  %v8752 = vpop.permute.xlu0 %8751
  %8753 = vrot.lane.b32.xlu0 %v8124, 67
  %v8754 = vpop.permute.xlu0 %8753
  %8755 = vrot.lane.b32.xlu0 %v8052, 67
  %v8756 = vpop.permute.xlu0 %8755
  %8757 = vrot.lane.b32.xlu0 %v8125, 67
  %v8758 = vpop.permute.xlu0 %8757
  %8759 = vrot.lane.b32.xlu0 %v8126, 67
  %v8760 = vpop.permute.xlu0 %8759
  %8761 = vrot.lane.b32.xlu0 %v8127, 67
  %v8762 = vpop.permute.xlu0 %8761
  %8763 = vrot.lane.b32.xlu0 %v8128, 67
  %v8764 = vpop.permute.xlu0 %8763
  %8765 = vrot.lane.b32.xlu0 %v8129, 67
  %v8766 = vpop.permute.xlu0 %8765
  %8767 = vrot.lane.b32.xlu0 %v8130, 67
  %v8768 = vpop.permute.xlu0 %8767
  %8769 = vrot.lane.b32.xlu0 %v8066, 67
  %v8770 = vpop.permute.xlu0 %8769
  %8771 = vrot.lane.b32.xlu0 %v8131, 67
  %v8772 = vpop.permute.xlu0 %8771
  %8773 = vrot.lane.b32.xlu0 %v8132, 67
  %v8774 = vpop.permute.xlu0 %8773
  %8775 = vrot.lane.b32.xlu0 %v8133, 67
  %v8776 = vpop.permute.xlu0 %8775
  %8777 = vrot.lane.b32.xlu0 %v8134, 67
  %v8778 = vpop.permute.xlu0 %8777
  %8779 = vrot.lane.b32.xlu0 %v8135, 67
  %v8780 = vpop.permute.xlu0 %8779
  %8781 = vrot.lane.b32.xlu0 %v8136, 67
  %v8782 = vpop.permute.xlu0 %8781
  %8783 = vrot.lane.b32.xlu0 %v8080, 67
  %v8784 = vpop.permute.xlu0 %8783
  %8785 = vrot.lane.b32.xlu0 %v8137, 67
  %v8786 = vpop.permute.xlu0 %8785
  %8787 = vrot.lane.b32.xlu0 %v8138, 67
  %v8788 = vpop.permute.xlu0 %8787
  %8789 = vrot.lane.b32.xlu0 %v8139, 67
  %v8790 = vpop.permute.xlu0 %8789
  %8791 = vrot.lane.b32.xlu0 %v8140, 67
  %v8792 = vpop.permute.xlu0 %8791
  %8793 = vrot.lane.b32.xlu0 %v8141, 67
  %v8794 = vpop.permute.xlu0 %8793
  %8795 = vrot.lane.b32.xlu0 %v8142, 67
  %v8796 = vpop.permute.xlu0 %8795
  %8797 = vrot.lane.b32.xlu0 %v8094, 67
  %v8798 = vpop.permute.xlu0 %8797
  %8799 = vrot.lane.b32.xlu0 %v5947, 67
  %v8800 = vpop.permute.xlu0 %8799
  %8801 = vrot.lane.b32.xlu0 %v5948, 67
  %v8802 = vpop.permute.xlu0 %8801
  %8803 = vrot.lane.b32.xlu0 %v5949, 67
  %v8804 = vpop.permute.xlu0 %8803
  %8805 = vrot.lane.b32.xlu0 %v5950, 67
  %v8806 = vpop.permute.xlu0 %8805
  %8807 = vrot.lane.b32.xlu0 %v5951, 67
  %v8808 = vpop.permute.xlu0 %8807
  %8809 = vrot.lane.b32.xlu0 %v8159, 67
  %v8810 = vpop.permute.xlu0 %8809
  %8811 = vrot.lane.b32.xlu0 %v8144, 67
  %v8812 = vpop.permute.xlu0 %8811
  %8813 = vrot.lane.b32.xlu0 %v5952, 67
  %v8814 = vpop.permute.xlu0 %8813
  %8815 = vrot.lane.b32.xlu0 %v5953, 67
  %v8816 = vpop.permute.xlu0 %8815
  %8817 = vrot.lane.b32.xlu0 %v5954, 67
  %v8818 = vpop.permute.xlu0 %8817
  %8819 = vrot.lane.b32.xlu0 %v5955, 67
  %v8820 = vpop.permute.xlu0 %8819
  %8821 = vrot.lane.b32.xlu0 %v5956, 67
  %v8822 = vpop.permute.xlu0 %8821
  %8823 = vrot.lane.b32.xlu0 %v8160, 67
  %v8824 = vpop.permute.xlu0 %8823
  %8825 = vrot.lane.b32.xlu0 %v8146, 67
  %v8826 = vpop.permute.xlu0 %8825
  %8827 = vrot.lane.b32.xlu0 %v5957, 67
  %v8828 = vpop.permute.xlu0 %8827
  %8829 = vrot.lane.b32.xlu0 %v5958, 67
  %v8830 = vpop.permute.xlu0 %8829
  %8831 = vrot.lane.b32.xlu0 %v5959, 67
  %v8832 = vpop.permute.xlu0 %8831
  %8833 = vrot.lane.b32.xlu0 %v5960, 67
  %v8834 = vpop.permute.xlu0 %8833
  %8835 = vrot.lane.b32.xlu0 %v5961, 67
  %v8836 = vpop.permute.xlu0 %8835
  %8837 = vrot.lane.b32.xlu0 %v8161, 67
  %v8838 = vpop.permute.xlu0 %8837
  %8839 = vrot.lane.b32.xlu0 %v8148, 67
  %v8840 = vpop.permute.xlu0 %8839
  %8841 = vrot.lane.b32.xlu0 %v5962, 67
  %v8842 = vpop.permute.xlu0 %8841
  %8843 = vrot.lane.b32.xlu0 %v5963, 67
  %v8844 = vpop.permute.xlu0 %8843
  %8845 = vrot.lane.b32.xlu0 %v5964, 67
  %v8846 = vpop.permute.xlu0 %8845
  %8847 = vrot.lane.b32.xlu0 %v5965, 67
  %v8848 = vpop.permute.xlu0 %8847
  %8849 = vrot.lane.b32.xlu0 %v5966, 67
  %v8850 = vpop.permute.xlu0 %8849
  %8851 = vrot.lane.b32.xlu0 %v8162, 67
  %v8852 = vpop.permute.xlu0 %8851
  %8853 = vrot.lane.b32.xlu0 %v8150, 67
  %v8854 = vpop.permute.xlu0 %8853
  %8855 = vrot.lane.b32.xlu0 %v5967, 67
  %v8856 = vpop.permute.xlu0 %8855
  %8857 = vrot.lane.b32.xlu0 %v5968, 67
  %v8858 = vpop.permute.xlu0 %8857
  %8859 = vrot.lane.b32.xlu0 %v5969, 67
  %v8860 = vpop.permute.xlu0 %8859
  %8861 = vrot.lane.b32.xlu0 %v5970, 67
  %v8862 = vpop.permute.xlu0 %8861
  %8863 = vrot.lane.b32.xlu0 %v5971, 67
  %v8864 = vpop.permute.xlu0 %8863
  %8865 = vrot.lane.b32.xlu0 %v8163, 67
  %v8866 = vpop.permute.xlu0 %8865
  %8867 = vrot.lane.b32.xlu0 %v8152, 67
  %v8868 = vpop.permute.xlu0 %8867
  %8869 = vrot.lane.b32.xlu0 %v5972, 67
  %v8870 = vpop.permute.xlu0 %8869
  %8871 = vrot.lane.b32.xlu0 %v5973, 67
  %v8872 = vpop.permute.xlu0 %8871
  %8873 = vrot.lane.b32.xlu0 %v5974, 67
  %v8874 = vpop.permute.xlu0 %8873
  %8875 = vrot.lane.b32.xlu0 %v5975, 67
  %v8876 = vpop.permute.xlu0 %8875
  %8877 = vrot.lane.b32.xlu0 %v5976, 67
  %v8878 = vpop.permute.xlu0 %8877
  %8879 = vrot.lane.b32.xlu0 %v8164, 67
  %v8880 = vpop.permute.xlu0 %8879
  %8881 = vrot.lane.b32.xlu0 %v8154, 67
  %v8882 = vpop.permute.xlu0 %8881
  %8883 = vrot.lane.b32.xlu0 %v5977, 67
  %v8884 = vpop.permute.xlu0 %8883
  %8885 = vrot.lane.b32.xlu0 %v5978, 67
  %v8886 = vpop.permute.xlu0 %8885
  %8887 = vrot.lane.b32.xlu0 %v5979, 67
  %v8888 = vpop.permute.xlu0 %8887
  %8889 = vrot.lane.b32.xlu0 %v5980, 67
  %v8890 = vpop.permute.xlu0 %8889
  %8891 = vrot.lane.b32.xlu0 %v5981, 67
  %v8892 = vpop.permute.xlu0 %8891
  %8893 = vrot.lane.b32.xlu0 %v8165, 67
  %v8894 = vpop.permute.xlu0 %8893
  %8895 = vrot.lane.b32.xlu0 %v8156, 67
  %v8896 = vpop.permute.xlu0 %8895
  %8897 = vrot.lane.b32.xlu0 %v5982, 67
  %v8898 = vpop.permute.xlu0 %8897
  %8899 = vrot.lane.b32.xlu0 %v5983, 67
  %v8900 = vpop.permute.xlu0 %8899
  %8901 = vrot.lane.b32.xlu0 %v5984, 67
  %v8902 = vpop.permute.xlu0 %8901
  %8903 = vrot.lane.b32.xlu0 %v5985, 67
  %v8904 = vpop.permute.xlu0 %8903
  %8905 = vrot.lane.b32.xlu0 %v5986, 67
  %v8906 = vpop.permute.xlu0 %8905
  %8907 = vrot.lane.b32.xlu0 %v8166, 67
  %v8908 = vpop.permute.xlu0 %8907
  %8909 = vrot.lane.b32.xlu0 %v8158, 67
  %v8910 = vpop.permute.xlu0 %8909
  %8911 = vrot.lane.b32.xlu0 %v6131, 67
  %v8912 = vpop.permute.xlu0 %8911
  %8913 = vrot.lane.b32.xlu0 %v6132, 67
  %v8914 = vpop.permute.xlu0 %8913
  %8915 = vrot.lane.b32.xlu0 %v6133, 67
  %v8916 = vpop.permute.xlu0 %8915
  %8917 = vrot.lane.b32.xlu0 %v6134, 67
  %v8918 = vpop.permute.xlu0 %8917
  %8919 = vrot.lane.b32.xlu0 %v6135, 67
  %v8920 = vpop.permute.xlu0 %8919
  %8921 = vrot.lane.b32.xlu0 %v8183, 67
  %v8922 = vpop.permute.xlu0 %8921
  %8923 = vrot.lane.b32.xlu0 %v8168, 67
  %v8924 = vpop.permute.xlu0 %8923
  %8925 = vrot.lane.b32.xlu0 %v6136, 67
  %v8926 = vpop.permute.xlu0 %8925
  %8927 = vrot.lane.b32.xlu0 %v6137, 67
  %v8928 = vpop.permute.xlu0 %8927
  %8929 = vrot.lane.b32.xlu0 %v6138, 67
  %v8930 = vpop.permute.xlu0 %8929
  %8931 = vrot.lane.b32.xlu0 %v6139, 67
  %v8932 = vpop.permute.xlu0 %8931
  %8933 = vrot.lane.b32.xlu0 %v6140, 67
  %v8934 = vpop.permute.xlu0 %8933
  %8935 = vrot.lane.b32.xlu0 %v8184, 67
  %v8936 = vpop.permute.xlu0 %8935
  %8937 = vrot.lane.b32.xlu0 %v8170, 67
  %v8938 = vpop.permute.xlu0 %8937
  %8939 = vrot.lane.b32.xlu0 %v6141, 67
  %v8940 = vpop.permute.xlu0 %8939
  %8941 = vrot.lane.b32.xlu0 %v6142, 67
  %v8942 = vpop.permute.xlu0 %8941
  %8943 = vrot.lane.b32.xlu0 %v6143, 67
  %v8944 = vpop.permute.xlu0 %8943
  %8945 = vrot.lane.b32.xlu0 %v6144, 67
  %v8946 = vpop.permute.xlu0 %8945
  %8947 = vrot.lane.b32.xlu0 %v6145, 67
  %v8948 = vpop.permute.xlu0 %8947
  %8949 = vrot.lane.b32.xlu0 %v8185, 67
  %v8950 = vpop.permute.xlu0 %8949
  %8951 = vrot.lane.b32.xlu0 %v8172, 67
  %v8952 = vpop.permute.xlu0 %8951
  %8953 = vrot.lane.b32.xlu0 %v6146, 67
  %v8954 = vpop.permute.xlu0 %8953
  %8955 = vrot.lane.b32.xlu0 %v6147, 67
  %v8956 = vpop.permute.xlu0 %8955
  %8957 = vrot.lane.b32.xlu0 %v6148, 67
  %v8958 = vpop.permute.xlu0 %8957
  %8959 = vrot.lane.b32.xlu0 %v6149, 67
  %v8960 = vpop.permute.xlu0 %8959
  %8961 = vrot.lane.b32.xlu0 %v6150, 67
  %v8962 = vpop.permute.xlu0 %8961
  %8963 = vrot.lane.b32.xlu0 %v8186, 67
  %v8964 = vpop.permute.xlu0 %8963
  %8965 = vrot.lane.b32.xlu0 %v8174, 67
  %v8966 = vpop.permute.xlu0 %8965
  %8967 = vrot.lane.b32.xlu0 %v6151, 67
  %v8968 = vpop.permute.xlu0 %8967
  %8969 = vrot.lane.b32.xlu0 %v6152, 67
  %v8970 = vpop.permute.xlu0 %8969
  %8971 = vrot.lane.b32.xlu0 %v6153, 67
  %v8972 = vpop.permute.xlu0 %8971
  %8973 = vrot.lane.b32.xlu0 %v6154, 67
  %v8974 = vpop.permute.xlu0 %8973
  %8975 = vrot.lane.b32.xlu0 %v6155, 67
  %v8976 = vpop.permute.xlu0 %8975
  %8977 = vrot.lane.b32.xlu0 %v8187, 67
  %v8978 = vpop.permute.xlu0 %8977
  %8979 = vrot.lane.b32.xlu0 %v8176, 67
  %v8980 = vpop.permute.xlu0 %8979
  %8981 = vrot.lane.b32.xlu0 %v6156, 67
  %v8982 = vpop.permute.xlu0 %8981
  %8983 = vrot.lane.b32.xlu0 %v6157, 67
  %v8984 = vpop.permute.xlu0 %8983
  %8985 = vrot.lane.b32.xlu0 %v6158, 67
  %v8986 = vpop.permute.xlu0 %8985
  %8987 = vrot.lane.b32.xlu0 %v6159, 67
  %v8988 = vpop.permute.xlu0 %8987
  %8989 = vrot.lane.b32.xlu0 %v6160, 67
  %v8990 = vpop.permute.xlu0 %8989
  %8991 = vrot.lane.b32.xlu0 %v8188, 67
  %v8992 = vpop.permute.xlu0 %8991
  %8993 = vrot.lane.b32.xlu0 %v8178, 67
  %v8994 = vpop.permute.xlu0 %8993
  %8995 = vrot.lane.b32.xlu0 %v6161, 67
  %v8996 = vpop.permute.xlu0 %8995
  %8997 = vrot.lane.b32.xlu0 %v6162, 67
  %v8998 = vpop.permute.xlu0 %8997
  %8999 = vrot.lane.b32.xlu0 %v6163, 67
  %v9000 = vpop.permute.xlu0 %8999
  %9001 = vrot.lane.b32.xlu0 %v6164, 67
  %v9002 = vpop.permute.xlu0 %9001
  %9003 = vrot.lane.b32.xlu0 %v6165, 67
  %v9004 = vpop.permute.xlu0 %9003
  %9005 = vrot.lane.b32.xlu0 %v8189, 67
  %v9006 = vpop.permute.xlu0 %9005
  %9007 = vrot.lane.b32.xlu0 %v8180, 67
  %v9008 = vpop.permute.xlu0 %9007
  %9009 = vrot.lane.b32.xlu0 %v6166, 67
  %v9010 = vpop.permute.xlu0 %9009
  %9011 = vrot.lane.b32.xlu0 %v6167, 67
  %v9012 = vpop.permute.xlu0 %9011
  %9013 = vrot.lane.b32.xlu0 %v6168, 67
  %v9014 = vpop.permute.xlu0 %9013
  %9015 = vrot.lane.b32.xlu0 %v6169, 67
  %v9016 = vpop.permute.xlu0 %9015
  %9017 = vrot.lane.b32.xlu0 %v6170, 67
  %v9018 = vpop.permute.xlu0 %9017
  %9019 = vrot.lane.b32.xlu0 %v8190, 67
  %v9020 = vpop.permute.xlu0 %9019
  %9021 = vrot.lane.b32.xlu0 %v8182, 67
  %v9022 = vpop.permute.xlu0 %9021
  %9023 = vrot.lane.b32.xlu0 %v6315, 67
  %v9024 = vpop.permute.xlu0 %9023
  %9025 = vrot.lane.b32.xlu0 %v6316, 67
  %v9026 = vpop.permute.xlu0 %9025
  %9027 = vrot.lane.b32.xlu0 %v6317, 67
  %v9028 = vpop.permute.xlu0 %9027
  %9029 = vrot.lane.b32.xlu0 %v6318, 67
  %v9030 = vpop.permute.xlu0 %9029
  %9031 = vrot.lane.b32.xlu0 %v6319, 67
  %v9032 = vpop.permute.xlu0 %9031
  %9033 = vrot.lane.b32.xlu0 %v8207, 67
  %v9034 = vpop.permute.xlu0 %9033
  %9035 = vrot.lane.b32.xlu0 %v8192, 67
  %v9036 = vpop.permute.xlu0 %9035
  %9037 = vrot.lane.b32.xlu0 %v6320, 67
  %v9038 = vpop.permute.xlu0 %9037
  %9039 = vrot.lane.b32.xlu0 %v6321, 67
  %v9040 = vpop.permute.xlu0 %9039
  %9041 = vrot.lane.b32.xlu0 %v6322, 67
  %v9042 = vpop.permute.xlu0 %9041
  %9043 = vrot.lane.b32.xlu0 %v6323, 67
  %v9044 = vpop.permute.xlu0 %9043
  %9045 = vrot.lane.b32.xlu0 %v6324, 67
  %v9046 = vpop.permute.xlu0 %9045
  %9047 = vrot.lane.b32.xlu0 %v8208, 67
  %v9048 = vpop.permute.xlu0 %9047
  %9049 = vrot.lane.b32.xlu0 %v8194, 67
  %v9050 = vpop.permute.xlu0 %9049
  %9051 = vrot.lane.b32.xlu0 %v6325, 67
  %v9052 = vpop.permute.xlu0 %9051
  %9053 = vrot.lane.b32.xlu0 %v6326, 67
  %v9054 = vpop.permute.xlu0 %9053
  %9055 = vrot.lane.b32.xlu0 %v6327, 67
  %v9056 = vpop.permute.xlu0 %9055
  %9057 = vrot.lane.b32.xlu0 %v6328, 67
  %v9058 = vpop.permute.xlu0 %9057
  %9059 = vrot.lane.b32.xlu0 %v6329, 67
  %v9060 = vpop.permute.xlu0 %9059
  %9061 = vrot.lane.b32.xlu0 %v8209, 67
  %v9062 = vpop.permute.xlu0 %9061
  %9063 = vrot.lane.b32.xlu0 %v8196, 67
  %v9064 = vpop.permute.xlu0 %9063
  %9065 = vrot.lane.b32.xlu0 %v6330, 67
  %v9066 = vpop.permute.xlu0 %9065
  %9067 = vrot.lane.b32.xlu0 %v6331, 67
  %v9068 = vpop.permute.xlu0 %9067
  %9069 = vrot.lane.b32.xlu0 %v6332, 67
  %v9070 = vpop.permute.xlu0 %9069
  %9071 = vrot.lane.b32.xlu0 %v6333, 67
  %v9072 = vpop.permute.xlu0 %9071
  %9073 = vrot.lane.b32.xlu0 %v6334, 67
  %v9074 = vpop.permute.xlu0 %9073
  %9075 = vrot.lane.b32.xlu0 %v8210, 67
  %v9076 = vpop.permute.xlu0 %9075
  %9077 = vrot.lane.b32.xlu0 %v8198, 67
  %v9078 = vpop.permute.xlu0 %9077
  %9079 = vrot.lane.b32.xlu0 %v6335, 67
  %v9080 = vpop.permute.xlu0 %9079
  %9081 = vrot.lane.b32.xlu0 %v6336, 67
  %v9082 = vpop.permute.xlu0 %9081
  %9083 = vrot.lane.b32.xlu0 %v6337, 67
  %v9084 = vpop.permute.xlu0 %9083
  %9085 = vrot.lane.b32.xlu0 %v6338, 67
  %v9086 = vpop.permute.xlu0 %9085
  %9087 = vrot.lane.b32.xlu0 %v6339, 67
  %v9088 = vpop.permute.xlu0 %9087
  %9089 = vrot.lane.b32.xlu0 %v8211, 67
  %v9090 = vpop.permute.xlu0 %9089
  %9091 = vrot.lane.b32.xlu0 %v8200, 67
  %v9092 = vpop.permute.xlu0 %9091
  %9093 = vrot.lane.b32.xlu0 %v6340, 67
  %v9094 = vpop.permute.xlu0 %9093
  %9095 = vrot.lane.b32.xlu0 %v6341, 67
  %v9096 = vpop.permute.xlu0 %9095
  %9097 = vrot.lane.b32.xlu0 %v6342, 67
  %v9098 = vpop.permute.xlu0 %9097
  %9099 = vrot.lane.b32.xlu0 %v6343, 67
  %v9100 = vpop.permute.xlu0 %9099
  %9101 = vrot.lane.b32.xlu0 %v6344, 67
  %v9102 = vpop.permute.xlu0 %9101
  %9103 = vrot.lane.b32.xlu0 %v8212, 67
  %v9104 = vpop.permute.xlu0 %9103
  %9105 = vrot.lane.b32.xlu0 %v8202, 67
  %v9106 = vpop.permute.xlu0 %9105
  %9107 = vrot.lane.b32.xlu0 %v6345, 67
  %v9108 = vpop.permute.xlu0 %9107
  %9109 = vrot.lane.b32.xlu0 %v6346, 67
  %v9110 = vpop.permute.xlu0 %9109
  %9111 = vrot.lane.b32.xlu0 %v6347, 67
  %v9112 = vpop.permute.xlu0 %9111
  %9113 = vrot.lane.b32.xlu0 %v6348, 67
  %v9114 = vpop.permute.xlu0 %9113
  %9115 = vrot.lane.b32.xlu0 %v6349, 67
  %v9116 = vpop.permute.xlu0 %9115
  %9117 = vrot.lane.b32.xlu0 %v8213, 67
  %v9118 = vpop.permute.xlu0 %9117
  %9119 = vrot.lane.b32.xlu0 %v8204, 67
  %v9120 = vpop.permute.xlu0 %9119
  %9121 = vrot.lane.b32.xlu0 %v6350, 67
  %v9122 = vpop.permute.xlu0 %9121
  %9123 = vrot.lane.b32.xlu0 %v6351, 67
  %v9124 = vpop.permute.xlu0 %9123
  %9125 = vrot.lane.b32.xlu0 %v6352, 67
  %v9126 = vpop.permute.xlu0 %9125
  %9127 = vrot.lane.b32.xlu0 %v6353, 67
  %v9128 = vpop.permute.xlu0 %9127
  %9129 = vrot.lane.b32.xlu0 %v6354, 67
  %v9130 = vpop.permute.xlu0 %9129
  %9131 = vrot.lane.b32.xlu0 %v8214, 67
  %v9132 = vpop.permute.xlu0 %9131
  %9133 = vrot.lane.b32.xlu0 %v8206, 67
  %v9134 = vpop.permute.xlu0 %9133
  %9135 = vrot.lane.b32.xlu0 %v6499, 67
  %v9136 = vpop.permute.xlu0 %9135
  %9137 = vrot.lane.b32.xlu0 %v6500, 67
  %v9138 = vpop.permute.xlu0 %9137
  %9139 = vrot.lane.b32.xlu0 %v6501, 67
  %v9140 = vpop.permute.xlu0 %9139
  %9141 = vrot.lane.b32.xlu0 %v6502, 67
  %v9142 = vpop.permute.xlu0 %9141
  %9143 = vrot.lane.b32.xlu0 %v6503, 67
  %v9144 = vpop.permute.xlu0 %9143
  %9145 = vrot.lane.b32.xlu0 %v8231, 67
  %v9146 = vpop.permute.xlu0 %9145
  %9147 = vrot.lane.b32.xlu0 %v8216, 67
  %v9148 = vpop.permute.xlu0 %9147
  %9149 = vrot.lane.b32.xlu0 %v6504, 67
  %v9150 = vpop.permute.xlu0 %9149
  %9151 = vrot.lane.b32.xlu0 %v6505, 67
  %v9152 = vpop.permute.xlu0 %9151
  %9153 = vrot.lane.b32.xlu0 %v6506, 67
  %v9154 = vpop.permute.xlu0 %9153
  %9155 = vrot.lane.b32.xlu0 %v6507, 67
  %v9156 = vpop.permute.xlu0 %9155
  %9157 = vrot.lane.b32.xlu0 %v6508, 67
  %v9158 = vpop.permute.xlu0 %9157
  %9159 = vrot.lane.b32.xlu0 %v8232, 67
  %v9160 = vpop.permute.xlu0 %9159
  %9161 = vrot.lane.b32.xlu0 %v8218, 67
  %v9162 = vpop.permute.xlu0 %9161
  %9163 = vrot.lane.b32.xlu0 %v6509, 67
  %v9164 = vpop.permute.xlu0 %9163
  %9165 = vrot.lane.b32.xlu0 %v6510, 67
  %v9166 = vpop.permute.xlu0 %9165
  %9167 = vrot.lane.b32.xlu0 %v6511, 67
  %v9168 = vpop.permute.xlu0 %9167
  %9169 = vrot.lane.b32.xlu0 %v6512, 67
  %v9170 = vpop.permute.xlu0 %9169
  %9171 = vrot.lane.b32.xlu0 %v6513, 67
  %v9172 = vpop.permute.xlu0 %9171
  %9173 = vrot.lane.b32.xlu0 %v8233, 67
  %v9174 = vpop.permute.xlu0 %9173
  %9175 = vrot.lane.b32.xlu0 %v8220, 67
  %v9176 = vpop.permute.xlu0 %9175
  %9177 = vrot.lane.b32.xlu0 %v6514, 67
  %v9178 = vpop.permute.xlu0 %9177
  %9179 = vrot.lane.b32.xlu0 %v6515, 67
  %v9180 = vpop.permute.xlu0 %9179
  %9181 = vrot.lane.b32.xlu0 %v6516, 67
  %v9182 = vpop.permute.xlu0 %9181
  %9183 = vrot.lane.b32.xlu0 %v6517, 67
  %v9184 = vpop.permute.xlu0 %9183
  %9185 = vrot.lane.b32.xlu0 %v6518, 67
  %v9186 = vpop.permute.xlu0 %9185
  %9187 = vrot.lane.b32.xlu0 %v8234, 67
  %v9188 = vpop.permute.xlu0 %9187
  %9189 = vrot.lane.b32.xlu0 %v8222, 67
  %v9190 = vpop.permute.xlu0 %9189
  %9191 = vrot.lane.b32.xlu0 %v6519, 67
  %v9192 = vpop.permute.xlu0 %9191
  %9193 = vrot.lane.b32.xlu0 %v6520, 67
  %v9194 = vpop.permute.xlu0 %9193
  %9195 = vrot.lane.b32.xlu0 %v6521, 67
  %v9196 = vpop.permute.xlu0 %9195
  %9197 = vrot.lane.b32.xlu0 %v6522, 67
  %v9198 = vpop.permute.xlu0 %9197
  %9199 = vrot.lane.b32.xlu0 %v6523, 67
  %v9200 = vpop.permute.xlu0 %9199
  %9201 = vrot.lane.b32.xlu0 %v8235, 67
  %v9202 = vpop.permute.xlu0 %9201
  %9203 = vrot.lane.b32.xlu0 %v8224, 67
  %v9204 = vpop.permute.xlu0 %9203
  %9205 = vrot.lane.b32.xlu0 %v6524, 67
  %v9206 = vpop.permute.xlu0 %9205
  %9207 = vrot.lane.b32.xlu0 %v6525, 67
  %v9208 = vpop.permute.xlu0 %9207
  %9209 = vrot.lane.b32.xlu0 %v6526, 67
  %v9210 = vpop.permute.xlu0 %9209
  %9211 = vrot.lane.b32.xlu0 %v6527, 67
  %v9212 = vpop.permute.xlu0 %9211
  %9213 = vrot.lane.b32.xlu0 %v6528, 67
  %v9214 = vpop.permute.xlu0 %9213
  %9215 = vrot.lane.b32.xlu0 %v8236, 67
  %v9216 = vpop.permute.xlu0 %9215
  %9217 = vrot.lane.b32.xlu0 %v8226, 67
  %v9218 = vpop.permute.xlu0 %9217
  %9219 = vrot.lane.b32.xlu0 %v6529, 67
  %v9220 = vpop.permute.xlu0 %9219
  %9221 = vrot.lane.b32.xlu0 %v6530, 67
  %v9222 = vpop.permute.xlu0 %9221
  %9223 = vrot.lane.b32.xlu0 %v6531, 67
  %v9224 = vpop.permute.xlu0 %9223
  %9225 = vrot.lane.b32.xlu0 %v6532, 67
  %v9226 = vpop.permute.xlu0 %9225
  %9227 = vrot.lane.b32.xlu0 %v6533, 67
  %v9228 = vpop.permute.xlu0 %9227
  %9229 = vrot.lane.b32.xlu0 %v8237, 67
  %v9230 = vpop.permute.xlu0 %9229
  %9231 = vrot.lane.b32.xlu0 %v8228, 67
  %v9232 = vpop.permute.xlu0 %9231
  %9233 = vrot.lane.b32.xlu0 %v6534, 67
  %v9234 = vpop.permute.xlu0 %9233
  %9235 = vrot.lane.b32.xlu0 %v6535, 67
  %v9236 = vpop.permute.xlu0 %9235
  %9237 = vrot.lane.b32.xlu0 %v6536, 67
  %v9238 = vpop.permute.xlu0 %9237
  %9239 = vrot.lane.b32.xlu0 %v6537, 67
  %v9240 = vpop.permute.xlu0 %9239
  %9241 = vrot.lane.b32.xlu0 %v6538, 67
  %v9242 = vpop.permute.xlu0 %9241
  %9243 = vrot.lane.b32.xlu0 %v8238, 67
  %v9244 = vpop.permute.xlu0 %9243
  %9245 = vrot.lane.b32.xlu0 %v8230, 67
  %v9246 = vpop.permute.xlu0 %9245
  %vm9247 = vcmask 547840
  %v9248 = vsel %vm9247, %v8240, %v8242
  %v9249 = vsel %vm9247, %v8242, %v8244
  %v9250 = vsel %vm9247, %v8244, %v8246
  %v9251 = vsel %vm9247, %v8246, %v8248
  %v9252 = vsel %vm9247, %v8248, %v8250
  %v9253 = vsel %vm9247, %v8250, %v8252
  %v9254 = vsel %vm9247, %v8254, %v8256
  %v9255 = vsel %vm9247, %v8256, %v8258
  %v9256 = vsel %vm9247, %v8258, %v8260
  %v9257 = vsel %vm9247, %v8260, %v8262
  %v9258 = vsel %vm9247, %v8262, %v8264
  %v9259 = vsel %vm9247, %v8264, %v8266
  %v9260 = vsel %vm9247, %v8268, %v8270
  %v9261 = vsel %vm9247, %v8270, %v8272
  %v9262 = vsel %vm9247, %v8272, %v8274
  %v9263 = vsel %vm9247, %v8274, %v8276
  %v9264 = vsel %vm9247, %v8276, %v8278
  %v9265 = vsel %vm9247, %v8278, %v8280
  %v9266 = vsel %vm9247, %v8282, %v8284
  %v9267 = vsel %vm9247, %v8284, %v8286
  %v9268 = vsel %vm9247, %v8286, %v8288
  %v9269 = vsel %vm9247, %v8288, %v8290
  %v9270 = vsel %vm9247, %v8290, %v8292
  %v9271 = vsel %vm9247, %v8292, %v8294
  %v9272 = vsel %vm9247, %v8296, %v8298
  %v9273 = vsel %vm9247, %v8298, %v8300
  %v9274 = vsel %vm9247, %v8300, %v8302
  %v9275 = vsel %vm9247, %v8302, %v8304
  %v9276 = vsel %vm9247, %v8304, %v8306
  %v9277 = vsel %vm9247, %v8306, %v8308
  %v9278 = vsel %vm9247, %v8310, %v8312
  %v9279 = vsel %vm9247, %v8312, %v8314
  %v9280 = vsel %vm9247, %v8314, %v8316
  %v9281 = vsel %vm9247, %v8316, %v8318
  %v9282 = vsel %vm9247, %v8318, %v8320
  %v9283 = vsel %vm9247, %v8320, %v8322
  %v9284 = vsel %vm9247, %v8324, %v8326
  %v9285 = vsel %vm9247, %v8326, %v8328
  %v9286 = vsel %vm9247, %v8328, %v8330
  %v9287 = vsel %vm9247, %v8330, %v8332
  %v9288 = vsel %vm9247, %v8332, %v8334
  %v9289 = vsel %vm9247, %v8334, %v8336
  %v9290 = vsel %vm9247, %v8338, %v8340
  %v9291 = vsel %vm9247, %v8340, %v8342
  %v9292 = vsel %vm9247, %v8342, %v8344
  %v9293 = vsel %vm9247, %v8344, %v8346
  %v9294 = vsel %vm9247, %v8346, %v8348
  %v9295 = vsel %vm9247, %v8348, %v8350
  %v9296 = vsel %vm9247, %v8352, %v8354
  %v9297 = vsel %vm9247, %v8354, %v8356
  %v9298 = vsel %vm9247, %v8356, %v8358
  %v9299 = vsel %vm9247, %v8358, %v8360
  %v9300 = vsel %vm9247, %v8360, %v8362
  %v9301 = vsel %vm9247, %v8362, %v8364
  %v9302 = vsel %vm9247, %v8366, %v8368
  %v9303 = vsel %vm9247, %v8368, %v8370
  %v9304 = vsel %vm9247, %v8370, %v8372
  %v9305 = vsel %vm9247, %v8372, %v8374
  %v9306 = vsel %vm9247, %v8374, %v8376
  %v9307 = vsel %vm9247, %v8376, %v8378
  %v9308 = vsel %vm9247, %v8380, %v8382
  %v9309 = vsel %vm9247, %v8382, %v8384
  %v9310 = vsel %vm9247, %v8384, %v8386
  %v9311 = vsel %vm9247, %v8386, %v8388
  %v9312 = vsel %vm9247, %v8388, %v8390
  %v9313 = vsel %vm9247, %v8390, %v8392
  %v9314 = vsel %vm9247, %v8394, %v8396
  %v9315 = vsel %vm9247, %v8396, %v8398
  %v9316 = vsel %vm9247, %v8398, %v8400
  %v9317 = vsel %vm9247, %v8400, %v8402
  %v9318 = vsel %vm9247, %v8402, %v8404
  %v9319 = vsel %vm9247, %v8404, %v8406
  %v9320 = vsel %vm9247, %v8408, %v8410
  %v9321 = vsel %vm9247, %v8410, %v8412
  %v9322 = vsel %vm9247, %v8412, %v8414
  %v9323 = vsel %vm9247, %v8414, %v8416
  %v9324 = vsel %vm9247, %v8416, %v8418
  %v9325 = vsel %vm9247, %v8418, %v8420
  %v9326 = vsel %vm9247, %v8422, %v8424
  %v9327 = vsel %vm9247, %v8424, %v8426
  %v9328 = vsel %vm9247, %v8426, %v8428
  %v9329 = vsel %vm9247, %v8428, %v8430
  %v9330 = vsel %vm9247, %v8430, %v8432
  %v9331 = vsel %vm9247, %v8432, %v8434
  %v9332 = vsel %vm9247, %v8436, %v8438
  %v9333 = vsel %vm9247, %v8438, %v8440
  %v9334 = vsel %vm9247, %v8440, %v8442
  %v9335 = vsel %vm9247, %v8442, %v8444
  %v9336 = vsel %vm9247, %v8444, %v8446
  %v9337 = vsel %vm9247, %v8446, %v8448
  %v9338 = vsel %vm9247, %v8450, %v8452
  %v9339 = vsel %vm9247, %v8452, %v8454
  %v9340 = vsel %vm9247, %v8454, %v8456
  %v9341 = vsel %vm9247, %v8456, %v8458
  %v9342 = vsel %vm9247, %v8458, %v8460
  %v9343 = vsel %vm9247, %v8460, %v8462
  %v9344 = vsel %vm9247, %v8464, %v8466
  %v9345 = vsel %vm9247, %v8466, %v8468
  %v9346 = vsel %vm9247, %v8468, %v8470
  %v9347 = vsel %vm9247, %v8470, %v8472
  %v9348 = vsel %vm9247, %v8472, %v8474
  %v9349 = vsel %vm9247, %v8474, %v8476
  %v9350 = vsel %vm9247, %v8478, %v8480
  %v9351 = vsel %vm9247, %v8480, %v8482
  %v9352 = vsel %vm9247, %v8482, %v8484
  %v9353 = vsel %vm9247, %v8484, %v8486
  %v9354 = vsel %vm9247, %v8486, %v8488
  %v9355 = vsel %vm9247, %v8488, %v8490
  %v9356 = vsel %vm9247, %v8492, %v8494
  %v9357 = vsel %vm9247, %v8494, %v8496
  %v9358 = vsel %vm9247, %v8496, %v8498
  %v9359 = vsel %vm9247, %v8498, %v8500
  %v9360 = vsel %vm9247, %v8500, %v8502
  %v9361 = vsel %vm9247, %v8502, %v8504
  %v9362 = vsel %vm9247, %v8506, %v8508
  %v9363 = vsel %vm9247, %v8508, %v8510
  %v9364 = vsel %vm9247, %v8510, %v8512
  %v9365 = vsel %vm9247, %v8512, %v8514
  %v9366 = vsel %vm9247, %v8514, %v8516
  %v9367 = vsel %vm9247, %v8516, %v8518
  %v9368 = vsel %vm9247, %v8520, %v8522
  %v9369 = vsel %vm9247, %v8522, %v8524
  %v9370 = vsel %vm9247, %v8524, %v8526
  %v9371 = vsel %vm9247, %v8526, %v8528
  %v9372 = vsel %vm9247, %v8528, %v8530
  %v9373 = vsel %vm9247, %v8530, %v8532
  %v9374 = vsel %vm9247, %v8534, %v8536
  %v9375 = vsel %vm9247, %v8536, %v8538
  %v9376 = vsel %vm9247, %v8538, %v8540
  %v9377 = vsel %vm9247, %v8540, %v8542
  %v9378 = vsel %vm9247, %v8542, %v8544
  %v9379 = vsel %vm9247, %v8544, %v8546
  %v9380 = vsel %vm9247, %v8548, %v8550
  %v9381 = vsel %vm9247, %v8550, %v8552
  %v9382 = vsel %vm9247, %v8552, %v8554
  %v9383 = vsel %vm9247, %v8554, %v8556
  %v9384 = vsel %vm9247, %v8556, %v8558
  %v9385 = vsel %vm9247, %v8558, %v8560
  %v9386 = vsel %vm9247, %v8562, %v8564
  %v9387 = vsel %vm9247, %v8564, %v8566
  %v9388 = vsel %vm9247, %v8566, %v8568
  %v9389 = vsel %vm9247, %v8568, %v8570
  %v9390 = vsel %vm9247, %v8570, %v8572
  %v9391 = vsel %vm9247, %v8572, %v8574
  %v9392 = vsel %vm9247, %v8576, %v8578
  %v9393 = vsel %vm9247, %v8578, %v8580
  %v9394 = vsel %vm9247, %v8580, %v8582
  %v9395 = vsel %vm9247, %v8582, %v8584
  %v9396 = vsel %vm9247, %v8584, %v8586
  %v9397 = vsel %vm9247, %v8586, %v8588
  %v9398 = vsel %vm9247, %v8590, %v8592
  %v9399 = vsel %vm9247, %v8592, %v8594
  %v9400 = vsel %vm9247, %v8594, %v8596
  %v9401 = vsel %vm9247, %v8596, %v8598
  %v9402 = vsel %vm9247, %v8598, %v8600
  %v9403 = vsel %vm9247, %v8600, %v8602
  %v9404 = vsel %vm9247, %v8604, %v8606
  %v9405 = vsel %vm9247, %v8606, %v8608
  %v9406 = vsel %vm9247, %v8608, %v8610
  %v9407 = vsel %vm9247, %v8610, %v8612
  %v9408 = vsel %vm9247, %v8612, %v8614
  %v9409 = vsel %vm9247, %v8614, %v8616
  %v9410 = vsel %vm9247, %v8618, %v8620
  %v9411 = vsel %vm9247, %v8620, %v8622
  %v9412 = vsel %vm9247, %v8622, %v8624
  %v9413 = vsel %vm9247, %v8624, %v8626
  %v9414 = vsel %vm9247, %v8626, %v8628
  %v9415 = vsel %vm9247, %v8628, %v8630
  %v9416 = vsel %vm9247, %v8632, %v8634
  %v9417 = vsel %vm9247, %v8634, %v8636
  %v9418 = vsel %vm9247, %v8636, %v8638
  %v9419 = vsel %vm9247, %v8638, %v8640
  %v9420 = vsel %vm9247, %v8640, %v8642
  %v9421 = vsel %vm9247, %v8642, %v8644
  %v9422 = vsel %vm9247, %v8646, %v8648
  %v9423 = vsel %vm9247, %v8648, %v8650
  %v9424 = vsel %vm9247, %v8650, %v8652
  %v9425 = vsel %vm9247, %v8652, %v8654
  %v9426 = vsel %vm9247, %v8654, %v8656
  %v9427 = vsel %vm9247, %v8656, %v8658
  %v9428 = vsel %vm9247, %v8660, %v8662
  %v9429 = vsel %vm9247, %v8662, %v8664
  %v9430 = vsel %vm9247, %v8664, %v8666
  %v9431 = vsel %vm9247, %v8666, %v8668
  %v9432 = vsel %vm9247, %v8668, %v8670
  %v9433 = vsel %vm9247, %v8670, %v8672
  %v9434 = vsel %vm9247, %v8674, %v8676
  %v9435 = vsel %vm9247, %v8676, %v8678
  %v9436 = vsel %vm9247, %v8678, %v8680
  %v9437 = vsel %vm9247, %v8680, %v8682
  %v9438 = vsel %vm9247, %v8682, %v8684
  %v9439 = vsel %vm9247, %v8684, %v8686
  %v9440 = vsel %vm9247, %v8688, %v8690
  %v9441 = vsel %vm9247, %v8690, %v8692
  %v9442 = vsel %vm9247, %v8692, %v8694
  %v9443 = vsel %vm9247, %v8694, %v8696
  %v9444 = vsel %vm9247, %v8696, %v8698
  %v9445 = vsel %vm9247, %v8698, %v8700
  %v9446 = vsel %vm9247, %v8702, %v8704
  %v9447 = vsel %vm9247, %v8704, %v8706
  %v9448 = vsel %vm9247, %v8706, %v8708
  %v9449 = vsel %vm9247, %v8708, %v8710
  %v9450 = vsel %vm9247, %v8710, %v8712
  %v9451 = vsel %vm9247, %v8712, %v8714
  %v9452 = vsel %vm9247, %v8716, %v8718
  %v9453 = vsel %vm9247, %v8718, %v8720
  %v9454 = vsel %vm9247, %v8720, %v8722
  %v9455 = vsel %vm9247, %v8722, %v8724
  %v9456 = vsel %vm9247, %v8724, %v8726
  %v9457 = vsel %vm9247, %v8726, %v8728
  %v9458 = vsel %vm9247, %v8730, %v8732
  %v9459 = vsel %vm9247, %v8732, %v8734
  %v9460 = vsel %vm9247, %v8734, %v8736
  %v9461 = vsel %vm9247, %v8736, %v8738
  %v9462 = vsel %vm9247, %v8738, %v8740
  %v9463 = vsel %vm9247, %v8740, %v8742
  %v9464 = vsel %vm9247, %v8744, %v8746
  %v9465 = vsel %vm9247, %v8746, %v8748
  %v9466 = vsel %vm9247, %v8748, %v8750
  %v9467 = vsel %vm9247, %v8750, %v8752
  %v9468 = vsel %vm9247, %v8752, %v8754
  %v9469 = vsel %vm9247, %v8754, %v8756
  %v9470 = vsel %vm9247, %v8758, %v8760
  %v9471 = vsel %vm9247, %v8760, %v8762
  %v9472 = vsel %vm9247, %v8762, %v8764
  %v9473 = vsel %vm9247, %v8764, %v8766
  %v9474 = vsel %vm9247, %v8766, %v8768
  %v9475 = vsel %vm9247, %v8768, %v8770
  %v9476 = vsel %vm9247, %v8772, %v8774
  %v9477 = vsel %vm9247, %v8774, %v8776
  %v9478 = vsel %vm9247, %v8776, %v8778
  %v9479 = vsel %vm9247, %v8778, %v8780
  %v9480 = vsel %vm9247, %v8780, %v8782
  %v9481 = vsel %vm9247, %v8782, %v8784
  %v9482 = vsel %vm9247, %v8786, %v8788
  %v9483 = vsel %vm9247, %v8788, %v8790
  %v9484 = vsel %vm9247, %v8790, %v8792
  %v9485 = vsel %vm9247, %v8792, %v8794
  %v9486 = vsel %vm9247, %v8794, %v8796
  %v9487 = vsel %vm9247, %v8796, %v8798
  %v9488 = vsel %vm9247, %v8800, %v8802
  %v9489 = vsel %vm9247, %v8802, %v8804
  %v9490 = vsel %vm9247, %v8804, %v8806
  %v9491 = vsel %vm9247, %v8806, %v8808
  %v9492 = vsel %vm9247, %v8808, %v8810
  %v9493 = vsel %vm9247, %v8810, %v8812
  %v9494 = vsel %vm9247, %v8814, %v8816
  %v9495 = vsel %vm9247, %v8816, %v8818
  %v9496 = vsel %vm9247, %v8818, %v8820
  %v9497 = vsel %vm9247, %v8820, %v8822
  %v9498 = vsel %vm9247, %v8822, %v8824
  %v9499 = vsel %vm9247, %v8824, %v8826
  %v9500 = vsel %vm9247, %v8828, %v8830
  %v9501 = vsel %vm9247, %v8830, %v8832
  %v9502 = vsel %vm9247, %v8832, %v8834
  %v9503 = vsel %vm9247, %v8834, %v8836
  %v9504 = vsel %vm9247, %v8836, %v8838
  %v9505 = vsel %vm9247, %v8838, %v8840
  %v9506 = vsel %vm9247, %v8842, %v8844
  %v9507 = vsel %vm9247, %v8844, %v8846
  %v9508 = vsel %vm9247, %v8846, %v8848
  %v9509 = vsel %vm9247, %v8848, %v8850
  %v9510 = vsel %vm9247, %v8850, %v8852
  %v9511 = vsel %vm9247, %v8852, %v8854
  %v9512 = vsel %vm9247, %v8856, %v8858
  %v9513 = vsel %vm9247, %v8858, %v8860
  %v9514 = vsel %vm9247, %v8860, %v8862
  %v9515 = vsel %vm9247, %v8862, %v8864
  %v9516 = vsel %vm9247, %v8864, %v8866
  %v9517 = vsel %vm9247, %v8866, %v8868
  %v9518 = vsel %vm9247, %v8870, %v8872
  %v9519 = vsel %vm9247, %v8872, %v8874
  %v9520 = vsel %vm9247, %v8874, %v8876
  %v9521 = vsel %vm9247, %v8876, %v8878
  %v9522 = vsel %vm9247, %v8878, %v8880
  %v9523 = vsel %vm9247, %v8880, %v8882
  %v9524 = vsel %vm9247, %v8884, %v8886
  %v9525 = vsel %vm9247, %v8886, %v8888
  %v9526 = vsel %vm9247, %v8888, %v8890
  %v9527 = vsel %vm9247, %v8890, %v8892
  %v9528 = vsel %vm9247, %v8892, %v8894
  %v9529 = vsel %vm9247, %v8894, %v8896
  %v9530 = vsel %vm9247, %v8898, %v8900
  %v9531 = vsel %vm9247, %v8900, %v8902
  %v9532 = vsel %vm9247, %v8902, %v8904
  %v9533 = vsel %vm9247, %v8904, %v8906
  %v9534 = vsel %vm9247, %v8906, %v8908
  %v9535 = vsel %vm9247, %v8908, %v8910
  %v9536 = vsel %vm9247, %v8912, %v8914
  %v9537 = vsel %vm9247, %v8914, %v8916
  %v9538 = vsel %vm9247, %v8916, %v8918
  %v9539 = vsel %vm9247, %v8918, %v8920
  %v9540 = vsel %vm9247, %v8920, %v8922
  %v9541 = vsel %vm9247, %v8922, %v8924
  %v9542 = vsel %vm9247, %v8926, %v8928
  %v9543 = vsel %vm9247, %v8928, %v8930
  %v9544 = vsel %vm9247, %v8930, %v8932
  %v9545 = vsel %vm9247, %v8932, %v8934
  %v9546 = vsel %vm9247, %v8934, %v8936
  %v9547 = vsel %vm9247, %v8936, %v8938
  %v9548 = vsel %vm9247, %v8940, %v8942
  %v9549 = vsel %vm9247, %v8942, %v8944
  %v9550 = vsel %vm9247, %v8944, %v8946
  %v9551 = vsel %vm9247, %v8946, %v8948
  %v9552 = vsel %vm9247, %v8948, %v8950
  %v9553 = vsel %vm9247, %v8950, %v8952
  %v9554 = vsel %vm9247, %v8954, %v8956
  %v9555 = vsel %vm9247, %v8956, %v8958
  %v9556 = vsel %vm9247, %v8958, %v8960
  %v9557 = vsel %vm9247, %v8960, %v8962
  %v9558 = vsel %vm9247, %v8962, %v8964
  %v9559 = vsel %vm9247, %v8964, %v8966
  %v9560 = vsel %vm9247, %v8968, %v8970
  %v9561 = vsel %vm9247, %v8970, %v8972
  %v9562 = vsel %vm9247, %v8972, %v8974
  %v9563 = vsel %vm9247, %v8974, %v8976
  %v9564 = vsel %vm9247, %v8976, %v8978
  %v9565 = vsel %vm9247, %v8978, %v8980
  %v9566 = vsel %vm9247, %v8982, %v8984
  %v9567 = vsel %vm9247, %v8984, %v8986
  %v9568 = vsel %vm9247, %v8986, %v8988
  %v9569 = vsel %vm9247, %v8988, %v8990
  %v9570 = vsel %vm9247, %v8990, %v8992
  %v9571 = vsel %vm9247, %v8992, %v8994
  %v9572 = vsel %vm9247, %v8996, %v8998
  %v9573 = vsel %vm9247, %v8998, %v9000
  %v9574 = vsel %vm9247, %v9000, %v9002
  %v9575 = vsel %vm9247, %v9002, %v9004
  %v9576 = vsel %vm9247, %v9004, %v9006
  %v9577 = vsel %vm9247, %v9006, %v9008
  %v9578 = vsel %vm9247, %v9010, %v9012
  %v9579 = vsel %vm9247, %v9012, %v9014
  %v9580 = vsel %vm9247, %v9014, %v9016
  %v9581 = vsel %vm9247, %v9016, %v9018
  %v9582 = vsel %vm9247, %v9018, %v9020
  %v9583 = vsel %vm9247, %v9020, %v9022
  %v9584 = vsel %vm9247, %v9024, %v9026
  %v9585 = vsel %vm9247, %v9026, %v9028
  %v9586 = vsel %vm9247, %v9028, %v9030
  %v9587 = vsel %vm9247, %v9030, %v9032
  %v9588 = vsel %vm9247, %v9032, %v9034
  %v9589 = vsel %vm9247, %v9034, %v9036
  %v9590 = vsel %vm9247, %v9038, %v9040
  %v9591 = vsel %vm9247, %v9040, %v9042
  %v9592 = vsel %vm9247, %v9042, %v9044
  %v9593 = vsel %vm9247, %v9044, %v9046
  %v9594 = vsel %vm9247, %v9046, %v9048
  %v9595 = vsel %vm9247, %v9048, %v9050
  %v9596 = vsel %vm9247, %v9052, %v9054
  %v9597 = vsel %vm9247, %v9054, %v9056
  %v9598 = vsel %vm9247, %v9056, %v9058
  %v9599 = vsel %vm9247, %v9058, %v9060
  %v9600 = vsel %vm9247, %v9060, %v9062
  %v9601 = vsel %vm9247, %v9062, %v9064
  %v9602 = vsel %vm9247, %v9066, %v9068
  %v9603 = vsel %vm9247, %v9068, %v9070
  %v9604 = vsel %vm9247, %v9070, %v9072
  %v9605 = vsel %vm9247, %v9072, %v9074
  %v9606 = vsel %vm9247, %v9074, %v9076
  %v9607 = vsel %vm9247, %v9076, %v9078
  %v9608 = vsel %vm9247, %v9080, %v9082
  %v9609 = vsel %vm9247, %v9082, %v9084
  %v9610 = vsel %vm9247, %v9084, %v9086
  %v9611 = vsel %vm9247, %v9086, %v9088
  %v9612 = vsel %vm9247, %v9088, %v9090
  %v9613 = vsel %vm9247, %v9090, %v9092
  %v9614 = vsel %vm9247, %v9094, %v9096
  %v9615 = vsel %vm9247, %v9096, %v9098
  %v9616 = vsel %vm9247, %v9098, %v9100
  %v9617 = vsel %vm9247, %v9100, %v9102
  %v9618 = vsel %vm9247, %v9102, %v9104
  %v9619 = vsel %vm9247, %v9104, %v9106
  %v9620 = vsel %vm9247, %v9108, %v9110
  %v9621 = vsel %vm9247, %v9110, %v9112
  %v9622 = vsel %vm9247, %v9112, %v9114
  %v9623 = vsel %vm9247, %v9114, %v9116
  %v9624 = vsel %vm9247, %v9116, %v9118
  %v9625 = vsel %vm9247, %v9118, %v9120
  %v9626 = vsel %vm9247, %v9122, %v9124
  %v9627 = vsel %vm9247, %v9124, %v9126
  %v9628 = vsel %vm9247, %v9126, %v9128
  %v9629 = vsel %vm9247, %v9128, %v9130
  %v9630 = vsel %vm9247, %v9130, %v9132
  %v9631 = vsel %vm9247, %v9132, %v9134
  %v9632 = vsel %vm9247, %v9136, %v9138
  %v9633 = vsel %vm9247, %v9138, %v9140
  %v9634 = vsel %vm9247, %v9140, %v9142
  %v9635 = vsel %vm9247, %v9142, %v9144
  %v9636 = vsel %vm9247, %v9144, %v9146
  %v9637 = vsel %vm9247, %v9146, %v9148
  %v9638 = vsel %vm9247, %v9150, %v9152
  %v9639 = vsel %vm9247, %v9152, %v9154
  %v9640 = vsel %vm9247, %v9154, %v9156
  %v9641 = vsel %vm9247, %v9156, %v9158
  %v9642 = vsel %vm9247, %v9158, %v9160
  %v9643 = vsel %vm9247, %v9160, %v9162
  %v9644 = vsel %vm9247, %v9164, %v9166
  %v9645 = vsel %vm9247, %v9166, %v9168
  %v9646 = vsel %vm9247, %v9168, %v9170
  %v9647 = vsel %vm9247, %v9170, %v9172
  %v9648 = vsel %vm9247, %v9172, %v9174
  %v9649 = vsel %vm9247, %v9174, %v9176
  %v9650 = vsel %vm9247, %v9178, %v9180
  %v9651 = vsel %vm9247, %v9180, %v9182
  %v9652 = vsel %vm9247, %v9182, %v9184
  %v9653 = vsel %vm9247, %v9184, %v9186
  %v9654 = vsel %vm9247, %v9186, %v9188
  %v9655 = vsel %vm9247, %v9188, %v9190
  %v9656 = vsel %vm9247, %v9192, %v9194
  %v9657 = vsel %vm9247, %v9194, %v9196
  %v9658 = vsel %vm9247, %v9196, %v9198
  %v9659 = vsel %vm9247, %v9198, %v9200
  %v9660 = vsel %vm9247, %v9200, %v9202
  %v9661 = vsel %vm9247, %v9202, %v9204
  %v9662 = vsel %vm9247, %v9206, %v9208
  %v9663 = vsel %vm9247, %v9208, %v9210
  %v9664 = vsel %vm9247, %v9210, %v9212
  %v9665 = vsel %vm9247, %v9212, %v9214
  %v9666 = vsel %vm9247, %v9214, %v9216
  %v9667 = vsel %vm9247, %v9216, %v9218
  %v9668 = vsel %vm9247, %v9220, %v9222
  %v9669 = vsel %vm9247, %v9222, %v9224
  %v9670 = vsel %vm9247, %v9224, %v9226
  %v9671 = vsel %vm9247, %v9226, %v9228
  %v9672 = vsel %vm9247, %v9228, %v9230
  %v9673 = vsel %vm9247, %v9230, %v9232
  %v9674 = vsel %vm9247, %v9234, %v9236
  %v9675 = vsel %vm9247, %v9236, %v9238
  %v9676 = vsel %vm9247, %v9238, %v9240
  %v9677 = vsel %vm9247, %v9240, %v9242
  %v9678 = vsel %vm9247, %v9242, %v9244
  %v9679 = vsel %vm9247, %v9244, %v9246
  %v10112 = vld [vmem:[%s5] sm:$0xff]
  %v10113 = vld [vmem:[%s5 + $0x8] sm:$0xff]
  %v10114 = vld [vmem:[%s5 + $0x10] sm:$0xff]
  %v10115 = vld [vmem:[%s5 + $0x18] sm:$0xff]
  %v10116 = vld [vmem:[%s5 + $0x20] sm:$0xff]
  %v10117 = vld [vmem:[%s5 + $0x28] sm:$0xff]
  %v10118 = vld [vmem:[%s5 + $0x30] sm:$0xff]
  %v10119 = vld [vmem:[%s5 + $0x38] sm:$0xff]
  %v10120 = vld [vmem:[%s5 + $0x40] sm:$0xff]
  %v10121 = vld [vmem:[%s5 + $0x48] sm:$0xff]
  %v10122 = vld [vmem:[%s5 + $0x50] sm:$0xff]
  %v10123 = vld [vmem:[%s5 + $0x58] sm:$0xff]
  %v10124 = vld [vmem:[%s5 + $0x60] sm:$0xff]
  %v10125 = vld [vmem:[%s6] sm:$0xff]
  %10127 = vset.pattern.permute.xlu0 0
  %10128 = vperm.xlu0 %10127, %v10125
  %v10129 = vpop.permute.xlu0 %10128
  %vm10131 = vcmask 523264
  %v10133 = vsel %vm10131, %v10124, 0
  %10135 = vmatprep.subr.mxu0 %v5012
  %10136 = vmatpush1.msra.mxu0 %v5011
  %10137 = vmatprep.subr.mxu0 %v5018
  %10138 = vmatpush1.msra.mxu0 %v5017
  %10139 = vmatprep.subr.mxu0 %v5024
  %10140 = vmatpush1.msra.mxu0 %v5023
  %10141 = vmatprep.subr.mxu0 %v5030
  %10142 = vmatpush1.msra.mxu0 %v5029
  %10143 = vmatprep.subr.mxu0 %v5036
  %10144 = vmatpush1.msra.mxu0 %v5035
  %10145 = vmatprep.subr.mxu0 %v5042
  %10146 = vmatpush1.msra.mxu0 %v5041
  %10147 = vmatprep.subr.mxu0 %v5048
  %10148 = vmatpush1.msra.mxu0 %v5047
  %10149 = vmatprep.subr.mxu0 %v5054
  %10150 = vmatpush1.msra.mxu0 %v5053
  %10151 = vmatprep.subr.mxu0 %v5212
  %10152 = vmatpush1.msra.mxu0 %v5211
  %10153 = vmatprep.subr.mxu0 %v5217
  %10154 = vmatpush1.msra.mxu0 %v5216
  %10155 = vmatprep.subr.mxu0 %v5222
  %10156 = vmatpush1.msra.mxu0 %v5221
  %10157 = vmatprep.subr.mxu0 %v5227
  %10158 = vmatpush1.msra.mxu0 %v5226
  %10159 = vmatprep.subr.mxu0 %v5232
  %10160 = vmatpush1.msra.mxu0 %v5231
  %10161 = vmatprep.subr.mxu0 %v5237
  %10162 = vmatpush1.msra.mxu0 %v5236
  %10163 = vmatprep.subr.mxu0 %v5242
  %10164 = vmatpush1.msra.mxu0 %v5241
  %10165 = vmatprep.subr.mxu0 %v5247
  %10166 = vmatpush1.msra.mxu0 %v5246
  %10167 = vmatprep.subr.mxu0 %v5396
  %10168 = vmatpush1.msra.mxu0 %v5395
  %10169 = vmatprep.subr.mxu0 %v5401
  %10170 = vmatpush1.msra.mxu0 %v5400
  %10171 = vmatprep.subr.mxu0 %v5406
  %10172 = vmatpush1.msra.mxu0 %v5405
  %10173 = vmatprep.subr.mxu0 %v5411
  %10174 = vmatpush1.msra.mxu0 %v5410
  %10175 = vmatprep.subr.mxu0 %v5416
  %10176 = vmatpush1.msra.mxu0 %v5415
  %10177 = vmatprep.subr.mxu0 %v5421
  %10178 = vmatpush1.msra.mxu0 %v5420
  %10179 = vmatprep.subr.mxu0 %v5426
  %10180 = vmatpush1.msra.mxu0 %v5425
  %10181 = vmatprep.subr.mxu0 %v5431
  %10182 = vmatpush1.msra.mxu0 %v5430
  %10183 = vmatprep.subr.mxu0 %v5580
  %10184 = vmatpush1.msra.mxu0 %v5579
  %10185 = vmatprep.subr.mxu0 %v5585
  %10186 = vmatpush1.msra.mxu0 %v5584
  %10187 = vmatprep.subr.mxu0 %v5590
  %10188 = vmatpush1.msra.mxu0 %v5589
  %10189 = vmatprep.subr.mxu0 %v5595
  %10190 = vmatpush1.msra.mxu0 %v5594
  %10191 = vmatprep.subr.mxu0 %v5600
  %10192 = vmatpush1.msra.mxu0 %v5599
  %10193 = vmatprep.subr.mxu0 %v5605
  %10194 = vmatpush1.msra.mxu0 %v5604
  %10195 = vmatprep.subr.mxu0 %v5610
  %10196 = vmatpush1.msra.mxu0 %v5609
  %10197 = vmatprep.subr.mxu0 %v5615
  %10198 = vmatpush1.msra.mxu0 %v5614
  %10199 = vmatprep.mubr.f32.mxu0 %v10113
  %10200 = vmatmul.mubr.f32.gmra.mrb[0].mxu0 %v10112
  %v10201 = vpop.f32.mrb[0].mxu0
  %v10202 = vadd.f32 %v10129, %v10201
  %v10203 = vpop.f32.mrb[0].mxu0
  %v10204 = vadd.f32 %v10129, %v10203
  %10205 = vdwg.mxu0
  %10206 = vmatprep.subr.mxu0 %v5764
  %10207 = vmatpush1.msra.mxu0 %v5763
  %10208 = vmatprep.subr.mxu0 %v5769
  %10209 = vmatpush1.msra.mxu0 %v5768
  %10210 = vmatprep.subr.mxu0 %v5774
  %10211 = vmatpush1.msra.mxu0 %v5773
  %10212 = vmatprep.subr.mxu0 %v5779
  %10213 = vmatpush1.msra.mxu0 %v5778
  %10214 = vmatprep.subr.mxu0 %v5784
  %10215 = vmatpush1.msra.mxu0 %v5783
  %10216 = vmatprep.subr.mxu0 %v5789
  %10217 = vmatpush1.msra.mxu0 %v5788
  %10218 = vmatprep.subr.mxu0 %v5794
  %10219 = vmatpush1.msra.mxu0 %v5793
  %10220 = vmatprep.subr.mxu0 %v5799
  %10221 = vmatpush1.msra.mxu0 %v5798
  %10222 = vmatprep.subr.mxu0 %v5948
  %10223 = vmatpush1.msra.mxu0 %v5947
  %10224 = vmatprep.subr.mxu0 %v5953
  %10225 = vmatpush1.msra.mxu0 %v5952
  %10226 = vmatprep.subr.mxu0 %v5958
  %10227 = vmatpush1.msra.mxu0 %v5957
  %10228 = vmatprep.subr.mxu0 %v5963
  %10229 = vmatpush1.msra.mxu0 %v5962
  %10230 = vmatprep.subr.mxu0 %v5968
  %10231 = vmatpush1.msra.mxu0 %v5967
  %10232 = vmatprep.subr.mxu0 %v5973
  %10233 = vmatpush1.msra.mxu0 %v5972
  %10234 = vmatprep.subr.mxu0 %v5978
  %10235 = vmatpush1.msra.mxu0 %v5977
  %10236 = vmatprep.subr.mxu0 %v5983
  %10237 = vmatpush1.msra.mxu0 %v5982
  %10238 = vmatprep.subr.mxu0 %v6132
  %10239 = vmatpush1.msra.mxu0 %v6131
  %10240 = vmatprep.subr.mxu0 %v6137
  %10241 = vmatpush1.msra.mxu0 %v6136
  %10242 = vmatprep.subr.mxu0 %v6142
  %10243 = vmatpush1.msra.mxu0 %v6141
  %10244 = vmatprep.subr.mxu0 %v6147
  %10245 = vmatpush1.msra.mxu0 %v6146
  %10246 = vmatprep.subr.mxu0 %v6152
  %10247 = vmatpush1.msra.mxu0 %v6151
  %10248 = vmatprep.subr.mxu0 %v6157
  %10249 = vmatpush1.msra.mxu0 %v6156
  %10250 = vmatprep.subr.mxu0 %v6162
  %10251 = vmatpush1.msra.mxu0 %v6161
  %10252 = vmatprep.subr.mxu0 %v6167
  %10253 = vmatpush1.msra.mxu0 %v6166
  %10254 = vmatprep.subr.mxu0 %v6316
  %10255 = vmatpush1.msra.mxu0 %v6315
  %10256 = vmatprep.subr.mxu0 %v6321
  %10257 = vmatpush1.msra.mxu0 %v6320
  %10258 = vmatprep.subr.mxu0 %v6326
  %10259 = vmatpush1.msra.mxu0 %v6325
  %10260 = vmatprep.subr.mxu0 %v6331
  %10261 = vmatpush1.msra.mxu0 %v6330
  %10262 = vmatprep.subr.mxu0 %v6336
  %10263 = vmatpush1.msra.mxu0 %v6335
  %10264 = vmatprep.subr.mxu0 %v6341
  %10265 = vmatpush1.msra.mxu0 %v6340
  %10266 = vmatprep.subr.mxu0 %v6346
  %10267 = vmatpush1.msra.mxu0 %v6345
  %10268 = vmatprep.subr.mxu0 %v6351
  %10269 = vmatpush1.msra.mxu0 %v6350
  %10270 = vmatprep.mubr.f32.mxu0 %v10115
  %10271 = vmatmul.mubr.f32.gmra.mrb[0].mxu0 %v10114
  %v10272 = vpop.f32.mrb[0].mxu0
  %v10273 = vadd.f32 %v10202, %v10272
  %v10274 = vpop.f32.mrb[0].mxu0
  %v10275 = vadd.f32 %v10204, %v10274
  %10276 = vdwg.mxu0
  %10277 = vmatprep.subr.mxu0 %v6500
  %10278 = vmatpush1.msra.mxu0 %v6499
  %10279 = vmatprep.subr.mxu0 %v6505
  %10280 = vmatpush1.msra.mxu0 %v6504
  %10281 = vmatprep.subr.mxu0 %v6510
  %10282 = vmatpush1.msra.mxu0 %v6509
  %10283 = vmatprep.subr.mxu0 %v6515
  %10284 = vmatpush1.msra.mxu0 %v6514
  %10285 = vmatprep.subr.mxu0 %v6520
  %10286 = vmatpush1.msra.mxu0 %v6519
  %10287 = vmatprep.subr.mxu0 %v6525
  %10288 = vmatpush1.msra.mxu0 %v6524
  %10289 = vmatprep.subr.mxu0 %v6530
  %10290 = vmatpush1.msra.mxu0 %v6529
  %10291 = vmatprep.subr.mxu0 %v6535
  %10292 = vmatpush1.msra.mxu0 %v6534
  %10293 = vmatprep.subr.mxu0 %v6684
  %10294 = vmatpush1.msra.mxu0 %v6683
  %10295 = vmatprep.subr.mxu0 %v6689
  %10296 = vmatpush1.msra.mxu0 %v6688
  %10297 = vmatprep.subr.mxu0 %v6694
  %10298 = vmatpush1.msra.mxu0 %v6693
  %10299 = vmatprep.subr.mxu0 %v6699
  %10300 = vmatpush1.msra.mxu0 %v6698
  %10301 = vmatprep.subr.mxu0 %v6704
  %10302 = vmatpush1.msra.mxu0 %v6703
  %10303 = vmatprep.subr.mxu0 %v6709
  %10304 = vmatpush1.msra.mxu0 %v6708
  %10305 = vmatprep.subr.mxu0 %v6714
  %10306 = vmatpush1.msra.mxu0 %v6713
  %10307 = vmatprep.subr.mxu0 %v6719
  %10308 = vmatpush1.msra.mxu0 %v6718
  %10309 = vmatprep.subr.mxu0 %v6868
  %10310 = vmatpush1.msra.mxu0 %v6867
  %10311 = vmatprep.subr.mxu0 %v6873
  %10312 = vmatpush1.msra.mxu0 %v6872
  %10313 = vmatprep.subr.mxu0 %v6878
  %10314 = vmatpush1.msra.mxu0 %v6877
  %10315 = vmatprep.subr.mxu0 %v6883
  %10316 = vmatpush1.msra.mxu0 %v6882
  %10317 = vmatprep.subr.mxu0 %v6888
  %10318 = vmatpush1.msra.mxu0 %v6887
  %10319 = vmatprep.subr.mxu0 %v6893
  %10320 = vmatpush1.msra.mxu0 %v6892
  %10321 = vmatprep.subr.mxu0 %v6898
  %10322 = vmatpush1.msra.mxu0 %v6897
  %10323 = vmatprep.subr.mxu0 %v6903
  %10324 = vmatpush1.msra.mxu0 %v6902
  %10325 = vmatprep.subr.mxu0 %v7053
  %10326 = vmatpush1.msra.mxu0 %v7052
  %10327 = vmatprep.subr.mxu0 %v7058
  %10328 = vmatpush1.msra.mxu0 %v7057
  %10329 = vmatprep.subr.mxu0 %v7063
  %10330 = vmatpush1.msra.mxu0 %v7062
  %10331 = vmatprep.subr.mxu0 %v7068
  %10332 = vmatpush1.msra.mxu0 %v7067
  %10333 = vmatprep.subr.mxu0 %v7073
  %10334 = vmatpush1.msra.mxu0 %v7072
  %10335 = vmatprep.subr.mxu0 %v7078
  %10336 = vmatpush1.msra.mxu0 %v7077
  %10337 = vmatprep.subr.mxu0 %v7083
  %10338 = vmatpush1.msra.mxu0 %v7082
  %10339 = vmatprep.subr.mxu0 %v7088
  %10340 = vmatpush1.msra.mxu0 %v7087
  %10341 = vmatprep.mubr.f32.mxu0 %v10117
  %10342 = vmatmul.mubr.f32.gmra.mrb[0].mxu0 %v10116
  %v10343 = vpop.f32.mrb[0].mxu0
  %v10344 = vadd.f32 %v10273, %v10343
  %v10345 = vpop.f32.mrb[0].mxu0
  %v10346 = vadd.f32 %v10275, %v10345
  %10347 = vdwg.mxu0
  %10348 = vmatprep.subr.mxu0 %v7238
  %10349 = vmatpush1.msra.mxu0 %v7237
  %10350 = vmatprep.subr.mxu0 %v7243
  %10351 = vmatpush1.msra.mxu0 %v7242
  %10352 = vmatprep.subr.mxu0 %v7248
  %10353 = vmatpush1.msra.mxu0 %v7247
  %10354 = vmatprep.subr.mxu0 %v7253
  %10355 = vmatpush1.msra.mxu0 %v7252
  %10356 = vmatprep.subr.mxu0 %v7258
  %10357 = vmatpush1.msra.mxu0 %v7257
  %10358 = vmatprep.subr.mxu0 %v7263
  %10359 = vmatpush1.msra.mxu0 %v7262
  %10360 = vmatprep.subr.mxu0 %v7268
  %10361 = vmatpush1.msra.mxu0 %v7267
  %10362 = vmatprep.subr.mxu0 %v7273
  %10363 = vmatpush1.msra.mxu0 %v7272
  %10364 = vmatprep.subr.mxu0 %v7423
  %10365 = vmatpush1.msra.mxu0 %v7422
  %10366 = vmatprep.subr.mxu0 %v7428
  %10367 = vmatpush1.msra.mxu0 %v7427
  %10368 = vmatprep.subr.mxu0 %v7433
  %10369 = vmatpush1.msra.mxu0 %v7432
  %10370 = vmatprep.subr.mxu0 %v7438
  %10371 = vmatpush1.msra.mxu0 %v7437
  %10372 = vmatprep.subr.mxu0 %v7443
  %10373 = vmatpush1.msra.mxu0 %v7442
  %10374 = vmatprep.subr.mxu0 %v7448
  %10375 = vmatpush1.msra.mxu0 %v7447
  %10376 = vmatprep.subr.mxu0 %v7453
  %10377 = vmatpush1.msra.mxu0 %v7452
  %10378 = vmatprep.subr.mxu0 %v7458
  %10379 = vmatpush1.msra.mxu0 %v7457
  %10380 = vmatprep.subr.mxu0 %v7607
  %10381 = vmatpush1.msra.mxu0 %v7606
  %10382 = vmatprep.subr.mxu0 %v7612
  %10383 = vmatpush1.msra.mxu0 %v7611
  %10384 = vmatprep.subr.mxu0 %v7617
  %10385 = vmatpush1.msra.mxu0 %v7616
  %10386 = vmatprep.subr.mxu0 %v7622
  %10387 = vmatpush1.msra.mxu0 %v7621
  %10388 = vmatprep.subr.mxu0 %v7627
  %10389 = vmatpush1.msra.mxu0 %v7626
  %10390 = vmatprep.subr.mxu0 %v7632
  %10391 = vmatpush1.msra.mxu0 %v7631
  %10392 = vmatprep.subr.mxu0 %v7637
  %10393 = vmatpush1.msra.mxu0 %v7636
  %10394 = vmatprep.subr.mxu0 %v7642
  %10395 = vmatpush1.msra.mxu0 %v7641
  %10396 = vmatprep.subr.mxu0 %v7816
  %10397 = vmatpush1.msra.mxu0 %v7815
  %10398 = vmatprep.subr.mxu0 %v7822
  %10399 = vmatpush1.msra.mxu0 %v7821
  %10400 = vmatprep.subr.mxu0 %v7828
  %10401 = vmatpush1.msra.mxu0 %v7827
  %10402 = vmatprep.subr.mxu0 %v7834
  %10403 = vmatpush1.msra.mxu0 %v7833
  %10404 = vmatprep.subr.mxu0 %v7840
  %10405 = vmatpush1.msra.mxu0 %v7839
  %10406 = vmatprep.subr.mxu0 %v7846
  %10407 = vmatpush1.msra.mxu0 %v7845
  %10408 = vmatprep.subr.mxu0 %v7852
  %10409 = vmatpush1.msra.mxu0 %v7851
  %10410 = vmatprep.subr.mxu0 %v7858
  %10411 = vmatpush1.msra.mxu0 %v7857
  %10412 = vmatprep.mubr.f32.mxu0 %v10119
  %10413 = vmatmul.mubr.f32.gmra.mrb[0].mxu0 %v10118
  %v10414 = vpop.f32.mrb[0].mxu0
  %v10415 = vadd.f32 %v10344, %v10414
  %v10416 = vpop.f32.mrb[0].mxu0
  %v10417 = vadd.f32 %v10346, %v10416
  %10418 = vdwg.mxu0
  %10419 = vmatprep.subr.mxu0 %v9249
  %10420 = vmatpush1.msra.mxu0 %v9248
  %10421 = vmatprep.subr.mxu0 %v9255
  %10422 = vmatpush1.msra.mxu0 %v9254
  %10423 = vmatprep.subr.mxu0 %v9261
  %10424 = vmatpush1.msra.mxu0 %v9260
  %10425 = vmatprep.subr.mxu0 %v9267
  %10426 = vmatpush1.msra.mxu0 %v9266
  %10427 = vmatprep.subr.mxu0 %v9273
  %10428 = vmatpush1.msra.mxu0 %v9272
  %10429 = vmatprep.subr.mxu0 %v9279
  %10430 = vmatpush1.msra.mxu0 %v9278
  %10431 = vmatprep.subr.mxu0 %v9285
  %10432 = vmatpush1.msra.mxu0 %v9284
  %10433 = vmatprep.subr.mxu0 %v9291
  %10434 = vmatpush1.msra.mxu0 %v9290
  %10435 = vmatprep.subr.mxu0 %v9297
  %10436 = vmatpush1.msra.mxu0 %v9296
  %10437 = vmatprep.subr.mxu0 %v9303
  %10438 = vmatpush1.msra.mxu0 %v9302
  %10439 = vmatprep.subr.mxu0 %v9309
  %10440 = vmatpush1.msra.mxu0 %v9308
  %10441 = vmatprep.subr.mxu0 %v9315
  %10442 = vmatpush1.msra.mxu0 %v9314
  %10443 = vmatprep.subr.mxu0 %v9321
  %10444 = vmatpush1.msra.mxu0 %v9320
  %10445 = vmatprep.subr.mxu0 %v9327
  %10446 = vmatpush1.msra.mxu0 %v9326
  %10447 = vmatprep.subr.mxu0 %v9333
  %10448 = vmatpush1.msra.mxu0 %v9332
  %10449 = vmatprep.subr.mxu0 %v9339
  %10450 = vmatpush1.msra.mxu0 %v9338
  %10451 = vmatprep.subr.mxu0 %v9345
  %10452 = vmatpush1.msra.mxu0 %v9344
  %10453 = vmatprep.subr.mxu0 %v9351
  %10454 = vmatpush1.msra.mxu0 %v9350
  %10455 = vmatprep.subr.mxu0 %v9357
  %10456 = vmatpush1.msra.mxu0 %v9356
  %10457 = vmatprep.subr.mxu0 %v9363
  %10458 = vmatpush1.msra.mxu0 %v9362
  %10459 = vmatprep.subr.mxu0 %v9369
  %10460 = vmatpush1.msra.mxu0 %v9368
  %10461 = vmatprep.subr.mxu0 %v9375
  %10462 = vmatpush1.msra.mxu0 %v9374
  %10463 = vmatprep.subr.mxu0 %v9381
  %10464 = vmatpush1.msra.mxu0 %v9380
  %10465 = vmatprep.subr.mxu0 %v9387
  %10466 = vmatpush1.msra.mxu0 %v9386
  %10467 = vmatprep.subr.mxu0 %v9393
  %10468 = vmatpush1.msra.mxu0 %v9392
  %10469 = vmatprep.subr.mxu0 %v9399
  %10470 = vmatpush1.msra.mxu0 %v9398
  %10471 = vmatprep.subr.mxu0 %v9405
  %10472 = vmatpush1.msra.mxu0 %v9404
  %10473 = vmatprep.subr.mxu0 %v9411
  %10474 = vmatpush1.msra.mxu0 %v9410
  %10475 = vmatprep.subr.mxu0 %v9417
  %10476 = vmatpush1.msra.mxu0 %v9416
  %10477 = vmatprep.subr.mxu0 %v9423
  %10478 = vmatpush1.msra.mxu0 %v9422
  %10479 = vmatprep.subr.mxu0 %v9429
  %10480 = vmatpush1.msra.mxu0 %v9428
  %10481 = vmatprep.subr.mxu0 %v9435
  %10482 = vmatpush1.msra.mxu0 %v9434
  %10483 = vmatprep.mubr.f32.mxu0 %v10121
  %10484 = vmatmul.mubr.f32.gmra.mrb[0].mxu0 %v10120
  %v10485 = vpop.f32.mrb[0].mxu0
  %v10486 = vadd.f32 %v10415, %v10485
  %v10487 = vpop.f32.mrb[0].mxu0
  %v10488 = vadd.f32 %v10417, %v10487
  %10489 = vdwg.mxu0
  %10490 = vmatprep.subr.mxu0 %v9441
  %10491 = vmatpush1.msra.mxu0 %v9440
  %10492 = vmatprep.subr.mxu0 %v9447
  %10493 = vmatpush1.msra.mxu0 %v9446
  %10494 = vmatprep.subr.mxu0 %v9453
  %10495 = vmatpush1.msra.mxu0 %v9452
  %10496 = vmatprep.subr.mxu0 %v9459
  %10497 = vmatpush1.msra.mxu0 %v9458
  %10498 = vmatprep.subr.mxu0 %v9465
  %10499 = vmatpush1.msra.mxu0 %v9464
  %10500 = vmatprep.subr.mxu0 %v9471
  %10501 = vmatpush1.msra.mxu0 %v9470
  %10502 = vmatprep.subr.mxu0 %v9477
  %10503 = vmatpush1.msra.mxu0 %v9476
  %10504 = vmatprep.subr.mxu0 %v9483
  %10505 = vmatpush1.msra.mxu0 %v9482
  %10506 = vmatprep.subr.mxu0 %v9489
  %10507 = vmatpush1.msra.mxu0 %v9488
  %10508 = vmatprep.subr.mxu0 %v9495
  %10509 = vmatpush1.msra.mxu0 %v9494
  %10510 = vmatprep.subr.mxu0 %v9501
  %10511 = vmatpush1.msra.mxu0 %v9500
  %10512 = vmatprep.subr.mxu0 %v9507
  %10513 = vmatpush1.msra.mxu0 %v9506
  %10514 = vmatprep.subr.mxu0 %v9513
  %10515 = vmatpush1.msra.mxu0 %v9512
  %10516 = vmatprep.subr.mxu0 %v9519
  %10517 = vmatpush1.msra.mxu0 %v9518
  %10518 = vmatprep.subr.mxu0 %v9525
  %10519 = vmatpush1.msra.mxu0 %v9524
  %10520 = vmatprep.subr.mxu0 %v9531
  %10521 = vmatpush1.msra.mxu0 %v9530
  %10522 = vmatprep.subr.mxu0 %v9537
  %10523 = vmatpush1.msra.mxu0 %v9536
  %10524 = vmatprep.subr.mxu0 %v9543
  %10525 = vmatpush1.msra.mxu0 %v9542
  %10526 = vmatprep.subr.mxu0 %v9549
  %10527 = vmatpush1.msra.mxu0 %v9548
  %10528 = vmatprep.subr.mxu0 %v9555
  %10529 = vmatpush1.msra.mxu0 %v9554
  %10530 = vmatprep.subr.mxu0 %v9561
  %10531 = vmatpush1.msra.mxu0 %v9560
  %10532 = vmatprep.subr.mxu0 %v9567
  %10533 = vmatpush1.msra.mxu0 %v9566
  %10534 = vmatprep.subr.mxu0 %v9573
  %10535 = vmatpush1.msra.mxu0 %v9572
  %10536 = vmatprep.subr.mxu0 %v9579
  %10537 = vmatpush1.msra.mxu0 %v9578
  %10538 = vmatprep.subr.mxu0 %v9585
  %10539 = vmatpush1.msra.mxu0 %v9584
  %10540 = vmatprep.subr.mxu0 %v9591
  %10541 = vmatpush1.msra.mxu0 %v9590
  %10542 = vmatprep.subr.mxu0 %v9597
  %10543 = vmatpush1.msra.mxu0 %v9596
  %10544 = vmatprep.subr.mxu0 %v9603
  %10545 = vmatpush1.msra.mxu0 %v9602
  %10546 = vmatprep.subr.mxu0 %v9609
  %10547 = vmatpush1.msra.mxu0 %v9608
  %10548 = vmatprep.subr.mxu0 %v9615
  %10549 = vmatpush1.msra.mxu0 %v9614
  %10550 = vmatprep.subr.mxu0 %v9621
  %10551 = vmatpush1.msra.mxu0 %v9620
  %10552 = vmatprep.subr.mxu0 %v9627
  %10553 = vmatpush1.msra.mxu0 %v9626
  %10554 = vmatprep.mubr.f32.mxu0 %v10123
  %10555 = vmatmul.mubr.f32.gmra.mrb[0].mxu0 %v10122
  %v10556 = vpop.f32.mrb[0].mxu0
  %v10557 = vadd.f32 %v10486, %v10556
  %v10558 = vpop.f32.mrb[0].mxu0
  %v10559 = vadd.f32 %v10488, %v10558
  %10560 = vdwg.mxu0
  %10561 = vmatprep.subr.mxu0 %v9633
  %10562 = vmatpush1.msra.mxu0 %v9632
  %10563 = vmatprep.subr.mxu0 %v9639
  %10564 = vmatpush1.msra.mxu0 %v9638
  %10565 = vmatprep.subr.mxu0 %v9645
  %10566 = vmatpush1.msra.mxu0 %v9644
  %10567 = vmatprep.subr.mxu0 %v9651
  %10568 = vmatpush1.msra.mxu0 %v9650
  %10569 = vmatprep.subr.mxu0 %v9657
  %10570 = vmatpush1.msra.mxu0 %v9656
  %10571 = vmatprep.subr.mxu0 %v9663
  %10572 = vmatpush1.msra.mxu0 %v9662
  %10573 = vmatprep.subr.mxu0 %v9669
  %10574 = vmatpush1.msra.mxu0 %v9668
  %10575 = vmatprep.subr.mxu0 %v9675
  %10576 = vmatpush1.msra.mxu0 %v9674
  %10577 = vmatprep.subr.mxu0 0.0
  %10578 = vmatpush1.msra.mxu0 0.0
  %10579 = vmatprep.subr.mxu0 0.0
  %10580 = vmatpush1.msra.mxu0 0.0
  %10581 = vmatprep.subr.mxu0 0.0
  %10582 = vmatpush1.msra.mxu0 0.0
  %10583 = vmatprep.subr.mxu0 0.0
  %10584 = vmatpush1.msra.mxu0 0.0
  %10585 = vmatprep.subr.mxu0 0.0
  %10586 = vmatpush1.msra.mxu0 0.0
  %10587 = vmatprep.subr.mxu0 0.0
  %10588 = vmatpush1.msra.mxu0 0.0
  %10589 = vmatprep.subr.mxu0 0.0
  %10590 = vmatpush1.msra.mxu0 0.0
  %10591 = vmatprep.subr.mxu0 0.0
  %10592 = vmatpush1.msra.mxu0 0.0
  %10593 = vmatprep.subr.mxu0 0.0
  %10594 = vmatpush1.msra.mxu0 0.0
  %10595 = vmatprep.subr.mxu0 0.0
  %10596 = vmatpush1.msra.mxu0 0.0
  %10597 = vmatprep.subr.mxu0 0.0
  %10598 = vmatpush1.msra.mxu0 0.0
  %10599 = vmatprep.subr.mxu0 0.0
  %10600 = vmatpush1.msra.mxu0 0.0
  %10601 = vmatprep.subr.mxu0 0.0
  %10602 = vmatpush1.msra.mxu0 0.0
  %10603 = vmatprep.subr.mxu0 0.0
  %10604 = vmatpush1.msra.mxu0 0.0
  %10605 = vmatprep.subr.mxu0 0.0
  %10606 = vmatpush1.msra.mxu0 0.0
  %10607 = vmatprep.subr.mxu0 0.0
  %10608 = vmatpush1.msra.mxu0 0.0
  %10609 = vmatprep.subr.mxu0 0.0
  %10610 = vmatpush1.msra.mxu0 0.0
  %10611 = vmatprep.subr.mxu0 0.0
  %10612 = vmatpush1.msra.mxu0 0.0
  %10613 = vmatprep.subr.mxu0 0.0
  %10614 = vmatpush1.msra.mxu0 0.0
  %10615 = vmatprep.subr.mxu0 0.0
  %10616 = vmatpush1.msra.mxu0 0.0
  %10617 = vmatprep.subr.mxu0 0.0
  %10618 = vmatpush1.msra.mxu0 0.0
  %10619 = vmatprep.subr.mxu0 0.0
  %10620 = vmatpush1.msra.mxu0 0.0
  %10621 = vmatprep.subr.mxu0 0.0
  %10622 = vmatpush1.msra.mxu0 0.0
  %10623 = vmatprep.subr.mxu0 0.0
  %10624 = vmatpush1.msra.mxu0 0.0
  %10625 = vmatprep.mubr.f32.mxu0 0.0
  %10626 = vmatmul.mubr.f32.gmra.mrb[0].mxu0 %v10133
  %v10627 = vpop.f32.mrb[0].mxu0
  %v10628 = vadd.f32 %v10557, %v10627
  %v10629 = vpop.f32.mrb[0].mxu0
  %v10630 = vadd.f32 %v10559, %v10629
  %10631 = vdwg.mxu0
  %10632 = vmatprep.subr.mxu0 %v5014
  %10633 = vmatpush1.msra.mxu0 %v5013
  %10634 = vmatprep.subr.mxu0 %v5020
  %10635 = vmatpush1.msra.mxu0 %v5019
  %10636 = vmatprep.subr.mxu0 %v5026
  %10637 = vmatpush1.msra.mxu0 %v5025
  %10638 = vmatprep.subr.mxu0 %v5032
  %10639 = vmatpush1.msra.mxu0 %v5031
  %10640 = vmatprep.subr.mxu0 %v5038
  %10641 = vmatpush1.msra.mxu0 %v5037
  %10642 = vmatprep.subr.mxu0 %v5044
  %10643 = vmatpush1.msra.mxu0 %v5043
  %10644 = vmatprep.subr.mxu0 %v5050
  %10645 = vmatpush1.msra.mxu0 %v5049
  %10646 = vmatprep.subr.mxu0 %v5056
  %10647 = vmatpush1.msra.mxu0 %v5055
  %10648 = vmatprep.subr.mxu0 %v5214
  %10649 = vmatpush1.msra.mxu0 %v5213
  %10650 = vmatprep.subr.mxu0 %v5219
  %10651 = vmatpush1.msra.mxu0 %v5218
  %10652 = vmatprep.subr.mxu0 %v5224
  %10653 = vmatpush1.msra.mxu0 %v5223
  %10654 = vmatprep.subr.mxu0 %v5229
  %10655 = vmatpush1.msra.mxu0 %v5228
  %10656 = vmatprep.subr.mxu0 %v5234
  %10657 = vmatpush1.msra.mxu0 %v5233
  %10658 = vmatprep.subr.mxu0 %v5239
  %10659 = vmatpush1.msra.mxu0 %v5238
  %10660 = vmatprep.subr.mxu0 %v5244
  %10661 = vmatpush1.msra.mxu0 %v5243
  %10662 = vmatprep.subr.mxu0 %v5249
  %10663 = vmatpush1.msra.mxu0 %v5248
  %10664 = vmatprep.subr.mxu0 %v5398
  %10665 = vmatpush1.msra.mxu0 %v5397
  %10666 = vmatprep.subr.mxu0 %v5403
  %10667 = vmatpush1.msra.mxu0 %v5402
  %10668 = vmatprep.subr.mxu0 %v5408
  %10669 = vmatpush1.msra.mxu0 %v5407
  %10670 = vmatprep.subr.mxu0 %v5413
  %10671 = vmatpush1.msra.mxu0 %v5412
  %10672 = vmatprep.subr.mxu0 %v5418
  %10673 = vmatpush1.msra.mxu0 %v5417
  %10674 = vmatprep.subr.mxu0 %v5423
  %10675 = vmatpush1.msra.mxu0 %v5422
  %10676 = vmatprep.subr.mxu0 %v5428
  %10677 = vmatpush1.msra.mxu0 %v5427
  %10678 = vmatprep.subr.mxu0 %v5433
  %10679 = vmatpush1.msra.mxu0 %v5432
  %10680 = vmatprep.subr.mxu0 %v5582
  %10681 = vmatpush1.msra.mxu0 %v5581
  %10682 = vmatprep.subr.mxu0 %v5587
  %10683 = vmatpush1.msra.mxu0 %v5586
  %10684 = vmatprep.subr.mxu0 %v5592
  %10685 = vmatpush1.msra.mxu0 %v5591
  %10686 = vmatprep.subr.mxu0 %v5597
  %10687 = vmatpush1.msra.mxu0 %v5596
  %10688 = vmatprep.subr.mxu0 %v5602
  %10689 = vmatpush1.msra.mxu0 %v5601
  %10690 = vmatprep.subr.mxu0 %v5607
  %10691 = vmatpush1.msra.mxu0 %v5606
  %10692 = vmatprep.subr.mxu0 %v5612
  %10693 = vmatpush1.msra.mxu0 %v5611
  %10694 = vmatprep.subr.mxu0 %v5617
  %10695 = vmatpush1.msra.mxu0 %v5616
  %10696 = vmatprep.mubr.f32.mxu0 %v10113
  %10697 = vmatmul.mubr.f32.gmra.mrb[0].mxu0 %v10112
  %v10698 = vpop.f32.mrb[0].mxu0
  %v10699 = vadd.f32 %v10129, %v10698
  %v10700 = vpop.f32.mrb[0].mxu0
  %v10701 = vadd.f32 %v10129, %v10700
  %10702 = vdwg.mxu0
  %10703 = vmatprep.subr.mxu0 %v5766
  %10704 = vmatpush1.msra.mxu0 %v5765
  %10705 = vmatprep.subr.mxu0 %v5771
  %10706 = vmatpush1.msra.mxu0 %v5770
  %10707 = vmatprep.subr.mxu0 %v5776
  %10708 = vmatpush1.msra.mxu0 %v5775
  %10709 = vmatprep.subr.mxu0 %v5781
  %10710 = vmatpush1.msra.mxu0 %v5780
  %10711 = vmatprep.subr.mxu0 %v5786
  %10712 = vmatpush1.msra.mxu0 %v5785
  %10713 = vmatprep.subr.mxu0 %v5791
  %10714 = vmatpush1.msra.mxu0 %v5790
  %10715 = vmatprep.subr.mxu0 %v5796
  %10716 = vmatpush1.msra.mxu0 %v5795
  %10717 = vmatprep.subr.mxu0 %v5801
  %10718 = vmatpush1.msra.mxu0 %v5800
  %10719 = vmatprep.subr.mxu0 %v5950
  %10720 = vmatpush1.msra.mxu0 %v5949
  %10721 = vmatprep.subr.mxu0 %v5955
  %10722 = vmatpush1.msra.mxu0 %v5954
  %10723 = vmatprep.subr.mxu0 %v5960
  %10724 = vmatpush1.msra.mxu0 %v5959
  %10725 = vmatprep.subr.mxu0 %v5965
  %10726 = vmatpush1.msra.mxu0 %v5964
  %10727 = vmatprep.subr.mxu0 %v5970
  %10728 = vmatpush1.msra.mxu0 %v5969
  %10729 = vmatprep.subr.mxu0 %v5975
  %10730 = vmatpush1.msra.mxu0 %v5974
  %10731 = vmatprep.subr.mxu0 %v5980
  %10732 = vmatpush1.msra.mxu0 %v5979
  %10733 = vmatprep.subr.mxu0 %v5985
  %10734 = vmatpush1.msra.mxu0 %v5984
  %10735 = vmatprep.subr.mxu0 %v6134
  %10736 = vmatpush1.msra.mxu0 %v6133
  %10737 = vmatprep.subr.mxu0 %v6139
  %10738 = vmatpush1.msra.mxu0 %v6138
  %10739 = vmatprep.subr.mxu0 %v6144
  %10740 = vmatpush1.msra.mxu0 %v6143
  %10741 = vmatprep.subr.mxu0 %v6149
  %10742 = vmatpush1.msra.mxu0 %v6148
  %10743 = vmatprep.subr.mxu0 %v6154
  %10744 = vmatpush1.msra.mxu0 %v6153
  %10745 = vmatprep.subr.mxu0 %v6159
  %10746 = vmatpush1.msra.mxu0 %v6158
  %10747 = vmatprep.subr.mxu0 %v6164
  %10748 = vmatpush1.msra.mxu0 %v6163
  %10749 = vmatprep.subr.mxu0 %v6169
  %10750 = vmatpush1.msra.mxu0 %v6168
  %10751 = vmatprep.subr.mxu0 %v6318
  %10752 = vmatpush1.msra.mxu0 %v6317
  %10753 = vmatprep.subr.mxu0 %v6323
  %10754 = vmatpush1.msra.mxu0 %v6322
  %10755 = vmatprep.subr.mxu0 %v6328
  %10756 = vmatpush1.msra.mxu0 %v6327
  %10757 = vmatprep.subr.mxu0 %v6333
  %10758 = vmatpush1.msra.mxu0 %v6332
  %10759 = vmatprep.subr.mxu0 %v6338
  %10760 = vmatpush1.msra.mxu0 %v6337
  %10761 = vmatprep.subr.mxu0 %v6343
  %10762 = vmatpush1.msra.mxu0 %v6342
  %10763 = vmatprep.subr.mxu0 %v6348
  %10764 = vmatpush1.msra.mxu0 %v6347
  %10765 = vmatprep.subr.mxu0 %v6353
  %10766 = vmatpush1.msra.mxu0 %v6352
  %10767 = vmatprep.mubr.f32.mxu0 %v10115
  %10768 = vmatmul.mubr.f32.gmra.mrb[0].mxu0 %v10114
  %v10769 = vpop.f32.mrb[0].mxu0
  %v10770 = vadd.f32 %v10699, %v10769
  %v10771 = vpop.f32.mrb[0].mxu0
  %v10772 = vadd.f32 %v10701, %v10771
  %10773 = vdwg.mxu0
  %10774 = vmatprep.subr.mxu0 %v6502
  %10775 = vmatpush1.msra.mxu0 %v6501
  %10776 = vmatprep.subr.mxu0 %v6507
  %10777 = vmatpush1.msra.mxu0 %v6506
  %10778 = vmatprep.subr.mxu0 %v6512
  %10779 = vmatpush1.msra.mxu0 %v6511
  %10780 = vmatprep.subr.mxu0 %v6517
  %10781 = vmatpush1.msra.mxu0 %v6516
  %10782 = vmatprep.subr.mxu0 %v6522
  %10783 = vmatpush1.msra.mxu0 %v6521
  %10784 = vmatprep.subr.mxu0 %v6527
  %10785 = vmatpush1.msra.mxu0 %v6526
  %10786 = vmatprep.subr.mxu0 %v6532
  %10787 = vmatpush1.msra.mxu0 %v6531
  %10788 = vmatprep.subr.mxu0 %v6537
  %10789 = vmatpush1.msra.mxu0 %v6536
  %10790 = vmatprep.subr.mxu0 %v6686
  %10791 = vmatpush1.msra.mxu0 %v6685
  %10792 = vmatprep.subr.mxu0 %v6691
  %10793 = vmatpush1.msra.mxu0 %v6690
  %10794 = vmatprep.subr.mxu0 %v6696
  %10795 = vmatpush1.msra.mxu0 %v6695
  %10796 = vmatprep.subr.mxu0 %v6701
  %10797 = vmatpush1.msra.mxu0 %v6700
  %10798 = vmatprep.subr.mxu0 %v6706
  %10799 = vmatpush1.msra.mxu0 %v6705
  %10800 = vmatprep.subr.mxu0 %v6711
  %10801 = vmatpush1.msra.mxu0 %v6710
  %10802 = vmatprep.subr.mxu0 %v6716
  %10803 = vmatpush1.msra.mxu0 %v6715
  %10804 = vmatprep.subr.mxu0 %v6721
  %10805 = vmatpush1.msra.mxu0 %v6720
  %10806 = vmatprep.subr.mxu0 %v6870
  %10807 = vmatpush1.msra.mxu0 %v6869
  %10808 = vmatprep.subr.mxu0 %v6875
  %10809 = vmatpush1.msra.mxu0 %v6874
  %10810 = vmatprep.subr.mxu0 %v6880
  %10811 = vmatpush1.msra.mxu0 %v6879
  %10812 = vmatprep.subr.mxu0 %v6885
  %10813 = vmatpush1.msra.mxu0 %v6884
  %10814 = vmatprep.subr.mxu0 %v6890
  %10815 = vmatpush1.msra.mxu0 %v6889
  %10816 = vmatprep.subr.mxu0 %v6895
  %10817 = vmatpush1.msra.mxu0 %v6894
  %10818 = vmatprep.subr.mxu0 %v6900
  %10819 = vmatpush1.msra.mxu0 %v6899
  %10820 = vmatprep.subr.mxu0 %v6905
  %10821 = vmatpush1.msra.mxu0 %v6904
  %10822 = vmatprep.subr.mxu0 %v7055
  %10823 = vmatpush1.msra.mxu0 %v7054
  %10824 = vmatprep.subr.mxu0 %v7060
  %10825 = vmatpush1.msra.mxu0 %v7059
  %10826 = vmatprep.subr.mxu0 %v7065
  %10827 = vmatpush1.msra.mxu0 %v7064
  %10828 = vmatprep.subr.mxu0 %v7070
  %10829 = vmatpush1.msra.mxu0 %v7069
  %10830 = vmatprep.subr.mxu0 %v7075
  %10831 = vmatpush1.msra.mxu0 %v7074
  %10832 = vmatprep.subr.mxu0 %v7080
  %10833 = vmatpush1.msra.mxu0 %v7079
  %10834 = vmatprep.subr.mxu0 %v7085
  %10835 = vmatpush1.msra.mxu0 %v7084
  %10836 = vmatprep.subr.mxu0 %v7090
  %10837 = vmatpush1.msra.mxu0 %v7089
  %10838 = vmatprep.mubr.f32.mxu0 %v10117
  %10839 = vmatmul.mubr.f32.gmra.mrb[0].mxu0 %v10116
  %v10840 = vpop.f32.mrb[0].mxu0
  %v10841 = vadd.f32 %v10770, %v10840
  %v10842 = vpop.f32.mrb[0].mxu0
  %v10843 = vadd.f32 %v10772, %v10842
  %10844 = vdwg.mxu0
  %10845 = vmatprep.subr.mxu0 %v7240
  %10846 = vmatpush1.msra.mxu0 %v7239
  %10847 = vmatprep.subr.mxu0 %v7245
  %10848 = vmatpush1.msra.mxu0 %v7244
  %10849 = vmatprep.subr.mxu0 %v7250
  %10850 = vmatpush1.msra.mxu0 %v7249
  %10851 = vmatprep.subr.mxu0 %v7255
  %10852 = vmatpush1.msra.mxu0 %v7254
  %10853 = vmatprep.subr.mxu0 %v7260
  %10854 = vmatpush1.msra.mxu0 %v7259
  %10855 = vmatprep.subr.mxu0 %v7265
  %10856 = vmatpush1.msra.mxu0 %v7264
  %10857 = vmatprep.subr.mxu0 %v7270
  %10858 = vmatpush1.msra.mxu0 %v7269
  %10859 = vmatprep.subr.mxu0 %v7275
  %10860 = vmatpush1.msra.mxu0 %v7274
  %10861 = vmatprep.subr.mxu0 %v7425
  %10862 = vmatpush1.msra.mxu0 %v7424
  %10863 = vmatprep.subr.mxu0 %v7430
  %10864 = vmatpush1.msra.mxu0 %v7429
  %10865 = vmatprep.subr.mxu0 %v7435
  %10866 = vmatpush1.msra.mxu0 %v7434
  %10867 = vmatprep.subr.mxu0 %v7440
  %10868 = vmatpush1.msra.mxu0 %v7439
  %10869 = vmatprep.subr.mxu0 %v7445
  %10870 = vmatpush1.msra.mxu0 %v7444
  %10871 = vmatprep.subr.mxu0 %v7450
  %10872 = vmatpush1.msra.mxu0 %v7449
  %10873 = vmatprep.subr.mxu0 %v7455
  %10874 = vmatpush1.msra.mxu0 %v7454
  %10875 = vmatprep.subr.mxu0 %v7460
  %10876 = vmatpush1.msra.mxu0 %v7459
  %10877 = vmatprep.subr.mxu0 %v7609
  %10878 = vmatpush1.msra.mxu0 %v7608
  %10879 = vmatprep.subr.mxu0 %v7614
  %10880 = vmatpush1.msra.mxu0 %v7613
  %10881 = vmatprep.subr.mxu0 %v7619
  %10882 = vmatpush1.msra.mxu0 %v7618
  %10883 = vmatprep.subr.mxu0 %v7624
  %10884 = vmatpush1.msra.mxu0 %v7623
  %10885 = vmatprep.subr.mxu0 %v7629
  %10886 = vmatpush1.msra.mxu0 %v7628
  %10887 = vmatprep.subr.mxu0 %v7634
  %10888 = vmatpush1.msra.mxu0 %v7633
  %10889 = vmatprep.subr.mxu0 %v7639
  %10890 = vmatpush1.msra.mxu0 %v7638
  %10891 = vmatprep.subr.mxu0 %v7644
  %10892 = vmatpush1.msra.mxu0 %v7643
  %10893 = vmatprep.subr.mxu0 %v7818
  %10894 = vmatpush1.msra.mxu0 %v7817
  %10895 = vmatprep.subr.mxu0 %v7824
  %10896 = vmatpush1.msra.mxu0 %v7823
  %10897 = vmatprep.subr.mxu0 %v7830
  %10898 = vmatpush1.msra.mxu0 %v7829
  %10899 = vmatprep.subr.mxu0 %v7836
  %10900 = vmatpush1.msra.mxu0 %v7835
  %10901 = vmatprep.subr.mxu0 %v7842
  %10902 = vmatpush1.msra.mxu0 %v7841
  %10903 = vmatprep.subr.mxu0 %v7848
  %10904 = vmatpush1.msra.mxu0 %v7847
  %10905 = vmatprep.subr.mxu0 %v7854
  %10906 = vmatpush1.msra.mxu0 %v7853
  %10907 = vmatprep.subr.mxu0 %v7860
  %10908 = vmatpush1.msra.mxu0 %v7859
  %10909 = vmatprep.mubr.f32.mxu0 %v10119
  %10910 = vmatmul.mubr.f32.gmra.mrb[0].mxu0 %v10118
  %v10911 = vpop.f32.mrb[0].mxu0
  %v10912 = vadd.f32 %v10841, %v10911
  %v10913 = vpop.f32.mrb[0].mxu0
  %v10914 = vadd.f32 %v10843, %v10913
  %10915 = vdwg.mxu0
  %10916 = vmatprep.subr.mxu0 %v9251
  %10917 = vmatpush1.msra.mxu0 %v9250
  %10918 = vmatprep.subr.mxu0 %v9257
  %10919 = vmatpush1.msra.mxu0 %v9256
  %10920 = vmatprep.subr.mxu0 %v9263
  %10921 = vmatpush1.msra.mxu0 %v9262
  %10922 = vmatprep.subr.mxu0 %v9269
  %10923 = vmatpush1.msra.mxu0 %v9268
  %10924 = vmatprep.subr.mxu0 %v9275
  %10925 = vmatpush1.msra.mxu0 %v9274
  %10926 = vmatprep.subr.mxu0 %v9281
  %10927 = vmatpush1.msra.mxu0 %v9280
  %10928 = vmatprep.subr.mxu0 %v9287
  %10929 = vmatpush1.msra.mxu0 %v9286
  %10930 = vmatprep.subr.mxu0 %v9293
  %10931 = vmatpush1.msra.mxu0 %v9292
  %10932 = vmatprep.subr.mxu0 %v9299
  %10933 = vmatpush1.msra.mxu0 %v9298
  %10934 = vmatprep.subr.mxu0 %v9305
  %10935 = vmatpush1.msra.mxu0 %v9304
  %10936 = vmatprep.subr.mxu0 %v9311
  %10937 = vmatpush1.msra.mxu0 %v9310
  %10938 = vmatprep.subr.mxu0 %v9317
  %10939 = vmatpush1.msra.mxu0 %v9316
  %10940 = vmatprep.subr.mxu0 %v9323
  %10941 = vmatpush1.msra.mxu0 %v9322
  %10942 = vmatprep.subr.mxu0 %v9329
  %10943 = vmatpush1.msra.mxu0 %v9328
  %10944 = vmatprep.subr.mxu0 %v9335
  %10945 = vmatpush1.msra.mxu0 %v9334
  %10946 = vmatprep.subr.mxu0 %v9341
  %10947 = vmatpush1.msra.mxu0 %v9340
  %10948 = vmatprep.subr.mxu0 %v9347
  %10949 = vmatpush1.msra.mxu0 %v9346
  %10950 = vmatprep.subr.mxu0 %v9353
  %10951 = vmatpush1.msra.mxu0 %v9352
  %10952 = vmatprep.subr.mxu0 %v9359
  %10953 = vmatpush1.msra.mxu0 %v9358
  %10954 = vmatprep.subr.mxu0 %v9365
  %10955 = vmatpush1.msra.mxu0 %v9364
  %10956 = vmatprep.subr.mxu0 %v9371
  %10957 = vmatpush1.msra.mxu0 %v9370
  %10958 = vmatprep.subr.mxu0 %v9377
  %10959 = vmatpush1.msra.mxu0 %v9376
  %10960 = vmatprep.subr.mxu0 %v9383
  %10961 = vmatpush1.msra.mxu0 %v9382
  %10962 = vmatprep.subr.mxu0 %v9389
  %10963 = vmatpush1.msra.mxu0 %v9388
  %10964 = vmatprep.subr.mxu0 %v9395
  %10965 = vmatpush1.msra.mxu0 %v9394
  %10966 = vmatprep.subr.mxu0 %v9401
  %10967 = vmatpush1.msra.mxu0 %v9400
  %10968 = vmatprep.subr.mxu0 %v9407
  %10969 = vmatpush1.msra.mxu0 %v9406
  %10970 = vmatprep.subr.mxu0 %v9413
  %10971 = vmatpush1.msra.mxu0 %v9412
  %10972 = vmatprep.subr.mxu0 %v9419
  %10973 = vmatpush1.msra.mxu0 %v9418
  %10974 = vmatprep.subr.mxu0 %v9425
  %10975 = vmatpush1.msra.mxu0 %v9424
  %10976 = vmatprep.subr.mxu0 %v9431
  %10977 = vmatpush1.msra.mxu0 %v9430
  %10978 = vmatprep.subr.mxu0 %v9437
  %10979 = vmatpush1.msra.mxu0 %v9436
  %10980 = vmatprep.mubr.f32.mxu0 %v10121
  %10981 = vmatmul.mubr.f32.gmra.mrb[0].mxu0 %v10120
  %v10982 = vpop.f32.mrb[0].mxu0
  %v10983 = vadd.f32 %v10912, %v10982
  %v10984 = vpop.f32.mrb[0].mxu0
  %v10985 = vadd.f32 %v10914, %v10984
  %10986 = vdwg.mxu0
  %10987 = vmatprep.subr.mxu0 %v9443
  %10988 = vmatpush1.msra.mxu0 %v9442
  %10989 = vmatprep.subr.mxu0 %v9449
  %10990 = vmatpush1.msra.mxu0 %v9448
  %10991 = vmatprep.subr.mxu0 %v9455
  %10992 = vmatpush1.msra.mxu0 %v9454
  %10993 = vmatprep.subr.mxu0 %v9461
  %10994 = vmatpush1.msra.mxu0 %v9460
  %10995 = vmatprep.subr.mxu0 %v9467
  %10996 = vmatpush1.msra.mxu0 %v9466
  %10997 = vmatprep.subr.mxu0 %v9473
  %10998 = vmatpush1.msra.mxu0 %v9472
  %10999 = vmatprep.subr.mxu0 %v9479
  %11000 = vmatpush1.msra.mxu0 %v9478
  %11001 = vmatprep.subr.mxu0 %v9485
  %11002 = vmatpush1.msra.mxu0 %v9484
  %11003 = vmatprep.subr.mxu0 %v9491
  %11004 = vmatpush1.msra.mxu0 %v9490
  %11005 = vmatprep.subr.mxu0 %v9497
  %11006 = vmatpush1.msra.mxu0 %v9496
  %11007 = vmatprep.subr.mxu0 %v9503
  %11008 = vmatpush1.msra.mxu0 %v9502
  %11009 = vmatprep.subr.mxu0 %v9509
  %11010 = vmatpush1.msra.mxu0 %v9508
  %11011 = vmatprep.subr.mxu0 %v9515
  %11012 = vmatpush1.msra.mxu0 %v9514
  %11013 = vmatprep.subr.mxu0 %v9521
  %11014 = vmatpush1.msra.mxu0 %v9520
  %11015 = vmatprep.subr.mxu0 %v9527
  %11016 = vmatpush1.msra.mxu0 %v9526
  %11017 = vmatprep.subr.mxu0 %v9533
  %11018 = vmatpush1.msra.mxu0 %v9532
  %11019 = vmatprep.subr.mxu0 %v9539
  %11020 = vmatpush1.msra.mxu0 %v9538
  %11021 = vmatprep.subr.mxu0 %v9545
  %11022 = vmatpush1.msra.mxu0 %v9544
  %11023 = vmatprep.subr.mxu0 %v9551
  %11024 = vmatpush1.msra.mxu0 %v9550
  %11025 = vmatprep.subr.mxu0 %v9557
  %11026 = vmatpush1.msra.mxu0 %v9556
  %11027 = vmatprep.subr.mxu0 %v9563
  %11028 = vmatpush1.msra.mxu0 %v9562
  %11029 = vmatprep.subr.mxu0 %v9569
  %11030 = vmatpush1.msra.mxu0 %v9568
  %11031 = vmatprep.subr.mxu0 %v9575
  %11032 = vmatpush1.msra.mxu0 %v9574
  %11033 = vmatprep.subr.mxu0 %v9581
  %11034 = vmatpush1.msra.mxu0 %v9580
  %11035 = vmatprep.subr.mxu0 %v9587
  %11036 = vmatpush1.msra.mxu0 %v9586
  %11037 = vmatprep.subr.mxu0 %v9593
  %11038 = vmatpush1.msra.mxu0 %v9592
  %11039 = vmatprep.subr.mxu0 %v9599
  %11040 = vmatpush1.msra.mxu0 %v9598
  %11041 = vmatprep.subr.mxu0 %v9605
  %11042 = vmatpush1.msra.mxu0 %v9604
  %11043 = vmatprep.subr.mxu0 %v9611
  %11044 = vmatpush1.msra.mxu0 %v9610
  %11045 = vmatprep.subr.mxu0 %v9617
  %11046 = vmatpush1.msra.mxu0 %v9616
  %11047 = vmatprep.subr.mxu0 %v9623
  %11048 = vmatpush1.msra.mxu0 %v9622
  %11049 = vmatprep.subr.mxu0 %v9629
  %11050 = vmatpush1.msra.mxu0 %v9628
  %11051 = vmatprep.mubr.f32.mxu0 %v10123
  %11052 = vmatmul.mubr.f32.gmra.mrb[0].mxu0 %v10122
  %v11053 = vpop.f32.mrb[0].mxu0
  %v11054 = vadd.f32 %v10983, %v11053
  %v11055 = vpop.f32.mrb[0].mxu0
  %v11056 = vadd.f32 %v10985, %v11055
  %11057 = vdwg.mxu0
  %11058 = vmatprep.subr.mxu0 %v9635
  %11059 = vmatpush1.msra.mxu0 %v9634
  %11060 = vmatprep.subr.mxu0 %v9641
  %11061 = vmatpush1.msra.mxu0 %v9640
  %11062 = vmatprep.subr.mxu0 %v9647
  %11063 = vmatpush1.msra.mxu0 %v9646
  %11064 = vmatprep.subr.mxu0 %v9653
  %11065 = vmatpush1.msra.mxu0 %v9652
  %11066 = vmatprep.subr.mxu0 %v9659
  %11067 = vmatpush1.msra.mxu0 %v9658
  %11068 = vmatprep.subr.mxu0 %v9665
  %11069 = vmatpush1.msra.mxu0 %v9664
  %11070 = vmatprep.subr.mxu0 %v9671
  %11071 = vmatpush1.msra.mxu0 %v9670
  %11072 = vmatprep.subr.mxu0 %v9677
  %11073 = vmatpush1.msra.mxu0 %v9676
  %11074 = vmatprep.subr.mxu0 0.0
  %11075 = vmatpush1.msra.mxu0 0.0
  %11076 = vmatprep.subr.mxu0 0.0
  %11077 = vmatpush1.msra.mxu0 0.0
  %11078 = vmatprep.subr.mxu0 0.0
  %11079 = vmatpush1.msra.mxu0 0.0
  %11080 = vmatprep.subr.mxu0 0.0
  %11081 = vmatpush1.msra.mxu0 0.0
  %11082 = vmatprep.subr.mxu0 0.0
  %11083 = vmatpush1.msra.mxu0 0.0
  %11084 = vmatprep.subr.mxu0 0.0
  %11085 = vmatpush1.msra.mxu0 0.0
  %11086 = vmatprep.subr.mxu0 0.0
  %11087 = vmatpush1.msra.mxu0 0.0
  %11088 = vmatprep.subr.mxu0 0.0
  %11089 = vmatpush1.msra.mxu0 0.0
  %11090 = vmatprep.subr.mxu0 0.0
  %11091 = vmatpush1.msra.mxu0 0.0
  %11092 = vmatprep.subr.mxu0 0.0
  %11093 = vmatpush1.msra.mxu0 0.0
  %11094 = vmatprep.subr.mxu0 0.0
  %11095 = vmatpush1.msra.mxu0 0.0
  %11096 = vmatprep.subr.mxu0 0.0
  %11097 = vmatpush1.msra.mxu0 0.0
  %11098 = vmatprep.subr.mxu0 0.0
  %11099 = vmatpush1.msra.mxu0 0.0
  %11100 = vmatprep.subr.mxu0 0.0
  %11101 = vmatpush1.msra.mxu0 0.0
  %11102 = vmatprep.subr.mxu0 0.0
  %11103 = vmatpush1.msra.mxu0 0.0
  %11104 = vmatprep.subr.mxu0 0.0
  %11105 = vmatpush1.msra.mxu0 0.0
  %11106 = vmatprep.subr.mxu0 0.0
  %11107 = vmatpush1.msra.mxu0 0.0
  %11108 = vmatprep.subr.mxu0 0.0
  %11109 = vmatpush1.msra.mxu0 0.0
  %11110 = vmatprep.subr.mxu0 0.0
  %11111 = vmatpush1.msra.mxu0 0.0
  %11112 = vmatprep.subr.mxu0 0.0
  %11113 = vmatpush1.msra.mxu0 0.0
  %11114 = vmatprep.subr.mxu0 0.0
  %11115 = vmatpush1.msra.mxu0 0.0
  %11116 = vmatprep.subr.mxu0 0.0
  %11117 = vmatpush1.msra.mxu0 0.0
  %11118 = vmatprep.subr.mxu0 0.0
  %11119 = vmatpush1.msra.mxu0 0.0
  %11120 = vmatprep.subr.mxu0 0.0
  %11121 = vmatpush1.msra.mxu0 0.0
  %11122 = vmatprep.mubr.f32.mxu0 0.0
  %11123 = vmatmul.mubr.f32.gmra.mrb[0].mxu0 %v10133
  %v11124 = vpop.f32.mrb[0].mxu0
  %v11125 = vadd.f32 %v11054, %v11124
  %v11126 = vpop.f32.mrb[0].mxu0
  %v11127 = vadd.f32 %v11056, %v11126
  %11128 = vdwg.mxu0
  %11129 = vmatprep.subr.mxu0 %v5016
  %11130 = vmatpush1.msra.mxu0 %v5015
  %11131 = vmatprep.subr.mxu0 %v5022
  %11132 = vmatpush1.msra.mxu0 %v5021
  %11133 = vmatprep.subr.mxu0 %v5028
  %11134 = vmatpush1.msra.mxu0 %v5027
  %11135 = vmatprep.subr.mxu0 %v5034
  %11136 = vmatpush1.msra.mxu0 %v5033
  %11137 = vmatprep.subr.mxu0 %v5040
  %11138 = vmatpush1.msra.mxu0 %v5039
  %11139 = vmatprep.subr.mxu0 %v5046
  %11140 = vmatpush1.msra.mxu0 %v5045
  %11141 = vmatprep.subr.mxu0 %v5052
  %11142 = vmatpush1.msra.mxu0 %v5051
  %11143 = vmatprep.subr.mxu0 %v5058
  %11144 = vmatpush1.msra.mxu0 %v5057
  %11145 = vmatprep.subr.mxu0 %v5126
  %11146 = vmatpush1.msra.mxu0 %v5215
  %11147 = vmatprep.subr.mxu0 %v5138
  %11148 = vmatpush1.msra.mxu0 %v5220
  %11149 = vmatprep.subr.mxu0 %v5150
  %11150 = vmatpush1.msra.mxu0 %v5225
  %11151 = vmatprep.subr.mxu0 %v5162
  %11152 = vmatpush1.msra.mxu0 %v5230
  %11153 = vmatprep.subr.mxu0 %v5174
  %11154 = vmatpush1.msra.mxu0 %v5235
  %11155 = vmatprep.subr.mxu0 %v5186
  %11156 = vmatpush1.msra.mxu0 %v5240
  %11157 = vmatprep.subr.mxu0 %v5198
  %11158 = vmatpush1.msra.mxu0 %v5245
  %11159 = vmatprep.subr.mxu0 %v5210
  %11160 = vmatpush1.msra.mxu0 %v5250
  %11161 = vmatprep.subr.mxu0 %v5310
  %11162 = vmatpush1.msra.mxu0 %v5399
  %11163 = vmatprep.subr.mxu0 %v5322
  %11164 = vmatpush1.msra.mxu0 %v5404
  %11165 = vmatprep.subr.mxu0 %v5334
  %11166 = vmatpush1.msra.mxu0 %v5409
  %11167 = vmatprep.subr.mxu0 %v5346
  %11168 = vmatpush1.msra.mxu0 %v5414
  %11169 = vmatprep.subr.mxu0 %v5358
  %11170 = vmatpush1.msra.mxu0 %v5419
  %11171 = vmatprep.subr.mxu0 %v5370
  %11172 = vmatpush1.msra.mxu0 %v5424
  %11173 = vmatprep.subr.mxu0 %v5382
  %11174 = vmatpush1.msra.mxu0 %v5429
  %11175 = vmatprep.subr.mxu0 %v5394
  %11176 = vmatpush1.msra.mxu0 %v5434
  %11177 = vmatprep.subr.mxu0 %v5494
  %11178 = vmatpush1.msra.mxu0 %v5583
  %11179 = vmatprep.subr.mxu0 %v5506
  %11180 = vmatpush1.msra.mxu0 %v5588
  %11181 = vmatprep.subr.mxu0 %v5518
  %11182 = vmatpush1.msra.mxu0 %v5593
  %11183 = vmatprep.subr.mxu0 %v5530
  %11184 = vmatpush1.msra.mxu0 %v5598
  %11185 = vmatprep.subr.mxu0 %v5542
  %11186 = vmatpush1.msra.mxu0 %v5603
  %11187 = vmatprep.subr.mxu0 %v5554
  %11188 = vmatpush1.msra.mxu0 %v5608
  %11189 = vmatprep.subr.mxu0 %v5566
  %11190 = vmatpush1.msra.mxu0 %v5613
  %11191 = vmatprep.subr.mxu0 %v5578
  %11192 = vmatpush1.msra.mxu0 %v5618
  %11193 = vmatprep.mubr.f32.mxu0 %v10113
  %11194 = vmatmul.mubr.f32.gmra.mrb[0].mxu0 %v10112
  %v11195 = vpop.f32.mrb[0].mxu0
  %v11196 = vadd.f32 %v10129, %v11195
  %v11197 = vpop.f32.mrb[0].mxu0
  %v11198 = vadd.f32 %v10129, %v11197
  %11199 = vdwg.mxu0
  %11200 = vmatprep.subr.mxu0 %v5678
  %11201 = vmatpush1.msra.mxu0 %v5767
  %11202 = vmatprep.subr.mxu0 %v5690
  %11203 = vmatpush1.msra.mxu0 %v5772
  %11204 = vmatprep.subr.mxu0 %v5702
  %11205 = vmatpush1.msra.mxu0 %v5777
  %11206 = vmatprep.subr.mxu0 %v5714
  %11207 = vmatpush1.msra.mxu0 %v5782
  %11208 = vmatprep.subr.mxu0 %v5726
  %11209 = vmatpush1.msra.mxu0 %v5787
  %11210 = vmatprep.subr.mxu0 %v5738
  %11211 = vmatpush1.msra.mxu0 %v5792
  %11212 = vmatprep.subr.mxu0 %v5750
  %11213 = vmatpush1.msra.mxu0 %v5797
  %11214 = vmatprep.subr.mxu0 %v5762
  %11215 = vmatpush1.msra.mxu0 %v5802
  %11216 = vmatprep.subr.mxu0 %v5862
  %11217 = vmatpush1.msra.mxu0 %v5951
  %11218 = vmatprep.subr.mxu0 %v5874
  %11219 = vmatpush1.msra.mxu0 %v5956
  %11220 = vmatprep.subr.mxu0 %v5886
  %11221 = vmatpush1.msra.mxu0 %v5961
  %11222 = vmatprep.subr.mxu0 %v5898
  %11223 = vmatpush1.msra.mxu0 %v5966
  %11224 = vmatprep.subr.mxu0 %v5910
  %11225 = vmatpush1.msra.mxu0 %v5971
  %11226 = vmatprep.subr.mxu0 %v5922
  %11227 = vmatpush1.msra.mxu0 %v5976
  %11228 = vmatprep.subr.mxu0 %v5934
  %11229 = vmatpush1.msra.mxu0 %v5981
  %11230 = vmatprep.subr.mxu0 %v5946
  %11231 = vmatpush1.msra.mxu0 %v5986
  %11232 = vmatprep.subr.mxu0 %v6046
  %11233 = vmatpush1.msra.mxu0 %v6135
  %11234 = vmatprep.subr.mxu0 %v6058
  %11235 = vmatpush1.msra.mxu0 %v6140
  %11236 = vmatprep.subr.mxu0 %v6070
  %11237 = vmatpush1.msra.mxu0 %v6145
  %11238 = vmatprep.subr.mxu0 %v6082
  %11239 = vmatpush1.msra.mxu0 %v6150
  %11240 = vmatprep.subr.mxu0 %v6094
  %11241 = vmatpush1.msra.mxu0 %v6155
  %11242 = vmatprep.subr.mxu0 %v6106
  %11243 = vmatpush1.msra.mxu0 %v6160
  %11244 = vmatprep.subr.mxu0 %v6118
  %11245 = vmatpush1.msra.mxu0 %v6165
  %11246 = vmatprep.subr.mxu0 %v6130
  %11247 = vmatpush1.msra.mxu0 %v6170
  %11248 = vmatprep.subr.mxu0 %v6230
  %11249 = vmatpush1.msra.mxu0 %v6319
  %11250 = vmatprep.subr.mxu0 %v6242
  %11251 = vmatpush1.msra.mxu0 %v6324
  %11252 = vmatprep.subr.mxu0 %v6254
  %11253 = vmatpush1.msra.mxu0 %v6329
  %11254 = vmatprep.subr.mxu0 %v6266
  %11255 = vmatpush1.msra.mxu0 %v6334
  %11256 = vmatprep.subr.mxu0 %v6278
  %11257 = vmatpush1.msra.mxu0 %v6339
  %11258 = vmatprep.subr.mxu0 %v6290
  %11259 = vmatpush1.msra.mxu0 %v6344
  %11260 = vmatprep.subr.mxu0 %v6302
  %11261 = vmatpush1.msra.mxu0 %v6349
  %11262 = vmatprep.subr.mxu0 %v6314
  %11263 = vmatpush1.msra.mxu0 %v6354
  %11264 = vmatprep.mubr.f32.mxu0 %v10115
  %11265 = vmatmul.mubr.f32.gmra.mrb[0].mxu0 %v10114
  %v11266 = vpop.f32.mrb[0].mxu0
  %v11267 = vadd.f32 %v11196, %v11266
  %v11268 = vpop.f32.mrb[0].mxu0
  %v11269 = vadd.f32 %v11198, %v11268
  %11270 = vdwg.mxu0
  %11271 = vmatprep.subr.mxu0 %v6414
  %11272 = vmatpush1.msra.mxu0 %v6503
  %11273 = vmatprep.subr.mxu0 %v6426
  %11274 = vmatpush1.msra.mxu0 %v6508
  %11275 = vmatprep.subr.mxu0 %v6438
  %11276 = vmatpush1.msra.mxu0 %v6513
  %11277 = vmatprep.subr.mxu0 %v6450
  %11278 = vmatpush1.msra.mxu0 %v6518
  %11279 = vmatprep.subr.mxu0 %v6462
  %11280 = vmatpush1.msra.mxu0 %v6523
  %11281 = vmatprep.subr.mxu0 %v6474
  %11282 = vmatpush1.msra.mxu0 %v6528
  %11283 = vmatprep.subr.mxu0 %v6486
  %11284 = vmatpush1.msra.mxu0 %v6533
  %11285 = vmatprep.subr.mxu0 %v6498
  %11286 = vmatpush1.msra.mxu0 %v6538
  %11287 = vmatprep.subr.mxu0 %v6598
  %11288 = vmatpush1.msra.mxu0 %v6687
  %11289 = vmatprep.subr.mxu0 %v6610
  %11290 = vmatpush1.msra.mxu0 %v6692
  %11291 = vmatprep.subr.mxu0 %v6622
  %11292 = vmatpush1.msra.mxu0 %v6697
  %11293 = vmatprep.subr.mxu0 %v6634
  %11294 = vmatpush1.msra.mxu0 %v6702
  %11295 = vmatprep.subr.mxu0 %v6646
  %11296 = vmatpush1.msra.mxu0 %v6707
  %11297 = vmatprep.subr.mxu0 %v6658
  %11298 = vmatpush1.msra.mxu0 %v6712
  %11299 = vmatprep.subr.mxu0 %v6670
  %11300 = vmatpush1.msra.mxu0 %v6717
  %11301 = vmatprep.subr.mxu0 %v6682
  %11302 = vmatpush1.msra.mxu0 %v6722
  %11303 = vmatprep.subr.mxu0 %v6782
  %11304 = vmatpush1.msra.mxu0 %v6871
  %11305 = vmatprep.subr.mxu0 %v6794
  %11306 = vmatpush1.msra.mxu0 %v6876
  %11307 = vmatprep.subr.mxu0 %v6806
  %11308 = vmatpush1.msra.mxu0 %v6881
  %11309 = vmatprep.subr.mxu0 %v6818
  %11310 = vmatpush1.msra.mxu0 %v6886
  %11311 = vmatprep.subr.mxu0 %v6830
  %11312 = vmatpush1.msra.mxu0 %v6891
  %11313 = vmatprep.subr.mxu0 %v6842
  %11314 = vmatpush1.msra.mxu0 %v6896
  %11315 = vmatprep.subr.mxu0 %v6854
  %11316 = vmatpush1.msra.mxu0 %v6901
  %11317 = vmatprep.subr.mxu0 %v6866
  %11318 = vmatpush1.msra.mxu0 %v6906
  %11319 = vmatprep.subr.mxu0 %v6966
  %11320 = vmatpush1.msra.mxu0 %v7056
  %11321 = vmatprep.subr.mxu0 %v6978
  %11322 = vmatpush1.msra.mxu0 %v7061
  %11323 = vmatprep.subr.mxu0 %v6990
  %11324 = vmatpush1.msra.mxu0 %v7066
  %11325 = vmatprep.subr.mxu0 %v7002
  %11326 = vmatpush1.msra.mxu0 %v7071
  %11327 = vmatprep.subr.mxu0 %v7014
  %11328 = vmatpush1.msra.mxu0 %v7076
  %11329 = vmatprep.subr.mxu0 %v7026
  %11330 = vmatpush1.msra.mxu0 %v7081
  %11331 = vmatprep.subr.mxu0 %v7038
  %11332 = vmatpush1.msra.mxu0 %v7086
  %11333 = vmatprep.subr.mxu0 %v7050
  %11334 = vmatpush1.msra.mxu0 %v7091
  %11335 = vmatprep.mubr.f32.mxu0 %v10117
  %11336 = vmatmul.mubr.f32.gmra.mrb[0].mxu0 %v10116
  %v11337 = vpop.f32.mrb[0].mxu0
  %v11338 = vadd.f32 %v11267, %v11337
  %v11339 = vpop.f32.mrb[0].mxu0
  %v11340 = vadd.f32 %v11269, %v11339
  %11341 = vdwg.mxu0
  %11342 = vmatprep.subr.mxu0 %v7151
  %11343 = vmatpush1.msra.mxu0 %v7241
  %11344 = vmatprep.subr.mxu0 %v7163
  %11345 = vmatpush1.msra.mxu0 %v7246
  %11346 = vmatprep.subr.mxu0 %v7175
  %11347 = vmatpush1.msra.mxu0 %v7251
  %11348 = vmatprep.subr.mxu0 %v7187
  %11349 = vmatpush1.msra.mxu0 %v7256
  %11350 = vmatprep.subr.mxu0 %v7199
  %11351 = vmatpush1.msra.mxu0 %v7261
  %11352 = vmatprep.subr.mxu0 %v7211
  %11353 = vmatpush1.msra.mxu0 %v7266
  %11354 = vmatprep.subr.mxu0 %v7223
  %11355 = vmatpush1.msra.mxu0 %v7271
  %11356 = vmatprep.subr.mxu0 %v7235
  %11357 = vmatpush1.msra.mxu0 %v7276
  %11358 = vmatprep.subr.mxu0 %v7336
  %11359 = vmatpush1.msra.mxu0 %v7426
  %11360 = vmatprep.subr.mxu0 %v7348
  %11361 = vmatpush1.msra.mxu0 %v7431
  %11362 = vmatprep.subr.mxu0 %v7360
  %11363 = vmatpush1.msra.mxu0 %v7436
  %11364 = vmatprep.subr.mxu0 %v7372
  %11365 = vmatpush1.msra.mxu0 %v7441
  %11366 = vmatprep.subr.mxu0 %v7384
  %11367 = vmatpush1.msra.mxu0 %v7446
  %11368 = vmatprep.subr.mxu0 %v7396
  %11369 = vmatpush1.msra.mxu0 %v7451
  %11370 = vmatprep.subr.mxu0 %v7408
  %11371 = vmatpush1.msra.mxu0 %v7456
  %11372 = vmatprep.subr.mxu0 %v7420
  %11373 = vmatpush1.msra.mxu0 %v7461
  %11374 = vmatprep.subr.mxu0 %v7521
  %11375 = vmatpush1.msra.mxu0 %v7610
  %11376 = vmatprep.subr.mxu0 %v7533
  %11377 = vmatpush1.msra.mxu0 %v7615
  %11378 = vmatprep.subr.mxu0 %v7545
  %11379 = vmatpush1.msra.mxu0 %v7620
  %11380 = vmatprep.subr.mxu0 %v7557
  %11381 = vmatpush1.msra.mxu0 %v7625
  %11382 = vmatprep.subr.mxu0 %v7569
  %11383 = vmatpush1.msra.mxu0 %v7630
  %11384 = vmatprep.subr.mxu0 %v7581
  %11385 = vmatpush1.msra.mxu0 %v7635
  %11386 = vmatprep.subr.mxu0 %v7593
  %11387 = vmatpush1.msra.mxu0 %v7640
  %11388 = vmatprep.subr.mxu0 %v7605
  %11389 = vmatpush1.msra.mxu0 %v7645
  %11390 = vmatprep.subr.mxu0 %v7820
  %11391 = vmatpush1.msra.mxu0 %v7819
  %11392 = vmatprep.subr.mxu0 %v7826
  %11393 = vmatpush1.msra.mxu0 %v7825
  %11394 = vmatprep.subr.mxu0 %v7832
  %11395 = vmatpush1.msra.mxu0 %v7831
  %11396 = vmatprep.subr.mxu0 %v7838
  %11397 = vmatpush1.msra.mxu0 %v7837
  %11398 = vmatprep.subr.mxu0 %v7844
  %11399 = vmatpush1.msra.mxu0 %v7843
  %11400 = vmatprep.subr.mxu0 %v7850
  %11401 = vmatpush1.msra.mxu0 %v7849
  %11402 = vmatprep.subr.mxu0 %v7856
  %11403 = vmatpush1.msra.mxu0 %v7855
  %11404 = vmatprep.subr.mxu0 %v7862
  %11405 = vmatpush1.msra.mxu0 %v7861
  %11406 = vmatprep.mubr.f32.mxu0 %v10119
  %11407 = vmatmul.mubr.f32.gmra.mrb[0].mxu0 %v10118
  %v11408 = vpop.f32.mrb[0].mxu0
  %v11409 = vadd.f32 %v11338, %v11408
  %v11410 = vpop.f32.mrb[0].mxu0
  %v11411 = vadd.f32 %v11340, %v11410
  %11412 = vdwg.mxu0
  %11413 = vmatprep.subr.mxu0 %v9253
  %11414 = vmatpush1.msra.mxu0 %v9252
  %11415 = vmatprep.subr.mxu0 %v9259
  %11416 = vmatpush1.msra.mxu0 %v9258
  %11417 = vmatprep.subr.mxu0 %v9265
  %11418 = vmatpush1.msra.mxu0 %v9264
  %11419 = vmatprep.subr.mxu0 %v9271
  %11420 = vmatpush1.msra.mxu0 %v9270
  %11421 = vmatprep.subr.mxu0 %v9277
  %11422 = vmatpush1.msra.mxu0 %v9276
  %11423 = vmatprep.subr.mxu0 %v9283
  %11424 = vmatpush1.msra.mxu0 %v9282
  %11425 = vmatprep.subr.mxu0 %v9289
  %11426 = vmatpush1.msra.mxu0 %v9288
  %11427 = vmatprep.subr.mxu0 %v9295
  %11428 = vmatpush1.msra.mxu0 %v9294
  %11429 = vmatprep.subr.mxu0 %v9301
  %11430 = vmatpush1.msra.mxu0 %v9300
  %11431 = vmatprep.subr.mxu0 %v9307
  %11432 = vmatpush1.msra.mxu0 %v9306
  %11433 = vmatprep.subr.mxu0 %v9313
  %11434 = vmatpush1.msra.mxu0 %v9312
  %11435 = vmatprep.subr.mxu0 %v9319
  %11436 = vmatpush1.msra.mxu0 %v9318
  %11437 = vmatprep.subr.mxu0 %v9325
  %11438 = vmatpush1.msra.mxu0 %v9324
  %11439 = vmatprep.subr.mxu0 %v9331
  %11440 = vmatpush1.msra.mxu0 %v9330
  %11441 = vmatprep.subr.mxu0 %v9337
  %11442 = vmatpush1.msra.mxu0 %v9336
  %11443 = vmatprep.subr.mxu0 %v9343
  %11444 = vmatpush1.msra.mxu0 %v9342
  %11445 = vmatprep.subr.mxu0 %v9349
  %11446 = vmatpush1.msra.mxu0 %v9348
  %11447 = vmatprep.subr.mxu0 %v9355
  %11448 = vmatpush1.msra.mxu0 %v9354
  %11449 = vmatprep.subr.mxu0 %v9361
  %11450 = vmatpush1.msra.mxu0 %v9360
  %11451 = vmatprep.subr.mxu0 %v9367
  %11452 = vmatpush1.msra.mxu0 %v9366
  %11453 = vmatprep.subr.mxu0 %v9373
  %11454 = vmatpush1.msra.mxu0 %v9372
  %11455 = vmatprep.subr.mxu0 %v9379
  %11456 = vmatpush1.msra.mxu0 %v9378
  %11457 = vmatprep.subr.mxu0 %v9385
  %11458 = vmatpush1.msra.mxu0 %v9384
  %11459 = vmatprep.subr.mxu0 %v9391
  %11460 = vmatpush1.msra.mxu0 %v9390
  %11461 = vmatprep.subr.mxu0 %v9397
  %11462 = vmatpush1.msra.mxu0 %v9396
  %11463 = vmatprep.subr.mxu0 %v9403
  %11464 = vmatpush1.msra.mxu0 %v9402
  %11465 = vmatprep.subr.mxu0 %v9409
  %11466 = vmatpush1.msra.mxu0 %v9408
  %11467 = vmatprep.subr.mxu0 %v9415
  %11468 = vmatpush1.msra.mxu0 %v9414
  %11469 = vmatprep.subr.mxu0 %v9421
  %11470 = vmatpush1.msra.mxu0 %v9420
  %11471 = vmatprep.subr.mxu0 %v9427
  %11472 = vmatpush1.msra.mxu0 %v9426
  %11473 = vmatprep.subr.mxu0 %v9433
  %11474 = vmatpush1.msra.mxu0 %v9432
  %11475 = vmatprep.subr.mxu0 %v9439
  %11476 = vmatpush1.msra.mxu0 %v9438
  %11477 = vmatprep.mubr.f32.mxu0 %v10121
  %11478 = vmatmul.mubr.f32.gmra.mrb[0].mxu0 %v10120
  %v11479 = vpop.f32.mrb[0].mxu0
  %v11480 = vadd.f32 %v11409, %v11479
  %v11481 = vpop.f32.mrb[0].mxu0
  %v11482 = vadd.f32 %v11411, %v11481
  %11483 = vdwg.mxu0
  %11484 = vmatprep.subr.mxu0 %v9445
  %11485 = vmatpush1.msra.mxu0 %v9444
  %11486 = vmatprep.subr.mxu0 %v9451
  %11487 = vmatpush1.msra.mxu0 %v9450
  %11488 = vmatprep.subr.mxu0 %v9457
  %11489 = vmatpush1.msra.mxu0 %v9456
  %11490 = vmatprep.subr.mxu0 %v9463
  %11491 = vmatpush1.msra.mxu0 %v9462
  %11492 = vmatprep.subr.mxu0 %v9469
  %11493 = vmatpush1.msra.mxu0 %v9468
  %11494 = vmatprep.subr.mxu0 %v9475
  %11495 = vmatpush1.msra.mxu0 %v9474
  %11496 = vmatprep.subr.mxu0 %v9481
  %11497 = vmatpush1.msra.mxu0 %v9480
  %11498 = vmatprep.subr.mxu0 %v9487
  %11499 = vmatpush1.msra.mxu0 %v9486
  %11500 = vmatprep.subr.mxu0 %v9493
  %11501 = vmatpush1.msra.mxu0 %v9492
  %11502 = vmatprep.subr.mxu0 %v9499
  %11503 = vmatpush1.msra.mxu0 %v9498
  %11504 = vmatprep.subr.mxu0 %v9505
  %11505 = vmatpush1.msra.mxu0 %v9504
  %11506 = vmatprep.subr.mxu0 %v9511
  %11507 = vmatpush1.msra.mxu0 %v9510
  %11508 = vmatprep.subr.mxu0 %v9517
  %11509 = vmatpush1.msra.mxu0 %v9516
  %11510 = vmatprep.subr.mxu0 %v9523
  %11511 = vmatpush1.msra.mxu0 %v9522
  %11512 = vmatprep.subr.mxu0 %v9529
  %11513 = vmatpush1.msra.mxu0 %v9528
  %11514 = vmatprep.subr.mxu0 %v9535
  %11515 = vmatpush1.msra.mxu0 %v9534
  %11516 = vmatprep.subr.mxu0 %v9541
  %11517 = vmatpush1.msra.mxu0 %v9540
  %11518 = vmatprep.subr.mxu0 %v9547
  %11519 = vmatpush1.msra.mxu0 %v9546
  %11520 = vmatprep.subr.mxu0 %v9553
  %11521 = vmatpush1.msra.mxu0 %v9552
  %11522 = vmatprep.subr.mxu0 %v9559
  %11523 = vmatpush1.msra.mxu0 %v9558
  %11524 = vmatprep.subr.mxu0 %v9565
  %11525 = vmatpush1.msra.mxu0 %v9564
  %11526 = vmatprep.subr.mxu0 %v9571
  %11527 = vmatpush1.msra.mxu0 %v9570
  %11528 = vmatprep.subr.mxu0 %v9577
  %11529 = vmatpush1.msra.mxu0 %v9576
  %11530 = vmatprep.subr.mxu0 %v9583
  %11531 = vmatpush1.msra.mxu0 %v9582
  %11532 = vmatprep.subr.mxu0 %v9589
  %11533 = vmatpush1.msra.mxu0 %v9588
  %11534 = vmatprep.subr.mxu0 %v9595
  %11535 = vmatpush1.msra.mxu0 %v9594
  %11536 = vmatprep.subr.mxu0 %v9601
  %11537 = vmatpush1.msra.mxu0 %v9600
  %11538 = vmatprep.subr.mxu0 %v9607
  %11539 = vmatpush1.msra.mxu0 %v9606
  %11540 = vmatprep.subr.mxu0 %v9613
  %11541 = vmatpush1.msra.mxu0 %v9612
  %11542 = vmatprep.subr.mxu0 %v9619
  %11543 = vmatpush1.msra.mxu0 %v9618
  %11544 = vmatprep.subr.mxu0 %v9625
  %11545 = vmatpush1.msra.mxu0 %v9624
  %11546 = vmatprep.subr.mxu0 %v9631
  %11547 = vmatpush1.msra.mxu0 %v9630
  %11548 = vmatprep.mubr.f32.mxu0 %v10123
  %11549 = vmatmul.mubr.f32.gmra.mrb[0].mxu0 %v10122
  %v11550 = vpop.f32.mrb[0].mxu0
  %v11551 = vadd.f32 %v11480, %v11550
  %v11552 = vpop.f32.mrb[0].mxu0
  %v11553 = vadd.f32 %v11482, %v11552
  %11554 = vdwg.mxu0
  %11555 = vmatprep.subr.mxu0 %v9637
  %11556 = vmatpush1.msra.mxu0 %v9636
  %11557 = vmatprep.subr.mxu0 %v9643
  %11558 = vmatpush1.msra.mxu0 %v9642
  %11559 = vmatprep.subr.mxu0 %v9649
  %11560 = vmatpush1.msra.mxu0 %v9648
  %11561 = vmatprep.subr.mxu0 %v9655
  %11562 = vmatpush1.msra.mxu0 %v9654
  %11563 = vmatprep.subr.mxu0 %v9661
  %11564 = vmatpush1.msra.mxu0 %v9660
  %11565 = vmatprep.subr.mxu0 %v9667
  %11566 = vmatpush1.msra.mxu0 %v9666
  %11567 = vmatprep.subr.mxu0 %v9673
  %11568 = vmatpush1.msra.mxu0 %v9672
  %11569 = vmatprep.subr.mxu0 %v9679
  %11570 = vmatpush1.msra.mxu0 %v9678
  %11571 = vmatprep.subr.mxu0 0.0
  %11572 = vmatpush1.msra.mxu0 0.0
  %11573 = vmatprep.subr.mxu0 0.0
  %11574 = vmatpush1.msra.mxu0 0.0
  %11575 = vmatprep.subr.mxu0 0.0
  %11576 = vmatpush1.msra.mxu0 0.0
  %11577 = vmatprep.subr.mxu0 0.0
  %11578 = vmatpush1.msra.mxu0 0.0
  %11579 = vmatprep.subr.mxu0 0.0
  %11580 = vmatpush1.msra.mxu0 0.0
  %11581 = vmatprep.subr.mxu0 0.0
  %11582 = vmatpush1.msra.mxu0 0.0
  %11583 = vmatprep.subr.mxu0 0.0
  %11584 = vmatpush1.msra.mxu0 0.0
  %11585 = vmatprep.subr.mxu0 0.0
  %11586 = vmatpush1.msra.mxu0 0.0
  %11587 = vmatprep.subr.mxu0 0.0
  %11588 = vmatpush1.msra.mxu0 0.0
  %11589 = vmatprep.subr.mxu0 0.0
  %11590 = vmatpush1.msra.mxu0 0.0
  %11591 = vmatprep.subr.mxu0 0.0
  %11592 = vmatpush1.msra.mxu0 0.0
  %11593 = vmatprep.subr.mxu0 0.0
  %11594 = vmatpush1.msra.mxu0 0.0
  %11595 = vmatprep.subr.mxu0 0.0
  %11596 = vmatpush1.msra.mxu0 0.0
  %11597 = vmatprep.subr.mxu0 0.0
  %11598 = vmatpush1.msra.mxu0 0.0
  %11599 = vmatprep.subr.mxu0 0.0
  %11600 = vmatpush1.msra.mxu0 0.0
  %11601 = vmatprep.subr.mxu0 0.0
  %11602 = vmatpush1.msra.mxu0 0.0
  %11603 = vmatprep.subr.mxu0 0.0
  %11604 = vmatpush1.msra.mxu0 0.0
  %11605 = vmatprep.subr.mxu0 0.0
  %11606 = vmatpush1.msra.mxu0 0.0
  %11607 = vmatprep.subr.mxu0 0.0
  %11608 = vmatpush1.msra.mxu0 0.0
  %11609 = vmatprep.subr.mxu0 0.0
  %11610 = vmatpush1.msra.mxu0 0.0
  %11611 = vmatprep.subr.mxu0 0.0
  %11612 = vmatpush1.msra.mxu0 0.0
  %11613 = vmatprep.subr.mxu0 0.0
  %11614 = vmatpush1.msra.mxu0 0.0
  %11615 = vmatprep.subr.mxu0 0.0
  %11616 = vmatpush1.msra.mxu0 0.0
  %11617 = vmatprep.subr.mxu0 0.0
  %11618 = vmatpush1.msra.mxu0 0.0
  %11619 = vmatprep.mubr.f32.mxu0 0.0
  %11620 = vmatmul.mubr.f32.gmra.mrb[0].mxu0 %v10133
  %v11621 = vpop.f32.mrb[0].mxu0
  %v11622 = vadd.f32 %v11551, %v11621
  %v11623 = vpop.f32.mrb[0].mxu0
  %v11624 = vadd.f32 %v11553, %v11623
  %11625 = vdwg.mxu0
  %11627 = vrot.lane.b32.xlu0 %v10628, 124
  %v11628 = vpop.permute.xlu0 %11627
  %11630 = vrot.lane.b32.xlu0 %v10628, 120
  %v11631 = vpop.permute.xlu0 %11630
  %11633 = vrot.lane.b32.xlu0 %v10628, 116
  %v11634 = vpop.permute.xlu0 %11633
  %11636 = vrot.lane.b32.xlu0 %v10628, 112
  %v11637 = vpop.permute.xlu0 %11636
  %11639 = vrot.lane.b32.xlu0 %v10628, 108
  %v11640 = vpop.permute.xlu0 %11639
  %11643 = vrot.lane.b32.xlu0 %v10628, 104
  %v11644 = vpop.permute.xlu0 %11643
  %11645 = vrot.lane.b32.xlu0 %v10630, 104
  %v11646 = vpop.permute.xlu0 %11645
  %v11647 = vsel %vm309, %v11644, %v11646
  %11649 = vrot.lane.b32.xlu0 %v10630, 100
  %v11650 = vpop.permute.xlu0 %11649
  %11652 = vrot.lane.b32.xlu0 %v10630, 96
  %v11653 = vpop.permute.xlu0 %11652
  %11655 = vrot.lane.b32.xlu0 %v10630, 92
  %v11656 = vpop.permute.xlu0 %11655
  %11658 = vrot.lane.b32.xlu0 %v10630, 88
  %v11659 = vpop.permute.xlu0 %11658
  %11661 = vrot.lane.b32.xlu0 %v10630, 84
  %v11662 = vpop.permute.xlu0 %11661
  %11664 = vrot.lane.b32.xlu0 %v10630, 80
  %v11665 = vpop.permute.xlu0 %11664
  %11668 = vrot.lane.b32.xlu0 %v11125, 76
  %v11669 = vpop.permute.xlu0 %11668
  %11671 = vrot.lane.b32.xlu0 %v11125, 72
  %v11672 = vpop.permute.xlu0 %11671
  %11674 = vrot.lane.b32.xlu0 %v11125, 68
  %v11675 = vpop.permute.xlu0 %11674
  %vm11677 = vcmask 130048
  %v11678 = vsel %vm11677, %v10628, %v11628
  %v11679 = vsel %vm4368, %v11678, %v11631
  %vm11680 = vcmask 392192
  %v11681 = vsel %vm11680, %v11679, %v11634
  %v11682 = vsel %vm10131, %v11681, %v11637
  %vm11683 = vcmask 654336
  %v11684 = vsel %vm11683, %v11682, %v11640
  %vm11685 = vcmask 785408
  %v11686 = vsel %vm11685, %v11684, %v11647
  %v11687 = vsel %vm435, %v11686, %v11650
  %v11688 = vsel %vm11677, %v11653, %v11656
  %v11689 = vsel %vm4368, %v11688, %v11659
  %v11690 = vsel %vm11680, %v11689, %v11662
  %v11691 = vsel %vm10131, %v11690, %v11665
  %v11692 = vsel %vm11683, %v11691, %v11669
  %v11693 = vsel %vm11685, %v11692, %v11672
  %v11694 = vsel %vm435, %v11693, %v11675
  %v11697 = vcombine.low %v11687, %v11694
  %11699 = vst [vmem:[%s9] sm:$0x77] %v11697
  %11701 = vrot.lane.b32.xlu0 %v11127, 112
  %v11702 = vpop.permute.xlu0 %11701
  %11704 = vrot.lane.b32.xlu0 %v11127, 108
  %v11705 = vpop.permute.xlu0 %11704
  %11707 = vrot.lane.b32.xlu0 %v11127, 104
  %v11708 = vpop.permute.xlu0 %11707
  %11710 = vrot.lane.b32.xlu0 %v11127, 100
  %v11711 = vpop.permute.xlu0 %11710
  %11713 = vrot.lane.b32.xlu0 %v11127, 96
  %v11714 = vpop.permute.xlu0 %11713
  %11717 = vrot.lane.b32.xlu0 %v11127, 92
  %v11718 = vpop.permute.xlu0 %11717
  %11719 = vrot.lane.b32.xlu0 %v11622, 92
  %v11720 = vpop.permute.xlu0 %11719
  %v11721 = vsel %vm561, %v11718, %v11720
  %11723 = vrot.lane.b32.xlu0 %v11622, 88
  %v11724 = vpop.permute.xlu0 %11723
  %11726 = vrot.lane.b32.xlu0 %v11622, 84
  %v11727 = vpop.permute.xlu0 %11726
  %11729 = vrot.lane.b32.xlu0 %v11622, 80
  %v11730 = vpop.permute.xlu0 %11729
  %11732 = vrot.lane.b32.xlu0 %v11622, 76
  %v11733 = vpop.permute.xlu0 %11732
  %11735 = vrot.lane.b32.xlu0 %v11622, 72
  %v11736 = vpop.permute.xlu0 %11735
  %11738 = vrot.lane.b32.xlu0 %v11622, 68
  %v11739 = vpop.permute.xlu0 %11738
  %11742 = vrot.lane.b32.xlu0 %v11624, 64
  %v11743 = vpop.permute.xlu0 %11742
  %11745 = vrot.lane.b32.xlu0 %v11624, 60
  %v11746 = vpop.permute.xlu0 %11745
  %11748 = vrot.lane.b32.xlu0 %v11624, 56
  %v11749 = vpop.permute.xlu0 %11748
  %11751 = vrot.lane.b32.xlu0 %v11624, 52
  %v11752 = vpop.permute.xlu0 %11751
  %v11754 = vsel %vm11677, %v11702, %v11705
  %v11755 = vsel %vm4368, %v11754, %v11708
  %v11756 = vsel %vm11680, %v11755, %v11711
  %v11757 = vsel %vm10131, %v11756, %v11714
  %v11758 = vsel %vm11683, %v11757, %v11721
  %v11759 = vsel %vm11685, %v11758, %v11724
  %v11760 = vsel %vm435, %v11759, %v11727
  %v11761 = vsel %vm11677, %v11730, %v11733
  %v11762 = vsel %vm4368, %v11761, %v11736
  %v11763 = vsel %vm11680, %v11762, %v11739
  %v11764 = vsel %vm10131, %v11763, %v11743
  %v11765 = vsel %vm11683, %v11764, %v11746
  %v11766 = vsel %vm11685, %v11765, %v11749
  %v11767 = vsel %vm435, %v11766, %v11752
  %v11770 = vcombine.low %v11760, %v11767
  %s11772 = scalar_lea.vmem %s9, 8
  %11773 = vst [vmem:[%s11772] sm:$0x77] %v11770
  // Predicated region
  $region38: #{srcnn_forward.1} parent=0 // pred_check
    _
  $region39: #{srcnn_forward.1} parent=0 // pred_check_branch
    %11775 = sbr.rel (0) target = $region41
  $region40: #{srcnn_forward.1} parent=0 // pred_region
    _
  $region41: #{srcnn_forward.1} parent=0 // pred_fallthru
    _
  // Predicated region
  $region42: #{srcnn_forward.1} parent=0 // pred_check
    _
  $region43: #{srcnn_forward.1} parent=0 // pred_check_branch
    %11777 = sbr.rel (0) target = $region45
  $region44: #{srcnn_forward.1} parent=0 // pred_region
    _
  $region45: #{srcnn_forward.1} parent=0 // pred_fallthru
    _

</llo_original>
